<compile_context>
chip_gen: v6e
topology: v6e:2x2x1
jax: 0.10.0
libtpu: 0.0.40
codegen_flags: <defaults>
</compile_context>

<pallas_src>
import jax
import jax.numpy as jnp
from jax.experimental import pallas as pl
from jax.experimental.pallas import tpu as pltpu

EPS = 1e-5
HIDDEN_DIMS = (1024, 512, 256, 64)       # logical PyTorch dims
H1, H2, H3, H4 = 1024, 512, 256, 128     # kernel dims (layer-4 padded 64->128)
OUT_DIM = 48
OUT_PAD = 128                            # lane-dense kernel output width
VEC_W = 1024                             # packed per-layer vector width
VMEM_LIMIT_BYTES = 32 * 1024 * 1024      # fixes v5e's 16 MiB default; OK on v7x


def _round_up(x, m):
    return (x + m - 1) // m * m


# --------------------------------------------------------------------------
# Kernel
# --------------------------------------------------------------------------
def dnn_kernel(x_ref, w1_ref, w2_ref, w3_ref, w4_ref, w5_ref, vec_ref,
               out_ref, acc_ref):
    """grid = (batch_tiles, k_tiles); k streams layer-1 K-tiles into acc_ref."""
    k = pl.program_id(1)

    @pl.when(k == 0)
    def _init():
        acc_ref[...] = jnp.zeros_like(acc_ref)

    # Layer-1 partial product: (TB, TK) bf16 @ (TK, 1024) bf16 -> f32 acc.
    acc_ref[...] += jnp.dot(x_ref[...], w1_ref[...],
                            preferred_element_type=jnp.float32)

    @pl.when(k == pl.num_programs(1) - 1)
    def _finish():
        def act(pre, li, dout):
            # aligned (8, VEC_W) block load, then value-level lane-dense slices
            blk = vec_ref[8 * li:8 * li + 8, :]
            b = blk[0:1, :dout]           # Linear bias
            s = blk[1:2, :dout]           # gamma * rsqrt(var + eps)
            t = blk[2:3, :dout]           # beta - mean * s
            # bias + ReLU + BatchNorm1d(eval); Dropout == identity in eval
            return jnp.maximum(pre + b, 0.0) * s + t

        h = act(acc_ref[...], 0, H1)
        h = act(jnp.dot(h.astype(jnp.bfloat16), w2_ref[...],
                        preferred_element_type=jnp.float32), 1, H2)
        h = act(jnp.dot(h.astype(jnp.bfloat16), w3_ref[...],
                        preferred_element_type=jnp.float32), 2, H3)
        h = act(jnp.dot(h.astype(jnp.bfloat16), w4_ref[...],
                        preferred_element_type=jnp.float32), 3, H4)

        blk5 = vec_ref[32:40, :]
        b5 = blk5[0:1, :OUT_PAD]
        out_ref[...] = (jnp.dot(h.astype(jnp.bfloat16), w5_ref[...],
                                preferred_element_type=jnp.float32)
                        + b5).astype(out_ref.dtype)


# --------------------------------------------------------------------------
# Parameter construction (PyTorch-style raw params) and kernel-side packing
# --------------------------------------------------------------------------
def init_params(key, in_features):
    """Raw PyTorch-like params. Linear: U(-k, k), k = 1/sqrt(fan_in).
    BN running stats / affine params are made non-trivial so the folded
    scale/shift path is actually exercised."""
    dims = (in_features,) + HIDDEN_DIMS
    keys = jax.random.split(key, len(HIDDEN_DIMS) + 1)
    layers = []
    for li, (din, dout) in enumerate(zip(dims[:-1], dims[1:])):
        kw, kb, kg, kbe, km, kv = jax.random.split(keys[li], 6)
        bound = 1.0 / (din ** 0.5)
        w = jax.random.uniform(kw, (din, dout), jnp.float32, -bound, bound)
        b = jax.random.uniform(kb, (dout,), jnp.float32, -bound, bound)
        gamma = jax.random.uniform(kg, (dout,), jnp.float32, 0.5, 1.5)
        beta = jax.random.uniform(kbe, (dout,), jnp.float32, -0.2, 0.2)
        mean = jax.random.uniform(km, (dout,), jnp.float32, -0.2, 0.2)
        var = jax.random.uniform(kv, (dout,), jnp.float32, 0.5, 1.5)
        layers.append((w, b, gamma, beta, mean, var))
    kw, kb = jax.random.split(keys[-1])
    bound = 1.0 / (HIDDEN_DIMS[-1] ** 0.5)
    w5 = jax.random.uniform(kw, (HIDDEN_DIMS[-1], OUT_DIM), jnp.float32, -bound, bound)
    b5 = jax.random.uniform(kb, (OUT_DIM,), jnp.float32, -bound, bound)
    return layers, (w5, b5)


def prepare_params(layers, last, *, tk=2048):
    """Host-side prep (do once): fold BN eval into (scale, shift), cast
    weights to bf16, pad layer-1 K to a multiple of tk, pad layer-4 width to
    128 lanes and the last layer to (128, 128), and pack all small vectors
    into one (40, VEC_W) f32 array. Returns a dict that carries tk so the
    forward cannot silently be called with a mismatched K tile."""
    weights, vec_blocks = [], []
    for li, (w, b, g, be, m, v) in enumerate(layers):
        scale = g * jax.lax.rsqrt(v + EPS)
        shift = be - m * scale
        dout = w.shape[1]
        if li == 0:
            k_pad = _round_up(w.shape[0], tk) - w.shape[0]
            if k_pad:
                w = jnp.pad(w, ((0, k_pad), (0, 0)))
        if li == 3:
            # lane-dense padding 64 -> 128; padded lanes get scale=shift=0,
            # so they stay exactly zero through ReLU/BN and contribute nothing
            # to the (zero-row-padded) last layer.
            w = jnp.pad(w, ((0, 0), (0, H4 - dout)))
        weights.append(w.astype(jnp.bfloat16))
        blk = jnp.zeros((8, VEC_W), jnp.float32)
        blk = blk.at[0, :dout].set(b)
        blk = blk.at[1, :dout].set(scale)
        blk = blk.at[2, :dout].set(shift)
        vec_blocks.append(blk)
    w5, b5 = last
    w5p = jnp.pad(w5, ((0, H4 - w5.shape[0]), (0, OUT_PAD - OUT_DIM)))
    weights.append(w5p.astype(jnp.bfloat16))
    blk = jnp.zeros((8, VEC_W), jnp.float32).at[0, :OUT_DIM].set(b5)
    vec_blocks.append(blk)
    vecs = jnp.concatenate(vec_blocks, axis=0)       # (40, VEC_W) f32
    return {"weights": tuple(weights), "vecs": vecs, "tk": tk}


# --------------------------------------------------------------------------
# Wrapper
# --------------------------------------------------------------------------
def dnn_forward(x, prepared, *, tile_b=512):
    w1, w2, w3, w4, w5 = prepared["weights"]
    vecs = prepared["vecs"]
    tk = prepared["tk"]

    B = x.shape[0]
    xf = x.reshape(B, -1)
    F = xf.shape[1]
    F_pad = w1.shape[0]
    assert F_pad % tk == 0 and F_pad >= F, "w1 must be prepared with this tk"

    tile_b = min(tile_b, _round_up(B, 8))
    B_pad = _round_up(B, tile_b)

    xb = xf.astype(jnp.bfloat16)                     # single dtype normalization
    if B_pad != B or F_pad != F:
        xb = jnp.pad(xb, ((0, B_pad - B), (0, F_pad - F)))

    n_b, n_k = B_pad // tile_b, F_pad // tk

    def call(single_buffer_resident):
        def resident(shape):
            # Block index never changes -> one VMEM copy is enough.
            if single_buffer_resident:
                return pl.BlockSpec(shape, lambda i, k: (0, 0),
                                    pipeline_mode=pl.Buffered(buffer_count=1))
            return pl.BlockSpec(shape, lambda i, k: (0, 0))

        return pl.pallas_call(
            dnn_kernel,
            out_shape=jax.ShapeDtypeStruct((B_pad, OUT_PAD), jnp.float32),
            grid_spec=pltpu.PrefetchScalarGridSpec(
                num_scalar_prefetch=0,
                grid=(n_b, n_k),
                in_specs=[
                    pl.BlockSpec((tile_b, tk), lambda i, k: (i, k)),   # x
                    pl.BlockSpec((tk, H1), lambda i, k: (k, 0)),       # w1 (K-streamed)
                    resident(w2.shape),                                # VMEM-resident
                    resident(w3.shape),
                    resident(w4.shape),
                    resident(w5.shape),
                    resident(vecs.shape),                              # packed b/scale/shift
                ],
                out_specs=pl.BlockSpec((tile_b, OUT_PAD), lambda i, k: (i, 0)),
                scratch_shapes=[pltpu.VMEM((tile_b, H1), jnp.float32)],
            ),
            compiler_params=pltpu.CompilerParams(
                dimension_semantics=("parallel", "arbitrary"),
                vmem_limit_bytes=VMEM_LIMIT_BYTES),
        )(xb, w1, w2, w3, w4, w5, vecs)

    try:
        out = jax.block_until_ready(call(True))
    except Exception:
        # Fallback: identical kernel with default double-buffered residents,
        # in case this JAX build rejects pipeline_mode=pl.Buffered(1).
        out = call(False)

    return out[:B, :OUT_DIM]


# --------------------------------------------------------------------------
# Pure-JAX reference (PyTorch eval-mode math, same bf16 matmul inputs)
# --------------------------------------------------------------------------
def dnn_reference(x, layers, last):
    h = x.reshape(x.shape[0], -1)
    for (w, b, g, be, m, v) in layers:
        z = jnp.dot(h.astype(jnp.bfloat16), w.astype(jnp.bfloat16),
                    preferred_element_type=jnp.float32) + b
        z = jnp.maximum(z, 0.0)
        h = (z - m) * (g * jax.lax.rsqrt(v + EPS)) + be   # BatchNorm1d eval
    w5, b5 = last
    return jnp.dot(h.astype(jnp.bfloat16), w5.astype(jnp.bfloat16),
                   preferred_element_type=jnp.float32) + b5


if __name__ == "__main__":
    key = jax.random.PRNGKey(0)
    kx, kp = jax.random.split(key)

    # Small synthetic input consistent with the forward (flattened spatial
    # input). Real model uses 398*400 = 159200 features; we use 8*128 = 1024
    # so the test is fast, while the K-streaming grid and batch tiling are
    # still exercised (4 K-tiles x 2 batch tiles).
    B, Hh, Ww = 16, 8, 128
    x = jax.random.normal(kx, (B, Hh, Ww), dtype=jnp.float32)

    layers, last = init_params(kp, in_features=Hh * Ww)
    prepared = prepare_params(layers, last, tk=256)   # small tk for the test only

    out = dnn_forward(x, prepared, tile_b=8)          # 2 batch tiles
    out = jax.block_until_ready(out)

    ref = dnn_reference(x, layers, last)
    assert out.shape == (B, OUT_DIM)
    max_err = float(jnp.max(jnp.abs(out - ref)))
    assert jnp.allclose(out, ref, atol=1e-3, rtol=1e-3), f"mismatch, max_err={max_err}"

    print("KERNEL_OK")
</pallas_src>

<mosaic_0001>
module attributes {stable_mosaic.version = 11 : i64} {
  func.func @dnn_kernel(%arg0: i32, %arg1: i32, %arg2: memref<8x256xbf16, #tpu.memory_space<vmem>>, %arg3: memref<256x1024xbf16, #tpu.memory_space<vmem>>, %arg4: memref<1024x512xbf16, #tpu.memory_space<vmem>>, %arg5: memref<512x256xbf16, #tpu.memory_space<vmem>>, %arg6: memref<256x128xbf16, #tpu.memory_space<vmem>>, %arg7: memref<128x128xbf16, #tpu.memory_space<vmem>>, %arg8: memref<40x1024xf32, #tpu.memory_space<vmem>>, %arg9: memref<8x128xf32, #tpu.memory_space<vmem>>, %arg10: memref<8x1024xf32, #tpu.memory_space<vmem>>) attributes {dimension_semantics = [#tpu.dimension_semantics<parallel>, #tpu.dimension_semantics<arbitrary>], iteration_bounds = array<i64: 2, 4>, scalar_prefetch = 0 : i64, scratch_operands = 1 : i64, tpu.core_type = #tpu.core_type<tc>, window_params = [{transform_indices = @transform_0, window_bounds = array<i64: 8, 256>}, {transform_indices = @transform_1, window_bounds = array<i64: 256, 1024>}, {pipeline_mode = #tpu.pipeline_mode<synchronous>, transform_indices = @transform_2, window_bounds = array<i64: 1024, 512>}, {pipeline_mode = #tpu.pipeline_mode<synchronous>, transform_indices = @transform_3, window_bounds = array<i64: 512, 256>}, {pipeline_mode = #tpu.pipeline_mode<synchronous>, transform_indices = @transform_4, window_bounds = array<i64: 256, 128>}, {pipeline_mode = #tpu.pipeline_mode<synchronous>, transform_indices = @transform_5, window_bounds = array<i64: 128, 128>}, {pipeline_mode = #tpu.pipeline_mode<synchronous>, transform_indices = @transform_6, window_bounds = array<i64: 40, 1024>}, {transform_indices = @transform_7, window_bounds = array<i64: 8, 128>}]} {
    %c0_i32 = arith.constant 0 : i32
    %0 = arith.cmpi eq, %arg1, %c0_i32 : i32
    %1 = arith.extui %0 : i1 to i32
    %c0_i32_0 = arith.constant 0 : i32
    %2 = arith.cmpi ne, %1, %c0_i32_0 : i32
    scf.if %2 {
      %cst_9 = arith.constant 0.000000e+00 : f32
      %12 = vector.broadcast %cst_9 : f32 to vector<8x1024xf32>
      %c0_10 = arith.constant 0 : index
      %c0_11 = arith.constant 0 : index
      %13 = vector.load %arg10[%c0_10, %c0_11] : memref<8x1024xf32, #tpu.memory_space<vmem>>, vector<8x1024xf32>
      tpu.vector_store %arg10[%c0_10, %c0_11], %12 {strides = array<i32>} : memref<8x1024xf32, #tpu.memory_space<vmem>>, vector<8x1024xf32>,
    } else {
    }
    %c0 = arith.constant 0 : index
    %c0_1 = arith.constant 0 : index
    %3 = vector.load %arg10[%c0, %c0_1] : memref<8x1024xf32, #tpu.memory_space<vmem>>, vector<8x1024xf32>
    %c0_2 = arith.constant 0 : index
    %c0_3 = arith.constant 0 : index
    %4 = vector.load %arg2[%c0_2, %c0_3] : memref<8x256xbf16, #tpu.memory_space<vmem>>, vector<8x256xbf16>
    %c0_4 = arith.constant 0 : index
    %c0_5 = arith.constant 0 : index
    %5 = vector.load %arg3[%c0_4, %c0_5] : memref<256x1024xbf16, #tpu.memory_space<vmem>>, vector<256x1024xbf16>
    %cst = arith.constant dense<0.000000e+00> : vector<8x1024xf32>
    %6 = tpu.matmul %4, %5, %cst {dimension_numbers = #tpu.dot_dimension_numbers<[1], [0], [0], [1], [0, 0, 1, 1], [], []>} : vector<8x256xbf16>, vector<256x1024xbf16>, vector<8x1024xf32> -> vector<8x1024xf32>
    %7 = arith.addf %3, %6 : vector<8x1024xf32>
    %c0_6 = arith.constant 0 : index
    %c0_7 = arith.constant 0 : index
    %8 = vector.load %arg10[%c0_6, %c0_7] : memref<8x1024xf32, #tpu.memory_space<vmem>>, vector<8x1024xf32>
    tpu.vector_store %arg10[%c0_6, %c0_7], %7 {strides = array<i32>} : memref<8x1024xf32, #tpu.memory_space<vmem>>, vector<8x1024xf32>,
    %c3_i32 = arith.constant 3 : i32
    %9 = arith.cmpi eq, %arg1, %c3_i32 : i32
    %10 = arith.extui %9 : i1 to i32
    %c0_i32_8 = arith.constant 0 : i32
    %11 = arith.cmpi ne, %10, %c0_i32_8 : i32
    scf.if %11 {
      %c0_9 = arith.constant 0 : index
      %c0_10 = arith.constant 0 : index
      %12 = vector.load %arg10[%c0_9, %c0_10] : memref<8x1024xf32, #tpu.memory_space<vmem>>, vector<8x1024xf32>
      %c0_11 = arith.constant 0 : index
      %c0_12 = arith.constant 0 : index
      %13 = vector.load %arg8[%c0_11, %c0_12] : memref<40x1024xf32, #tpu.memory_space<vmem>>, vector<8x1024xf32>
      %14 = vector.extract_strided_slice %13 {offsets = [0, 0], sizes = [1, 1024], strides = [1, 1]} : vector<8x1024xf32> to vector<1x1024xf32>
      %15 = vector.extract_strided_slice %13 {offsets = [1, 0], sizes = [1, 1024], strides = [1, 1]} : vector<8x1024xf32> to vector<1x1024xf32>
      %16 = vector.extract_strided_slice %13 {offsets = [2, 0], sizes = [1, 1024], strides = [1, 1]} : vector<8x1024xf32> to vector<1x1024xf32>
      %17 = vector.broadcast %14 : vector<1x1024xf32> to vector<8x1024xf32>
      %18 = arith.addf %12, %17 : vector<8x1024xf32>
      %cst_13 = arith.constant 0.000000e+00 : f32
      %19 = vector.broadcast %cst_13 : f32 to vector<8x1024xf32>
      %20 = arith.maximumf %18, %19 : vector<8x1024xf32>
      %21 = vector.broadcast %15 : vector<1x1024xf32> to vector<8x1024xf32>
      %22 = arith.mulf %20, %21 : vector<8x1024xf32>
      %23 = vector.broadcast %16 : vector<1x1024xf32> to vector<8x1024xf32>
      %24 = arith.addf %22, %23 : vector<8x1024xf32>
      %25 = arith.truncf %24 : vector<8x1024xf32> to vector<8x1024xbf16>
      %c0_14 = arith.constant 0 : index
      %c0_15 = arith.constant 0 : index
      %26 = vector.load %arg4[%c0_14, %c0_15] : memref<1024x512xbf16, #tpu.memory_space<vmem>>, vector<1024x512xbf16>
      %cst_16 = arith.constant dense<0.000000e+00> : vector<8x512xf32>
      %27 = tpu.matmul %25, %26, %cst_16 {dimension_numbers = #tpu.dot_dimension_numbers<[1], [0], [0], [1], [0, 0, 1, 1], [], []>} : vector<8x1024xbf16>, vector<1024x512xbf16>, vector<8x512xf32> -> vector<8x512xf32>
      %c8 = arith.constant 8 : index
      %c0_17 = arith.constant 0 : index
      %28 = vector.load %arg8[%c8, %c0_17] : memref<40x1024xf32, #tpu.memory_space<vmem>>, vector<8x1024xf32>
      %29 = vector.extract_strided_slice %28 {offsets = [0, 0], sizes = [1, 512], strides = [1, 1]} : vector<8x1024xf32> to vector<1x512xf32>
      %30 = vector.extract_strided_slice %28 {offsets = [1, 0], sizes = [1, 512], strides = [1, 1]} : vector<8x1024xf32> to vector<1x512xf32>
      %31 = vector.extract_strided_slice %28 {offsets = [2, 0], sizes = [1, 512], strides = [1, 1]} : vector<8x1024xf32> to vector<1x512xf32>
      %32 = vector.broadcast %29 : vector<1x512xf32> to vector<8x512xf32>
      %33 = arith.addf %27, %32 : vector<8x512xf32>
      %cst_18 = arith.constant 0.000000e+00 : f32
      %34 = vector.broadcast %cst_18 : f32 to vector<8x512xf32>
      %35 = arith.maximumf %33, %34 : vector<8x512xf32>
      %36 = vector.broadcast %30 : vector<1x512xf32> to vector<8x512xf32>
      %37 = arith.mulf %35, %36 : vector<8x512xf32>
      %38 = vector.broadcast %31 : vector<1x512xf32> to vector<8x512xf32>
      %39 = arith.addf %37, %38 : vector<8x512xf32>
      %40 = arith.truncf %39 : vector<8x512xf32> to vector<8x512xbf16>
      %c0_19 = arith.constant 0 : index
      %c0_20 = arith.constant 0 : index
      %41 = vector.load %arg5[%c0_19, %c0_20] : memref<512x256xbf16, #tpu.memory_space<vmem>>, vector<512x256xbf16>
      %cst_21 = arith.constant dense<0.000000e+00> : vector<8x256xf32>
      %42 = tpu.matmul %40, %41, %cst_21 {dimension_numbers = #tpu.dot_dimension_numbers<[1], [0], [0], [1], [0, 0, 1, 1], [], []>} : vector<8x512xbf16>, vector<512x256xbf16>, vector<8x256xf32> -> vector<8x256xf32>
      %c16 = arith.constant 16 : index
      %c0_22 = arith.constant 0 : index
      %43 = vector.load %arg8[%c16, %c0_22] : memref<40x1024xf32, #tpu.memory_space<vmem>>, vector<8x1024xf32>
      %44 = vector.extract_strided_slice %43 {offsets = [0, 0], sizes = [1, 256], strides = [1, 1]} : vector<8x1024xf32> to vector<1x256xf32>
      %45 = vector.extract_strided_slice %43 {offsets = [1, 0], sizes = [1, 256], strides = [1, 1]} : vector<8x1024xf32> to vector<1x256xf32>
      %46 = vector.extract_strided_slice %43 {offsets = [2, 0], sizes = [1, 256], strides = [1, 1]} : vector<8x1024xf32> to vector<1x256xf32>
      %47 = vector.broadcast %44 : vector<1x256xf32> to vector<8x256xf32>
      %48 = arith.addf %42, %47 : vector<8x256xf32>
      %cst_23 = arith.constant 0.000000e+00 : f32
      %49 = vector.broadcast %cst_23 : f32 to vector<8x256xf32>
      %50 = arith.maximumf %48, %49 : vector<8x256xf32>
      %51 = vector.broadcast %45 : vector<1x256xf32> to vector<8x256xf32>
      %52 = arith.mulf %50, %51 : vector<8x256xf32>
      %53 = vector.broadcast %46 : vector<1x256xf32> to vector<8x256xf32>
      %54 = arith.addf %52, %53 : vector<8x256xf32>
      %55 = arith.truncf %54 : vector<8x256xf32> to vector<8x256xbf16>
      %c0_24 = arith.constant 0 : index
      %c0_25 = arith.constant 0 : index
      %56 = vector.load %arg6[%c0_24, %c0_25] : memref<256x128xbf16, #tpu.memory_space<vmem>>, vector<256x128xbf16>
      %cst_26 = arith.constant dense<0.000000e+00> : vector<8x128xf32>
      %57 = tpu.matmul %55, %56, %cst_26 {dimension_numbers = #tpu.dot_dimension_numbers<[1], [0], [0], [1], [0, 0, 1, 1], [], []>} : vector<8x256xbf16>, vector<256x128xbf16>, vector<8x128xf32> -> vector<8x128xf32>
      %c24 = arith.constant 24 : index
      %c0_27 = arith.constant 0 : index
      %58 = vector.load %arg8[%c24, %c0_27] : memref<40x1024xf32, #tpu.memory_space<vmem>>, vector<8x1024xf32>
      %59 = vector.extract_strided_slice %58 {offsets = [0, 0], sizes = [1, 128], strides = [1, 1]} : vector<8x1024xf32> to vector<1x128xf32>
      %60 = vector.extract_strided_slice %58 {offsets = [1, 0], sizes = [1, 128], strides = [1, 1]} : vector<8x1024xf32> to vector<1x128xf32>
      %61 = vector.extract_strided_slice %58 {offsets = [2, 0], sizes = [1, 128], strides = [1, 1]} : vector<8x1024xf32> to vector<1x128xf32>
      %62 = vector.broadcast %59 : vector<1x128xf32> to vector<8x128xf32>
      %63 = arith.addf %57, %62 : vector<8x128xf32>
      %cst_28 = arith.constant 0.000000e+00 : f32
      %64 = vector.broadcast %cst_28 : f32 to vector<8x128xf32>
      %65 = arith.maximumf %63, %64 : vector<8x128xf32>
      %66 = vector.broadcast %60 : vector<1x128xf32> to vector<8x128xf32>
      %67 = arith.mulf %65, %66 : vector<8x128xf32>
      %68 = vector.broadcast %61 : vector<1x128xf32> to vector<8x128xf32>
      %69 = arith.addf %67, %68 : vector<8x128xf32>
      %c32 = arith.constant 32 : index
      %c0_29 = arith.constant 0 : index
      %70 = vector.load %arg8[%c32, %c0_29] : memref<40x1024xf32, #tpu.memory_space<vmem>>, vector<8x1024xf32>
      %71 = vector.extract_strided_slice %70 {offsets = [0, 0], sizes = [1, 128], strides = [1, 1]} : vector<8x1024xf32> to vector<1x128xf32>
      %72 = arith.truncf %69 : vector<8x128xf32> to vector<8x128xbf16>
      %c0_30 = arith.constant 0 : index
      %c0_31 = arith.constant 0 : index
      %73 = vector.load %arg7[%c0_30, %c0_31] : memref<128x128xbf16, #tpu.memory_space<vmem>>, vector<128x128xbf16>
      %cst_32 = arith.constant dense<0.000000e+00> : vector<8x128xf32>
      %74 = tpu.matmul %72, %73, %cst_32 {dimension_numbers = #tpu.dot_dimension_numbers<[1], [0], [0], [1], [0, 0, 1, 1], [], []>} : vector<8x128xbf16>, vector<128x128xbf16>, vector<8x128xf32> -> vector<8x128xf32>
      %75 = vector.broadcast %71 : vector<1x128xf32> to vector<8x128xf32>
      %76 = arith.addf %74, %75 : vector<8x128xf32>
      %c0_33 = arith.constant 0 : index
      %c0_34 = arith.constant 0 : index
      %77 = vector.load %arg9[%c0_33, %c0_34] : memref<8x128xf32, #tpu.memory_space<vmem>>, vector<8x128xf32>
      tpu.vector_store %arg9[%c0_33, %c0_34], %76 {strides = array<i32>} : memref<8x128xf32, #tpu.memory_space<vmem>>, vector<8x128xf32>,
    } else {
    }
    return
  }
  func.func @transform_0(%arg0: i32, %arg1: i32) -> (i32, i32) {
    %c0_i32 = arith.constant 0 : i32
    return %arg0, %arg1 : i32, i32
  }
  func.func @transform_1(%arg0: i32, %arg1: i32) -> (i32, i32) {
    %c0_i32 = arith.constant 0 : i32
    %c0_i32_0 = arith.constant 0 : i32
    return %arg1, %c0_i32 : i32, i32
  }
  func.func @transform_2(%arg0: i32, %arg1: i32) -> (i32, i32) {
    %c0_i32 = arith.constant 0 : i32
    %c0_i32_0 = arith.constant 0 : i32
    %c0_i32_1 = arith.constant 0 : i32
    return %c0_i32, %c0_i32_0 : i32, i32
  }
  func.func @transform_3(%arg0: i32, %arg1: i32) -> (i32, i32) {
    %c0_i32 = arith.constant 0 : i32
    %c0_i32_0 = arith.constant 0 : i32
    %c0_i32_1 = arith.constant 0 : i32
    return %c0_i32, %c0_i32_0 : i32, i32
  }
  func.func @transform_4(%arg0: i32, %arg1: i32) -> (i32, i32) {
    %c0_i32 = arith.constant 0 : i32
    %c0_i32_0 = arith.constant 0 : i32
    %c0_i32_1 = arith.constant 0 : i32
    return %c0_i32, %c0_i32_0 : i32, i32
  }
  func.func @transform_5(%arg0: i32, %arg1: i32) -> (i32, i32) {
    %c0_i32 = arith.constant 0 : i32
    %c0_i32_0 = arith.constant 0 : i32
    %c0_i32_1 = arith.constant 0 : i32
    return %c0_i32, %c0_i32_0 : i32, i32
  }
  func.func @transform_6(%arg0: i32, %arg1: i32) -> (i32, i32) {
    %c0_i32 = arith.constant 0 : i32
    %c0_i32_0 = arith.constant 0 : i32
    %c0_i32_1 = arith.constant 0 : i32
    return %c0_i32, %c0_i32_0 : i32, i32
  }
  func.func @transform_7(%arg0: i32, %arg1: i32) -> (i32, i32) {
    %c0_i32 = arith.constant 0 : i32
    %c0_i32_0 = arith.constant 0 : i32
    return %arg0, %c0_i32 : i32, i32
  }
}

module attributes {stable_mosaic.version = 11 : i64} {
  func.func @dnn_kernel(%arg0: i32, %arg1: i32, %arg2: memref<8x256xbf16, #tpu.memory_space<vmem>>, %arg3: memref<256x1024xbf16, #tpu.memory_space<vmem>>, %arg4: memref<1024x512xbf16, #tpu.memory_space<vmem>>, %arg5: memref<512x256xbf16, #tpu.memory_space<vmem>>, %arg6: memref<256x128xbf16, #tpu.memory_space<vmem>>, %arg7: memref<128x128xbf16, #tpu.memory_space<vmem>>, %arg8: memref<40x1024xf32, #tpu.memory_space<vmem>>, %arg9: memref<8x128xf32, #tpu.memory_space<vmem>>, %arg10: memref<8x1024xf32, #tpu.memory_space<vmem>>) attributes {dimension_semantics = [#tpu.dimension_semantics<parallel>, #tpu.dimension_semantics<arbitrary>], iteration_bounds = array<i64: 2, 4>, scalar_prefetch = 0 : i64, scratch_operands = 1 : i64, tpu.core_type = #tpu.core_type<tc>, window_params = [{transform_indices = @transform_0, window_bounds = array<i64: 8, 256>}, {transform_indices = @transform_1, window_bounds = array<i64: 256, 1024>}, {pipeline_mode = #tpu.pipeline_mode<synchronous>, transform_indices = @transform_2, window_bounds = array<i64: 1024, 512>}, {pipeline_mode = #tpu.pipeline_mode<synchronous>, transform_indices = @transform_3, window_bounds = array<i64: 512, 256>}, {pipeline_mode = #tpu.pipeline_mode<synchronous>, transform_indices = @transform_4, window_bounds = array<i64: 256, 128>}, {pipeline_mode = #tpu.pipeline_mode<synchronous>, transform_indices = @transform_5, window_bounds = array<i64: 128, 128>}, {pipeline_mode = #tpu.pipeline_mode<synchronous>, transform_indices = @transform_6, window_bounds = array<i64: 40, 1024>}, {transform_indices = @transform_7, window_bounds = array<i64: 8, 128>}]} {
    %c0_i32 = arith.constant 0 : i32
    %0 = arith.cmpi eq, %arg1, %c0_i32 : i32
    %1 = arith.extui %0 : i1 to i32
    %c0_i32_0 = arith.constant 0 : i32
    %2 = arith.cmpi ne, %1, %c0_i32_0 : i32
    scf.if %2 {
      %cst_9 = arith.constant 0.000000e+00 : f32
      %12 = vector.broadcast %cst_9 : f32 to vector<8x1024xf32>
      %c0_10 = arith.constant 0 : index
      %c0_11 = arith.constant 0 : index
      %13 = vector.load %arg10[%c0_10, %c0_11] : memref<8x1024xf32, #tpu.memory_space<vmem>>, vector<8x1024xf32>
      tpu.vector_store %arg10[%c0_10, %c0_11], %12 {strides = array<i32>} : memref<8x1024xf32, #tpu.memory_space<vmem>>, vector<8x1024xf32>,
    } else {
    }
    %c0 = arith.constant 0 : index
    %c0_1 = arith.constant 0 : index
    %3 = vector.load %arg10[%c0, %c0_1] : memref<8x1024xf32, #tpu.memory_space<vmem>>, vector<8x1024xf32>
    %c0_2 = arith.constant 0 : index
    %c0_3 = arith.constant 0 : index
    %4 = vector.load %arg2[%c0_2, %c0_3] : memref<8x256xbf16, #tpu.memory_space<vmem>>, vector<8x256xbf16>
    %c0_4 = arith.constant 0 : index
    %c0_5 = arith.constant 0 : index
    %5 = vector.load %arg3[%c0_4, %c0_5] : memref<256x1024xbf16, #tpu.memory_space<vmem>>, vector<256x1024xbf16>
    %cst = arith.constant dense<0.000000e+00> : vector<8x1024xf32>
    %6 = tpu.matmul %4, %5, %cst {dimension_numbers = #tpu.dot_dimension_numbers<[1], [0], [0], [1], [0, 0, 1, 1], [], []>} : vector<8x256xbf16>, vector<256x1024xbf16>, vector<8x1024xf32> -> vector<8x1024xf32>
    %7 = arith.addf %3, %6 : vector<8x1024xf32>
    %c0_6 = arith.constant 0 : index
    %c0_7 = arith.constant 0 : index
    %8 = vector.load %arg10[%c0_6, %c0_7] : memref<8x1024xf32, #tpu.memory_space<vmem>>, vector<8x1024xf32>
    tpu.vector_store %arg10[%c0_6, %c0_7], %7 {strides = array<i32>} : memref<8x1024xf32, #tpu.memory_space<vmem>>, vector<8x1024xf32>,
    %c3_i32 = arith.constant 3 : i32
    %9 = arith.cmpi eq, %arg1, %c3_i32 : i32
    %10 = arith.extui %9 : i1 to i32
    %c0_i32_8 = arith.constant 0 : i32
    %11 = arith.cmpi ne, %10, %c0_i32_8 : i32
    scf.if %11 {
      %c0_9 = arith.constant 0 : index
      %c0_10 = arith.constant 0 : index
      %12 = vector.load %arg10[%c0_9, %c0_10] : memref<8x1024xf32, #tpu.memory_space<vmem>>, vector<8x1024xf32>
      %c0_11 = arith.constant 0 : index
      %c0_12 = arith.constant 0 : index
      %13 = vector.load %arg8[%c0_11, %c0_12] : memref<40x1024xf32, #tpu.memory_space<vmem>>, vector<8x1024xf32>
      %14 = vector.extract_strided_slice %13 {offsets = [0, 0], sizes = [1, 1024], strides = [1, 1]} : vector<8x1024xf32> to vector<1x1024xf32>
      %15 = vector.extract_strided_slice %13 {offsets = [1, 0], sizes = [1, 1024], strides = [1, 1]} : vector<8x1024xf32> to vector<1x1024xf32>
      %16 = vector.extract_strided_slice %13 {offsets = [2, 0], sizes = [1, 1024], strides = [1, 1]} : vector<8x1024xf32> to vector<1x1024xf32>
      %17 = vector.broadcast %14 : vector<1x1024xf32> to vector<8x1024xf32>
      %18 = arith.addf %12, %17 : vector<8x1024xf32>
      %cst_13 = arith.constant 0.000000e+00 : f32
      %19 = vector.broadcast %cst_13 : f32 to vector<8x1024xf32>
      %20 = arith.maximumf %18, %19 : vector<8x1024xf32>
      %21 = vector.broadcast %15 : vector<1x1024xf32> to vector<8x1024xf32>
      %22 = arith.mulf %20, %21 : vector<8x1024xf32>
      %23 = vector.broadcast %16 : vector<1x1024xf32> to vector<8x1024xf32>
      %24 = arith.addf %22, %23 : vector<8x1024xf32>
      %25 = arith.truncf %24 : vector<8x1024xf32> to vector<8x1024xbf16>
      %c0_14 = arith.constant 0 : index
      %c0_15 = arith.constant 0 : index
      %26 = vector.load %arg4[%c0_14, %c0_15] : memref<1024x512xbf16, #tpu.memory_space<vmem>>, vector<1024x512xbf16>
      %cst_16 = arith.constant dense<0.000000e+00> : vector<8x512xf32>
      %27 = tpu.matmul %25, %26, %cst_16 {dimension_numbers = #tpu.dot_dimension_numbers<[1], [0], [0], [1], [0, 0, 1, 1], [], []>} : vector<8x1024xbf16>, vector<1024x512xbf16>, vector<8x512xf32> -> vector<8x512xf32>
      %c8 = arith.constant 8 : index
      %c0_17 = arith.constant 0 : index
      %28 = vector.load %arg8[%c8, %c0_17] : memref<40x1024xf32, #tpu.memory_space<vmem>>, vector<8x1024xf32>
      %29 = vector.extract_strided_slice %28 {offsets = [0, 0], sizes = [1, 512], strides = [1, 1]} : vector<8x1024xf32> to vector<1x512xf32>
      %30 = vector.extract_strided_slice %28 {offsets = [1, 0], sizes = [1, 512], strides = [1, 1]} : vector<8x1024xf32> to vector<1x512xf32>
      %31 = vector.extract_strided_slice %28 {offsets = [2, 0], sizes = [1, 512], strides = [1, 1]} : vector<8x1024xf32> to vector<1x512xf32>
      %32 = vector.broadcast %29 : vector<1x512xf32> to vector<8x512xf32>
      %33 = arith.addf %27, %32 : vector<8x512xf32>
      %cst_18 = arith.constant 0.000000e+00 : f32
      %34 = vector.broadcast %cst_18 : f32 to vector<8x512xf32>
      %35 = arith.maximumf %33, %34 : vector<8x512xf32>
      %36 = vector.broadcast %30 : vector<1x512xf32> to vector<8x512xf32>
      %37 = arith.mulf %35, %36 : vector<8x512xf32>
      %38 = vector.broadcast %31 : vector<1x512xf32> to vector<8x512xf32>
      %39 = arith.addf %37, %38 : vector<8x512xf32>
      %40 = arith.truncf %39 : vector<8x512xf32> to vector<8x512xbf16>
      %c0_19 = arith.constant 0 : index
      %c0_20 = arith.constant 0 : index
      %41 = vector.load %arg5[%c0_19, %c0_20] : memref<512x256xbf16, #tpu.memory_space<vmem>>, vector<512x256xbf16>
      %cst_21 = arith.constant dense<0.000000e+00> : vector<8x256xf32>
      %42 = tpu.matmul %40, %41, %cst_21 {dimension_numbers = #tpu.dot_dimension_numbers<[1], [0], [0], [1], [0, 0, 1, 1], [], []>} : vector<8x512xbf16>, vector<512x256xbf16>, vector<8x256xf32> -> vector<8x256xf32>
      %c16 = arith.constant 16 : index
      %c0_22 = arith.constant 0 : index
      %43 = vector.load %arg8[%c16, %c0_22] : memref<40x1024xf32, #tpu.memory_space<vmem>>, vector<8x1024xf32>
      %44 = vector.extract_strided_slice %43 {offsets = [0, 0], sizes = [1, 256], strides = [1, 1]} : vector<8x1024xf32> to vector<1x256xf32>
      %45 = vector.extract_strided_slice %43 {offsets = [1, 0], sizes = [1, 256], strides = [1, 1]} : vector<8x1024xf32> to vector<1x256xf32>
      %46 = vector.extract_strided_slice %43 {offsets = [2, 0], sizes = [1, 256], strides = [1, 1]} : vector<8x1024xf32> to vector<1x256xf32>
      %47 = vector.broadcast %44 : vector<1x256xf32> to vector<8x256xf32>
      %48 = arith.addf %42, %47 : vector<8x256xf32>
      %cst_23 = arith.constant 0.000000e+00 : f32
      %49 = vector.broadcast %cst_23 : f32 to vector<8x256xf32>
      %50 = arith.maximumf %48, %49 : vector<8x256xf32>
      %51 = vector.broadcast %45 : vector<1x256xf32> to vector<8x256xf32>
      %52 = arith.mulf %50, %51 : vector<8x256xf32>
      %53 = vector.broadcast %46 : vector<1x256xf32> to vector<8x256xf32>
      %54 = arith.addf %52, %53 : vector<8x256xf32>
      %55 = arith.truncf %54 : vector<8x256xf32> to vector<8x256xbf16>
      %c0_24 = arith.constant 0 : index
      %c0_25 = arith.constant 0 : index
      %56 = vector.load %arg6[%c0_24, %c0_25] : memref<256x128xbf16, #tpu.memory_space<vmem>>, vector<256x128xbf16>
      %cst_26 = arith.constant dense<0.000000e+00> : vector<8x128xf32>
      %57 = tpu.matmul %55, %56, %cst_26 {dimension_numbers = #tpu.dot_dimension_numbers<[1], [0], [0], [1], [0, 0, 1, 1], [], []>} : vector<8x256xbf16>, vector<256x128xbf16>, vector<8x128xf32> -> vector<8x128xf32>
      %c24 = arith.constant 24 : index
      %c0_27 = arith.constant 0 : index
      %58 = vector.load %arg8[%c24, %c0_27] : memref<40x1024xf32, #tpu.memory_space<vmem>>, vector<8x1024xf32>
      %59 = vector.extract_strided_slice %58 {offsets = [0, 0], sizes = [1, 128], strides = [1, 1]} : vector<8x1024xf32> to vector<1x128xf32>
      %60 = vector.extract_strided_slice %58 {offsets = [1, 0], sizes = [1, 128], strides = [1, 1]} : vector<8x1024xf32> to vector<1x128xf32>
      %61 = vector.extract_strided_slice %58 {offsets = [2, 0], sizes = [1, 128], strides = [1, 1]} : vector<8x1024xf32> to vector<1x128xf32>
      %62 = vector.broadcast %59 : vector<1x128xf32> to vector<8x128xf32>
      %63 = arith.addf %57, %62 : vector<8x128xf32>
      %cst_28 = arith.constant 0.000000e+00 : f32
      %64 = vector.broadcast %cst_28 : f32 to vector<8x128xf32>
      %65 = arith.maximumf %63, %64 : vector<8x128xf32>
      %66 = vector.broadcast %60 : vector<1x128xf32> to vector<8x128xf32>
      %67 = arith.mulf %65, %66 : vector<8x128xf32>
      %68 = vector.broadcast %61 : vector<1x128xf32> to vector<8x128xf32>
      %69 = arith.addf %67, %68 : vector<8x128xf32>
      %c32 = arith.constant 32 : index
      %c0_29 = arith.constant 0 : index
      %70 = vector.load %arg8[%c32, %c0_29] : memref<40x1024xf32, #tpu.memory_space<vmem>>, vector<8x1024xf32>
      %71 = vector.extract_strided_slice %70 {offsets = [0, 0], sizes = [1, 128], strides = [1, 1]} : vector<8x1024xf32> to vector<1x128xf32>
      %72 = arith.truncf %69 : vector<8x128xf32> to vector<8x128xbf16>
      %c0_30 = arith.constant 0 : index
      %c0_31 = arith.constant 0 : index
      %73 = vector.load %arg7[%c0_30, %c0_31] : memref<128x128xbf16, #tpu.memory_space<vmem>>, vector<128x128xbf16>
      %cst_32 = arith.constant dense<0.000000e+00> : vector<8x128xf32>
      %74 = tpu.matmul %72, %73, %cst_32 {dimension_numbers = #tpu.dot_dimension_numbers<[1], [0], [0], [1], [0, 0, 1, 1], [], []>} : vector<8x128xbf16>, vector<128x128xbf16>, vector<8x128xf32> -> vector<8x128xf32>
      %75 = vector.broadcast %71 : vector<1x128xf32> to vector<8x128xf32>
      %76 = arith.addf %74, %75 : vector<8x128xf32>
      %c0_33 = arith.constant 0 : index
      %c0_34 = arith.constant 0 : index
      %77 = vector.load %arg9[%c0_33, %c0_34] : memref<8x128xf32, #tpu.memory_space<vmem>>, vector<8x128xf32>
      tpu.vector_store %arg9[%c0_33, %c0_34], %76 {strides = array<i32>} : memref<8x128xf32, #tpu.memory_space<vmem>>, vector<8x128xf32>,
    } else {
    }
    return
  }
  func.func @transform_0(%arg0: i32, %arg1: i32) -> (i32, i32) {
    %c0_i32 = arith.constant 0 : i32
    return %arg0, %arg1 : i32, i32
  }
  func.func @transform_1(%arg0: i32, %arg1: i32) -> (i32, i32) {
    %c0_i32 = arith.constant 0 : i32
    %c0_i32_0 = arith.constant 0 : i32
    return %arg1, %c0_i32 : i32, i32
  }
  func.func @transform_2(%arg0: i32, %arg1: i32) -> (i32, i32) {
    %c0_i32 = arith.constant 0 : i32
    %c0_i32_0 = arith.constant 0 : i32
    %c0_i32_1 = arith.constant 0 : i32
    return %c0_i32, %c0_i32_0 : i32, i32
  }
  func.func @transform_3(%arg0: i32, %arg1: i32) -> (i32, i32) {
    %c0_i32 = arith.constant 0 : i32
    %c0_i32_0 = arith.constant 0 : i32
    %c0_i32_1 = arith.constant 0 : i32
    return %c0_i32, %c0_i32_0 : i32, i32
  }
  func.func @transform_4(%arg0: i32, %arg1: i32) -> (i32, i32) {
    %c0_i32 = arith.constant 0 : i32
    %c0_i32_0 = arith.constant 0 : i32
    %c0_i32_1 = arith.constant 0 : i32
    return %c0_i32, %c0_i32_0 : i32, i32
  }
  func.func @transform_5(%arg0: i32, %arg1: i32) -> (i32, i32) {
    %c0_i32 = arith.constant 0 : i32
    %c0_i32_0 = arith.constant 0 : i32
    %c0_i32_1 = arith.constant 0 : i32
    return %c0_i32, %c0_i32_0 : i32, i32
  }
  func.func @transform_6(%arg0: i32, %arg1: i32) -> (i32, i32) {
    %c0_i32 = arith.constant 0 : i32
    %c0_i32_0 = arith.constant 0 : i32
    %c0_i32_1 = arith.constant 0 : i32
    return %c0_i32, %c0_i32_0 : i32, i32
  }
  func.func @transform_7(%arg0: i32, %arg1: i32) -> (i32, i32) {
    %c0_i32 = arith.constant 0 : i32
    %c0_i32_0 = arith.constant 0 : i32
    return %arg0, %c0_i32 : i32, i32
  }
}

</mosaic_0001>

<llo_original>
// kernel: tpu_custom_call.1
$region0: #{tpu_custom_call.1}
  #allocation0 [shape = 'u32[]', space=smem, size = 0x4, offset = 0x4, fixed_abs, tag = 'smem constant byte address 0x4 - core index']
  #allocation1 [shape = 'u32[144,128]{1,0:T(1,128)}', space=vmem, size = 0x12000, scoped, tag = 'internal scratch']
  #allocation2 [shape = 'f32[8,1024]{1,0:T(8,128)}', space=vmem, size = 0x8000, scoped, tag = 'scratch operand']
  %s0 = inlined_call_operand.hbm [shape: bf16[16,1024], index: 0, kind: input, shape index: {}]
  %s1 = inlined_call_operand.hbm [shape: bf16[1024,1024], index: 1, kind: input, shape index: {}]
  %s2 = inlined_call_operand.hbm [shape: bf16[1024,512], index: 2, kind: input, shape index: {}]
  %s3 = inlined_call_operand.hbm [shape: bf16[512,256], index: 3, kind: input, shape index: {}]
  %s4 = inlined_call_operand.hbm [shape: bf16[256,128], index: 4, kind: input, shape index: {}]
  %s5 = inlined_call_operand.hbm [shape: bf16[128,128], index: 5, kind: input, shape index: {}]
  %s6 = inlined_call_operand.hbm [shape: f32[40,1024], index: 6, kind: input, shape index: {}]
  %s7 = inlined_call_operand.hbm [shape: f32[16,128], index: 7, kind: output, shape index: {}]
  %s8 = sld [smem:[#allocation0]]
  $region97: #{tpu_custom_call.1} parent=0
    _
  %s10 = ssub.s32 1, %s8
  %s11 = scalar_select 0, %s10, %s8
  $region1: #{tpu_custom_call.1} parent=0
    #allocation3 [shape = 'u8[8192]{0}', space=vmem, size = 0x2000, scoped, tag = 'input window, operand 0']
    #allocation4 [shape = 's32[2]{0}', space=sflag, size = 0x8, scoped, tag = 'scoped memory for tpu_custom_call.1']
    #allocation5 [shape = 's32[2]{0}', space=sflag, size = 0x8, scoped, tag = 'scoped memory for tpu_custom_call.1']
    #allocation6 [shape = 'u8[1048576]{0}', space=vmem, size = 0x100000, scoped, tag = 'input window, operand 1']
    #allocation7 [shape = 's32[2]{0}', space=sflag, size = 0x8, scoped, tag = 'scoped memory for tpu_custom_call.1']
    #allocation8 [shape = 'u8[1048576]{0}', space=vmem, size = 0x100000, scoped, tag = 'input window, operand 2, single buffered']
    #allocation9 [shape = 'u8[262144]{0}', space=vmem, size = 0x40000, scoped, tag = 'input window, operand 3, single buffered']
    #allocation10 [shape = 's32[1]{0}', space=sflag, size = 0x4, scoped, tag = 'scoped memory for tpu_custom_call.1']
    #allocation11 [shape = 'u8[65536]{0}', space=vmem, size = 0x10000, scoped, tag = 'input window, operand 4, single buffered']
    #allocation12 [shape = 'u8[32768]{0}', space=vmem, size = 0x8000, scoped, tag = 'input window, operand 5, single buffered']
    #allocation13 [shape = 's32[1]{0}', space=sflag, size = 0x4, scoped, tag = 'scoped memory for tpu_custom_call.1']
    #allocation14 [shape = 'u8[163840]{0}', space=vmem, size = 0x28000, scoped, tag = 'input window, operand 6, single buffered']
    #allocation15 [shape = 'u8[8192]{0}', space=vmem, size = 0x2000, scoped, tag = 'output window, operand 0']
    %12 = vsyncpa [#allocation4], 0
    %s13 = scalar_lea.sflag [#allocation4], 1
    %14 = vsyncpa %s13, 0
    %15 = vsyncpa [#allocation7], 0
    %s16 = scalar_lea.sflag [#allocation7], 1
    %17 = vsyncpa %s16, 0
    %18 = vsyncpa [#allocation10], 0
    %19 = vsyncpa [#allocation13], 0
    %20 = vsyncpa [#allocation5], 0
    %s21 = scalar_lea.sflag [#allocation5], 1
    %22 = vsyncpa %s21, 0
    loop: start=0, step=1, limit=10
    $region2: #{tpu_custom_call.1} parent=1 // loop_pre_header
      _
    $region3: #{tpu_custom_call.1} parent=1 // loop_header
      %s24 = sphi 0, %s28
      %p25 = scmp.ge.s32.totalorder %s24, 10
      %s31 = sphi 0, %s43
      %s32 = sphi 0, %s39
      %s33 = sphi 0, %s31
      %s34 = sphi 0, %s32
      %s35 = sphi 0, %s33
      %s36 = sphi 0, %s34
      %s48 = sphi 0, %s50
      %s51 = sphi 0, %s48
      %s52 = sphi 0, %s51
      %s68 = sphi 0, %s52
      %s74 = sphi 0, %s76
      %s77 = sphi 0, %s74
      %s78 = sphi 0, %s77
      %s94 = sphi 0, %s78
      %s98 = sphi 0, %s98
      %s100 = sphi 0, %s98
      %s101 = sphi 0, %s100
      %s115 = sphi 0, %s101
      %s119 = sphi 0, %s119
      %s121 = sphi 0, %s119
      %s122 = sphi 0, %s121
      %s136 = sphi 0, %s122
      %s140 = sphi 0, %s140
      %s142 = sphi 0, %s140
      %s143 = sphi 0, %s142
      %s157 = sphi 0, %s143
      %s161 = sphi 0, %s161
      %s163 = sphi 0, %s161
      %s164 = sphi 0, %s163
      %s178 = sphi 0, %s164
      %s182 = sphi 0, %s182
      %s184 = sphi 0, %s182
      %s185 = sphi 0, %s184
      %s199 = sphi 0, %s185
      %s205 = sphi 0, %s207
      %s208 = sphi 0, %s205
      %s209 = sphi 0, %s208
      %s225 = sphi 0, %s209
    $region4: #{tpu_custom_call.1} parent=1 // loop_header_branch
      %27 = sbr.rel (%p25) target = $region8
    $region5: #{tpu_custom_call.1} parent=1 // loop_body
      %s29 = ssub.s32 %s24, 1
      %s30 = ssub.s32 %s24, 2
      %s37 = sadd.s32 1, %s32
      %p38 = scmp.ge.s32.totalorder %s37, 4
      %s39 = scalar_select %p38, 0, %s37
      %s40 = sadd.s32 1, %s31
      %s41 = scalar_select %p38, %s40, %s31
      %p42 = scmp.ge.s32.totalorder %s41, 2
      %s43 = scalar_select %p42, 0, %s41
      %s44 = ssub.s32 %s31, %s43
      %s45 = ssub.s32 %s32, %s39
      %s46 = sor.u32 %s44, %s45
      %p47 = scmp.eq.s32.totalorder %s46, 0
      %s49 = sadd.s32 %s48, 1
      %s50 = scalar_select %p47, %s48, %s49
      %p53 = pneg %p47
      %p54 = scmp.eq.s32.totalorder %s24, 7
      %p55 = por %p53, %p54
      %p56 = scmp.ne.s32.totalorder %s48, %s51
      %p57 = scmp.eq.s32.totalorder %s24, 0
      %p58 = por %p56, %p57
      %p59 = scmp.ne.s32.totalorder %s48, %s51
      %p60 = scmp.eq.s32.totalorder %s29, 7
      %p61 = por %p59, %p60
      %p62 = scmp.ne.s32.totalorder %s51, %s52
      %p63 = scmp.eq.s32.totalorder %s29, 0
      %p64 = por %p62, %p63
      %p65 = scmp.ne.s32.totalorder %s51, %s52
      %p66 = scmp.eq.s32.totalorder %s30, 7
      %p67 = por %p65, %p66
      %p69 = scmp.ne.s32.totalorder %s52, %s68
      %p70 = scmp.eq.s32.totalorder %s30, 0
      %p71 = por %p69, %p70
      %s72 = ssub.s32 %s32, %s39
      %p73 = scmp.eq.s32.totalorder %s72, 0
      %s75 = sadd.s32 %s74, 1
      %s76 = scalar_select %p73, %s74, %s75
      %p79 = pneg %p73
      %p80 = scmp.eq.s32.totalorder %s24, 7
      %p81 = por %p79, %p80
      %p82 = scmp.ne.s32.totalorder %s74, %s77
      %p83 = scmp.eq.s32.totalorder %s24, 0
      %p84 = por %p82, %p83
      %p85 = scmp.ne.s32.totalorder %s74, %s77
      %p86 = scmp.eq.s32.totalorder %s29, 7
      %p87 = por %p85, %p86
      %p88 = scmp.ne.s32.totalorder %s77, %s78
      %p89 = scmp.eq.s32.totalorder %s29, 0
      %p90 = por %p88, %p89
      %p91 = scmp.ne.s32.totalorder %s77, %s78
      %p92 = scmp.eq.s32.totalorder %s30, 7
      %p93 = por %p91, %p92
      %p95 = scmp.ne.s32.totalorder %s78, %s94
      %p96 = scmp.eq.s32.totalorder %s30, 0
      %p97 = por %p95, %p96
      %s99 = sadd.s32 %s98, 1
      %p102 = scmp.eq.s32.totalorder %s24, 7
      %p103 = scmp.ne.s32.totalorder %s98, %s100
      %p104 = scmp.eq.s32.totalorder %s24, 0
      %p105 = por %p103, %p104
      %p106 = scmp.ne.s32.totalorder %s98, %s100
      %p107 = scmp.eq.s32.totalorder %s29, 7
      %p108 = por %p106, %p107
      %p109 = scmp.ne.s32.totalorder %s100, %s101
      %p110 = scmp.eq.s32.totalorder %s29, 0
      %p111 = por %p109, %p110
      %p112 = scmp.ne.s32.totalorder %s100, %s101
      %p113 = scmp.eq.s32.totalorder %s30, 7
      %p114 = por %p112, %p113
      %p116 = scmp.ne.s32.totalorder %s101, %s115
      %p117 = scmp.eq.s32.totalorder %s30, 0
      %p118 = por %p116, %p117
      %s120 = sadd.s32 %s119, 1
      %p123 = scmp.eq.s32.totalorder %s24, 7
      %p124 = scmp.ne.s32.totalorder %s119, %s121
      %p125 = scmp.eq.s32.totalorder %s24, 0
      %p126 = por %p124, %p125
      %p127 = scmp.ne.s32.totalorder %s119, %s121
      %p128 = scmp.eq.s32.totalorder %s29, 7
      %p129 = por %p127, %p128
      %p130 = scmp.ne.s32.totalorder %s121, %s122
      %p131 = scmp.eq.s32.totalorder %s29, 0
      %p132 = por %p130, %p131
      %p133 = scmp.ne.s32.totalorder %s121, %s122
      %p134 = scmp.eq.s32.totalorder %s30, 7
      %p135 = por %p133, %p134
      %p137 = scmp.ne.s32.totalorder %s122, %s136
      %p138 = scmp.eq.s32.totalorder %s30, 0
      %p139 = por %p137, %p138
      %s141 = sadd.s32 %s140, 1
      %p144 = scmp.eq.s32.totalorder %s24, 7
      %p145 = scmp.ne.s32.totalorder %s140, %s142
      %p146 = scmp.eq.s32.totalorder %s24, 0
      %p147 = por %p145, %p146
      %p148 = scmp.ne.s32.totalorder %s140, %s142
      %p149 = scmp.eq.s32.totalorder %s29, 7
      %p150 = por %p148, %p149
      %p151 = scmp.ne.s32.totalorder %s142, %s143
      %p152 = scmp.eq.s32.totalorder %s29, 0
      %p153 = por %p151, %p152
      %p154 = scmp.ne.s32.totalorder %s142, %s143
      %p155 = scmp.eq.s32.totalorder %s30, 7
      %p156 = por %p154, %p155
      %p158 = scmp.ne.s32.totalorder %s143, %s157
      %p159 = scmp.eq.s32.totalorder %s30, 0
      %p160 = por %p158, %p159
      %s162 = sadd.s32 %s161, 1
      %p165 = scmp.eq.s32.totalorder %s24, 7
      %p166 = scmp.ne.s32.totalorder %s161, %s163
      %p167 = scmp.eq.s32.totalorder %s24, 0
      %p168 = por %p166, %p167
      %p169 = scmp.ne.s32.totalorder %s161, %s163
      %p170 = scmp.eq.s32.totalorder %s29, 7
      %p171 = por %p169, %p170
      %p172 = scmp.ne.s32.totalorder %s163, %s164
      %p173 = scmp.eq.s32.totalorder %s29, 0
      %p174 = por %p172, %p173
      %p175 = scmp.ne.s32.totalorder %s163, %s164
      %p176 = scmp.eq.s32.totalorder %s30, 7
      %p177 = por %p175, %p176
      %p179 = scmp.ne.s32.totalorder %s164, %s178
      %p180 = scmp.eq.s32.totalorder %s30, 0
      %p181 = por %p179, %p180
      %s183 = sadd.s32 %s182, 1
      %p186 = scmp.eq.s32.totalorder %s24, 7
      %p187 = scmp.ne.s32.totalorder %s182, %s184
      %p188 = scmp.eq.s32.totalorder %s24, 0
      %p189 = por %p187, %p188
      %p190 = scmp.ne.s32.totalorder %s182, %s184
      %p191 = scmp.eq.s32.totalorder %s29, 7
      %p192 = por %p190, %p191
      %p193 = scmp.ne.s32.totalorder %s184, %s185
      %p194 = scmp.eq.s32.totalorder %s29, 0
      %p195 = por %p193, %p194
      %p196 = scmp.ne.s32.totalorder %s184, %s185
      %p197 = scmp.eq.s32.totalorder %s30, 7
      %p198 = por %p196, %p197
      %p200 = scmp.ne.s32.totalorder %s185, %s199
      %p201 = scmp.eq.s32.totalorder %s30, 0
      %p202 = por %p200, %p201
      %s203 = ssub.s32 %s31, %s43
      %p204 = scmp.eq.s32.totalorder %s203, 0
      %s206 = sadd.s32 %s205, 1
      %s207 = scalar_select %p204, %s205, %s206
      %p210 = pneg %p204
      %p211 = scmp.eq.s32.totalorder %s24, 7
      %p212 = por %p210, %p211
      %p213 = scmp.ne.s32.totalorder %s205, %s208
      %p214 = scmp.eq.s32.totalorder %s24, 0
      %p215 = por %p213, %p214
      %p216 = scmp.ne.s32.totalorder %s205, %s208
      %p217 = scmp.eq.s32.totalorder %s29, 7
      %p218 = por %p216, %p217
      %p219 = scmp.ne.s32.totalorder %s208, %s209
      %p220 = scmp.eq.s32.totalorder %s29, 0
      %p221 = por %p219, %p220
      %p222 = scmp.ne.s32.totalorder %s208, %s209
      %p223 = scmp.eq.s32.totalorder %s30, 7
      %p224 = por %p222, %p223
      %p226 = scmp.ne.s32.totalorder %s209, %s225
      %p227 = scmp.eq.s32.totalorder %s30, 0
      %p228 = por %p226, %p227
      %p229 = scmp.le.s32.totalorder 1, %s24
      %p230 = scmp.lt.s32.totalorder %s24, 9
      %p231 = pnand %p229, %p230
      %p232 = pneg %p231
      // Predicated region
      $region9: #{tpu_custom_call.1} parent=5 // pred_check
        _
      $region10: #{tpu_custom_call.1} parent=5 // pred_check_branch
        %234 = sbr.rel (%p231) target = $region12
      $region11: #{tpu_custom_call.1} parent=5 // pred_region
        %s235 = ssub.s32 %s24, 1
        // Predicated region
        $region13: #{tpu_custom_call.1} parent=11 // pred_check
          %p236 = pneg %p111
        $region14: #{tpu_custom_call.1} parent=11 // pred_check_branch
          %238 = sbr.rel (%p236) target = $region16
        $region15: #{tpu_custom_call.1} parent=11 // pred_region
          %s240 = ssub.s32 32768, 32768
          %241 = vsyncadd [#allocation7], %s240
          %s242 = sshll.u32 [#allocation8], 4
          %s243 = int_to_ptr.vmem [resolvable:$true] %s242
          %248 = dma.hbm_to_vmem [thread:$0]  %s2, 32768, %s243, [#allocation7], 256, 256, 16
        $region16: #{tpu_custom_call.1} parent=11 // pred_fallthru
          _
        // Predicated region
        $region17: #{tpu_custom_call.1} parent=11 // pred_check
          %p249 = pneg %p132
        $region18: #{tpu_custom_call.1} parent=11 // pred_check_branch
          %251 = sbr.rel (%p249) target = $region20
        $region19: #{tpu_custom_call.1} parent=11 // pred_region
          %s253 = ssub.s32 8192, 8192
          %254 = vsyncadd [#allocation10], %s253
          %s255 = sshll.u32 [#allocation9], 4
          %s256 = int_to_ptr.vmem [resolvable:$true] %s255
          %261 = dma.hbm_to_vmem [thread:$0]  %s3, 8192, %s256, [#allocation10], 128, 128, 8
        $region20: #{tpu_custom_call.1} parent=11 // pred_fallthru
          _
        // Predicated region
        $region21: #{tpu_custom_call.1} parent=11 // pred_check
          %p262 = pneg %p153
        $region22: #{tpu_custom_call.1} parent=11 // pred_check_branch
          %264 = sbr.rel (%p262) target = $region24
        $region23: #{tpu_custom_call.1} parent=11 // pred_region
          %s266 = ssub.s32 2048, 2048
          %267 = vsyncadd [#allocation10], %s266
          %s268 = sshll.u32 [#allocation11], 4
          %s269 = int_to_ptr.vmem [resolvable:$true] %s268
          %274 = dma.hbm_to_vmem [thread:$0]  %s4, 2048, %s269, [#allocation10], 64, 64, 4
        $region24: #{tpu_custom_call.1} parent=11 // pred_fallthru
          _
        // Predicated region
        $region25: #{tpu_custom_call.1} parent=11 // pred_check
          %p275 = pneg %p174
        $region26: #{tpu_custom_call.1} parent=11 // pred_check_branch
          %277 = sbr.rel (%p275) target = $region28
        $region27: #{tpu_custom_call.1} parent=11 // pred_region
          %s279 = ssub.s32 1024, 1024
          %280 = vsyncadd [#allocation13], %s279
          %s281 = sshll.u32 [#allocation12], 4
          %s282 = int_to_ptr.vmem [resolvable:$true] %s281
          %287 = dma.hbm_to_vmem [thread:$0]  %s5, 1024, %s282, [#allocation13], 64, 64, 4
        $region28: #{tpu_custom_call.1} parent=11 // pred_fallthru
          _
        // Predicated region
        $region29: #{tpu_custom_call.1} parent=11 // pred_check
          %p288 = pneg %p195
        $region30: #{tpu_custom_call.1} parent=11 // pred_check_branch
          %290 = sbr.rel (%p288) target = $region32
        $region31: #{tpu_custom_call.1} parent=11 // pred_region
          %s292 = ssub.s32 5120, 5120
          %293 = vsyncadd [#allocation13], %s292
          %s294 = sshll.u32 [#allocation14], 4
          %s295 = int_to_ptr.vmem [resolvable:$true] %s294
          %300 = dma.hbm_to_vmem [thread:$0]  %s6, 5120, %s295, [#allocation13], 1024, 1024, 64
        $region32: #{tpu_custom_call.1} parent=11 // pred_fallthru
          _
      $region12: #{tpu_custom_call.1} parent=5 // pred_fallthru
        _
      %p301 = scmp.lt.s32.totalorder %s24, 8
      // Predicated region
      $region33: #{tpu_custom_call.1} parent=5 // pred_check
        %p302 = pneg %p301
      $region34: #{tpu_custom_call.1} parent=5 // pred_check_branch
        %304 = sbr.rel (%p302) target = $region36
      $region35: #{tpu_custom_call.1} parent=5 // pred_region
        // Predicated region
        $region37: #{tpu_custom_call.1} parent=35 // pred_check
          %p305 = pneg %p58
        $region38: #{tpu_custom_call.1} parent=35 // pred_check_branch
          %307 = sbr.rel (%p305) target = $region40
        $region39: #{tpu_custom_call.1} parent=35 // pred_region
          %s308 = sand.u32 %s48, 1
          %s309 = scalar_lea.sflag [#allocation4], %s308
          %s310 = sand.u32 %s48, 1
          %s311 = smul.addr %s310, 8
          %s312 = scalar_lea.vmem [#allocation3], %s311
          %s313 = smul.u32 2, %s32
          %s315 = ssub.s32 128, 128
          %316 = vsyncadd %s309, %s315
          %s317 = smul.addr %s31, 8
          %s318 = sadd.s32 %s313, %s317
          %s319 = smul.addr %s318, 64
          %s320 = scalar_lea.hbm %s0, %s319
          %s322 = sshll.u32 %s312, 4
          %s323 = int_to_ptr.vmem [resolvable:$true] %s322
          %325 = dma.hbm_to_vmem [thread:$0]  %s320, 128, %s323, %s309
        $region40: #{tpu_custom_call.1} parent=35 // pred_fallthru
          _
        // Predicated region
        $region41: #{tpu_custom_call.1} parent=35 // pred_check
          %p326 = pneg %p84
        $region42: #{tpu_custom_call.1} parent=35 // pred_check_branch
          %328 = sbr.rel (%p326) target = $region44
        $region43: #{tpu_custom_call.1} parent=35 // pred_region
          %s329 = sand.u32 %s24, 1
          %s330 = scalar_lea.sflag [#allocation7], %s329
          %s331 = sand.u32 %s74, 1
          %s332 = smul.addr %s331, 1024
          %s333 = scalar_lea.vmem [#allocation6], %s332
          %s334 = smul.u32 32, %s32
          %s336 = ssub.s32 16384, 16384
          %337 = vsyncadd %s330, %s336
          %s338 = smul.addr %s334, 8
          %s339 = smul.addr %s338, 64
          %s340 = scalar_lea.hbm %s1, %s339
          %s341 = sshll.u32 %s333, 4
          %s342 = int_to_ptr.vmem [resolvable:$true] %s341
          %347 = dma.hbm_to_vmem [thread:$0]  %s340, 16384, %s342, %s330, 512, 512, 32
        $region44: #{tpu_custom_call.1} parent=35 // pred_fallthru
          _
      $region36: #{tpu_custom_call.1} parent=5 // pred_fallthru
        _
      %p348 = scmp.le.s32.totalorder 1, %s24
      %p349 = scmp.lt.s32.totalorder %s24, 9
      %p350 = pnand %p348, %p349
      %p351 = pneg %p350
      // Predicated region
      $region45: #{tpu_custom_call.1} parent=5 // pred_check
        _
      $region46: #{tpu_custom_call.1} parent=5 // pred_check_branch
        %353 = sbr.rel (%p350) target = $region48
      $region47: #{tpu_custom_call.1} parent=5 // pred_region
        %s354 = ssub.s32 %s24, 1
        %s355 = sand.u32 %s51, 1
        %s356 = scalar_lea.sflag [#allocation4], %s355
        %s357 = sand.u32 %s51, 1
        %s358 = smul.addr %s357, 8
        %s359 = scalar_lea.vmem [#allocation3], %s358
        // Predicated region
        $region49: #{tpu_custom_call.1} parent=47 // pred_check
          %p360 = pneg %p64
        $region50: #{tpu_custom_call.1} parent=47 // pred_check_branch
          %362 = sbr.rel (%p360) target = $region52
        $region51: #{tpu_custom_call.1} parent=47 // pred_region
          %363 = dma.done %s356, 128
        $region52: #{tpu_custom_call.1} parent=47 // pred_fallthru
          _
        %s364 = sand.u32 %s29, 1
        %s365 = scalar_lea.sflag [#allocation7], %s364
        %s366 = sand.u32 %s77, 1
        %s367 = smul.addr %s366, 1024
        %s368 = scalar_lea.vmem [#allocation6], %s367
        // Predicated region
        $region53: #{tpu_custom_call.1} parent=47 // pred_check
          %p369 = pneg %p90
        $region54: #{tpu_custom_call.1} parent=47 // pred_check_branch
          %371 = sbr.rel (%p369) target = $region56
        $region55: #{tpu_custom_call.1} parent=47 // pred_region
          %372 = dma.done %s365, 16384
        $region56: #{tpu_custom_call.1} parent=47 // pred_fallthru
          _
        // Predicated region
        $region57: #{tpu_custom_call.1} parent=47 // pred_check
          %p373 = pneg %p111
        $region58: #{tpu_custom_call.1} parent=47 // pred_check_branch
          %375 = sbr.rel (%p373) target = $region60
        $region59: #{tpu_custom_call.1} parent=47 // pred_region
          %376 = dma.done [#allocation7], 32768
        $region60: #{tpu_custom_call.1} parent=47 // pred_fallthru
          _
        // Predicated region
        $region61: #{tpu_custom_call.1} parent=47 // pred_check
          %p377 = pneg %p132
        $region62: #{tpu_custom_call.1} parent=47 // pred_check_branch
          %379 = sbr.rel (%p377) target = $region64
        $region63: #{tpu_custom_call.1} parent=47 // pred_region
          %380 = dma.done [#allocation10], 8192
        $region64: #{tpu_custom_call.1} parent=47 // pred_fallthru
          _
        // Predicated region
        $region65: #{tpu_custom_call.1} parent=47 // pred_check
          %p381 = pneg %p153
        $region66: #{tpu_custom_call.1} parent=47 // pred_check_branch
          %383 = sbr.rel (%p381) target = $region68
        $region67: #{tpu_custom_call.1} parent=47 // pred_region
          %384 = dma.done [#allocation10], 2048
        $region68: #{tpu_custom_call.1} parent=47 // pred_fallthru
          _
        // Predicated region
        $region69: #{tpu_custom_call.1} parent=47 // pred_check
          %p385 = pneg %p174
        $region70: #{tpu_custom_call.1} parent=47 // pred_check_branch
          %387 = sbr.rel (%p385) target = $region72
        $region71: #{tpu_custom_call.1} parent=47 // pred_region
          %388 = dma.done [#allocation13], 1024
        $region72: #{tpu_custom_call.1} parent=47 // pred_fallthru
          _
        // Predicated region
        $region73: #{tpu_custom_call.1} parent=47 // pred_check
          %p389 = pneg %p195
        $region74: #{tpu_custom_call.1} parent=47 // pred_check_branch
          %391 = sbr.rel (%p389) target = $region76
        $region75: #{tpu_custom_call.1} parent=47 // pred_region
          %392 = dma.done [#allocation13], 5120
        $region76: #{tpu_custom_call.1} parent=47 // pred_fallthru
          _
        %s393 = sand.u32 %s51, 1
        %s394 = scalar_lea.sflag [#allocation4], %s393
        %s395 = sand.u32 %s51, 1
        %s396 = smul.addr %s395, 8
        %s397 = scalar_lea.vmem [#allocation3], %s396
        %p398 = pneg %p64
        %p399 = pneg %p61
        %s400 = sand.u32 %s29, 1
        %s401 = scalar_lea.sflag [#allocation7], %s400
        %s402 = sand.u32 %s77, 1
        %s403 = smul.addr %s402, 1024
        %s404 = scalar_lea.vmem [#allocation6], %s403
        %p405 = pneg %p90
        %p406 = pneg %p87
        %p407 = pneg %p111
        %p408 = pneg %p108
        %p409 = pneg %p132
        %p410 = pneg %p129
        %p411 = pneg %p153
        %p412 = pneg %p150
        %p413 = pneg %p174
        %p414 = pneg %p171
        %p415 = pneg %p195
        %p416 = pneg %p192
        %p417 = pneg %p221
        %p418 = pneg %p218
        %s419 = sand.u32 %s208, 1
        %s420 = scalar_lea.sflag [#allocation5], %s419
        %s421 = sand.u32 %s208, 1
        %s422 = smul.addr %s421, 8
        %s423 = scalar_lea.vmem [#allocation15], %s422
        %s424 = smul.u32 2, %s34
        %s425 = smul.u32 32, %s34
        %p427 = scmp.eq.s32.totalorder %s34, 0
        // Predicated region
        $region77: #{tpu_custom_call.1} parent=47 // pred_check
          %p428 = pneg %p427
        $region78: #{tpu_custom_call.1} parent=47 // pred_check_branch
          %430 = sbr.rel (%p428) target = $region80
        $region79: #{tpu_custom_call.1} parent=47 // pred_region
          %431 = vst [vmem:[#allocation2] sm:$0xff] 0.0
          %432 = vst [vmem:[#allocation2 + $0x8] sm:$0xff] 0.0
          %433 = vst [vmem:[#allocation2 + $0x10] sm:$0xff] 0.0
          %434 = vst [vmem:[#allocation2 + $0x18] sm:$0xff] 0.0
          %435 = vst [vmem:[#allocation2 + $0x20] sm:$0xff] 0.0
          %436 = vst [vmem:[#allocation2 + $0x28] sm:$0xff] 0.0
          %437 = vst [vmem:[#allocation2 + $0x30] sm:$0xff] 0.0
          %438 = vst [vmem:[#allocation2 + $0x38] sm:$0xff] 0.0
        $region80: #{tpu_custom_call.1} parent=47 // pred_fallthru
          _
        %v439 = vld [vmem:[#allocation2] sm:$0xff]
        %v440 = vld [vmem:[#allocation2 + $0x8] sm:$0xff]
        %v441 = vld [vmem:[#allocation2 + $0x10] sm:$0xff]
        %v442 = vld [vmem:[#allocation2 + $0x18] sm:$0xff]
        %v443 = vld [vmem:[#allocation2 + $0x20] sm:$0xff]
        %v444 = vld [vmem:[#allocation2 + $0x28] sm:$0xff]
        %v445 = vld [vmem:[#allocation2 + $0x30] sm:$0xff]
        %v446 = vld [vmem:[#allocation2 + $0x38] sm:$0xff]
        %v447 = vld [vmem:[%s359] sm:$0xff]
        %v448 = vld [vmem:[%s368] sm:$0xff]
        %v449 = vld [vmem:[%s368 + $0x8] sm:$0xff]
        %v450 = vld [vmem:[%s368 + $0x10] sm:$0xff]
        %v451 = vld [vmem:[%s368 + $0x18] sm:$0xff]
        %v452 = vld [vmem:[%s368 + $0x20] sm:$0xff]
        %v453 = vld [vmem:[%s368 + $0x28] sm:$0xff]
        %v454 = vld [vmem:[%s368 + $0x30] sm:$0xff]
        %v455 = vld [vmem:[%s368 + $0x38] sm:$0xff]
        %v456 = vld [vmem:[%s368 + $0x40] sm:$0xff]
        %v457 = vld [vmem:[%s368 + $0x48] sm:$0xff]
        %v458 = vld [vmem:[%s368 + $0x50] sm:$0xff]
        %v459 = vld [vmem:[%s368 + $0x58] sm:$0xff]
        %v460 = vld [vmem:[%s368 + $0x60] sm:$0xff]
        %v461 = vld [vmem:[%s368 + $0x68] sm:$0xff]
        %v462 = vld [vmem:[%s368 + $0x70] sm:$0xff]
        %v463 = vld [vmem:[%s368 + $0x78] sm:$0xff]
        %v464 = vld [vmem:[%s368 + $0x80] sm:$0xff]
        %v465 = vld [vmem:[%s368 + $0x88] sm:$0xff]
        %v466 = vld [vmem:[%s368 + $0x90] sm:$0xff]
        %v467 = vld [vmem:[%s368 + $0x98] sm:$0xff]
        %v468 = vld [vmem:[%s368 + $0xa0] sm:$0xff]
        %v469 = vld [vmem:[%s368 + $0xa8] sm:$0xff]
        %v470 = vld [vmem:[%s368 + $0xb0] sm:$0xff]
        %v471 = vld [vmem:[%s368 + $0xb8] sm:$0xff]
        %v472 = vld [vmem:[%s368 + $0xc0] sm:$0xff]
        %v473 = vld [vmem:[%s368 + $0xc8] sm:$0xff]
        %v474 = vld [vmem:[%s368 + $0xd0] sm:$0xff]
        %v475 = vld [vmem:[%s368 + $0xd8] sm:$0xff]
        %v476 = vld [vmem:[%s368 + $0xe0] sm:$0xff]
        %v477 = vld [vmem:[%s368 + $0xe8] sm:$0xff]
        %v478 = vld [vmem:[%s368 + $0xf0] sm:$0xff]
        %v479 = vld [vmem:[%s368 + $0xf8] sm:$0xff]
        %v480 = vld [vmem:[%s368 + $0x100] sm:$0xff]
        %v481 = vld [vmem:[%s368 + $0x108] sm:$0xff]
        %v482 = vld [vmem:[%s368 + $0x110] sm:$0xff]
        %v483 = vld [vmem:[%s368 + $0x118] sm:$0xff]
        %v484 = vld [vmem:[%s368 + $0x120] sm:$0xff]
        %v485 = vld [vmem:[%s368 + $0x128] sm:$0xff]
        %v486 = vld [vmem:[%s368 + $0x130] sm:$0xff]
        %v487 = vld [vmem:[%s368 + $0x138] sm:$0xff]
        %v488 = vld [vmem:[%s368 + $0x140] sm:$0xff]
        %v489 = vld [vmem:[%s368 + $0x148] sm:$0xff]
        %v490 = vld [vmem:[%s368 + $0x150] sm:$0xff]
        %v491 = vld [vmem:[%s368 + $0x158] sm:$0xff]
        %v492 = vld [vmem:[%s368 + $0x160] sm:$0xff]
        %v493 = vld [vmem:[%s368 + $0x168] sm:$0xff]
        %v494 = vld [vmem:[%s368 + $0x170] sm:$0xff]
        %v495 = vld [vmem:[%s368 + $0x178] sm:$0xff]
        %v496 = vld [vmem:[%s368 + $0x180] sm:$0xff]
        %v497 = vld [vmem:[%s368 + $0x188] sm:$0xff]
        %v498 = vld [vmem:[%s368 + $0x190] sm:$0xff]
        %v499 = vld [vmem:[%s368 + $0x198] sm:$0xff]
        %v500 = vld [vmem:[%s368 + $0x1a0] sm:$0xff]
        %v501 = vld [vmem:[%s368 + $0x1a8] sm:$0xff]
        %v502 = vld [vmem:[%s368 + $0x1b0] sm:$0xff]
        %v503 = vld [vmem:[%s368 + $0x1b8] sm:$0xff]
        %v504 = vld [vmem:[%s368 + $0x1c0] sm:$0xff]
        %v505 = vld [vmem:[%s368 + $0x1c8] sm:$0xff]
        %v506 = vld [vmem:[%s368 + $0x1d0] sm:$0xff]
        %v507 = vld [vmem:[%s368 + $0x1d8] sm:$0xff]
        %v508 = vld [vmem:[%s368 + $0x1e0] sm:$0xff]
        %v509 = vld [vmem:[%s368 + $0x1e8] sm:$0xff]
        %v510 = vld [vmem:[%s368 + $0x1f0] sm:$0xff]
        %v511 = vld [vmem:[%s368 + $0x1f8] sm:$0xff]
        %v512 = vld [vmem:[%s368 + $0x200] sm:$0xff]
        %v513 = vld [vmem:[%s368 + $0x208] sm:$0xff]
        %v514 = vld [vmem:[%s368 + $0x210] sm:$0xff]
        %v515 = vld [vmem:[%s368 + $0x218] sm:$0xff]
        %v516 = vld [vmem:[%s368 + $0x220] sm:$0xff]
        %v517 = vld [vmem:[%s368 + $0x228] sm:$0xff]
        %v518 = vld [vmem:[%s368 + $0x230] sm:$0xff]
        %v519 = vld [vmem:[%s368 + $0x238] sm:$0xff]
        %v520 = vld [vmem:[%s368 + $0x240] sm:$0xff]
        %v521 = vld [vmem:[%s368 + $0x248] sm:$0xff]
        %v522 = vld [vmem:[%s368 + $0x250] sm:$0xff]
        %v523 = vld [vmem:[%s368 + $0x258] sm:$0xff]
        %v524 = vld [vmem:[%s368 + $0x260] sm:$0xff]
        %v525 = vld [vmem:[%s368 + $0x268] sm:$0xff]
        %v526 = vld [vmem:[%s368 + $0x270] sm:$0xff]
        %v527 = vld [vmem:[%s368 + $0x278] sm:$0xff]
        %v528 = vld [vmem:[%s368 + $0x280] sm:$0xff]
        %v529 = vld [vmem:[%s368 + $0x288] sm:$0xff]
        %v530 = vld [vmem:[%s368 + $0x290] sm:$0xff]
        %v531 = vld [vmem:[%s368 + $0x298] sm:$0xff]
        %v532 = vld [vmem:[%s368 + $0x2a0] sm:$0xff]
        %v533 = vld [vmem:[%s368 + $0x2a8] sm:$0xff]
        %v534 = vld [vmem:[%s368 + $0x2b0] sm:$0xff]
        %v535 = vld [vmem:[%s368 + $0x2b8] sm:$0xff]
        %v536 = vld [vmem:[%s368 + $0x2c0] sm:$0xff]
        %v537 = vld [vmem:[%s368 + $0x2c8] sm:$0xff]
        %v538 = vld [vmem:[%s368 + $0x2d0] sm:$0xff]
        %v539 = vld [vmem:[%s368 + $0x2d8] sm:$0xff]
        %v540 = vld [vmem:[%s368 + $0x2e0] sm:$0xff]
        %v541 = vld [vmem:[%s368 + $0x2e8] sm:$0xff]
        %v542 = vld [vmem:[%s368 + $0x2f0] sm:$0xff]
        %v543 = vld [vmem:[%s368 + $0x2f8] sm:$0xff]
        %v544 = vld [vmem:[%s368 + $0x300] sm:$0xff]
        %v545 = vld [vmem:[%s368 + $0x308] sm:$0xff]
        %v546 = vld [vmem:[%s368 + $0x310] sm:$0xff]
        %v547 = vld [vmem:[%s368 + $0x318] sm:$0xff]
        %v548 = vld [vmem:[%s368 + $0x320] sm:$0xff]
        %v549 = vld [vmem:[%s368 + $0x328] sm:$0xff]
        %v550 = vld [vmem:[%s368 + $0x330] sm:$0xff]
        %v551 = vld [vmem:[%s368 + $0x338] sm:$0xff]
        %v552 = vld [vmem:[%s368 + $0x340] sm:$0xff]
        %v553 = vld [vmem:[%s368 + $0x348] sm:$0xff]
        %v554 = vld [vmem:[%s368 + $0x350] sm:$0xff]
        %v555 = vld [vmem:[%s368 + $0x358] sm:$0xff]
        %v556 = vld [vmem:[%s368 + $0x360] sm:$0xff]
        %v557 = vld [vmem:[%s368 + $0x368] sm:$0xff]
        %v558 = vld [vmem:[%s368 + $0x370] sm:$0xff]
        %v559 = vld [vmem:[%s368 + $0x378] sm:$0xff]
        %v560 = vld [vmem:[%s368 + $0x380] sm:$0xff]
        %v561 = vld [vmem:[%s368 + $0x388] sm:$0xff]
        %v562 = vld [vmem:[%s368 + $0x390] sm:$0xff]
        %v563 = vld [vmem:[%s368 + $0x398] sm:$0xff]
        %v564 = vld [vmem:[%s368 + $0x3a0] sm:$0xff]
        %v565 = vld [vmem:[%s368 + $0x3a8] sm:$0xff]
        %v566 = vld [vmem:[%s368 + $0x3b0] sm:$0xff]
        %v567 = vld [vmem:[%s368 + $0x3b8] sm:$0xff]
        %v568 = vld [vmem:[%s368 + $0x3c0] sm:$0xff]
        %v569 = vld [vmem:[%s368 + $0x3c8] sm:$0xff]
        %v570 = vld [vmem:[%s368 + $0x3d0] sm:$0xff]
        %v571 = vld [vmem:[%s368 + $0x3d8] sm:$0xff]
        %v572 = vld [vmem:[%s368 + $0x3e0] sm:$0xff]
        %v573 = vld [vmem:[%s368 + $0x3e8] sm:$0xff]
        %v574 = vld [vmem:[%s368 + $0x3f0] sm:$0xff]
        %v575 = vld [vmem:[%s368 + $0x3f8] sm:$0xff]
        %v577 = vunpack.c.l.b16 %v447
        %v578 = vunpack.c.h.b16 %v447
        %v579 = vpack.c.b16 %v577, %v577
        %v580 = vpack.c.b16 %v578, %v578
        %v711 = vunpack.c.l.b16 %v448
        %v712 = vunpack.c.h.b16 %v448
        %v713 = vunpack.c.l.b16 %v449
        %v714 = vunpack.c.h.b16 %v449
        %v715 = vunpack.c.l.b16 %v450
        %v716 = vunpack.c.h.b16 %v450
        %v717 = vunpack.c.l.b16 %v451
        %v718 = vunpack.c.h.b16 %v451
        %v719 = vunpack.c.l.b16 %v452
        %v720 = vunpack.c.h.b16 %v452
        %v721 = vunpack.c.l.b16 %v453
        %v722 = vunpack.c.h.b16 %v453
        %v723 = vunpack.c.l.b16 %v454
        %v724 = vunpack.c.h.b16 %v454
        %v725 = vunpack.c.l.b16 %v455
        %v726 = vunpack.c.h.b16 %v455
        %v727 = vunpack.c.l.b16 %v456
        %v728 = vunpack.c.h.b16 %v456
        %v729 = vunpack.c.l.b16 %v457
        %v730 = vunpack.c.h.b16 %v457
        %v731 = vunpack.c.l.b16 %v458
        %v732 = vunpack.c.h.b16 %v458
        %v733 = vunpack.c.l.b16 %v459
        %v734 = vunpack.c.h.b16 %v459
        %v735 = vunpack.c.l.b16 %v460
        %v736 = vunpack.c.h.b16 %v460
        %v737 = vunpack.c.l.b16 %v461
        %v738 = vunpack.c.h.b16 %v461
        %v739 = vunpack.c.l.b16 %v462
        %v740 = vunpack.c.h.b16 %v462
        %v741 = vunpack.c.l.b16 %v463
        %v742 = vunpack.c.h.b16 %v463
        %v743 = vunpack.c.l.b16 %v464
        %v744 = vunpack.c.h.b16 %v464
        %v745 = vunpack.c.l.b16 %v465
        %v746 = vunpack.c.h.b16 %v465
        %v747 = vunpack.c.l.b16 %v466
        %v748 = vunpack.c.h.b16 %v466
        %v749 = vunpack.c.l.b16 %v467
        %v750 = vunpack.c.h.b16 %v467
        %v751 = vunpack.c.l.b16 %v468
        %v752 = vunpack.c.h.b16 %v468
        %v753 = vunpack.c.l.b16 %v469
        %v754 = vunpack.c.h.b16 %v469
        %v755 = vunpack.c.l.b16 %v470
        %v756 = vunpack.c.h.b16 %v470
        %v757 = vunpack.c.l.b16 %v471
        %v758 = vunpack.c.h.b16 %v471
        %v759 = vunpack.c.l.b16 %v472
        %v760 = vunpack.c.h.b16 %v472
        %v761 = vunpack.c.l.b16 %v473
        %v762 = vunpack.c.h.b16 %v473
        %v763 = vunpack.c.l.b16 %v474
        %v764 = vunpack.c.h.b16 %v474
        %v765 = vunpack.c.l.b16 %v475
        %v766 = vunpack.c.h.b16 %v475
        %v767 = vunpack.c.l.b16 %v476
        %v768 = vunpack.c.h.b16 %v476
        %v769 = vunpack.c.l.b16 %v477
        %v770 = vunpack.c.h.b16 %v477
        %v771 = vunpack.c.l.b16 %v478
        %v772 = vunpack.c.h.b16 %v478
        %v773 = vunpack.c.l.b16 %v479
        %v774 = vunpack.c.h.b16 %v479
        %v775 = vunpack.c.l.b16 %v480
        %v776 = vunpack.c.h.b16 %v480
        %v777 = vunpack.c.l.b16 %v481
        %v778 = vunpack.c.h.b16 %v481
        %v779 = vunpack.c.l.b16 %v482
        %v780 = vunpack.c.h.b16 %v482
        %v781 = vunpack.c.l.b16 %v483
        %v782 = vunpack.c.h.b16 %v483
        %v783 = vunpack.c.l.b16 %v484
        %v784 = vunpack.c.h.b16 %v484
        %v785 = vunpack.c.l.b16 %v485
        %v786 = vunpack.c.h.b16 %v485
        %v787 = vunpack.c.l.b16 %v486
        %v788 = vunpack.c.h.b16 %v486
        %v789 = vunpack.c.l.b16 %v487
        %v790 = vunpack.c.h.b16 %v487
        %v791 = vunpack.c.l.b16 %v488
        %v792 = vunpack.c.h.b16 %v488
        %v793 = vunpack.c.l.b16 %v489
        %v794 = vunpack.c.h.b16 %v489
        %v795 = vunpack.c.l.b16 %v490
        %v796 = vunpack.c.h.b16 %v490
        %v797 = vunpack.c.l.b16 %v491
        %v798 = vunpack.c.h.b16 %v491
        %v799 = vunpack.c.l.b16 %v492
        %v800 = vunpack.c.h.b16 %v492
        %v801 = vunpack.c.l.b16 %v493
        %v802 = vunpack.c.h.b16 %v493
        %v803 = vunpack.c.l.b16 %v494
        %v804 = vunpack.c.h.b16 %v494
        %v805 = vunpack.c.l.b16 %v495
        %v806 = vunpack.c.h.b16 %v495
        %v807 = vunpack.c.l.b16 %v496
        %v808 = vunpack.c.h.b16 %v496
        %v809 = vunpack.c.l.b16 %v497
        %v810 = vunpack.c.h.b16 %v497
        %v811 = vunpack.c.l.b16 %v498
        %v812 = vunpack.c.h.b16 %v498
        %v813 = vunpack.c.l.b16 %v499
        %v814 = vunpack.c.h.b16 %v499
        %v815 = vunpack.c.l.b16 %v500
        %v816 = vunpack.c.h.b16 %v500
        %v817 = vunpack.c.l.b16 %v501
        %v818 = vunpack.c.h.b16 %v501
        %v819 = vunpack.c.l.b16 %v502
        %v820 = vunpack.c.h.b16 %v502
        %v821 = vunpack.c.l.b16 %v503
        %v822 = vunpack.c.h.b16 %v503
        %v823 = vunpack.c.l.b16 %v504
        %v824 = vunpack.c.h.b16 %v504
        %v825 = vunpack.c.l.b16 %v505
        %v826 = vunpack.c.h.b16 %v505
        %v827 = vunpack.c.l.b16 %v506
        %v828 = vunpack.c.h.b16 %v506
        %v829 = vunpack.c.l.b16 %v507
        %v830 = vunpack.c.h.b16 %v507
        %v831 = vunpack.c.l.b16 %v508
        %v832 = vunpack.c.h.b16 %v508
        %v833 = vunpack.c.l.b16 %v509
        %v834 = vunpack.c.h.b16 %v509
        %v835 = vunpack.c.l.b16 %v510
        %v836 = vunpack.c.h.b16 %v510
        %v837 = vunpack.c.l.b16 %v511
        %v838 = vunpack.c.h.b16 %v511
        %v839 = vunpack.c.l.b16 %v512
        %v840 = vunpack.c.h.b16 %v512
        %v841 = vunpack.c.l.b16 %v513
        %v842 = vunpack.c.h.b16 %v513
        %v843 = vunpack.c.l.b16 %v514
        %v844 = vunpack.c.h.b16 %v514
        %v845 = vunpack.c.l.b16 %v515
        %v846 = vunpack.c.h.b16 %v515
        %v847 = vunpack.c.l.b16 %v516
        %v848 = vunpack.c.h.b16 %v516
        %v849 = vunpack.c.l.b16 %v517
        %v850 = vunpack.c.h.b16 %v517
        %v851 = vunpack.c.l.b16 %v518
        %v852 = vunpack.c.h.b16 %v518
        %v853 = vunpack.c.l.b16 %v519
        %v854 = vunpack.c.h.b16 %v519
        %v855 = vunpack.c.l.b16 %v520
        %v856 = vunpack.c.h.b16 %v520
        %v857 = vunpack.c.l.b16 %v521
        %v858 = vunpack.c.h.b16 %v521
        %v859 = vunpack.c.l.b16 %v522
        %v860 = vunpack.c.h.b16 %v522
        %v861 = vunpack.c.l.b16 %v523
        %v862 = vunpack.c.h.b16 %v523
        %v863 = vunpack.c.l.b16 %v524
        %v864 = vunpack.c.h.b16 %v524
        %v865 = vunpack.c.l.b16 %v525
        %v866 = vunpack.c.h.b16 %v525
        %v867 = vunpack.c.l.b16 %v526
        %v868 = vunpack.c.h.b16 %v526
        %v869 = vunpack.c.l.b16 %v527
        %v870 = vunpack.c.h.b16 %v527
        %v871 = vunpack.c.l.b16 %v528
        %v872 = vunpack.c.h.b16 %v528
        %v873 = vunpack.c.l.b16 %v529
        %v874 = vunpack.c.h.b16 %v529
        %v875 = vunpack.c.l.b16 %v530
        %v876 = vunpack.c.h.b16 %v530
        %v877 = vunpack.c.l.b16 %v531
        %v878 = vunpack.c.h.b16 %v531
        %v879 = vunpack.c.l.b16 %v532
        %v880 = vunpack.c.h.b16 %v532
        %v881 = vunpack.c.l.b16 %v533
        %v882 = vunpack.c.h.b16 %v533
        %v883 = vunpack.c.l.b16 %v534
        %v884 = vunpack.c.h.b16 %v534
        %v885 = vunpack.c.l.b16 %v535
        %v886 = vunpack.c.h.b16 %v535
        %v887 = vunpack.c.l.b16 %v536
        %v888 = vunpack.c.h.b16 %v536
        %v889 = vunpack.c.l.b16 %v537
        %v890 = vunpack.c.h.b16 %v537
        %v891 = vunpack.c.l.b16 %v538
        %v892 = vunpack.c.h.b16 %v538
        %v893 = vunpack.c.l.b16 %v539
        %v894 = vunpack.c.h.b16 %v539
        %v895 = vunpack.c.l.b16 %v540
        %v896 = vunpack.c.h.b16 %v540
        %v897 = vunpack.c.l.b16 %v541
        %v898 = vunpack.c.h.b16 %v541
        %v899 = vunpack.c.l.b16 %v542
        %v900 = vunpack.c.h.b16 %v542
        %v901 = vunpack.c.l.b16 %v543
        %v902 = vunpack.c.h.b16 %v543
        %v903 = vunpack.c.l.b16 %v544
        %v904 = vunpack.c.h.b16 %v544
        %v905 = vunpack.c.l.b16 %v545
        %v906 = vunpack.c.h.b16 %v545
        %v907 = vunpack.c.l.b16 %v546
        %v908 = vunpack.c.h.b16 %v546
        %v909 = vunpack.c.l.b16 %v547
        %v910 = vunpack.c.h.b16 %v547
        %v911 = vunpack.c.l.b16 %v548
        %v912 = vunpack.c.h.b16 %v548
        %v913 = vunpack.c.l.b16 %v549
        %v914 = vunpack.c.h.b16 %v549
        %v915 = vunpack.c.l.b16 %v550
        %v916 = vunpack.c.h.b16 %v550
        %v917 = vunpack.c.l.b16 %v551
        %v918 = vunpack.c.h.b16 %v551
        %v919 = vunpack.c.l.b16 %v552
        %v920 = vunpack.c.h.b16 %v552
        %v921 = vunpack.c.l.b16 %v553
        %v922 = vunpack.c.h.b16 %v553
        %v923 = vunpack.c.l.b16 %v554
        %v924 = vunpack.c.h.b16 %v554
        %v925 = vunpack.c.l.b16 %v555
        %v926 = vunpack.c.h.b16 %v555
        %v927 = vunpack.c.l.b16 %v556
        %v928 = vunpack.c.h.b16 %v556
        %v929 = vunpack.c.l.b16 %v557
        %v930 = vunpack.c.h.b16 %v557
        %v931 = vunpack.c.l.b16 %v558
        %v932 = vunpack.c.h.b16 %v558
        %v933 = vunpack.c.l.b16 %v559
        %v934 = vunpack.c.h.b16 %v559
        %v935 = vunpack.c.l.b16 %v560
        %v936 = vunpack.c.h.b16 %v560
        %v937 = vunpack.c.l.b16 %v561
        %v938 = vunpack.c.h.b16 %v561
        %v939 = vunpack.c.l.b16 %v562
        %v940 = vunpack.c.h.b16 %v562
        %v941 = vunpack.c.l.b16 %v563
        %v942 = vunpack.c.h.b16 %v563
        %v943 = vunpack.c.l.b16 %v564
        %v944 = vunpack.c.h.b16 %v564
        %v945 = vunpack.c.l.b16 %v565
        %v946 = vunpack.c.h.b16 %v565
        %v947 = vunpack.c.l.b16 %v566
        %v948 = vunpack.c.h.b16 %v566
        %v949 = vunpack.c.l.b16 %v567
        %v950 = vunpack.c.h.b16 %v567
        %v951 = vunpack.c.l.b16 %v568
        %v952 = vunpack.c.h.b16 %v568
        %v953 = vunpack.c.l.b16 %v569
        %v954 = vunpack.c.h.b16 %v569
        %v955 = vunpack.c.l.b16 %v570
        %v956 = vunpack.c.h.b16 %v570
        %v957 = vunpack.c.l.b16 %v571
        %v958 = vunpack.c.h.b16 %v571
        %v959 = vunpack.c.l.b16 %v572
        %v960 = vunpack.c.h.b16 %v572
        %v961 = vunpack.c.l.b16 %v573
        %v962 = vunpack.c.h.b16 %v573
        %v963 = vunpack.c.l.b16 %v574
        %v964 = vunpack.c.h.b16 %v574
        %v965 = vunpack.c.l.b16 %v575
        %v966 = vunpack.c.h.b16 %v575
        %v967 = vpack.c.b16 %v719, %v711
        %v968 = vpack.c.b16 %v720, %v712
        %v969 = vpack.c.b16 %v721, %v713
        %v970 = vpack.c.b16 %v722, %v714
        %v971 = vpack.c.b16 %v723, %v715
        %v972 = vpack.c.b16 %v724, %v716
        %v973 = vpack.c.b16 %v725, %v717
        %v974 = vpack.c.b16 %v726, %v718
        %v975 = vpack.c.b16 %v735, %v727
        %v976 = vpack.c.b16 %v736, %v728
        %v977 = vpack.c.b16 %v737, %v729
        %v978 = vpack.c.b16 %v738, %v730
        %v979 = vpack.c.b16 %v739, %v731
        %v980 = vpack.c.b16 %v740, %v732
        %v981 = vpack.c.b16 %v741, %v733
        %v982 = vpack.c.b16 %v742, %v734
        %v983 = vpack.c.b16 %v751, %v743
        %v984 = vpack.c.b16 %v752, %v744
        %v985 = vpack.c.b16 %v753, %v745
        %v986 = vpack.c.b16 %v754, %v746
        %v987 = vpack.c.b16 %v755, %v747
        %v988 = vpack.c.b16 %v756, %v748
        %v989 = vpack.c.b16 %v757, %v749
        %v990 = vpack.c.b16 %v758, %v750
        %v991 = vpack.c.b16 %v767, %v759
        %v992 = vpack.c.b16 %v768, %v760
        %v993 = vpack.c.b16 %v769, %v761
        %v994 = vpack.c.b16 %v770, %v762
        %v995 = vpack.c.b16 %v771, %v763
        %v996 = vpack.c.b16 %v772, %v764
        %v997 = vpack.c.b16 %v773, %v765
        %v998 = vpack.c.b16 %v774, %v766
        %v999 = vpack.c.b16 %v783, %v775
        %v1000 = vpack.c.b16 %v784, %v776
        %v1001 = vpack.c.b16 %v785, %v777
        %v1002 = vpack.c.b16 %v786, %v778
        %v1003 = vpack.c.b16 %v787, %v779
        %v1004 = vpack.c.b16 %v788, %v780
        %v1005 = vpack.c.b16 %v789, %v781
        %v1006 = vpack.c.b16 %v790, %v782
        %v1007 = vpack.c.b16 %v799, %v791
        %v1008 = vpack.c.b16 %v800, %v792
        %v1009 = vpack.c.b16 %v801, %v793
        %v1010 = vpack.c.b16 %v802, %v794
        %v1011 = vpack.c.b16 %v803, %v795
        %v1012 = vpack.c.b16 %v804, %v796
        %v1013 = vpack.c.b16 %v805, %v797
        %v1014 = vpack.c.b16 %v806, %v798
        %v1015 = vpack.c.b16 %v815, %v807
        %v1016 = vpack.c.b16 %v816, %v808
        %v1017 = vpack.c.b16 %v817, %v809
        %v1018 = vpack.c.b16 %v818, %v810
        %v1019 = vpack.c.b16 %v819, %v811
        %v1020 = vpack.c.b16 %v820, %v812
        %v1021 = vpack.c.b16 %v821, %v813
        %v1022 = vpack.c.b16 %v822, %v814
        %v1023 = vpack.c.b16 %v831, %v823
        %v1024 = vpack.c.b16 %v832, %v824
        %v1025 = vpack.c.b16 %v833, %v825
        %v1026 = vpack.c.b16 %v834, %v826
        %v1027 = vpack.c.b16 %v835, %v827
        %v1028 = vpack.c.b16 %v836, %v828
        %v1029 = vpack.c.b16 %v837, %v829
        %v1030 = vpack.c.b16 %v838, %v830
        %v1031 = vpack.c.b16 %v847, %v839
        %v1032 = vpack.c.b16 %v848, %v840
        %v1033 = vpack.c.b16 %v849, %v841
        %v1034 = vpack.c.b16 %v850, %v842
        %v1035 = vpack.c.b16 %v851, %v843
        %v1036 = vpack.c.b16 %v852, %v844
        %v1037 = vpack.c.b16 %v853, %v845
        %v1038 = vpack.c.b16 %v854, %v846
        %v1039 = vpack.c.b16 %v863, %v855
        %v1040 = vpack.c.b16 %v864, %v856
        %v1041 = vpack.c.b16 %v865, %v857
        %v1042 = vpack.c.b16 %v866, %v858
        %v1043 = vpack.c.b16 %v867, %v859
        %v1044 = vpack.c.b16 %v868, %v860
        %v1045 = vpack.c.b16 %v869, %v861
        %v1046 = vpack.c.b16 %v870, %v862
        %v1047 = vpack.c.b16 %v879, %v871
        %v1048 = vpack.c.b16 %v880, %v872
        %v1049 = vpack.c.b16 %v881, %v873
        %v1050 = vpack.c.b16 %v882, %v874
        %v1051 = vpack.c.b16 %v883, %v875
        %v1052 = vpack.c.b16 %v884, %v876
        %v1053 = vpack.c.b16 %v885, %v877
        %v1054 = vpack.c.b16 %v886, %v878
        %v1055 = vpack.c.b16 %v895, %v887
        %v1056 = vpack.c.b16 %v896, %v888
        %v1057 = vpack.c.b16 %v897, %v889
        %v1058 = vpack.c.b16 %v898, %v890
        %v1059 = vpack.c.b16 %v899, %v891
        %v1060 = vpack.c.b16 %v900, %v892
        %v1061 = vpack.c.b16 %v901, %v893
        %v1062 = vpack.c.b16 %v902, %v894
        %v1063 = vpack.c.b16 %v911, %v903
        %v1064 = vpack.c.b16 %v912, %v904
        %v1065 = vpack.c.b16 %v913, %v905
        %v1066 = vpack.c.b16 %v914, %v906
        %v1067 = vpack.c.b16 %v915, %v907
        %v1068 = vpack.c.b16 %v916, %v908
        %v1069 = vpack.c.b16 %v917, %v909
        %v1070 = vpack.c.b16 %v918, %v910
        %v1071 = vpack.c.b16 %v927, %v919
        %v1072 = vpack.c.b16 %v928, %v920
        %v1073 = vpack.c.b16 %v929, %v921
        %v1074 = vpack.c.b16 %v930, %v922
        %v1075 = vpack.c.b16 %v931, %v923
        %v1076 = vpack.c.b16 %v932, %v924
        %v1077 = vpack.c.b16 %v933, %v925
        %v1078 = vpack.c.b16 %v934, %v926
        %v1079 = vpack.c.b16 %v943, %v935
        %v1080 = vpack.c.b16 %v944, %v936
        %v1081 = vpack.c.b16 %v945, %v937
        %v1082 = vpack.c.b16 %v946, %v938
        %v1083 = vpack.c.b16 %v947, %v939
        %v1084 = vpack.c.b16 %v948, %v940
        %v1085 = vpack.c.b16 %v949, %v941
        %v1086 = vpack.c.b16 %v950, %v942
        %v1087 = vpack.c.b16 %v959, %v951
        %v1088 = vpack.c.b16 %v960, %v952
        %v1089 = vpack.c.b16 %v961, %v953
        %v1090 = vpack.c.b16 %v962, %v954
        %v1091 = vpack.c.b16 %v963, %v955
        %v1092 = vpack.c.b16 %v964, %v956
        %v1093 = vpack.c.b16 %v965, %v957
        %v1094 = vpack.c.b16 %v966, %v958
        %1223 = vmatprep.subr.bf16.mxu0 %v1024
        %1224 = vmatpush1.bf16.msra.mxu0 %v1023
        %1225 = vmatprep.subr.bf16.mxu0 %v1016
        %1226 = vmatpush1.bf16.msra.mxu0 %v1015
        %1227 = vmatprep.subr.bf16.mxu0 %v1008
        %1228 = vmatpush1.bf16.msra.mxu0 %v1007
        %1229 = vmatprep.subr.bf16.mxu0 %v1000
        %1230 = vmatpush1.bf16.msra.mxu0 %v999
        %1231 = vmatprep.subr.bf16.mxu0 %v992
        %1232 = vmatpush1.bf16.msra.mxu0 %v991
        %1233 = vmatprep.subr.bf16.mxu0 %v984
        %1234 = vmatpush1.bf16.msra.mxu0 %v983
        %1235 = vmatprep.subr.bf16.mxu0 %v976
        %1236 = vmatpush1.bf16.msra.mxu0 %v975
        %1237 = vmatprep.subr.bf16.mxu0 %v968
        %1238 = vmatpush1.bf16.msra.mxu0 %v967
        %1239 = vmatprep.subr.bf16.mxu0 %v1088
        %1240 = vmatpush2.bf16.msra.mxu0 %v1087
        %1241 = vmatprep.subr.bf16.mxu0 %v1080
        %1242 = vmatpush2.bf16.msra.mxu0 %v1079
        %1243 = vmatprep.subr.bf16.mxu0 %v1072
        %1244 = vmatpush2.bf16.msra.mxu0 %v1071
        %1245 = vmatprep.subr.bf16.mxu0 %v1064
        %1246 = vmatpush2.bf16.msra.mxu0 %v1063
        %1247 = vmatprep.subr.bf16.mxu0 %v1056
        %1248 = vmatpush2.bf16.msra.mxu0 %v1055
        %1249 = vmatprep.subr.bf16.mxu0 %v1048
        %1250 = vmatpush2.bf16.msra.mxu0 %v1047
        %1251 = vmatprep.subr.bf16.mxu0 %v1040
        %1252 = vmatpush2.bf16.msra.mxu0 %v1039
        %1253 = vmatprep.subr.bf16.mxu0 %v1032
        %1254 = vmatpush2.bf16.msra.mxu0 %v1031
        %1255 = vmatprep.mubr.bf16.mxu0 %v580
        %1256 = vmatmul.mubr.bf16.gmra.mxu0 %v579
        %v1257 = vpop.f32.mrf.mxu0
        %v1258 = vadd.f32 0.0, %v1257
        %v1259 = vpop.f32.mrf.mxu0
        %v1260 = vadd.f32 0.0, %v1259
        %v1261 = vpop.f32.mrf.mxu0
        %v1262 = vpop.f32.mrf.mxu0
        %1263 = vdwg.mxu0
        %1264 = vmatprep.subr.bf16.mxu0 %v1026
        %1265 = vmatpush1.bf16.msra.mxu0 %v1025
        %1266 = vmatprep.subr.bf16.mxu0 %v1018
        %1267 = vmatpush1.bf16.msra.mxu0 %v1017
        %1268 = vmatprep.subr.bf16.mxu0 %v1010
        %1269 = vmatpush1.bf16.msra.mxu0 %v1009
        %1270 = vmatprep.subr.bf16.mxu0 %v1002
        %1271 = vmatpush1.bf16.msra.mxu0 %v1001
        %1272 = vmatprep.subr.bf16.mxu0 %v994
        %1273 = vmatpush1.bf16.msra.mxu0 %v993
        %1274 = vmatprep.subr.bf16.mxu0 %v986
        %1275 = vmatpush1.bf16.msra.mxu0 %v985
        %1276 = vmatprep.subr.bf16.mxu0 %v978
        %1277 = vmatpush1.bf16.msra.mxu0 %v977
        %1278 = vmatprep.subr.bf16.mxu0 %v970
        %1279 = vmatpush1.bf16.msra.mxu0 %v969
        %1280 = vmatprep.subr.bf16.mxu0 %v1090
        %1281 = vmatpush2.bf16.msra.mxu0 %v1089
        %1282 = vmatprep.subr.bf16.mxu0 %v1082
        %1283 = vmatpush2.bf16.msra.mxu0 %v1081
        %1284 = vmatprep.subr.bf16.mxu0 %v1074
        %1285 = vmatpush2.bf16.msra.mxu0 %v1073
        %1286 = vmatprep.subr.bf16.mxu0 %v1066
        %1287 = vmatpush2.bf16.msra.mxu0 %v1065
        %1288 = vmatprep.subr.bf16.mxu0 %v1058
        %1289 = vmatpush2.bf16.msra.mxu0 %v1057
        %1290 = vmatprep.subr.bf16.mxu0 %v1050
        %1291 = vmatpush2.bf16.msra.mxu0 %v1049
        %1292 = vmatprep.subr.bf16.mxu0 %v1042
        %1293 = vmatpush2.bf16.msra.mxu0 %v1041
        %1294 = vmatprep.subr.bf16.mxu0 %v1034
        %1295 = vmatpush2.bf16.msra.mxu0 %v1033
        %1296 = vmatprep.mubr.bf16.mxu0 %v580
        %1297 = vmatmul.mubr.bf16.gmra.mxu0 %v579
        %v1298 = vpop.f32.mrf.mxu0
        %v1299 = vadd.f32 0.0, %v1298
        %v1300 = vpop.f32.mrf.mxu0
        %v1301 = vadd.f32 0.0, %v1300
        %v1302 = vpop.f32.mrf.mxu0
        %v1303 = vpop.f32.mrf.mxu0
        %1304 = vdwg.mxu0
        %1305 = vmatprep.subr.bf16.mxu0 %v1028
        %1306 = vmatpush1.bf16.msra.mxu0 %v1027
        %1307 = vmatprep.subr.bf16.mxu0 %v1020
        %1308 = vmatpush1.bf16.msra.mxu0 %v1019
        %1309 = vmatprep.subr.bf16.mxu0 %v1012
        %1310 = vmatpush1.bf16.msra.mxu0 %v1011
        %1311 = vmatprep.subr.bf16.mxu0 %v1004
        %1312 = vmatpush1.bf16.msra.mxu0 %v1003
        %1313 = vmatprep.subr.bf16.mxu0 %v996
        %1314 = vmatpush1.bf16.msra.mxu0 %v995
        %1315 = vmatprep.subr.bf16.mxu0 %v988
        %1316 = vmatpush1.bf16.msra.mxu0 %v987
        %1317 = vmatprep.subr.bf16.mxu0 %v980
        %1318 = vmatpush1.bf16.msra.mxu0 %v979
        %1319 = vmatprep.subr.bf16.mxu0 %v972
        %1320 = vmatpush1.bf16.msra.mxu0 %v971
        %1321 = vmatprep.subr.bf16.mxu0 %v1092
        %1322 = vmatpush2.bf16.msra.mxu0 %v1091
        %1323 = vmatprep.subr.bf16.mxu0 %v1084
        %1324 = vmatpush2.bf16.msra.mxu0 %v1083
        %1325 = vmatprep.subr.bf16.mxu0 %v1076
        %1326 = vmatpush2.bf16.msra.mxu0 %v1075
        %1327 = vmatprep.subr.bf16.mxu0 %v1068
        %1328 = vmatpush2.bf16.msra.mxu0 %v1067
        %1329 = vmatprep.subr.bf16.mxu0 %v1060
        %1330 = vmatpush2.bf16.msra.mxu0 %v1059
        %1331 = vmatprep.subr.bf16.mxu0 %v1052
        %1332 = vmatpush2.bf16.msra.mxu0 %v1051
        %1333 = vmatprep.subr.bf16.mxu0 %v1044
        %1334 = vmatpush2.bf16.msra.mxu0 %v1043
        %1335 = vmatprep.subr.bf16.mxu0 %v1036
        %1336 = vmatpush2.bf16.msra.mxu0 %v1035
        %1337 = vmatprep.mubr.bf16.mxu0 %v580
        %1338 = vmatmul.mubr.bf16.gmra.mxu0 %v579
        %v1339 = vpop.f32.mrf.mxu0
        %v1340 = vadd.f32 0.0, %v1339
        %v1341 = vpop.f32.mrf.mxu0
        %v1342 = vadd.f32 0.0, %v1341
        %v1343 = vpop.f32.mrf.mxu0
        %v1344 = vpop.f32.mrf.mxu0
        %1345 = vdwg.mxu0
        %1346 = vmatprep.subr.bf16.mxu0 %v1030
        %1347 = vmatpush1.bf16.msra.mxu0 %v1029
        %1348 = vmatprep.subr.bf16.mxu0 %v1022
        %1349 = vmatpush1.bf16.msra.mxu0 %v1021
        %1350 = vmatprep.subr.bf16.mxu0 %v1014
        %1351 = vmatpush1.bf16.msra.mxu0 %v1013
        %1352 = vmatprep.subr.bf16.mxu0 %v1006
        %1353 = vmatpush1.bf16.msra.mxu0 %v1005
        %1354 = vmatprep.subr.bf16.mxu0 %v998
        %1355 = vmatpush1.bf16.msra.mxu0 %v997
        %1356 = vmatprep.subr.bf16.mxu0 %v990
        %1357 = vmatpush1.bf16.msra.mxu0 %v989
        %1358 = vmatprep.subr.bf16.mxu0 %v982
        %1359 = vmatpush1.bf16.msra.mxu0 %v981
        %1360 = vmatprep.subr.bf16.mxu0 %v974
        %1361 = vmatpush1.bf16.msra.mxu0 %v973
        %1362 = vmatprep.subr.bf16.mxu0 %v1094
        %1363 = vmatpush2.bf16.msra.mxu0 %v1093
        %1364 = vmatprep.subr.bf16.mxu0 %v1086
        %1365 = vmatpush2.bf16.msra.mxu0 %v1085
        %1366 = vmatprep.subr.bf16.mxu0 %v1078
        %1367 = vmatpush2.bf16.msra.mxu0 %v1077
        %1368 = vmatprep.subr.bf16.mxu0 %v1070
        %1369 = vmatpush2.bf16.msra.mxu0 %v1069
        %1370 = vmatprep.subr.bf16.mxu0 %v1062
        %1371 = vmatpush2.bf16.msra.mxu0 %v1061
        %1372 = vmatprep.subr.bf16.mxu0 %v1054
        %1373 = vmatpush2.bf16.msra.mxu0 %v1053
        %1374 = vmatprep.subr.bf16.mxu0 %v1046
        %1375 = vmatpush2.bf16.msra.mxu0 %v1045
        %1376 = vmatprep.subr.bf16.mxu0 %v1038
        %1377 = vmatpush2.bf16.msra.mxu0 %v1037
        %1378 = vmatprep.mubr.bf16.mxu0 %v580
        %1379 = vmatmul.mubr.bf16.gmra.mxu0 %v579
        %v1380 = vpop.f32.mrf.mxu0
        %v1381 = vadd.f32 0.0, %v1380
        %v1382 = vpop.f32.mrf.mxu0
        %v1383 = vadd.f32 0.0, %v1382
        %v1384 = vpop.f32.mrf.mxu0
        %v1385 = vpop.f32.mrf.mxu0
        %1386 = vdwg.mxu0
        %v1387 = vadd.f32 %v439, %v1258
        %v1388 = vadd.f32 %v440, %v1260
        %v1389 = vadd.f32 %v441, %v1299
        %v1390 = vadd.f32 %v442, %v1301
        %v1391 = vadd.f32 %v443, %v1340
        %v1392 = vadd.f32 %v444, %v1342
        %v1393 = vadd.f32 %v445, %v1381
        %v1394 = vadd.f32 %v446, %v1383
        %1395 = vst [vmem:[#allocation2] sm:$0xff] %v1387
        %1396 = vst [vmem:[#allocation2 + $0x8] sm:$0xff] %v1388
        %1397 = vst [vmem:[#allocation2 + $0x10] sm:$0xff] %v1389
        %1398 = vst [vmem:[#allocation2 + $0x18] sm:$0xff] %v1390
        %1399 = vst [vmem:[#allocation2 + $0x20] sm:$0xff] %v1391
        %1400 = vst [vmem:[#allocation2 + $0x28] sm:$0xff] %v1392
        %1401 = vst [vmem:[#allocation2 + $0x30] sm:$0xff] %v1393
        %1402 = vst [vmem:[#allocation2 + $0x38] sm:$0xff] %v1394
        %p1403 = scmp.eq.s32.totalorder %s34, 3
        // Predicated region
        $region81: #{tpu_custom_call.1} parent=47 // pred_check
          %p1404 = pneg %p1403
        $region82: #{tpu_custom_call.1} parent=47 // pred_check_branch
          %1406 = sbr.rel (%p1404) target = $region84
        $region83: #{tpu_custom_call.1} parent=47 // pred_region
          %v1407 = vld [vmem:[#allocation2] sm:$0xff]
          %v1408 = vld [vmem:[#allocation2 + $0x8] sm:$0xff]
          %v1409 = vld [vmem:[#allocation2 + $0x10] sm:$0xff]
          %v1410 = vld [vmem:[#allocation2 + $0x18] sm:$0xff]
          %v1411 = vld [vmem:[#allocation2 + $0x20] sm:$0xff]
          %v1412 = vld [vmem:[#allocation2 + $0x28] sm:$0xff]
          %v1413 = vld [vmem:[#allocation2 + $0x30] sm:$0xff]
          %v1414 = vld [vmem:[#allocation2 + $0x38] sm:$0xff]
          %v1415 = vld [vmem:[#allocation14] sm:$0xff]
          %v1416 = vld [vmem:[#allocation14 + $0x8] sm:$0xff]
          %v1417 = vld [vmem:[#allocation14 + $0x10] sm:$0xff]
          %v1418 = vld [vmem:[#allocation14 + $0x18] sm:$0xff]
          %v1419 = vld [vmem:[#allocation14 + $0x20] sm:$0xff]
          %v1420 = vld [vmem:[#allocation14 + $0x28] sm:$0xff]
          %v1421 = vld [vmem:[#allocation14 + $0x30] sm:$0xff]
          %v1422 = vld [vmem:[#allocation14 + $0x38] sm:$0xff]
          %v1423 = vlaneseq
          %v1424 = vshrl.u32 %v1423, 7
          %v1425 = vsub.s32 0, %v1424
          %v1426 = vrot.slane %v1415, %v1425
          %v1427 = vlaneseq
          %v1428 = vshrl.u32 %v1427, 7
          %v1429 = vsub.s32 0, %v1428
          %v1430 = vrot.slane %v1416, %v1429
          %v1431 = vlaneseq
          %v1432 = vshrl.u32 %v1431, 7
          %v1433 = vsub.s32 0, %v1432
          %v1434 = vrot.slane %v1417, %v1433
          %v1435 = vlaneseq
          %v1436 = vshrl.u32 %v1435, 7
          %v1437 = vsub.s32 0, %v1436
          %v1438 = vrot.slane %v1418, %v1437
          %v1439 = vlaneseq
          %v1440 = vshrl.u32 %v1439, 7
          %v1441 = vsub.s32 0, %v1440
          %v1442 = vrot.slane %v1419, %v1441
          %v1443 = vlaneseq
          %v1444 = vshrl.u32 %v1443, 7
          %v1445 = vsub.s32 0, %v1444
          %v1446 = vrot.slane %v1420, %v1445
          %v1447 = vlaneseq
          %v1448 = vshrl.u32 %v1447, 7
          %v1449 = vsub.s32 0, %v1448
          %v1450 = vrot.slane %v1421, %v1449
          %v1451 = vlaneseq
          %v1452 = vshrl.u32 %v1451, 7
          %v1453 = vsub.s32 0, %v1452
          %v1454 = vrot.slane %v1422, %v1453
          %v1455 = vadd.f32 %v1407, %v1426
          %v1456 = vadd.f32 %v1408, %v1430
          %v1457 = vadd.f32 %v1409, %v1434
          %v1458 = vadd.f32 %v1410, %v1438
          %v1459 = vadd.f32 %v1411, %v1442
          %v1460 = vadd.f32 %v1412, %v1446
          %v1461 = vadd.f32 %v1413, %v1450
          %v1462 = vadd.f32 %v1414, %v1454
          %v1463 = vmax.f32 %v1455, 0.0
          %v1464 = vmax.f32 %v1456, 0.0
          %v1465 = vmax.f32 %v1457, 0.0
          %v1466 = vmax.f32 %v1458, 0.0
          %v1467 = vmax.f32 %v1459, 0.0
          %v1468 = vmax.f32 %v1460, 0.0
          %v1469 = vmax.f32 %v1461, 0.0
          %v1470 = vmax.f32 %v1462, 0.0
          %v1471 = vlaneseq
          %v1472 = vshrl.u32 %v1471, 7
          %v1473 = vsub.s32 1, %v1472
          %v1474 = vrot.slane %v1415, %v1473
          %v1475 = vlaneseq
          %v1476 = vshrl.u32 %v1475, 7
          %v1477 = vsub.s32 1, %v1476
          %v1478 = vrot.slane %v1416, %v1477
          %v1479 = vlaneseq
          %v1480 = vshrl.u32 %v1479, 7
          %v1481 = vsub.s32 1, %v1480
          %v1482 = vrot.slane %v1417, %v1481
          %v1483 = vlaneseq
          %v1484 = vshrl.u32 %v1483, 7
          %v1485 = vsub.s32 1, %v1484
          %v1486 = vrot.slane %v1418, %v1485
          %v1487 = vlaneseq
          %v1488 = vshrl.u32 %v1487, 7
          %v1489 = vsub.s32 1, %v1488
          %v1490 = vrot.slane %v1419, %v1489
          %v1491 = vlaneseq
          %v1492 = vshrl.u32 %v1491, 7
          %v1493 = vsub.s32 1, %v1492
          %v1494 = vrot.slane %v1420, %v1493
          %v1495 = vlaneseq
          %v1496 = vshrl.u32 %v1495, 7
          %v1497 = vsub.s32 1, %v1496
          %v1498 = vrot.slane %v1421, %v1497
          %v1499 = vlaneseq
          %v1500 = vshrl.u32 %v1499, 7
          %v1501 = vsub.s32 1, %v1500
          %v1502 = vrot.slane %v1422, %v1501
          %v1503 = vmul.f32 %v1463, %v1474
          %v1504 = vmul.f32 %v1464, %v1478
          %v1505 = vmul.f32 %v1465, %v1482
          %v1506 = vmul.f32 %v1466, %v1486
          %v1507 = vmul.f32 %v1467, %v1490
          %v1508 = vmul.f32 %v1468, %v1494
          %v1509 = vmul.f32 %v1469, %v1498
          %v1510 = vmul.f32 %v1470, %v1502
          %v1511 = vlaneseq
          %v1512 = vshrl.u32 %v1511, 7
          %v1513 = vsub.s32 2, %v1512
          %v1514 = vrot.slane %v1415, %v1513
          %v1515 = vlaneseq
          %v1516 = vshrl.u32 %v1515, 7
          %v1517 = vsub.s32 2, %v1516
          %v1518 = vrot.slane %v1416, %v1517
          %v1519 = vlaneseq
          %v1520 = vshrl.u32 %v1519, 7
          %v1521 = vsub.s32 2, %v1520
          %v1522 = vrot.slane %v1417, %v1521
          %v1523 = vlaneseq
          %v1524 = vshrl.u32 %v1523, 7
          %v1525 = vsub.s32 2, %v1524
          %v1526 = vrot.slane %v1418, %v1525
          %v1527 = vlaneseq
          %v1528 = vshrl.u32 %v1527, 7
          %v1529 = vsub.s32 2, %v1528
          %v1530 = vrot.slane %v1419, %v1529
          %v1531 = vlaneseq
          %v1532 = vshrl.u32 %v1531, 7
          %v1533 = vsub.s32 2, %v1532
          %v1534 = vrot.slane %v1420, %v1533
          %v1535 = vlaneseq
          %v1536 = vshrl.u32 %v1535, 7
          %v1537 = vsub.s32 2, %v1536
          %v1538 = vrot.slane %v1421, %v1537
          %v1539 = vlaneseq
          %v1540 = vshrl.u32 %v1539, 7
          %v1541 = vsub.s32 2, %v1540
          %v1542 = vrot.slane %v1422, %v1541
          %v1543 = vadd.f32 %v1503, %v1514
          %v1544 = vadd.f32 %v1504, %v1518
          %v1545 = vadd.f32 %v1505, %v1522
          %v1546 = vadd.f32 %v1506, %v1526
          %v1547 = vadd.f32 %v1507, %v1530
          %v1548 = vadd.f32 %v1508, %v1534
          %v1549 = vadd.f32 %v1509, %v1538
          %v1550 = vadd.f32 %v1510, %v1542
          %v1551 = vpack.c.bf16 %v1543, %v1543
          %v1552 = vpack.c.bf16 %v1544, %v1544
          %v1553 = vpack.c.bf16 %v1545, %v1545
          %v1554 = vpack.c.bf16 %v1546, %v1546
          %v1555 = vpack.c.bf16 %v1547, %v1547
          %v1556 = vpack.c.bf16 %v1548, %v1548
          %v1557 = vpack.c.bf16 %v1549, %v1549
          %v1558 = vpack.c.bf16 %v1550, %v1550
          %v1559 = vld [vmem:[#allocation8] sm:$0xff]
          %v1560 = vld [vmem:[#allocation8 + $0x8] sm:$0xff]
          %v1561 = vld [vmem:[#allocation8 + $0x10] sm:$0xff]
          %v1562 = vld [vmem:[#allocation8 + $0x18] sm:$0xff]
          %v1563 = vld [vmem:[#allocation8 + $0x20] sm:$0xff]
          %v1564 = vld [vmem:[#allocation8 + $0x28] sm:$0xff]
          %v1565 = vld [vmem:[#allocation8 + $0x30] sm:$0xff]
          %v1566 = vld [vmem:[#allocation8 + $0x38] sm:$0xff]
          %v1567 = vld [vmem:[#allocation8 + $0x40] sm:$0xff]
          %v1568 = vld [vmem:[#allocation8 + $0x48] sm:$0xff]
          %v1569 = vld [vmem:[#allocation8 + $0x50] sm:$0xff]
          %v1570 = vld [vmem:[#allocation8 + $0x58] sm:$0xff]
          %v1571 = vld [vmem:[#allocation8 + $0x60] sm:$0xff]
          %v1572 = vld [vmem:[#allocation8 + $0x68] sm:$0xff]
          %v1573 = vld [vmem:[#allocation8 + $0x70] sm:$0xff]
          %v1574 = vld [vmem:[#allocation8 + $0x78] sm:$0xff]
          %v1575 = vld [vmem:[#allocation8 + $0x80] sm:$0xff]
          %v1576 = vld [vmem:[#allocation8 + $0x88] sm:$0xff]
          %v1577 = vld [vmem:[#allocation8 + $0x90] sm:$0xff]
          %v1578 = vld [vmem:[#allocation8 + $0x98] sm:$0xff]
          %v1579 = vld [vmem:[#allocation8 + $0xa0] sm:$0xff]
          %v1580 = vld [vmem:[#allocation8 + $0xa8] sm:$0xff]
          %v1581 = vld [vmem:[#allocation8 + $0xb0] sm:$0xff]
          %v1582 = vld [vmem:[#allocation8 + $0xb8] sm:$0xff]
          %v1583 = vld [vmem:[#allocation8 + $0xc0] sm:$0xff]
          %v1584 = vld [vmem:[#allocation8 + $0xc8] sm:$0xff]
          %v1585 = vld [vmem:[#allocation8 + $0xd0] sm:$0xff]
          %v1586 = vld [vmem:[#allocation8 + $0xd8] sm:$0xff]
          %v1587 = vld [vmem:[#allocation8 + $0xe0] sm:$0xff]
          %v1588 = vld [vmem:[#allocation8 + $0xe8] sm:$0xff]
          %v1589 = vld [vmem:[#allocation8 + $0xf0] sm:$0xff]
          %v1590 = vld [vmem:[#allocation8 + $0xf8] sm:$0xff]
          %v1591 = vld [vmem:[#allocation8 + $0x100] sm:$0xff]
          %v1592 = vld [vmem:[#allocation8 + $0x108] sm:$0xff]
          %v1593 = vld [vmem:[#allocation8 + $0x110] sm:$0xff]
          %v1594 = vld [vmem:[#allocation8 + $0x118] sm:$0xff]
          %v1595 = vld [vmem:[#allocation8 + $0x120] sm:$0xff]
          %v1596 = vld [vmem:[#allocation8 + $0x128] sm:$0xff]
          %v1597 = vld [vmem:[#allocation8 + $0x130] sm:$0xff]
          %v1598 = vld [vmem:[#allocation8 + $0x138] sm:$0xff]
          %v1599 = vld [vmem:[#allocation8 + $0x140] sm:$0xff]
          %v1600 = vld [vmem:[#allocation8 + $0x148] sm:$0xff]
          %v1601 = vld [vmem:[#allocation8 + $0x150] sm:$0xff]
          %v1602 = vld [vmem:[#allocation8 + $0x158] sm:$0xff]
          %v1603 = vld [vmem:[#allocation8 + $0x160] sm:$0xff]
          %v1604 = vld [vmem:[#allocation8 + $0x168] sm:$0xff]
          %v1605 = vld [vmem:[#allocation8 + $0x170] sm:$0xff]
          %v1606 = vld [vmem:[#allocation8 + $0x178] sm:$0xff]
          %v1607 = vld [vmem:[#allocation8 + $0x180] sm:$0xff]
          %v1608 = vld [vmem:[#allocation8 + $0x188] sm:$0xff]
          %v1609 = vld [vmem:[#allocation8 + $0x190] sm:$0xff]
          %v1610 = vld [vmem:[#allocation8 + $0x198] sm:$0xff]
          %v1611 = vld [vmem:[#allocation8 + $0x1a0] sm:$0xff]
          %v1612 = vld [vmem:[#allocation8 + $0x1a8] sm:$0xff]
          %v1613 = vld [vmem:[#allocation8 + $0x1b0] sm:$0xff]
          %v1614 = vld [vmem:[#allocation8 + $0x1b8] sm:$0xff]
          %v1615 = vld [vmem:[#allocation8 + $0x1c0] sm:$0xff]
          %v1616 = vld [vmem:[#allocation8 + $0x1c8] sm:$0xff]
          %v1617 = vld [vmem:[#allocation8 + $0x1d0] sm:$0xff]
          %v1618 = vld [vmem:[#allocation8 + $0x1d8] sm:$0xff]
          %v1619 = vld [vmem:[#allocation8 + $0x1e0] sm:$0xff]
          %v1620 = vld [vmem:[#allocation8 + $0x1e8] sm:$0xff]
          %v1621 = vld [vmem:[#allocation8 + $0x1f0] sm:$0xff]
          %v1622 = vld [vmem:[#allocation8 + $0x1f8] sm:$0xff]
          %v1623 = vld [vmem:[#allocation8 + $0x200] sm:$0xff]
          %v1624 = vld [vmem:[#allocation8 + $0x208] sm:$0xff]
          %v1625 = vld [vmem:[#allocation8 + $0x210] sm:$0xff]
          %v1626 = vld [vmem:[#allocation8 + $0x218] sm:$0xff]
          %v1627 = vld [vmem:[#allocation8 + $0x220] sm:$0xff]
          %v1628 = vld [vmem:[#allocation8 + $0x228] sm:$0xff]
          %v1629 = vld [vmem:[#allocation8 + $0x230] sm:$0xff]
          %v1630 = vld [vmem:[#allocation8 + $0x238] sm:$0xff]
          %v1631 = vld [vmem:[#allocation8 + $0x240] sm:$0xff]
          %v1632 = vld [vmem:[#allocation8 + $0x248] sm:$0xff]
          %v1633 = vld [vmem:[#allocation8 + $0x250] sm:$0xff]
          %v1634 = vld [vmem:[#allocation8 + $0x258] sm:$0xff]
          %v1635 = vld [vmem:[#allocation8 + $0x260] sm:$0xff]
          %v1636 = vld [vmem:[#allocation8 + $0x268] sm:$0xff]
          %v1637 = vld [vmem:[#allocation8 + $0x270] sm:$0xff]
          %v1638 = vld [vmem:[#allocation8 + $0x278] sm:$0xff]
          %v1639 = vld [vmem:[#allocation8 + $0x280] sm:$0xff]
          %v1640 = vld [vmem:[#allocation8 + $0x288] sm:$0xff]
          %v1641 = vld [vmem:[#allocation8 + $0x290] sm:$0xff]
          %v1642 = vld [vmem:[#allocation8 + $0x298] sm:$0xff]
          %v1643 = vld [vmem:[#allocation8 + $0x2a0] sm:$0xff]
          %v1644 = vld [vmem:[#allocation8 + $0x2a8] sm:$0xff]
          %v1645 = vld [vmem:[#allocation8 + $0x2b0] sm:$0xff]
          %v1646 = vld [vmem:[#allocation8 + $0x2b8] sm:$0xff]
          %v1647 = vld [vmem:[#allocation8 + $0x2c0] sm:$0xff]
          %v1648 = vld [vmem:[#allocation8 + $0x2c8] sm:$0xff]
          %v1649 = vld [vmem:[#allocation8 + $0x2d0] sm:$0xff]
          %v1650 = vld [vmem:[#allocation8 + $0x2d8] sm:$0xff]
          %v1651 = vld [vmem:[#allocation8 + $0x2e0] sm:$0xff]
          %v1652 = vld [vmem:[#allocation8 + $0x2e8] sm:$0xff]
          %v1653 = vld [vmem:[#allocation8 + $0x2f0] sm:$0xff]
          %v1654 = vld [vmem:[#allocation8 + $0x2f8] sm:$0xff]
          %v1655 = vld [vmem:[#allocation8 + $0x300] sm:$0xff]
          %v1656 = vld [vmem:[#allocation8 + $0x308] sm:$0xff]
          %v1657 = vld [vmem:[#allocation8 + $0x310] sm:$0xff]
          %v1658 = vld [vmem:[#allocation8 + $0x318] sm:$0xff]
          %v1659 = vld [vmem:[#allocation8 + $0x320] sm:$0xff]
          %v1660 = vld [vmem:[#allocation8 + $0x328] sm:$0xff]
          %v1661 = vld [vmem:[#allocation8 + $0x330] sm:$0xff]
          %v1662 = vld [vmem:[#allocation8 + $0x338] sm:$0xff]
          %v1663 = vld [vmem:[#allocation8 + $0x340] sm:$0xff]
          %v1664 = vld [vmem:[#allocation8 + $0x348] sm:$0xff]
          %v1665 = vld [vmem:[#allocation8 + $0x350] sm:$0xff]
          %v1666 = vld [vmem:[#allocation8 + $0x358] sm:$0xff]
          %v1667 = vld [vmem:[#allocation8 + $0x360] sm:$0xff]
          %v1668 = vld [vmem:[#allocation8 + $0x368] sm:$0xff]
          %v1669 = vld [vmem:[#allocation8 + $0x370] sm:$0xff]
          %v1670 = vld [vmem:[#allocation8 + $0x378] sm:$0xff]
          %v1671 = vld [vmem:[#allocation8 + $0x380] sm:$0xff]
          %v1672 = vld [vmem:[#allocation8 + $0x388] sm:$0xff]
          %v1673 = vld [vmem:[#allocation8 + $0x390] sm:$0xff]
          %v1674 = vld [vmem:[#allocation8 + $0x398] sm:$0xff]
          %v1675 = vld [vmem:[#allocation8 + $0x3a0] sm:$0xff]
          %v1676 = vld [vmem:[#allocation8 + $0x3a8] sm:$0xff]
          %v1677 = vld [vmem:[#allocation8 + $0x3b0] sm:$0xff]
          %v1678 = vld [vmem:[#allocation8 + $0x3b8] sm:$0xff]
          %v1679 = vld [vmem:[#allocation8 + $0x3c0] sm:$0xff]
          %v1680 = vld [vmem:[#allocation8 + $0x3c8] sm:$0xff]
          %v1681 = vld [vmem:[#allocation8 + $0x3d0] sm:$0xff]
          %v1682 = vld [vmem:[#allocation8 + $0x3d8] sm:$0xff]
          %v1683 = vld [vmem:[#allocation8 + $0x3e0] sm:$0xff]
          %v1684 = vld [vmem:[#allocation8 + $0x3e8] sm:$0xff]
          %v1685 = vld [vmem:[#allocation8 + $0x3f0] sm:$0xff]
          %v1686 = vld [vmem:[#allocation8 + $0x3f8] sm:$0xff]
          %v1687 = vld [vmem:[#allocation8 + $0x400] sm:$0xff]
          %v1688 = vld [vmem:[#allocation8 + $0x408] sm:$0xff]
          %v1689 = vld [vmem:[#allocation8 + $0x410] sm:$0xff]
          %v1690 = vld [vmem:[#allocation8 + $0x418] sm:$0xff]
          %v1691 = vld [vmem:[#allocation8 + $0x420] sm:$0xff]
          %v1692 = vld [vmem:[#allocation8 + $0x428] sm:$0xff]
          %v1693 = vld [vmem:[#allocation8 + $0x430] sm:$0xff]
          %v1694 = vld [vmem:[#allocation8 + $0x438] sm:$0xff]
          %v1695 = vld [vmem:[#allocation8 + $0x440] sm:$0xff]
          %v1696 = vld [vmem:[#allocation8 + $0x448] sm:$0xff]
          %v1697 = vld [vmem:[#allocation8 + $0x450] sm:$0xff]
          %v1698 = vld [vmem:[#allocation8 + $0x458] sm:$0xff]
          %v1699 = vld [vmem:[#allocation8 + $0x460] sm:$0xff]
          %v1700 = vld [vmem:[#allocation8 + $0x468] sm:$0xff]
          %v1701 = vld [vmem:[#allocation8 + $0x470] sm:$0xff]
          %v1702 = vld [vmem:[#allocation8 + $0x478] sm:$0xff]
          %v1703 = vld [vmem:[#allocation8 + $0x480] sm:$0xff]
          %v1704 = vld [vmem:[#allocation8 + $0x488] sm:$0xff]
          %v1705 = vld [vmem:[#allocation8 + $0x490] sm:$0xff]
          %v1706 = vld [vmem:[#allocation8 + $0x498] sm:$0xff]
          %v1707 = vld [vmem:[#allocation8 + $0x4a0] sm:$0xff]
          %v1708 = vld [vmem:[#allocation8 + $0x4a8] sm:$0xff]
          %v1709 = vld [vmem:[#allocation8 + $0x4b0] sm:$0xff]
          %v1710 = vld [vmem:[#allocation8 + $0x4b8] sm:$0xff]
          %v1711 = vld [vmem:[#allocation8 + $0x4c0] sm:$0xff]
          %v1712 = vld [vmem:[#allocation8 + $0x4c8] sm:$0xff]
          %v1713 = vld [vmem:[#allocation8 + $0x4d0] sm:$0xff]
          %v1714 = vld [vmem:[#allocation8 + $0x4d8] sm:$0xff]
          %v1715 = vld [vmem:[#allocation8 + $0x4e0] sm:$0xff]
          %v1716 = vld [vmem:[#allocation8 + $0x4e8] sm:$0xff]
          %v1717 = vld [vmem:[#allocation8 + $0x4f0] sm:$0xff]
          %v1718 = vld [vmem:[#allocation8 + $0x4f8] sm:$0xff]
          %v1719 = vld [vmem:[#allocation8 + $0x500] sm:$0xff]
          %v1720 = vld [vmem:[#allocation8 + $0x508] sm:$0xff]
          %v1721 = vld [vmem:[#allocation8 + $0x510] sm:$0xff]
          %v1722 = vld [vmem:[#allocation8 + $0x518] sm:$0xff]
          %v1723 = vld [vmem:[#allocation8 + $0x520] sm:$0xff]
          %v1724 = vld [vmem:[#allocation8 + $0x528] sm:$0xff]
          %v1725 = vld [vmem:[#allocation8 + $0x530] sm:$0xff]
          %v1726 = vld [vmem:[#allocation8 + $0x538] sm:$0xff]
          %v1727 = vld [vmem:[#allocation8 + $0x540] sm:$0xff]
          %v1728 = vld [vmem:[#allocation8 + $0x548] sm:$0xff]
          %v1729 = vld [vmem:[#allocation8 + $0x550] sm:$0xff]
          %v1730 = vld [vmem:[#allocation8 + $0x558] sm:$0xff]
          %v1731 = vld [vmem:[#allocation8 + $0x560] sm:$0xff]
          %v1732 = vld [vmem:[#allocation8 + $0x568] sm:$0xff]
          %v1733 = vld [vmem:[#allocation8 + $0x570] sm:$0xff]
          %v1734 = vld [vmem:[#allocation8 + $0x578] sm:$0xff]
          %v1735 = vld [vmem:[#allocation8 + $0x580] sm:$0xff]
          %v1736 = vld [vmem:[#allocation8 + $0x588] sm:$0xff]
          %v1737 = vld [vmem:[#allocation8 + $0x590] sm:$0xff]
          %v1738 = vld [vmem:[#allocation8 + $0x598] sm:$0xff]
          %v1739 = vld [vmem:[#allocation8 + $0x5a0] sm:$0xff]
          %v1740 = vld [vmem:[#allocation8 + $0x5a8] sm:$0xff]
          %v1741 = vld [vmem:[#allocation8 + $0x5b0] sm:$0xff]
          %v1742 = vld [vmem:[#allocation8 + $0x5b8] sm:$0xff]
          %v1743 = vld [vmem:[#allocation8 + $0x5c0] sm:$0xff]
          %v1744 = vld [vmem:[#allocation8 + $0x5c8] sm:$0xff]
          %v1745 = vld [vmem:[#allocation8 + $0x5d0] sm:$0xff]
          %v1746 = vld [vmem:[#allocation8 + $0x5d8] sm:$0xff]
          %v1747 = vld [vmem:[#allocation8 + $0x5e0] sm:$0xff]
          %v1748 = vld [vmem:[#allocation8 + $0x5e8] sm:$0xff]
          %v1749 = vld [vmem:[#allocation8 + $0x5f0] sm:$0xff]
          %v1750 = vld [vmem:[#allocation8 + $0x5f8] sm:$0xff]
          %v1751 = vld [vmem:[#allocation8 + $0x600] sm:$0xff]
          %v1752 = vld [vmem:[#allocation8 + $0x608] sm:$0xff]
          %v1753 = vld [vmem:[#allocation8 + $0x610] sm:$0xff]
          %v1754 = vld [vmem:[#allocation8 + $0x618] sm:$0xff]
          %v1755 = vld [vmem:[#allocation8 + $0x620] sm:$0xff]
          %v1756 = vld [vmem:[#allocation8 + $0x628] sm:$0xff]
          %v1757 = vld [vmem:[#allocation8 + $0x630] sm:$0xff]
          %v1758 = vld [vmem:[#allocation8 + $0x638] sm:$0xff]
          %v1759 = vld [vmem:[#allocation8 + $0x640] sm:$0xff]
          %v1760 = vld [vmem:[#allocation8 + $0x648] sm:$0xff]
          %v1761 = vld [vmem:[#allocation8 + $0x650] sm:$0xff]
          %v1762 = vld [vmem:[#allocation8 + $0x658] sm:$0xff]
          %v1763 = vld [vmem:[#allocation8 + $0x660] sm:$0xff]
          %v1764 = vld [vmem:[#allocation8 + $0x668] sm:$0xff]
          %v1765 = vld [vmem:[#allocation8 + $0x670] sm:$0xff]
          %v1766 = vld [vmem:[#allocation8 + $0x678] sm:$0xff]
          %v1767 = vld [vmem:[#allocation8 + $0x680] sm:$0xff]
          %v1768 = vld [vmem:[#allocation8 + $0x688] sm:$0xff]
          %v1769 = vld [vmem:[#allocation8 + $0x690] sm:$0xff]
          %v1770 = vld [vmem:[#allocation8 + $0x698] sm:$0xff]
          %v1771 = vld [vmem:[#allocation8 + $0x6a0] sm:$0xff]
          %v1772 = vld [vmem:[#allocation8 + $0x6a8] sm:$0xff]
          %v1773 = vld [vmem:[#allocation8 + $0x6b0] sm:$0xff]
          %v1774 = vld [vmem:[#allocation8 + $0x6b8] sm:$0xff]
          %v1775 = vld [vmem:[#allocation8 + $0x6c0] sm:$0xff]
          %v1776 = vld [vmem:[#allocation8 + $0x6c8] sm:$0xff]
          %v1777 = vld [vmem:[#allocation8 + $0x6d0] sm:$0xff]
          %v1778 = vld [vmem:[#allocation8 + $0x6d8] sm:$0xff]
          %v1779 = vld [vmem:[#allocation8 + $0x6e0] sm:$0xff]
          %v1780 = vld [vmem:[#allocation8 + $0x6e8] sm:$0xff]
          %v1781 = vld [vmem:[#allocation8 + $0x6f0] sm:$0xff]
          %v1782 = vld [vmem:[#allocation8 + $0x6f8] sm:$0xff]
          %v1783 = vld [vmem:[#allocation8 + $0x700] sm:$0xff]
          %v1784 = vld [vmem:[#allocation8 + $0x708] sm:$0xff]
          %v1785 = vld [vmem:[#allocation8 + $0x710] sm:$0xff]
          %v1786 = vld [vmem:[#allocation8 + $0x718] sm:$0xff]
          %v1787 = vld [vmem:[#allocation8 + $0x720] sm:$0xff]
          %v1788 = vld [vmem:[#allocation8 + $0x728] sm:$0xff]
          %v1789 = vld [vmem:[#allocation8 + $0x730] sm:$0xff]
          %v1790 = vld [vmem:[#allocation8 + $0x738] sm:$0xff]
          %v1791 = vld [vmem:[#allocation8 + $0x740] sm:$0xff]
          %v1792 = vld [vmem:[#allocation8 + $0x748] sm:$0xff]
          %v1793 = vld [vmem:[#allocation8 + $0x750] sm:$0xff]
          %v1794 = vld [vmem:[#allocation8 + $0x758] sm:$0xff]
          %v1795 = vld [vmem:[#allocation8 + $0x760] sm:$0xff]
          %v1796 = vld [vmem:[#allocation8 + $0x768] sm:$0xff]
          %v1797 = vld [vmem:[#allocation8 + $0x770] sm:$0xff]
          %v1798 = vld [vmem:[#allocation8 + $0x778] sm:$0xff]
          %v1799 = vld [vmem:[#allocation8 + $0x780] sm:$0xff]
          %v1800 = vld [vmem:[#allocation8 + $0x788] sm:$0xff]
          %v1801 = vld [vmem:[#allocation8 + $0x790] sm:$0xff]
          %v1802 = vld [vmem:[#allocation8 + $0x798] sm:$0xff]
          %v1803 = vld [vmem:[#allocation8 + $0x7a0] sm:$0xff]
          %v1804 = vld [vmem:[#allocation8 + $0x7a8] sm:$0xff]
          %v1805 = vld [vmem:[#allocation8 + $0x7b0] sm:$0xff]
          %v1806 = vld [vmem:[#allocation8 + $0x7b8] sm:$0xff]
          %v1807 = vld [vmem:[#allocation8 + $0x7c0] sm:$0xff]
          %v1808 = vld [vmem:[#allocation8 + $0x7c8] sm:$0xff]
          %v1809 = vld [vmem:[#allocation8 + $0x7d0] sm:$0xff]
          %v1810 = vld [vmem:[#allocation8 + $0x7d8] sm:$0xff]
          %v1811 = vld [vmem:[#allocation8 + $0x7e0] sm:$0xff]
          %v1812 = vld [vmem:[#allocation8 + $0x7e8] sm:$0xff]
          %v1813 = vld [vmem:[#allocation8 + $0x7f0] sm:$0xff]
          %v1814 = vld [vmem:[#allocation8 + $0x7f8] sm:$0xff]
          %v1815 = vld [vmem:[#allocation14 + $0x40] sm:$0xff]
          %v1816 = vld [vmem:[#allocation14 + $0x48] sm:$0xff]
          %v1817 = vld [vmem:[#allocation14 + $0x50] sm:$0xff]
          %v1818 = vld [vmem:[#allocation14 + $0x58] sm:$0xff]
          %v1819 = vlaneseq
          %v1820 = vshrl.u32 %v1819, 7
          %v1821 = vsub.s32 0, %v1820
          %v1822 = vrot.slane %v1815, %v1821
          %v1823 = vlaneseq
          %v1824 = vshrl.u32 %v1823, 7
          %v1825 = vsub.s32 0, %v1824
          %v1826 = vrot.slane %v1816, %v1825
          %v1827 = vlaneseq
          %v1828 = vshrl.u32 %v1827, 7
          %v1829 = vsub.s32 0, %v1828
          %v1830 = vrot.slane %v1817, %v1829
          %v1831 = vlaneseq
          %v1832 = vshrl.u32 %v1831, 7
          %v1833 = vsub.s32 0, %v1832
          %v1834 = vrot.slane %v1818, %v1833
          %v2091 = vunpack.c.l.b16 %v1559
          %v2092 = vunpack.c.h.b16 %v1559
          %v2093 = vunpack.c.l.b16 %v1560
          %v2094 = vunpack.c.h.b16 %v1560
          %v2095 = vunpack.c.l.b16 %v1561
          %v2096 = vunpack.c.h.b16 %v1561
          %v2097 = vunpack.c.l.b16 %v1562
          %v2098 = vunpack.c.h.b16 %v1562
          %v2099 = vunpack.c.l.b16 %v1563
          %v2100 = vunpack.c.h.b16 %v1563
          %v2101 = vunpack.c.l.b16 %v1564
          %v2102 = vunpack.c.h.b16 %v1564
          %v2103 = vunpack.c.l.b16 %v1565
          %v2104 = vunpack.c.h.b16 %v1565
          %v2105 = vunpack.c.l.b16 %v1566
          %v2106 = vunpack.c.h.b16 %v1566
          %v2107 = vunpack.c.l.b16 %v1567
          %v2108 = vunpack.c.h.b16 %v1567
          %v2109 = vunpack.c.l.b16 %v1568
          %v2110 = vunpack.c.h.b16 %v1568
          %v2111 = vunpack.c.l.b16 %v1569
          %v2112 = vunpack.c.h.b16 %v1569
          %v2113 = vunpack.c.l.b16 %v1570
          %v2114 = vunpack.c.h.b16 %v1570
          %v2115 = vunpack.c.l.b16 %v1571
          %v2116 = vunpack.c.h.b16 %v1571
          %v2117 = vunpack.c.l.b16 %v1572
          %v2118 = vunpack.c.h.b16 %v1572
          %v2119 = vunpack.c.l.b16 %v1573
          %v2120 = vunpack.c.h.b16 %v1573
          %v2121 = vunpack.c.l.b16 %v1574
          %v2122 = vunpack.c.h.b16 %v1574
          %v2123 = vunpack.c.l.b16 %v1575
          %v2124 = vunpack.c.h.b16 %v1575
          %v2125 = vunpack.c.l.b16 %v1576
          %v2126 = vunpack.c.h.b16 %v1576
          %v2127 = vunpack.c.l.b16 %v1577
          %v2128 = vunpack.c.h.b16 %v1577
          %v2129 = vunpack.c.l.b16 %v1578
          %v2130 = vunpack.c.h.b16 %v1578
          %v2131 = vunpack.c.l.b16 %v1579
          %v2132 = vunpack.c.h.b16 %v1579
          %v2133 = vunpack.c.l.b16 %v1580
          %v2134 = vunpack.c.h.b16 %v1580
          %v2135 = vunpack.c.l.b16 %v1581
          %v2136 = vunpack.c.h.b16 %v1581
          %v2137 = vunpack.c.l.b16 %v1582
          %v2138 = vunpack.c.h.b16 %v1582
          %v2139 = vunpack.c.l.b16 %v1583
          %v2140 = vunpack.c.h.b16 %v1583
          %v2141 = vunpack.c.l.b16 %v1584
          %v2142 = vunpack.c.h.b16 %v1584
          %v2143 = vunpack.c.l.b16 %v1585
          %v2144 = vunpack.c.h.b16 %v1585
          %v2145 = vunpack.c.l.b16 %v1586
          %v2146 = vunpack.c.h.b16 %v1586
          %v2147 = vunpack.c.l.b16 %v1587
          %v2148 = vunpack.c.h.b16 %v1587
          %v2149 = vunpack.c.l.b16 %v1588
          %v2150 = vunpack.c.h.b16 %v1588
          %v2151 = vunpack.c.l.b16 %v1589
          %v2152 = vunpack.c.h.b16 %v1589
          %v2153 = vunpack.c.l.b16 %v1590
          %v2154 = vunpack.c.h.b16 %v1590
          %v2155 = vunpack.c.l.b16 %v1591
          %v2156 = vunpack.c.h.b16 %v1591
          %v2157 = vunpack.c.l.b16 %v1592
          %v2158 = vunpack.c.h.b16 %v1592
          %v2159 = vunpack.c.l.b16 %v1593
          %v2160 = vunpack.c.h.b16 %v1593
          %v2161 = vunpack.c.l.b16 %v1594
          %v2162 = vunpack.c.h.b16 %v1594
          %v2163 = vunpack.c.l.b16 %v1595
          %v2164 = vunpack.c.h.b16 %v1595
          %v2165 = vunpack.c.l.b16 %v1596
          %v2166 = vunpack.c.h.b16 %v1596
          %v2167 = vunpack.c.l.b16 %v1597
          %v2168 = vunpack.c.h.b16 %v1597
          %v2169 = vunpack.c.l.b16 %v1598
          %v2170 = vunpack.c.h.b16 %v1598
          %v2171 = vunpack.c.l.b16 %v1599
          %v2172 = vunpack.c.h.b16 %v1599
          %v2173 = vunpack.c.l.b16 %v1600
          %v2174 = vunpack.c.h.b16 %v1600
          %v2175 = vunpack.c.l.b16 %v1601
          %v2176 = vunpack.c.h.b16 %v1601
          %v2177 = vunpack.c.l.b16 %v1602
          %v2178 = vunpack.c.h.b16 %v1602
          %v2179 = vunpack.c.l.b16 %v1603
          %v2180 = vunpack.c.h.b16 %v1603
          %v2181 = vunpack.c.l.b16 %v1604
          %v2182 = vunpack.c.h.b16 %v1604
          %v2183 = vunpack.c.l.b16 %v1605
          %v2184 = vunpack.c.h.b16 %v1605
          %v2185 = vunpack.c.l.b16 %v1606
          %v2186 = vunpack.c.h.b16 %v1606
          %v2187 = vunpack.c.l.b16 %v1607
          %v2188 = vunpack.c.h.b16 %v1607
          %v2189 = vunpack.c.l.b16 %v1608
          %v2190 = vunpack.c.h.b16 %v1608
          %v2191 = vunpack.c.l.b16 %v1609
          %v2192 = vunpack.c.h.b16 %v1609
          %v2193 = vunpack.c.l.b16 %v1610
          %v2194 = vunpack.c.h.b16 %v1610
          %v2195 = vunpack.c.l.b16 %v1611
          %v2196 = vunpack.c.h.b16 %v1611
          %v2197 = vunpack.c.l.b16 %v1612
          %v2198 = vunpack.c.h.b16 %v1612
          %v2199 = vunpack.c.l.b16 %v1613
          %v2200 = vunpack.c.h.b16 %v1613
          %v2201 = vunpack.c.l.b16 %v1614
          %v2202 = vunpack.c.h.b16 %v1614
          %v2203 = vunpack.c.l.b16 %v1615
          %v2204 = vunpack.c.h.b16 %v1615
          %v2205 = vunpack.c.l.b16 %v1616
          %v2206 = vunpack.c.h.b16 %v1616
          %v2207 = vunpack.c.l.b16 %v1617
          %v2208 = vunpack.c.h.b16 %v1617
          %v2209 = vunpack.c.l.b16 %v1618
          %v2210 = vunpack.c.h.b16 %v1618
          %v2211 = vunpack.c.l.b16 %v1619
          %v2212 = vunpack.c.h.b16 %v1619
          %v2213 = vunpack.c.l.b16 %v1620
          %v2214 = vunpack.c.h.b16 %v1620
          %v2215 = vunpack.c.l.b16 %v1621
          %v2216 = vunpack.c.h.b16 %v1621
          %v2217 = vunpack.c.l.b16 %v1622
          %v2218 = vunpack.c.h.b16 %v1622
          %v2219 = vunpack.c.l.b16 %v1623
          %v2220 = vunpack.c.h.b16 %v1623
          %v2221 = vunpack.c.l.b16 %v1624
          %v2222 = vunpack.c.h.b16 %v1624
          %v2223 = vunpack.c.l.b16 %v1625
          %v2224 = vunpack.c.h.b16 %v1625
          %v2225 = vunpack.c.l.b16 %v1626
          %v2226 = vunpack.c.h.b16 %v1626
          %v2227 = vunpack.c.l.b16 %v1627
          %v2228 = vunpack.c.h.b16 %v1627
          %v2229 = vunpack.c.l.b16 %v1628
          %v2230 = vunpack.c.h.b16 %v1628
          %v2231 = vunpack.c.l.b16 %v1629
          %v2232 = vunpack.c.h.b16 %v1629
          %v2233 = vunpack.c.l.b16 %v1630
          %v2234 = vunpack.c.h.b16 %v1630
          %v2235 = vunpack.c.l.b16 %v1631
          %v2236 = vunpack.c.h.b16 %v1631
          %v2237 = vunpack.c.l.b16 %v1632
          %v2238 = vunpack.c.h.b16 %v1632
          %v2239 = vunpack.c.l.b16 %v1633
          %v2240 = vunpack.c.h.b16 %v1633
          %v2241 = vunpack.c.l.b16 %v1634
          %v2242 = vunpack.c.h.b16 %v1634
          %v2243 = vunpack.c.l.b16 %v1635
          %v2244 = vunpack.c.h.b16 %v1635
          %v2245 = vunpack.c.l.b16 %v1636
          %v2246 = vunpack.c.h.b16 %v1636
          %v2247 = vunpack.c.l.b16 %v1637
          %v2248 = vunpack.c.h.b16 %v1637
          %v2249 = vunpack.c.l.b16 %v1638
          %v2250 = vunpack.c.h.b16 %v1638
          %v2251 = vunpack.c.l.b16 %v1639
          %v2252 = vunpack.c.h.b16 %v1639
          %v2253 = vunpack.c.l.b16 %v1640
          %v2254 = vunpack.c.h.b16 %v1640
          %v2255 = vunpack.c.l.b16 %v1641
          %v2256 = vunpack.c.h.b16 %v1641
          %v2257 = vunpack.c.l.b16 %v1642
          %v2258 = vunpack.c.h.b16 %v1642
          %v2259 = vunpack.c.l.b16 %v1643
          %v2260 = vunpack.c.h.b16 %v1643
          %v2261 = vunpack.c.l.b16 %v1644
          %v2262 = vunpack.c.h.b16 %v1644
          %v2263 = vunpack.c.l.b16 %v1645
          %v2264 = vunpack.c.h.b16 %v1645
          %v2265 = vunpack.c.l.b16 %v1646
          %v2266 = vunpack.c.h.b16 %v1646
          %v2267 = vunpack.c.l.b16 %v1647
          %v2268 = vunpack.c.h.b16 %v1647
          %v2269 = vunpack.c.l.b16 %v1648
          %v2270 = vunpack.c.h.b16 %v1648
          %v2271 = vunpack.c.l.b16 %v1649
          %v2272 = vunpack.c.h.b16 %v1649
          %v2273 = vunpack.c.l.b16 %v1650
          %v2274 = vunpack.c.h.b16 %v1650
          %v2275 = vunpack.c.l.b16 %v1651
          %v2276 = vunpack.c.h.b16 %v1651
          %v2277 = vunpack.c.l.b16 %v1652
          %v2278 = vunpack.c.h.b16 %v1652
          %v2279 = vunpack.c.l.b16 %v1653
          %v2280 = vunpack.c.h.b16 %v1653
          %v2281 = vunpack.c.l.b16 %v1654
          %v2282 = vunpack.c.h.b16 %v1654
          %v2283 = vunpack.c.l.b16 %v1655
          %v2284 = vunpack.c.h.b16 %v1655
          %v2285 = vunpack.c.l.b16 %v1656
          %v2286 = vunpack.c.h.b16 %v1656
          %v2287 = vunpack.c.l.b16 %v1657
          %v2288 = vunpack.c.h.b16 %v1657
          %v2289 = vunpack.c.l.b16 %v1658
          %v2290 = vunpack.c.h.b16 %v1658
          %v2291 = vunpack.c.l.b16 %v1659
          %v2292 = vunpack.c.h.b16 %v1659
          %v2293 = vunpack.c.l.b16 %v1660
          %v2294 = vunpack.c.h.b16 %v1660
          %v2295 = vunpack.c.l.b16 %v1661
          %v2296 = vunpack.c.h.b16 %v1661
          %v2297 = vunpack.c.l.b16 %v1662
          %v2298 = vunpack.c.h.b16 %v1662
          %v2299 = vunpack.c.l.b16 %v1663
          %v2300 = vunpack.c.h.b16 %v1663
          %v2301 = vunpack.c.l.b16 %v1664
          %v2302 = vunpack.c.h.b16 %v1664
          %v2303 = vunpack.c.l.b16 %v1665
          %v2304 = vunpack.c.h.b16 %v1665
          %v2305 = vunpack.c.l.b16 %v1666
          %v2306 = vunpack.c.h.b16 %v1666
          %v2307 = vunpack.c.l.b16 %v1667
          %v2308 = vunpack.c.h.b16 %v1667
          %v2309 = vunpack.c.l.b16 %v1668
          %v2310 = vunpack.c.h.b16 %v1668
          %v2311 = vunpack.c.l.b16 %v1669
          %v2312 = vunpack.c.h.b16 %v1669
          %v2313 = vunpack.c.l.b16 %v1670
          %v2314 = vunpack.c.h.b16 %v1670
          %v2315 = vunpack.c.l.b16 %v1671
          %v2316 = vunpack.c.h.b16 %v1671
          %v2317 = vunpack.c.l.b16 %v1672
          %v2318 = vunpack.c.h.b16 %v1672
          %v2319 = vunpack.c.l.b16 %v1673
          %v2320 = vunpack.c.h.b16 %v1673
          %v2321 = vunpack.c.l.b16 %v1674
          %v2322 = vunpack.c.h.b16 %v1674
          %v2323 = vunpack.c.l.b16 %v1675
          %v2324 = vunpack.c.h.b16 %v1675
          %v2325 = vunpack.c.l.b16 %v1676
          %v2326 = vunpack.c.h.b16 %v1676
          %v2327 = vunpack.c.l.b16 %v1677
          %v2328 = vunpack.c.h.b16 %v1677
          %v2329 = vunpack.c.l.b16 %v1678
          %v2330 = vunpack.c.h.b16 %v1678
          %v2331 = vunpack.c.l.b16 %v1679
          %v2332 = vunpack.c.h.b16 %v1679
          %v2333 = vunpack.c.l.b16 %v1680
          %v2334 = vunpack.c.h.b16 %v1680
          %v2335 = vunpack.c.l.b16 %v1681
          %v2336 = vunpack.c.h.b16 %v1681
          %v2337 = vunpack.c.l.b16 %v1682
          %v2338 = vunpack.c.h.b16 %v1682
          %v2339 = vunpack.c.l.b16 %v1683
          %v2340 = vunpack.c.h.b16 %v1683
          %v2341 = vunpack.c.l.b16 %v1684
          %v2342 = vunpack.c.h.b16 %v1684
          %v2343 = vunpack.c.l.b16 %v1685
          %v2344 = vunpack.c.h.b16 %v1685
          %v2345 = vunpack.c.l.b16 %v1686
          %v2346 = vunpack.c.h.b16 %v1686
          %v2347 = vunpack.c.l.b16 %v1687
          %v2348 = vunpack.c.h.b16 %v1687
          %v2349 = vunpack.c.l.b16 %v1688
          %v2350 = vunpack.c.h.b16 %v1688
          %v2351 = vunpack.c.l.b16 %v1689
          %v2352 = vunpack.c.h.b16 %v1689
          %v2353 = vunpack.c.l.b16 %v1690
          %v2354 = vunpack.c.h.b16 %v1690
          %v2355 = vunpack.c.l.b16 %v1691
          %v2356 = vunpack.c.h.b16 %v1691
          %v2357 = vunpack.c.l.b16 %v1692
          %v2358 = vunpack.c.h.b16 %v1692
          %v2359 = vunpack.c.l.b16 %v1693
          %v2360 = vunpack.c.h.b16 %v1693
          %v2361 = vunpack.c.l.b16 %v1694
          %v2362 = vunpack.c.h.b16 %v1694
          %v2363 = vunpack.c.l.b16 %v1695
          %v2364 = vunpack.c.h.b16 %v1695
          %v2365 = vunpack.c.l.b16 %v1696
          %v2366 = vunpack.c.h.b16 %v1696
          %v2367 = vunpack.c.l.b16 %v1697
          %v2368 = vunpack.c.h.b16 %v1697
          %v2369 = vunpack.c.l.b16 %v1698
          %v2370 = vunpack.c.h.b16 %v1698
          %v2371 = vunpack.c.l.b16 %v1699
          %v2372 = vunpack.c.h.b16 %v1699
          %v2373 = vunpack.c.l.b16 %v1700
          %v2374 = vunpack.c.h.b16 %v1700
          %v2375 = vunpack.c.l.b16 %v1701
          %v2376 = vunpack.c.h.b16 %v1701
          %v2377 = vunpack.c.l.b16 %v1702
          %v2378 = vunpack.c.h.b16 %v1702
          %v2379 = vunpack.c.l.b16 %v1703
          %v2380 = vunpack.c.h.b16 %v1703
          %v2381 = vunpack.c.l.b16 %v1704
          %v2382 = vunpack.c.h.b16 %v1704
          %v2383 = vunpack.c.l.b16 %v1705
          %v2384 = vunpack.c.h.b16 %v1705
          %v2385 = vunpack.c.l.b16 %v1706
          %v2386 = vunpack.c.h.b16 %v1706
          %v2387 = vunpack.c.l.b16 %v1707
          %v2388 = vunpack.c.h.b16 %v1707
          %v2389 = vunpack.c.l.b16 %v1708
          %v2390 = vunpack.c.h.b16 %v1708
          %v2391 = vunpack.c.l.b16 %v1709
          %v2392 = vunpack.c.h.b16 %v1709
          %v2393 = vunpack.c.l.b16 %v1710
          %v2394 = vunpack.c.h.b16 %v1710
          %v2395 = vunpack.c.l.b16 %v1711
          %v2396 = vunpack.c.h.b16 %v1711
          %v2397 = vunpack.c.l.b16 %v1712
          %v2398 = vunpack.c.h.b16 %v1712
          %v2399 = vunpack.c.l.b16 %v1713
          %v2400 = vunpack.c.h.b16 %v1713
          %v2401 = vunpack.c.l.b16 %v1714
          %v2402 = vunpack.c.h.b16 %v1714
          %v2403 = vunpack.c.l.b16 %v1715
          %v2404 = vunpack.c.h.b16 %v1715
          %v2405 = vunpack.c.l.b16 %v1716
          %v2406 = vunpack.c.h.b16 %v1716
          %v2407 = vunpack.c.l.b16 %v1717
          %v2408 = vunpack.c.h.b16 %v1717
          %v2409 = vunpack.c.l.b16 %v1718
          %v2410 = vunpack.c.h.b16 %v1718
          %v2411 = vunpack.c.l.b16 %v1719
          %v2412 = vunpack.c.h.b16 %v1719
          %v2413 = vunpack.c.l.b16 %v1720
          %v2414 = vunpack.c.h.b16 %v1720
          %v2415 = vunpack.c.l.b16 %v1721
          %v2416 = vunpack.c.h.b16 %v1721
          %v2417 = vunpack.c.l.b16 %v1722
          %v2418 = vunpack.c.h.b16 %v1722
          %v2419 = vunpack.c.l.b16 %v1723
          %v2420 = vunpack.c.h.b16 %v1723
          %v2421 = vunpack.c.l.b16 %v1724
          %v2422 = vunpack.c.h.b16 %v1724
          %v2423 = vunpack.c.l.b16 %v1725
          %v2424 = vunpack.c.h.b16 %v1725
          %v2425 = vunpack.c.l.b16 %v1726
          %v2426 = vunpack.c.h.b16 %v1726
          %v2427 = vunpack.c.l.b16 %v1727
          %v2428 = vunpack.c.h.b16 %v1727
          %v2429 = vunpack.c.l.b16 %v1728
          %v2430 = vunpack.c.h.b16 %v1728
          %v2431 = vunpack.c.l.b16 %v1729
          %v2432 = vunpack.c.h.b16 %v1729
          %v2433 = vunpack.c.l.b16 %v1730
          %v2434 = vunpack.c.h.b16 %v1730
          %v2435 = vunpack.c.l.b16 %v1731
          %v2436 = vunpack.c.h.b16 %v1731
          %v2437 = vunpack.c.l.b16 %v1732
          %v2438 = vunpack.c.h.b16 %v1732
          %v2439 = vunpack.c.l.b16 %v1733
          %v2440 = vunpack.c.h.b16 %v1733
          %v2441 = vunpack.c.l.b16 %v1734
          %v2442 = vunpack.c.h.b16 %v1734
          %v2443 = vunpack.c.l.b16 %v1735
          %v2444 = vunpack.c.h.b16 %v1735
          %v2445 = vunpack.c.l.b16 %v1736
          %v2446 = vunpack.c.h.b16 %v1736
          %v2447 = vunpack.c.l.b16 %v1737
          %v2448 = vunpack.c.h.b16 %v1737
          %v2449 = vunpack.c.l.b16 %v1738
          %v2450 = vunpack.c.h.b16 %v1738
          %v2451 = vunpack.c.l.b16 %v1739
          %v2452 = vunpack.c.h.b16 %v1739
          %v2453 = vunpack.c.l.b16 %v1740
          %v2454 = vunpack.c.h.b16 %v1740
          %v2455 = vunpack.c.l.b16 %v1741
          %v2456 = vunpack.c.h.b16 %v1741
          %v2457 = vunpack.c.l.b16 %v1742
          %v2458 = vunpack.c.h.b16 %v1742
          %v2459 = vunpack.c.l.b16 %v1743
          %v2460 = vunpack.c.h.b16 %v1743
          %v2461 = vunpack.c.l.b16 %v1744
          %v2462 = vunpack.c.h.b16 %v1744
          %v2463 = vunpack.c.l.b16 %v1745
          %v2464 = vunpack.c.h.b16 %v1745
          %v2465 = vunpack.c.l.b16 %v1746
          %v2466 = vunpack.c.h.b16 %v1746
          %v2467 = vunpack.c.l.b16 %v1747
          %v2468 = vunpack.c.h.b16 %v1747
          %v2469 = vunpack.c.l.b16 %v1748
          %v2470 = vunpack.c.h.b16 %v1748
          %v2471 = vunpack.c.l.b16 %v1749
          %v2472 = vunpack.c.h.b16 %v1749
          %v2473 = vunpack.c.l.b16 %v1750
          %v2474 = vunpack.c.h.b16 %v1750
          %v2475 = vunpack.c.l.b16 %v1751
          %v2476 = vunpack.c.h.b16 %v1751
          %v2477 = vunpack.c.l.b16 %v1752
          %v2478 = vunpack.c.h.b16 %v1752
          %v2479 = vunpack.c.l.b16 %v1753
          %v2480 = vunpack.c.h.b16 %v1753
          %v2481 = vunpack.c.l.b16 %v1754
          %v2482 = vunpack.c.h.b16 %v1754
          %v2483 = vunpack.c.l.b16 %v1755
          %v2484 = vunpack.c.h.b16 %v1755
          %v2485 = vunpack.c.l.b16 %v1756
          %v2486 = vunpack.c.h.b16 %v1756
          %v2487 = vunpack.c.l.b16 %v1757
          %v2488 = vunpack.c.h.b16 %v1757
          %v2489 = vunpack.c.l.b16 %v1758
          %v2490 = vunpack.c.h.b16 %v1758
          %v2491 = vunpack.c.l.b16 %v1759
          %v2492 = vunpack.c.h.b16 %v1759
          %v2493 = vunpack.c.l.b16 %v1760
          %v2494 = vunpack.c.h.b16 %v1760
          %v2495 = vunpack.c.l.b16 %v1761
          %v2496 = vunpack.c.h.b16 %v1761
          %v2497 = vunpack.c.l.b16 %v1762
          %v2498 = vunpack.c.h.b16 %v1762
          %v2499 = vunpack.c.l.b16 %v1763
          %v2500 = vunpack.c.h.b16 %v1763
          %v2501 = vunpack.c.l.b16 %v1764
          %v2502 = vunpack.c.h.b16 %v1764
          %v2503 = vunpack.c.l.b16 %v1765
          %v2504 = vunpack.c.h.b16 %v1765
          %v2505 = vunpack.c.l.b16 %v1766
          %v2506 = vunpack.c.h.b16 %v1766
          %v2507 = vunpack.c.l.b16 %v1767
          %v2508 = vunpack.c.h.b16 %v1767
          %v2509 = vunpack.c.l.b16 %v1768
          %v2510 = vunpack.c.h.b16 %v1768
          %v2511 = vunpack.c.l.b16 %v1769
          %v2512 = vunpack.c.h.b16 %v1769
          %v2513 = vunpack.c.l.b16 %v1770
          %v2514 = vunpack.c.h.b16 %v1770
          %v2515 = vunpack.c.l.b16 %v1771
          %v2516 = vunpack.c.h.b16 %v1771
          %v2517 = vunpack.c.l.b16 %v1772
          %v2518 = vunpack.c.h.b16 %v1772
          %v2519 = vunpack.c.l.b16 %v1773
          %v2520 = vunpack.c.h.b16 %v1773
          %v2521 = vunpack.c.l.b16 %v1774
          %v2522 = vunpack.c.h.b16 %v1774
          %v2523 = vunpack.c.l.b16 %v1775
          %v2524 = vunpack.c.h.b16 %v1775
          %v2525 = vunpack.c.l.b16 %v1776
          %v2526 = vunpack.c.h.b16 %v1776
          %v2527 = vunpack.c.l.b16 %v1777
          %v2528 = vunpack.c.h.b16 %v1777
          %v2529 = vunpack.c.l.b16 %v1778
          %v2530 = vunpack.c.h.b16 %v1778
          %v2531 = vunpack.c.l.b16 %v1779
          %v2532 = vunpack.c.h.b16 %v1779
          %v2533 = vunpack.c.l.b16 %v1780
          %v2534 = vunpack.c.h.b16 %v1780
          %v2535 = vunpack.c.l.b16 %v1781
          %v2536 = vunpack.c.h.b16 %v1781
          %v2537 = vunpack.c.l.b16 %v1782
          %v2538 = vunpack.c.h.b16 %v1782
          %v2539 = vunpack.c.l.b16 %v1783
          %v2540 = vunpack.c.h.b16 %v1783
          %v2541 = vunpack.c.l.b16 %v1784
          %v2542 = vunpack.c.h.b16 %v1784
          %v2543 = vunpack.c.l.b16 %v1785
          %v2544 = vunpack.c.h.b16 %v1785
          %v2545 = vunpack.c.l.b16 %v1786
          %v2546 = vunpack.c.h.b16 %v1786
          %v2547 = vunpack.c.l.b16 %v1787
          %v2548 = vunpack.c.h.b16 %v1787
          %v2549 = vunpack.c.l.b16 %v1788
          %v2550 = vunpack.c.h.b16 %v1788
          %v2551 = vunpack.c.l.b16 %v1789
          %v2552 = vunpack.c.h.b16 %v1789
          %v2553 = vunpack.c.l.b16 %v1790
          %v2554 = vunpack.c.h.b16 %v1790
          %v2555 = vunpack.c.l.b16 %v1791
          %v2556 = vunpack.c.h.b16 %v1791
          %v2557 = vunpack.c.l.b16 %v1792
          %v2558 = vunpack.c.h.b16 %v1792
          %v2559 = vunpack.c.l.b16 %v1793
          %v2560 = vunpack.c.h.b16 %v1793
          %v2561 = vunpack.c.l.b16 %v1794
          %v2562 = vunpack.c.h.b16 %v1794
          %v2563 = vunpack.c.l.b16 %v1795
          %v2564 = vunpack.c.h.b16 %v1795
          %v2565 = vunpack.c.l.b16 %v1796
          %v2566 = vunpack.c.h.b16 %v1796
          %v2567 = vunpack.c.l.b16 %v1797
          %v2568 = vunpack.c.h.b16 %v1797
          %v2569 = vunpack.c.l.b16 %v1798
          %v2570 = vunpack.c.h.b16 %v1798
          %v2571 = vunpack.c.l.b16 %v1799
          %v2572 = vunpack.c.h.b16 %v1799
          %v2573 = vunpack.c.l.b16 %v1800
          %v2574 = vunpack.c.h.b16 %v1800
          %v2575 = vunpack.c.l.b16 %v1801
          %v2576 = vunpack.c.h.b16 %v1801
          %v2577 = vunpack.c.l.b16 %v1802
          %v2578 = vunpack.c.h.b16 %v1802
          %v2579 = vunpack.c.l.b16 %v1803
          %v2580 = vunpack.c.h.b16 %v1803
          %v2581 = vunpack.c.l.b16 %v1804
          %v2582 = vunpack.c.h.b16 %v1804
          %v2583 = vunpack.c.l.b16 %v1805
          %v2584 = vunpack.c.h.b16 %v1805
          %v2585 = vunpack.c.l.b16 %v1806
          %v2586 = vunpack.c.h.b16 %v1806
          %v2587 = vunpack.c.l.b16 %v1807
          %v2588 = vunpack.c.h.b16 %v1807
          %v2589 = vunpack.c.l.b16 %v1808
          %v2590 = vunpack.c.h.b16 %v1808
          %v2591 = vunpack.c.l.b16 %v1809
          %v2592 = vunpack.c.h.b16 %v1809
          %v2593 = vunpack.c.l.b16 %v1810
          %v2594 = vunpack.c.h.b16 %v1810
          %v2595 = vunpack.c.l.b16 %v1811
          %v2596 = vunpack.c.h.b16 %v1811
          %v2597 = vunpack.c.l.b16 %v1812
          %v2598 = vunpack.c.h.b16 %v1812
          %v2599 = vunpack.c.l.b16 %v1813
          %v2600 = vunpack.c.h.b16 %v1813
          %v2601 = vunpack.c.l.b16 %v1814
          %v2602 = vunpack.c.h.b16 %v1814
          %v2603 = vpack.c.b16 %v2095, %v2091
          %v2604 = vpack.c.b16 %v2096, %v2092
          %v2605 = vpack.c.b16 %v2097, %v2093
          %v2606 = vpack.c.b16 %v2098, %v2094
          %v2607 = vpack.c.b16 %v2103, %v2099
          %v2608 = vpack.c.b16 %v2104, %v2100
          %v2609 = vpack.c.b16 %v2105, %v2101
          %v2610 = vpack.c.b16 %v2106, %v2102
          %v2611 = vpack.c.b16 %v2111, %v2107
          %v2612 = vpack.c.b16 %v2112, %v2108
          %v2613 = vpack.c.b16 %v2113, %v2109
          %v2614 = vpack.c.b16 %v2114, %v2110
          %v2615 = vpack.c.b16 %v2119, %v2115
          %v2616 = vpack.c.b16 %v2120, %v2116
          %v2617 = vpack.c.b16 %v2121, %v2117
          %v2618 = vpack.c.b16 %v2122, %v2118
          %v2619 = vpack.c.b16 %v2127, %v2123
          %v2620 = vpack.c.b16 %v2128, %v2124
          %v2621 = vpack.c.b16 %v2129, %v2125
          %v2622 = vpack.c.b16 %v2130, %v2126
          %v2623 = vpack.c.b16 %v2135, %v2131
          %v2624 = vpack.c.b16 %v2136, %v2132
          %v2625 = vpack.c.b16 %v2137, %v2133
          %v2626 = vpack.c.b16 %v2138, %v2134
          %v2627 = vpack.c.b16 %v2143, %v2139
          %v2628 = vpack.c.b16 %v2144, %v2140
          %v2629 = vpack.c.b16 %v2145, %v2141
          %v2630 = vpack.c.b16 %v2146, %v2142
          %v2631 = vpack.c.b16 %v2151, %v2147
          %v2632 = vpack.c.b16 %v2152, %v2148
          %v2633 = vpack.c.b16 %v2153, %v2149
          %v2634 = vpack.c.b16 %v2154, %v2150
          %v2635 = vpack.c.b16 %v2159, %v2155
          %v2636 = vpack.c.b16 %v2160, %v2156
          %v2637 = vpack.c.b16 %v2161, %v2157
          %v2638 = vpack.c.b16 %v2162, %v2158
          %v2639 = vpack.c.b16 %v2167, %v2163
          %v2640 = vpack.c.b16 %v2168, %v2164
          %v2641 = vpack.c.b16 %v2169, %v2165
          %v2642 = vpack.c.b16 %v2170, %v2166
          %v2643 = vpack.c.b16 %v2175, %v2171
          %v2644 = vpack.c.b16 %v2176, %v2172
          %v2645 = vpack.c.b16 %v2177, %v2173
          %v2646 = vpack.c.b16 %v2178, %v2174
          %v2647 = vpack.c.b16 %v2183, %v2179
          %v2648 = vpack.c.b16 %v2184, %v2180
          %v2649 = vpack.c.b16 %v2185, %v2181
          %v2650 = vpack.c.b16 %v2186, %v2182
          %v2651 = vpack.c.b16 %v2191, %v2187
          %v2652 = vpack.c.b16 %v2192, %v2188
          %v2653 = vpack.c.b16 %v2193, %v2189
          %v2654 = vpack.c.b16 %v2194, %v2190
          %v2655 = vpack.c.b16 %v2199, %v2195
          %v2656 = vpack.c.b16 %v2200, %v2196
          %v2657 = vpack.c.b16 %v2201, %v2197
          %v2658 = vpack.c.b16 %v2202, %v2198
          %v2659 = vpack.c.b16 %v2207, %v2203
          %v2660 = vpack.c.b16 %v2208, %v2204
          %v2661 = vpack.c.b16 %v2209, %v2205
          %v2662 = vpack.c.b16 %v2210, %v2206
          %v2663 = vpack.c.b16 %v2215, %v2211
          %v2664 = vpack.c.b16 %v2216, %v2212
          %v2665 = vpack.c.b16 %v2217, %v2213
          %v2666 = vpack.c.b16 %v2218, %v2214
          %v2667 = vpack.c.b16 %v2223, %v2219
          %v2668 = vpack.c.b16 %v2224, %v2220
          %v2669 = vpack.c.b16 %v2225, %v2221
          %v2670 = vpack.c.b16 %v2226, %v2222
          %v2671 = vpack.c.b16 %v2231, %v2227
          %v2672 = vpack.c.b16 %v2232, %v2228
          %v2673 = vpack.c.b16 %v2233, %v2229
          %v2674 = vpack.c.b16 %v2234, %v2230
          %v2675 = vpack.c.b16 %v2239, %v2235
          %v2676 = vpack.c.b16 %v2240, %v2236
          %v2677 = vpack.c.b16 %v2241, %v2237
          %v2678 = vpack.c.b16 %v2242, %v2238
          %v2679 = vpack.c.b16 %v2247, %v2243
          %v2680 = vpack.c.b16 %v2248, %v2244
          %v2681 = vpack.c.b16 %v2249, %v2245
          %v2682 = vpack.c.b16 %v2250, %v2246
          %v2683 = vpack.c.b16 %v2255, %v2251
          %v2684 = vpack.c.b16 %v2256, %v2252
          %v2685 = vpack.c.b16 %v2257, %v2253
          %v2686 = vpack.c.b16 %v2258, %v2254
          %v2687 = vpack.c.b16 %v2263, %v2259
          %v2688 = vpack.c.b16 %v2264, %v2260
          %v2689 = vpack.c.b16 %v2265, %v2261
          %v2690 = vpack.c.b16 %v2266, %v2262
          %v2691 = vpack.c.b16 %v2271, %v2267
          %v2692 = vpack.c.b16 %v2272, %v2268
          %v2693 = vpack.c.b16 %v2273, %v2269
          %v2694 = vpack.c.b16 %v2274, %v2270
          %v2695 = vpack.c.b16 %v2279, %v2275
          %v2696 = vpack.c.b16 %v2280, %v2276
          %v2697 = vpack.c.b16 %v2281, %v2277
          %v2698 = vpack.c.b16 %v2282, %v2278
          %v2699 = vpack.c.b16 %v2287, %v2283
          %v2700 = vpack.c.b16 %v2288, %v2284
          %v2701 = vpack.c.b16 %v2289, %v2285
          %v2702 = vpack.c.b16 %v2290, %v2286
          %v2703 = vpack.c.b16 %v2295, %v2291
          %v2704 = vpack.c.b16 %v2296, %v2292
          %v2705 = vpack.c.b16 %v2297, %v2293
          %v2706 = vpack.c.b16 %v2298, %v2294
          %v2707 = vpack.c.b16 %v2303, %v2299
          %v2708 = vpack.c.b16 %v2304, %v2300
          %v2709 = vpack.c.b16 %v2305, %v2301
          %v2710 = vpack.c.b16 %v2306, %v2302
          %v2711 = vpack.c.b16 %v2311, %v2307
          %v2712 = vpack.c.b16 %v2312, %v2308
          %v2713 = vpack.c.b16 %v2313, %v2309
          %v2714 = vpack.c.b16 %v2314, %v2310
          %v2715 = vpack.c.b16 %v2319, %v2315
          %v2716 = vpack.c.b16 %v2320, %v2316
          %v2717 = vpack.c.b16 %v2321, %v2317
          %v2718 = vpack.c.b16 %v2322, %v2318
          %v2719 = vpack.c.b16 %v2327, %v2323
          %v2720 = vpack.c.b16 %v2328, %v2324
          %v2721 = vpack.c.b16 %v2329, %v2325
          %v2722 = vpack.c.b16 %v2330, %v2326
          %v2723 = vpack.c.b16 %v2335, %v2331
          %v2724 = vpack.c.b16 %v2336, %v2332
          %v2725 = vpack.c.b16 %v2337, %v2333
          %v2726 = vpack.c.b16 %v2338, %v2334
          %v2727 = vpack.c.b16 %v2343, %v2339
          %v2728 = vpack.c.b16 %v2344, %v2340
          %v2729 = vpack.c.b16 %v2345, %v2341
          %v2730 = vpack.c.b16 %v2346, %v2342
          %v2731 = vpack.c.b16 %v2351, %v2347
          %v2732 = vpack.c.b16 %v2352, %v2348
          %v2733 = vpack.c.b16 %v2353, %v2349
          %v2734 = vpack.c.b16 %v2354, %v2350
          %v2735 = vpack.c.b16 %v2359, %v2355
          %v2736 = vpack.c.b16 %v2360, %v2356
          %v2737 = vpack.c.b16 %v2361, %v2357
          %v2738 = vpack.c.b16 %v2362, %v2358
          %v2739 = vpack.c.b16 %v2367, %v2363
          %v2740 = vpack.c.b16 %v2368, %v2364
          %v2741 = vpack.c.b16 %v2369, %v2365
          %v2742 = vpack.c.b16 %v2370, %v2366
          %v2743 = vpack.c.b16 %v2375, %v2371
          %v2744 = vpack.c.b16 %v2376, %v2372
          %v2745 = vpack.c.b16 %v2377, %v2373
          %v2746 = vpack.c.b16 %v2378, %v2374
          %v2747 = vpack.c.b16 %v2383, %v2379
          %v2748 = vpack.c.b16 %v2384, %v2380
          %v2749 = vpack.c.b16 %v2385, %v2381
          %v2750 = vpack.c.b16 %v2386, %v2382
          %v2751 = vpack.c.b16 %v2391, %v2387
          %v2752 = vpack.c.b16 %v2392, %v2388
          %v2753 = vpack.c.b16 %v2393, %v2389
          %v2754 = vpack.c.b16 %v2394, %v2390
          %v2755 = vpack.c.b16 %v2399, %v2395
          %v2756 = vpack.c.b16 %v2400, %v2396
          %v2757 = vpack.c.b16 %v2401, %v2397
          %v2758 = vpack.c.b16 %v2402, %v2398
          %v2759 = vpack.c.b16 %v2407, %v2403
          %v2760 = vpack.c.b16 %v2408, %v2404
          %v2761 = vpack.c.b16 %v2409, %v2405
          %v2762 = vpack.c.b16 %v2410, %v2406
          %v2763 = vpack.c.b16 %v2415, %v2411
          %v2764 = vpack.c.b16 %v2416, %v2412
          %v2765 = vpack.c.b16 %v2417, %v2413
          %v2766 = vpack.c.b16 %v2418, %v2414
          %v2767 = vpack.c.b16 %v2423, %v2419
          %v2768 = vpack.c.b16 %v2424, %v2420
          %v2769 = vpack.c.b16 %v2425, %v2421
          %v2770 = vpack.c.b16 %v2426, %v2422
          %v2771 = vpack.c.b16 %v2431, %v2427
          %v2772 = vpack.c.b16 %v2432, %v2428
          %v2773 = vpack.c.b16 %v2433, %v2429
          %v2774 = vpack.c.b16 %v2434, %v2430
          %v2775 = vpack.c.b16 %v2439, %v2435
          %v2776 = vpack.c.b16 %v2440, %v2436
          %v2777 = vpack.c.b16 %v2441, %v2437
          %v2778 = vpack.c.b16 %v2442, %v2438
          %v2779 = vpack.c.b16 %v2447, %v2443
          %v2780 = vpack.c.b16 %v2448, %v2444
          %v2781 = vpack.c.b16 %v2449, %v2445
          %v2782 = vpack.c.b16 %v2450, %v2446
          %v2783 = vpack.c.b16 %v2455, %v2451
          %v2784 = vpack.c.b16 %v2456, %v2452
          %v2785 = vpack.c.b16 %v2457, %v2453
          %v2786 = vpack.c.b16 %v2458, %v2454
          %v2787 = vpack.c.b16 %v2463, %v2459
          %v2788 = vpack.c.b16 %v2464, %v2460
          %v2789 = vpack.c.b16 %v2465, %v2461
          %v2790 = vpack.c.b16 %v2466, %v2462
          %v2791 = vpack.c.b16 %v2471, %v2467
          %v2792 = vpack.c.b16 %v2472, %v2468
          %v2793 = vpack.c.b16 %v2473, %v2469
          %v2794 = vpack.c.b16 %v2474, %v2470
          %v2795 = vpack.c.b16 %v2479, %v2475
          %v2796 = vpack.c.b16 %v2480, %v2476
          %v2797 = vpack.c.b16 %v2481, %v2477
          %v2798 = vpack.c.b16 %v2482, %v2478
          %v2799 = vpack.c.b16 %v2487, %v2483
          %v2800 = vpack.c.b16 %v2488, %v2484
          %v2801 = vpack.c.b16 %v2489, %v2485
          %v2802 = vpack.c.b16 %v2490, %v2486
          %v2803 = vpack.c.b16 %v2495, %v2491
          %v2804 = vpack.c.b16 %v2496, %v2492
          %v2805 = vpack.c.b16 %v2497, %v2493
          %v2806 = vpack.c.b16 %v2498, %v2494
          %v2807 = vpack.c.b16 %v2503, %v2499
          %v2808 = vpack.c.b16 %v2504, %v2500
          %v2809 = vpack.c.b16 %v2505, %v2501
          %v2810 = vpack.c.b16 %v2506, %v2502
          %v2811 = vpack.c.b16 %v2511, %v2507
          %v2812 = vpack.c.b16 %v2512, %v2508
          %v2813 = vpack.c.b16 %v2513, %v2509
          %v2814 = vpack.c.b16 %v2514, %v2510
          %v2815 = vpack.c.b16 %v2519, %v2515
          %v2816 = vpack.c.b16 %v2520, %v2516
          %v2817 = vpack.c.b16 %v2521, %v2517
          %v2818 = vpack.c.b16 %v2522, %v2518
          %v2819 = vpack.c.b16 %v2527, %v2523
          %v2820 = vpack.c.b16 %v2528, %v2524
          %v2821 = vpack.c.b16 %v2529, %v2525
          %v2822 = vpack.c.b16 %v2530, %v2526
          %v2823 = vpack.c.b16 %v2535, %v2531
          %v2824 = vpack.c.b16 %v2536, %v2532
          %v2825 = vpack.c.b16 %v2537, %v2533
          %v2826 = vpack.c.b16 %v2538, %v2534
          %v2827 = vpack.c.b16 %v2543, %v2539
          %v2828 = vpack.c.b16 %v2544, %v2540
          %v2829 = vpack.c.b16 %v2545, %v2541
          %v2830 = vpack.c.b16 %v2546, %v2542
          %v2831 = vpack.c.b16 %v2551, %v2547
          %v2832 = vpack.c.b16 %v2552, %v2548
          %v2833 = vpack.c.b16 %v2553, %v2549
          %v2834 = vpack.c.b16 %v2554, %v2550
          %v2835 = vpack.c.b16 %v2559, %v2555
          %v2836 = vpack.c.b16 %v2560, %v2556
          %v2837 = vpack.c.b16 %v2561, %v2557
          %v2838 = vpack.c.b16 %v2562, %v2558
          %v2839 = vpack.c.b16 %v2567, %v2563
          %v2840 = vpack.c.b16 %v2568, %v2564
          %v2841 = vpack.c.b16 %v2569, %v2565
          %v2842 = vpack.c.b16 %v2570, %v2566
          %v2843 = vpack.c.b16 %v2575, %v2571
          %v2844 = vpack.c.b16 %v2576, %v2572
          %v2845 = vpack.c.b16 %v2577, %v2573
          %v2846 = vpack.c.b16 %v2578, %v2574
          %v2847 = vpack.c.b16 %v2583, %v2579
          %v2848 = vpack.c.b16 %v2584, %v2580
          %v2849 = vpack.c.b16 %v2585, %v2581
          %v2850 = vpack.c.b16 %v2586, %v2582
          %v2851 = vpack.c.b16 %v2591, %v2587
          %v2852 = vpack.c.b16 %v2592, %v2588
          %v2853 = vpack.c.b16 %v2593, %v2589
          %v2854 = vpack.c.b16 %v2594, %v2590
          %v2855 = vpack.c.b16 %v2599, %v2595
          %v2856 = vpack.c.b16 %v2600, %v2596
          %v2857 = vpack.c.b16 %v2601, %v2597
          %v2858 = vpack.c.b16 %v2602, %v2598
          %3115 = vmatprep.subr.bf16.mxu0 %v2632
          %3116 = vmatpush1.bf16.msra.mxu0 %v2631
          %3117 = vmatprep.subr.bf16.mxu0 %v2628
          %3118 = vmatpush1.bf16.msra.mxu0 %v2627
          %3119 = vmatprep.subr.bf16.mxu0 %v2624
          %3120 = vmatpush1.bf16.msra.mxu0 %v2623
          %3121 = vmatprep.subr.bf16.mxu0 %v2620
          %3122 = vmatpush1.bf16.msra.mxu0 %v2619
          %3123 = vmatprep.subr.bf16.mxu0 %v2616
          %3124 = vmatpush1.bf16.msra.mxu0 %v2615
          %3125 = vmatprep.subr.bf16.mxu0 %v2612
          %3126 = vmatpush1.bf16.msra.mxu0 %v2611
          %3127 = vmatprep.subr.bf16.mxu0 %v2608
          %3128 = vmatpush1.bf16.msra.mxu0 %v2607
          %3129 = vmatprep.subr.bf16.mxu0 %v2604
          %3130 = vmatpush1.bf16.msra.mxu0 %v2603
          %3131 = vmatprep.subr.bf16.mxu0 %v2664
          %3132 = vmatpush2.bf16.msra.mxu0 %v2663
          %3133 = vmatprep.subr.bf16.mxu0 %v2660
          %3134 = vmatpush2.bf16.msra.mxu0 %v2659
          %3135 = vmatprep.subr.bf16.mxu0 %v2656
          %3136 = vmatpush2.bf16.msra.mxu0 %v2655
          %3137 = vmatprep.subr.bf16.mxu0 %v2652
          %3138 = vmatpush2.bf16.msra.mxu0 %v2651
          %3139 = vmatprep.subr.bf16.mxu0 %v2648
          %3140 = vmatpush2.bf16.msra.mxu0 %v2647
          %3141 = vmatprep.subr.bf16.mxu0 %v2644
          %3142 = vmatpush2.bf16.msra.mxu0 %v2643
          %3143 = vmatprep.subr.bf16.mxu0 %v2640
          %3144 = vmatpush2.bf16.msra.mxu0 %v2639
          %3145 = vmatprep.subr.bf16.mxu0 %v2636
          %3146 = vmatpush2.bf16.msra.mxu0 %v2635
          %3147 = vmatprep.mubr.bf16.mxu0 %v1552
          %3148 = vmatmul.mubr.bf16.gmra.mxu0 %v1551
          %v3149 = vpop.f32.mrf.mxu0
          %v3150 = vadd.f32 %v1822, %v3149
          %v3151 = vpop.f32.mrf.mxu0
          %v3152 = vadd.f32 %v1826, %v3151
          %v3153 = vpop.f32.mrf.mxu0
          %v3154 = vpop.f32.mrf.mxu0
          %3155 = vdwg.mxu0
          %3156 = vmatprep.subr.bf16.mxu0 %v2696
          %3157 = vmatpush1.bf16.msra.mxu0 %v2695
          %3158 = vmatprep.subr.bf16.mxu0 %v2692
          %3159 = vmatpush1.bf16.msra.mxu0 %v2691
          %3160 = vmatprep.subr.bf16.mxu0 %v2688
          %3161 = vmatpush1.bf16.msra.mxu0 %v2687
          %3162 = vmatprep.subr.bf16.mxu0 %v2684
          %3163 = vmatpush1.bf16.msra.mxu0 %v2683
          %3164 = vmatprep.subr.bf16.mxu0 %v2680
          %3165 = vmatpush1.bf16.msra.mxu0 %v2679
          %3166 = vmatprep.subr.bf16.mxu0 %v2676
          %3167 = vmatpush1.bf16.msra.mxu0 %v2675
          %3168 = vmatprep.subr.bf16.mxu0 %v2672
          %3169 = vmatpush1.bf16.msra.mxu0 %v2671
          %3170 = vmatprep.subr.bf16.mxu0 %v2668
          %3171 = vmatpush1.bf16.msra.mxu0 %v2667
          %3172 = vmatprep.subr.bf16.mxu0 %v2728
          %3173 = vmatpush2.bf16.msra.mxu0 %v2727
          %3174 = vmatprep.subr.bf16.mxu0 %v2724
          %3175 = vmatpush2.bf16.msra.mxu0 %v2723
          %3176 = vmatprep.subr.bf16.mxu0 %v2720
          %3177 = vmatpush2.bf16.msra.mxu0 %v2719
          %3178 = vmatprep.subr.bf16.mxu0 %v2716
          %3179 = vmatpush2.bf16.msra.mxu0 %v2715
          %3180 = vmatprep.subr.bf16.mxu0 %v2712
          %3181 = vmatpush2.bf16.msra.mxu0 %v2711
          %3182 = vmatprep.subr.bf16.mxu0 %v2708
          %3183 = vmatpush2.bf16.msra.mxu0 %v2707
          %3184 = vmatprep.subr.bf16.mxu0 %v2704
          %3185 = vmatpush2.bf16.msra.mxu0 %v2703
          %3186 = vmatprep.subr.bf16.mxu0 %v2700
          %3187 = vmatpush2.bf16.msra.mxu0 %v2699
          %3188 = vmatprep.mubr.bf16.mxu0 %v1554
          %3189 = vmatmul.mubr.bf16.gmra.mxu0 %v1553
          %v3190 = vpop.f32.mrf.mxu0
          %v3191 = vadd.f32 %v3150, %v3190
          %v3192 = vpop.f32.mrf.mxu0
          %v3193 = vadd.f32 %v3152, %v3192
          %v3194 = vpop.f32.mrf.mxu0
          %v3195 = vpop.f32.mrf.mxu0
          %3196 = vdwg.mxu0
          %3197 = vmatprep.subr.bf16.mxu0 %v2760
          %3198 = vmatpush1.bf16.msra.mxu0 %v2759
          %3199 = vmatprep.subr.bf16.mxu0 %v2756
          %3200 = vmatpush1.bf16.msra.mxu0 %v2755
          %3201 = vmatprep.subr.bf16.mxu0 %v2752
          %3202 = vmatpush1.bf16.msra.mxu0 %v2751
          %3203 = vmatprep.subr.bf16.mxu0 %v2748
          %3204 = vmatpush1.bf16.msra.mxu0 %v2747
          %3205 = vmatprep.subr.bf16.mxu0 %v2744
          %3206 = vmatpush1.bf16.msra.mxu0 %v2743
          %3207 = vmatprep.subr.bf16.mxu0 %v2740
          %3208 = vmatpush1.bf16.msra.mxu0 %v2739
          %3209 = vmatprep.subr.bf16.mxu0 %v2736
          %3210 = vmatpush1.bf16.msra.mxu0 %v2735
          %3211 = vmatprep.subr.bf16.mxu0 %v2732
          %3212 = vmatpush1.bf16.msra.mxu0 %v2731
          %3213 = vmatprep.subr.bf16.mxu0 %v2792
          %3214 = vmatpush2.bf16.msra.mxu0 %v2791
          %3215 = vmatprep.subr.bf16.mxu0 %v2788
          %3216 = vmatpush2.bf16.msra.mxu0 %v2787
          %3217 = vmatprep.subr.bf16.mxu0 %v2784
          %3218 = vmatpush2.bf16.msra.mxu0 %v2783
          %3219 = vmatprep.subr.bf16.mxu0 %v2780
          %3220 = vmatpush2.bf16.msra.mxu0 %v2779
          %3221 = vmatprep.subr.bf16.mxu0 %v2776
          %3222 = vmatpush2.bf16.msra.mxu0 %v2775
          %3223 = vmatprep.subr.bf16.mxu0 %v2772
          %3224 = vmatpush2.bf16.msra.mxu0 %v2771
          %3225 = vmatprep.subr.bf16.mxu0 %v2768
          %3226 = vmatpush2.bf16.msra.mxu0 %v2767
          %3227 = vmatprep.subr.bf16.mxu0 %v2764
          %3228 = vmatpush2.bf16.msra.mxu0 %v2763
          %3229 = vmatprep.mubr.bf16.mxu0 %v1556
          %3230 = vmatmul.mubr.bf16.gmra.mxu0 %v1555
          %v3231 = vpop.f32.mrf.mxu0
          %v3232 = vadd.f32 %v3191, %v3231
          %v3233 = vpop.f32.mrf.mxu0
          %v3234 = vadd.f32 %v3193, %v3233
          %v3235 = vpop.f32.mrf.mxu0
          %v3236 = vpop.f32.mrf.mxu0
          %3237 = vdwg.mxu0
          %3238 = vmatprep.subr.bf16.mxu0 %v2824
          %3239 = vmatpush1.bf16.msra.mxu0 %v2823
          %3240 = vmatprep.subr.bf16.mxu0 %v2820
          %3241 = vmatpush1.bf16.msra.mxu0 %v2819
          %3242 = vmatprep.subr.bf16.mxu0 %v2816
          %3243 = vmatpush1.bf16.msra.mxu0 %v2815
          %3244 = vmatprep.subr.bf16.mxu0 %v2812
          %3245 = vmatpush1.bf16.msra.mxu0 %v2811
          %3246 = vmatprep.subr.bf16.mxu0 %v2808
          %3247 = vmatpush1.bf16.msra.mxu0 %v2807
          %3248 = vmatprep.subr.bf16.mxu0 %v2804
          %3249 = vmatpush1.bf16.msra.mxu0 %v2803
          %3250 = vmatprep.subr.bf16.mxu0 %v2800
          %3251 = vmatpush1.bf16.msra.mxu0 %v2799
          %3252 = vmatprep.subr.bf16.mxu0 %v2796
          %3253 = vmatpush1.bf16.msra.mxu0 %v2795
          %3254 = vmatprep.subr.bf16.mxu0 %v2856
          %3255 = vmatpush2.bf16.msra.mxu0 %v2855
          %3256 = vmatprep.subr.bf16.mxu0 %v2852
          %3257 = vmatpush2.bf16.msra.mxu0 %v2851
          %3258 = vmatprep.subr.bf16.mxu0 %v2848
          %3259 = vmatpush2.bf16.msra.mxu0 %v2847
          %3260 = vmatprep.subr.bf16.mxu0 %v2844
          %3261 = vmatpush2.bf16.msra.mxu0 %v2843
          %3262 = vmatprep.subr.bf16.mxu0 %v2840
          %3263 = vmatpush2.bf16.msra.mxu0 %v2839
          %3264 = vmatprep.subr.bf16.mxu0 %v2836
          %3265 = vmatpush2.bf16.msra.mxu0 %v2835
          %3266 = vmatprep.subr.bf16.mxu0 %v2832
          %3267 = vmatpush2.bf16.msra.mxu0 %v2831
          %3268 = vmatprep.subr.bf16.mxu0 %v2828
          %3269 = vmatpush2.bf16.msra.mxu0 %v2827
          %3270 = vmatprep.mubr.bf16.mxu0 %v1558
          %3271 = vmatmul.mubr.bf16.gmra.mxu0 %v1557
          %v3272 = vpop.f32.mrf.mxu0
          %v3273 = vadd.f32 %v3232, %v3272
          %v3274 = vpop.f32.mrf.mxu0
          %v3275 = vadd.f32 %v3234, %v3274
          %v3276 = vpop.f32.mrf.mxu0
          %v3277 = vpop.f32.mrf.mxu0
          %3278 = vdwg.mxu0
          %3279 = vmatprep.subr.bf16.mxu0 %v2634
          %3280 = vmatpush1.bf16.msra.mxu0 %v2633
          %3281 = vmatprep.subr.bf16.mxu0 %v2630
          %3282 = vmatpush1.bf16.msra.mxu0 %v2629
          %3283 = vmatprep.subr.bf16.mxu0 %v2626
          %3284 = vmatpush1.bf16.msra.mxu0 %v2625
          %3285 = vmatprep.subr.bf16.mxu0 %v2622
          %3286 = vmatpush1.bf16.msra.mxu0 %v2621
          %3287 = vmatprep.subr.bf16.mxu0 %v2618
          %3288 = vmatpush1.bf16.msra.mxu0 %v2617
          %3289 = vmatprep.subr.bf16.mxu0 %v2614
          %3290 = vmatpush1.bf16.msra.mxu0 %v2613
          %3291 = vmatprep.subr.bf16.mxu0 %v2610
          %3292 = vmatpush1.bf16.msra.mxu0 %v2609
          %3293 = vmatprep.subr.bf16.mxu0 %v2606
          %3294 = vmatpush1.bf16.msra.mxu0 %v2605
          %3295 = vmatprep.subr.bf16.mxu0 %v2666
          %3296 = vmatpush2.bf16.msra.mxu0 %v2665
          %3297 = vmatprep.subr.bf16.mxu0 %v2662
          %3298 = vmatpush2.bf16.msra.mxu0 %v2661
          %3299 = vmatprep.subr.bf16.mxu0 %v2658
          %3300 = vmatpush2.bf16.msra.mxu0 %v2657
          %3301 = vmatprep.subr.bf16.mxu0 %v2654
          %3302 = vmatpush2.bf16.msra.mxu0 %v2653
          %3303 = vmatprep.subr.bf16.mxu0 %v2650
          %3304 = vmatpush2.bf16.msra.mxu0 %v2649
          %3305 = vmatprep.subr.bf16.mxu0 %v2646
          %3306 = vmatpush2.bf16.msra.mxu0 %v2645
          %3307 = vmatprep.subr.bf16.mxu0 %v2642
          %3308 = vmatpush2.bf16.msra.mxu0 %v2641
          %3309 = vmatprep.subr.bf16.mxu0 %v2638
          %3310 = vmatpush2.bf16.msra.mxu0 %v2637
          %3311 = vmatprep.mubr.bf16.mxu0 %v1552
          %3312 = vmatmul.mubr.bf16.gmra.mxu0 %v1551
          %v3313 = vpop.f32.mrf.mxu0
          %v3314 = vadd.f32 %v1830, %v3313
          %v3315 = vpop.f32.mrf.mxu0
          %v3316 = vadd.f32 %v1834, %v3315
          %v3317 = vpop.f32.mrf.mxu0
          %v3318 = vpop.f32.mrf.mxu0
          %3319 = vdwg.mxu0
          %3320 = vmatprep.subr.bf16.mxu0 %v2698
          %3321 = vmatpush1.bf16.msra.mxu0 %v2697
          %3322 = vmatprep.subr.bf16.mxu0 %v2694
          %3323 = vmatpush1.bf16.msra.mxu0 %v2693
          %3324 = vmatprep.subr.bf16.mxu0 %v2690
          %3325 = vmatpush1.bf16.msra.mxu0 %v2689
          %3326 = vmatprep.subr.bf16.mxu0 %v2686
          %3327 = vmatpush1.bf16.msra.mxu0 %v2685
          %3328 = vmatprep.subr.bf16.mxu0 %v2682
          %3329 = vmatpush1.bf16.msra.mxu0 %v2681
          %3330 = vmatprep.subr.bf16.mxu0 %v2678
          %3331 = vmatpush1.bf16.msra.mxu0 %v2677
          %3332 = vmatprep.subr.bf16.mxu0 %v2674
          %3333 = vmatpush1.bf16.msra.mxu0 %v2673
          %3334 = vmatprep.subr.bf16.mxu0 %v2670
          %3335 = vmatpush1.bf16.msra.mxu0 %v2669
          %3336 = vmatprep.subr.bf16.mxu0 %v2730
          %3337 = vmatpush2.bf16.msra.mxu0 %v2729
          %3338 = vmatprep.subr.bf16.mxu0 %v2726
          %3339 = vmatpush2.bf16.msra.mxu0 %v2725
          %3340 = vmatprep.subr.bf16.mxu0 %v2722
          %3341 = vmatpush2.bf16.msra.mxu0 %v2721
          %3342 = vmatprep.subr.bf16.mxu0 %v2718
          %3343 = vmatpush2.bf16.msra.mxu0 %v2717
          %3344 = vmatprep.subr.bf16.mxu0 %v2714
          %3345 = vmatpush2.bf16.msra.mxu0 %v2713
          %3346 = vmatprep.subr.bf16.mxu0 %v2710
          %3347 = vmatpush2.bf16.msra.mxu0 %v2709
          %3348 = vmatprep.subr.bf16.mxu0 %v2706
          %3349 = vmatpush2.bf16.msra.mxu0 %v2705
          %3350 = vmatprep.subr.bf16.mxu0 %v2702
          %3351 = vmatpush2.bf16.msra.mxu0 %v2701
          %3352 = vmatprep.mubr.bf16.mxu0 %v1554
          %3353 = vmatmul.mubr.bf16.gmra.mxu0 %v1553
          %v3354 = vpop.f32.mrf.mxu0
          %v3355 = vadd.f32 %v3314, %v3354
          %v3356 = vpop.f32.mrf.mxu0
          %v3357 = vadd.f32 %v3316, %v3356
          %v3358 = vpop.f32.mrf.mxu0
          %v3359 = vpop.f32.mrf.mxu0
          %3360 = vdwg.mxu0
          %3361 = vmatprep.subr.bf16.mxu0 %v2762
          %3362 = vmatpush1.bf16.msra.mxu0 %v2761
          %3363 = vmatprep.subr.bf16.mxu0 %v2758
          %3364 = vmatpush1.bf16.msra.mxu0 %v2757
          %3365 = vmatprep.subr.bf16.mxu0 %v2754
          %3366 = vmatpush1.bf16.msra.mxu0 %v2753
          %3367 = vmatprep.subr.bf16.mxu0 %v2750
          %3368 = vmatpush1.bf16.msra.mxu0 %v2749
          %3369 = vmatprep.subr.bf16.mxu0 %v2746
          %3370 = vmatpush1.bf16.msra.mxu0 %v2745
          %3371 = vmatprep.subr.bf16.mxu0 %v2742
          %3372 = vmatpush1.bf16.msra.mxu0 %v2741
          %3373 = vmatprep.subr.bf16.mxu0 %v2738
          %3374 = vmatpush1.bf16.msra.mxu0 %v2737
          %3375 = vmatprep.subr.bf16.mxu0 %v2734
          %3376 = vmatpush1.bf16.msra.mxu0 %v2733
          %3377 = vmatprep.subr.bf16.mxu0 %v2794
          %3378 = vmatpush2.bf16.msra.mxu0 %v2793
          %3379 = vmatprep.subr.bf16.mxu0 %v2790
          %3380 = vmatpush2.bf16.msra.mxu0 %v2789
          %3381 = vmatprep.subr.bf16.mxu0 %v2786
          %3382 = vmatpush2.bf16.msra.mxu0 %v2785
          %3383 = vmatprep.subr.bf16.mxu0 %v2782
          %3384 = vmatpush2.bf16.msra.mxu0 %v2781
          %3385 = vmatprep.subr.bf16.mxu0 %v2778
          %3386 = vmatpush2.bf16.msra.mxu0 %v2777
          %3387 = vmatprep.subr.bf16.mxu0 %v2774
          %3388 = vmatpush2.bf16.msra.mxu0 %v2773
          %3389 = vmatprep.subr.bf16.mxu0 %v2770
          %3390 = vmatpush2.bf16.msra.mxu0 %v2769
          %3391 = vmatprep.subr.bf16.mxu0 %v2766
          %3392 = vmatpush2.bf16.msra.mxu0 %v2765
          %3393 = vmatprep.mubr.bf16.mxu0 %v1556
          %3394 = vmatmul.mubr.bf16.gmra.mxu0 %v1555
          %v3395 = vpop.f32.mrf.mxu0
          %v3396 = vadd.f32 %v3355, %v3395
          %v3397 = vpop.f32.mrf.mxu0
          %v3398 = vadd.f32 %v3357, %v3397
          %v3399 = vpop.f32.mrf.mxu0
          %v3400 = vpop.f32.mrf.mxu0
          %3401 = vdwg.mxu0
          %3402 = vmatprep.subr.bf16.mxu0 %v2826
          %3403 = vmatpush1.bf16.msra.mxu0 %v2825
          %3404 = vmatprep.subr.bf16.mxu0 %v2822
          %3405 = vmatpush1.bf16.msra.mxu0 %v2821
          %3406 = vmatprep.subr.bf16.mxu0 %v2818
          %3407 = vmatpush1.bf16.msra.mxu0 %v2817
          %3408 = vmatprep.subr.bf16.mxu0 %v2814
          %3409 = vmatpush1.bf16.msra.mxu0 %v2813
          %3410 = vmatprep.subr.bf16.mxu0 %v2810
          %3411 = vmatpush1.bf16.msra.mxu0 %v2809
          %3412 = vmatprep.subr.bf16.mxu0 %v2806
          %3413 = vmatpush1.bf16.msra.mxu0 %v2805
          %3414 = vmatprep.subr.bf16.mxu0 %v2802
          %3415 = vmatpush1.bf16.msra.mxu0 %v2801
          %3416 = vmatprep.subr.bf16.mxu0 %v2798
          %3417 = vmatpush1.bf16.msra.mxu0 %v2797
          %3418 = vmatprep.subr.bf16.mxu0 %v2858
          %3419 = vmatpush2.bf16.msra.mxu0 %v2857
          %3420 = vmatprep.subr.bf16.mxu0 %v2854
          %3421 = vmatpush2.bf16.msra.mxu0 %v2853
          %3422 = vmatprep.subr.bf16.mxu0 %v2850
          %3423 = vmatpush2.bf16.msra.mxu0 %v2849
          %3424 = vmatprep.subr.bf16.mxu0 %v2846
          %3425 = vmatpush2.bf16.msra.mxu0 %v2845
          %3426 = vmatprep.subr.bf16.mxu0 %v2842
          %3427 = vmatpush2.bf16.msra.mxu0 %v2841
          %3428 = vmatprep.subr.bf16.mxu0 %v2838
          %3429 = vmatpush2.bf16.msra.mxu0 %v2837
          %3430 = vmatprep.subr.bf16.mxu0 %v2834
          %3431 = vmatpush2.bf16.msra.mxu0 %v2833
          %3432 = vmatprep.subr.bf16.mxu0 %v2830
          %3433 = vmatpush2.bf16.msra.mxu0 %v2829
          %3434 = vmatprep.mubr.bf16.mxu0 %v1558
          %3435 = vmatmul.mubr.bf16.gmra.mxu0 %v1557
          %v3436 = vpop.f32.mrf.mxu0
          %v3437 = vadd.f32 %v3396, %v3436
          %v3438 = vpop.f32.mrf.mxu0
          %v3439 = vadd.f32 %v3398, %v3438
          %v3440 = vpop.f32.mrf.mxu0
          %v3441 = vpop.f32.mrf.mxu0
          %3442 = vdwg.mxu0
          %v3443 = vmax.f32 %v3273, 0.0
          %v3444 = vmax.f32 %v3275, 0.0
          %v3445 = vmax.f32 %v3437, 0.0
          %v3446 = vmax.f32 %v3439, 0.0
          %v3447 = vlaneseq
          %v3448 = vshrl.u32 %v3447, 7
          %v3449 = vsub.s32 1, %v3448
          %v3450 = vrot.slane %v1815, %v3449
          %v3451 = vlaneseq
          %v3452 = vshrl.u32 %v3451, 7
          %v3453 = vsub.s32 1, %v3452
          %v3454 = vrot.slane %v1816, %v3453
          %v3455 = vlaneseq
          %v3456 = vshrl.u32 %v3455, 7
          %v3457 = vsub.s32 1, %v3456
          %v3458 = vrot.slane %v1817, %v3457
          %v3459 = vlaneseq
          %v3460 = vshrl.u32 %v3459, 7
          %v3461 = vsub.s32 1, %v3460
          %v3462 = vrot.slane %v1818, %v3461
          %v3463 = vmul.f32 %v3443, %v3450
          %v3464 = vmul.f32 %v3444, %v3454
          %v3465 = vmul.f32 %v3445, %v3458
          %v3466 = vmul.f32 %v3446, %v3462
          %v3467 = vlaneseq
          %v3468 = vshrl.u32 %v3467, 7
          %v3469 = vsub.s32 2, %v3468
          %v3470 = vrot.slane %v1815, %v3469
          %v3471 = vlaneseq
          %v3472 = vshrl.u32 %v3471, 7
          %v3473 = vsub.s32 2, %v3472
          %v3474 = vrot.slane %v1816, %v3473
          %v3475 = vlaneseq
          %v3476 = vshrl.u32 %v3475, 7
          %v3477 = vsub.s32 2, %v3476
          %v3478 = vrot.slane %v1817, %v3477
          %v3479 = vlaneseq
          %v3480 = vshrl.u32 %v3479, 7
          %v3481 = vsub.s32 2, %v3480
          %v3482 = vrot.slane %v1818, %v3481
          %v3483 = vadd.f32 %v3463, %v3470
          %v3484 = vadd.f32 %v3464, %v3474
          %v3485 = vadd.f32 %v3465, %v3478
          %v3486 = vadd.f32 %v3466, %v3482
          %v3487 = vpack.c.bf16 %v3483, %v3483
          %v3488 = vpack.c.bf16 %v3484, %v3484
          %v3489 = vpack.c.bf16 %v3485, %v3485
          %v3490 = vpack.c.bf16 %v3486, %v3486
          %v3491 = vld [vmem:[#allocation9] sm:$0xff]
          %v3492 = vld [vmem:[#allocation9 + $0x8] sm:$0xff]
          %v3493 = vld [vmem:[#allocation9 + $0x10] sm:$0xff]
          %v3494 = vld [vmem:[#allocation9 + $0x18] sm:$0xff]
          %v3495 = vld [vmem:[#allocation9 + $0x20] sm:$0xff]
          %v3496 = vld [vmem:[#allocation9 + $0x28] sm:$0xff]
          %v3497 = vld [vmem:[#allocation9 + $0x30] sm:$0xff]
          %v3498 = vld [vmem:[#allocation9 + $0x38] sm:$0xff]
          %v3499 = vld [vmem:[#allocation9 + $0x40] sm:$0xff]
          %v3500 = vld [vmem:[#allocation9 + $0x48] sm:$0xff]
          %v3501 = vld [vmem:[#allocation9 + $0x50] sm:$0xff]
          %v3502 = vld [vmem:[#allocation9 + $0x58] sm:$0xff]
          %v3503 = vld [vmem:[#allocation9 + $0x60] sm:$0xff]
          %v3504 = vld [vmem:[#allocation9 + $0x68] sm:$0xff]
          %v3505 = vld [vmem:[#allocation9 + $0x70] sm:$0xff]
          %v3506 = vld [vmem:[#allocation9 + $0x78] sm:$0xff]
          %v3507 = vld [vmem:[#allocation9 + $0x80] sm:$0xff]
          %v3508 = vld [vmem:[#allocation9 + $0x88] sm:$0xff]
          %v3509 = vld [vmem:[#allocation9 + $0x90] sm:$0xff]
          %v3510 = vld [vmem:[#allocation9 + $0x98] sm:$0xff]
          %v3511 = vld [vmem:[#allocation9 + $0xa0] sm:$0xff]
          %v3512 = vld [vmem:[#allocation9 + $0xa8] sm:$0xff]
          %v3513 = vld [vmem:[#allocation9 + $0xb0] sm:$0xff]
          %v3514 = vld [vmem:[#allocation9 + $0xb8] sm:$0xff]
          %v3515 = vld [vmem:[#allocation9 + $0xc0] sm:$0xff]
          %v3516 = vld [vmem:[#allocation9 + $0xc8] sm:$0xff]
          %v3517 = vld [vmem:[#allocation9 + $0xd0] sm:$0xff]
          %v3518 = vld [vmem:[#allocation9 + $0xd8] sm:$0xff]
          %v3519 = vld [vmem:[#allocation9 + $0xe0] sm:$0xff]
          %v3520 = vld [vmem:[#allocation9 + $0xe8] sm:$0xff]
          %v3521 = vld [vmem:[#allocation9 + $0xf0] sm:$0xff]
          %v3522 = vld [vmem:[#allocation9 + $0xf8] sm:$0xff]
          %v3523 = vld [vmem:[#allocation9 + $0x100] sm:$0xff]
          %v3524 = vld [vmem:[#allocation9 + $0x108] sm:$0xff]
          %v3525 = vld [vmem:[#allocation9 + $0x110] sm:$0xff]
          %v3526 = vld [vmem:[#allocation9 + $0x118] sm:$0xff]
          %v3527 = vld [vmem:[#allocation9 + $0x120] sm:$0xff]
          %v3528 = vld [vmem:[#allocation9 + $0x128] sm:$0xff]
          %v3529 = vld [vmem:[#allocation9 + $0x130] sm:$0xff]
          %v3530 = vld [vmem:[#allocation9 + $0x138] sm:$0xff]
          %v3531 = vld [vmem:[#allocation9 + $0x140] sm:$0xff]
          %v3532 = vld [vmem:[#allocation9 + $0x148] sm:$0xff]
          %v3533 = vld [vmem:[#allocation9 + $0x150] sm:$0xff]
          %v3534 = vld [vmem:[#allocation9 + $0x158] sm:$0xff]
          %v3535 = vld [vmem:[#allocation9 + $0x160] sm:$0xff]
          %v3536 = vld [vmem:[#allocation9 + $0x168] sm:$0xff]
          %v3537 = vld [vmem:[#allocation9 + $0x170] sm:$0xff]
          %v3538 = vld [vmem:[#allocation9 + $0x178] sm:$0xff]
          %v3539 = vld [vmem:[#allocation9 + $0x180] sm:$0xff]
          %v3540 = vld [vmem:[#allocation9 + $0x188] sm:$0xff]
          %v3541 = vld [vmem:[#allocation9 + $0x190] sm:$0xff]
          %v3542 = vld [vmem:[#allocation9 + $0x198] sm:$0xff]
          %v3543 = vld [vmem:[#allocation9 + $0x1a0] sm:$0xff]
          %v3544 = vld [vmem:[#allocation9 + $0x1a8] sm:$0xff]
          %v3545 = vld [vmem:[#allocation9 + $0x1b0] sm:$0xff]
          %v3546 = vld [vmem:[#allocation9 + $0x1b8] sm:$0xff]
          %v3547 = vld [vmem:[#allocation9 + $0x1c0] sm:$0xff]
          %v3548 = vld [vmem:[#allocation9 + $0x1c8] sm:$0xff]
          %v3549 = vld [vmem:[#allocation9 + $0x1d0] sm:$0xff]
          %v3550 = vld [vmem:[#allocation9 + $0x1d8] sm:$0xff]
          %v3551 = vld [vmem:[#allocation9 + $0x1e0] sm:$0xff]
          %v3552 = vld [vmem:[#allocation9 + $0x1e8] sm:$0xff]
          %v3553 = vld [vmem:[#allocation9 + $0x1f0] sm:$0xff]
          %v3554 = vld [vmem:[#allocation9 + $0x1f8] sm:$0xff]
          %v3555 = vld [vmem:[#allocation14 + $0x80] sm:$0xff]
          %v3556 = vld [vmem:[#allocation14 + $0x88] sm:$0xff]
          %v3557 = vlaneseq
          %v3558 = vshrl.u32 %v3557, 7
          %v3559 = vsub.s32 0, %v3558
          %v3560 = vrot.slane %v3555, %v3559
          %v3561 = vlaneseq
          %v3562 = vshrl.u32 %v3561, 7
          %v3563 = vsub.s32 0, %v3562
          %v3564 = vrot.slane %v3556, %v3563
          %v3629 = vunpack.c.l.b16 %v3491
          %v3630 = vunpack.c.h.b16 %v3491
          %v3631 = vunpack.c.l.b16 %v3492
          %v3632 = vunpack.c.h.b16 %v3492
          %v3633 = vunpack.c.l.b16 %v3493
          %v3634 = vunpack.c.h.b16 %v3493
          %v3635 = vunpack.c.l.b16 %v3494
          %v3636 = vunpack.c.h.b16 %v3494
          %v3637 = vunpack.c.l.b16 %v3495
          %v3638 = vunpack.c.h.b16 %v3495
          %v3639 = vunpack.c.l.b16 %v3496
          %v3640 = vunpack.c.h.b16 %v3496
          %v3641 = vunpack.c.l.b16 %v3497
          %v3642 = vunpack.c.h.b16 %v3497
          %v3643 = vunpack.c.l.b16 %v3498
          %v3644 = vunpack.c.h.b16 %v3498
          %v3645 = vunpack.c.l.b16 %v3499
          %v3646 = vunpack.c.h.b16 %v3499
          %v3647 = vunpack.c.l.b16 %v3500
          %v3648 = vunpack.c.h.b16 %v3500
          %v3649 = vunpack.c.l.b16 %v3501
          %v3650 = vunpack.c.h.b16 %v3501
          %v3651 = vunpack.c.l.b16 %v3502
          %v3652 = vunpack.c.h.b16 %v3502
          %v3653 = vunpack.c.l.b16 %v3503
          %v3654 = vunpack.c.h.b16 %v3503
          %v3655 = vunpack.c.l.b16 %v3504
          %v3656 = vunpack.c.h.b16 %v3504
          %v3657 = vunpack.c.l.b16 %v3505
          %v3658 = vunpack.c.h.b16 %v3505
          %v3659 = vunpack.c.l.b16 %v3506
          %v3660 = vunpack.c.h.b16 %v3506
          %v3661 = vunpack.c.l.b16 %v3507
          %v3662 = vunpack.c.h.b16 %v3507
          %v3663 = vunpack.c.l.b16 %v3508
          %v3664 = vunpack.c.h.b16 %v3508
          %v3665 = vunpack.c.l.b16 %v3509
          %v3666 = vunpack.c.h.b16 %v3509
          %v3667 = vunpack.c.l.b16 %v3510
          %v3668 = vunpack.c.h.b16 %v3510
          %v3669 = vunpack.c.l.b16 %v3511
          %v3670 = vunpack.c.h.b16 %v3511
          %v3671 = vunpack.c.l.b16 %v3512
          %v3672 = vunpack.c.h.b16 %v3512
          %v3673 = vunpack.c.l.b16 %v3513
          %v3674 = vunpack.c.h.b16 %v3513
          %v3675 = vunpack.c.l.b16 %v3514
          %v3676 = vunpack.c.h.b16 %v3514
          %v3677 = vunpack.c.l.b16 %v3515
          %v3678 = vunpack.c.h.b16 %v3515
          %v3679 = vunpack.c.l.b16 %v3516
          %v3680 = vunpack.c.h.b16 %v3516
          %v3681 = vunpack.c.l.b16 %v3517
          %v3682 = vunpack.c.h.b16 %v3517
          %v3683 = vunpack.c.l.b16 %v3518
          %v3684 = vunpack.c.h.b16 %v3518
          %v3685 = vunpack.c.l.b16 %v3519
          %v3686 = vunpack.c.h.b16 %v3519
          %v3687 = vunpack.c.l.b16 %v3520
          %v3688 = vunpack.c.h.b16 %v3520
          %v3689 = vunpack.c.l.b16 %v3521
          %v3690 = vunpack.c.h.b16 %v3521
          %v3691 = vunpack.c.l.b16 %v3522
          %v3692 = vunpack.c.h.b16 %v3522
          %v3693 = vunpack.c.l.b16 %v3523
          %v3694 = vunpack.c.h.b16 %v3523
          %v3695 = vunpack.c.l.b16 %v3524
          %v3696 = vunpack.c.h.b16 %v3524
          %v3697 = vunpack.c.l.b16 %v3525
          %v3698 = vunpack.c.h.b16 %v3525
          %v3699 = vunpack.c.l.b16 %v3526
          %v3700 = vunpack.c.h.b16 %v3526
          %v3701 = vunpack.c.l.b16 %v3527
          %v3702 = vunpack.c.h.b16 %v3527
          %v3703 = vunpack.c.l.b16 %v3528
          %v3704 = vunpack.c.h.b16 %v3528
          %v3705 = vunpack.c.l.b16 %v3529
          %v3706 = vunpack.c.h.b16 %v3529
          %v3707 = vunpack.c.l.b16 %v3530
          %v3708 = vunpack.c.h.b16 %v3530
          %v3709 = vunpack.c.l.b16 %v3531
          %v3710 = vunpack.c.h.b16 %v3531
          %v3711 = vunpack.c.l.b16 %v3532
          %v3712 = vunpack.c.h.b16 %v3532
          %v3713 = vunpack.c.l.b16 %v3533
          %v3714 = vunpack.c.h.b16 %v3533
          %v3715 = vunpack.c.l.b16 %v3534
          %v3716 = vunpack.c.h.b16 %v3534
          %v3717 = vunpack.c.l.b16 %v3535
          %v3718 = vunpack.c.h.b16 %v3535
          %v3719 = vunpack.c.l.b16 %v3536
          %v3720 = vunpack.c.h.b16 %v3536
          %v3721 = vunpack.c.l.b16 %v3537
          %v3722 = vunpack.c.h.b16 %v3537
          %v3723 = vunpack.c.l.b16 %v3538
          %v3724 = vunpack.c.h.b16 %v3538
          %v3725 = vunpack.c.l.b16 %v3539
          %v3726 = vunpack.c.h.b16 %v3539
          %v3727 = vunpack.c.l.b16 %v3540
          %v3728 = vunpack.c.h.b16 %v3540
          %v3729 = vunpack.c.l.b16 %v3541
          %v3730 = vunpack.c.h.b16 %v3541
          %v3731 = vunpack.c.l.b16 %v3542
          %v3732 = vunpack.c.h.b16 %v3542
          %v3733 = vunpack.c.l.b16 %v3543
          %v3734 = vunpack.c.h.b16 %v3543
          %v3735 = vunpack.c.l.b16 %v3544
          %v3736 = vunpack.c.h.b16 %v3544
          %v3737 = vunpack.c.l.b16 %v3545
          %v3738 = vunpack.c.h.b16 %v3545
          %v3739 = vunpack.c.l.b16 %v3546
          %v3740 = vunpack.c.h.b16 %v3546
          %v3741 = vunpack.c.l.b16 %v3547
          %v3742 = vunpack.c.h.b16 %v3547
          %v3743 = vunpack.c.l.b16 %v3548
          %v3744 = vunpack.c.h.b16 %v3548
          %v3745 = vunpack.c.l.b16 %v3549
          %v3746 = vunpack.c.h.b16 %v3549
          %v3747 = vunpack.c.l.b16 %v3550
          %v3748 = vunpack.c.h.b16 %v3550
          %v3749 = vunpack.c.l.b16 %v3551
          %v3750 = vunpack.c.h.b16 %v3551
          %v3751 = vunpack.c.l.b16 %v3552
          %v3752 = vunpack.c.h.b16 %v3552
          %v3753 = vunpack.c.l.b16 %v3553
          %v3754 = vunpack.c.h.b16 %v3553
          %v3755 = vunpack.c.l.b16 %v3554
          %v3756 = vunpack.c.h.b16 %v3554
          %v3757 = vpack.c.b16 %v3631, %v3629
          %v3758 = vpack.c.b16 %v3632, %v3630
          %v3759 = vpack.c.b16 %v3635, %v3633
          %v3760 = vpack.c.b16 %v3636, %v3634
          %v3761 = vpack.c.b16 %v3639, %v3637
          %v3762 = vpack.c.b16 %v3640, %v3638
          %v3763 = vpack.c.b16 %v3643, %v3641
          %v3764 = vpack.c.b16 %v3644, %v3642
          %v3765 = vpack.c.b16 %v3647, %v3645
          %v3766 = vpack.c.b16 %v3648, %v3646
          %v3767 = vpack.c.b16 %v3651, %v3649
          %v3768 = vpack.c.b16 %v3652, %v3650
          %v3769 = vpack.c.b16 %v3655, %v3653
          %v3770 = vpack.c.b16 %v3656, %v3654
          %v3771 = vpack.c.b16 %v3659, %v3657
          %v3772 = vpack.c.b16 %v3660, %v3658
          %v3773 = vpack.c.b16 %v3663, %v3661
          %v3774 = vpack.c.b16 %v3664, %v3662
          %v3775 = vpack.c.b16 %v3667, %v3665
          %v3776 = vpack.c.b16 %v3668, %v3666
          %v3777 = vpack.c.b16 %v3671, %v3669
          %v3778 = vpack.c.b16 %v3672, %v3670
          %v3779 = vpack.c.b16 %v3675, %v3673
          %v3780 = vpack.c.b16 %v3676, %v3674
          %v3781 = vpack.c.b16 %v3679, %v3677
          %v3782 = vpack.c.b16 %v3680, %v3678
          %v3783 = vpack.c.b16 %v3683, %v3681
          %v3784 = vpack.c.b16 %v3684, %v3682
          %v3785 = vpack.c.b16 %v3687, %v3685
          %v3786 = vpack.c.b16 %v3688, %v3686
          %v3787 = vpack.c.b16 %v3691, %v3689
          %v3788 = vpack.c.b16 %v3692, %v3690
          %v3789 = vpack.c.b16 %v3695, %v3693
          %v3790 = vpack.c.b16 %v3696, %v3694
          %v3791 = vpack.c.b16 %v3699, %v3697
          %v3792 = vpack.c.b16 %v3700, %v3698
          %v3793 = vpack.c.b16 %v3703, %v3701
          %v3794 = vpack.c.b16 %v3704, %v3702
          %v3795 = vpack.c.b16 %v3707, %v3705
          %v3796 = vpack.c.b16 %v3708, %v3706
          %v3797 = vpack.c.b16 %v3711, %v3709
          %v3798 = vpack.c.b16 %v3712, %v3710
          %v3799 = vpack.c.b16 %v3715, %v3713
          %v3800 = vpack.c.b16 %v3716, %v3714
          %v3801 = vpack.c.b16 %v3719, %v3717
          %v3802 = vpack.c.b16 %v3720, %v3718
          %v3803 = vpack.c.b16 %v3723, %v3721
          %v3804 = vpack.c.b16 %v3724, %v3722
          %v3805 = vpack.c.b16 %v3727, %v3725
          %v3806 = vpack.c.b16 %v3728, %v3726
          %v3807 = vpack.c.b16 %v3731, %v3729
          %v3808 = vpack.c.b16 %v3732, %v3730
          %v3809 = vpack.c.b16 %v3735, %v3733
          %v3810 = vpack.c.b16 %v3736, %v3734
          %v3811 = vpack.c.b16 %v3739, %v3737
          %v3812 = vpack.c.b16 %v3740, %v3738
          %v3813 = vpack.c.b16 %v3743, %v3741
          %v3814 = vpack.c.b16 %v3744, %v3742
          %v3815 = vpack.c.b16 %v3747, %v3745
          %v3816 = vpack.c.b16 %v3748, %v3746
          %v3817 = vpack.c.b16 %v3751, %v3749
          %v3818 = vpack.c.b16 %v3752, %v3750
          %v3819 = vpack.c.b16 %v3755, %v3753
          %v3820 = vpack.c.b16 %v3756, %v3754
          %3885 = vmatprep.subr.bf16.mxu0 %v3772
          %3886 = vmatpush1.bf16.msra.mxu0 %v3771
          %3887 = vmatprep.subr.bf16.mxu0 %v3770
          %3888 = vmatpush1.bf16.msra.mxu0 %v3769
          %3889 = vmatprep.subr.bf16.mxu0 %v3768
          %3890 = vmatpush1.bf16.msra.mxu0 %v3767
          %3891 = vmatprep.subr.bf16.mxu0 %v3766
          %3892 = vmatpush1.bf16.msra.mxu0 %v3765
          %3893 = vmatprep.subr.bf16.mxu0 %v3764
          %3894 = vmatpush1.bf16.msra.mxu0 %v3763
          %3895 = vmatprep.subr.bf16.mxu0 %v3762
          %3896 = vmatpush1.bf16.msra.mxu0 %v3761
          %3897 = vmatprep.subr.bf16.mxu0 %v3760
          %3898 = vmatpush1.bf16.msra.mxu0 %v3759
          %3899 = vmatprep.subr.bf16.mxu0 %v3758
          %3900 = vmatpush1.bf16.msra.mxu0 %v3757
          %3901 = vmatprep.subr.bf16.mxu0 %v3788
          %3902 = vmatpush2.bf16.msra.mxu0 %v3787
          %3903 = vmatprep.subr.bf16.mxu0 %v3786
          %3904 = vmatpush2.bf16.msra.mxu0 %v3785
          %3905 = vmatprep.subr.bf16.mxu0 %v3784
          %3906 = vmatpush2.bf16.msra.mxu0 %v3783
          %3907 = vmatprep.subr.bf16.mxu0 %v3782
          %3908 = vmatpush2.bf16.msra.mxu0 %v3781
          %3909 = vmatprep.subr.bf16.mxu0 %v3780
          %3910 = vmatpush2.bf16.msra.mxu0 %v3779
          %3911 = vmatprep.subr.bf16.mxu0 %v3778
          %3912 = vmatpush2.bf16.msra.mxu0 %v3777
          %3913 = vmatprep.subr.bf16.mxu0 %v3776
          %3914 = vmatpush2.bf16.msra.mxu0 %v3775
          %3915 = vmatprep.subr.bf16.mxu0 %v3774
          %3916 = vmatpush2.bf16.msra.mxu0 %v3773
          %3917 = vmatprep.mubr.bf16.mxu0 %v3488
          %3918 = vmatmul.mubr.bf16.gmra.mxu0 %v3487
          %v3919 = vpop.f32.mrf.mxu0
          %v3920 = vadd.f32 %v3560, %v3919
          %v3921 = vpop.f32.mrf.mxu0
          %v3922 = vadd.f32 %v3564, %v3921
          %v3923 = vpop.f32.mrf.mxu0
          %v3924 = vpop.f32.mrf.mxu0
          %3925 = vdwg.mxu0
          %3926 = vmatprep.subr.bf16.mxu0 %v3804
          %3927 = vmatpush1.bf16.msra.mxu0 %v3803
          %3928 = vmatprep.subr.bf16.mxu0 %v3802
          %3929 = vmatpush1.bf16.msra.mxu0 %v3801
          %3930 = vmatprep.subr.bf16.mxu0 %v3800
          %3931 = vmatpush1.bf16.msra.mxu0 %v3799
          %3932 = vmatprep.subr.bf16.mxu0 %v3798
          %3933 = vmatpush1.bf16.msra.mxu0 %v3797
          %3934 = vmatprep.subr.bf16.mxu0 %v3796
          %3935 = vmatpush1.bf16.msra.mxu0 %v3795
          %3936 = vmatprep.subr.bf16.mxu0 %v3794
          %3937 = vmatpush1.bf16.msra.mxu0 %v3793
          %3938 = vmatprep.subr.bf16.mxu0 %v3792
          %3939 = vmatpush1.bf16.msra.mxu0 %v3791
          %3940 = vmatprep.subr.bf16.mxu0 %v3790
          %3941 = vmatpush1.bf16.msra.mxu0 %v3789
          %3942 = vmatprep.subr.bf16.mxu0 %v3820
          %3943 = vmatpush2.bf16.msra.mxu0 %v3819
          %3944 = vmatprep.subr.bf16.mxu0 %v3818
          %3945 = vmatpush2.bf16.msra.mxu0 %v3817
          %3946 = vmatprep.subr.bf16.mxu0 %v3816
          %3947 = vmatpush2.bf16.msra.mxu0 %v3815
          %3948 = vmatprep.subr.bf16.mxu0 %v3814
          %3949 = vmatpush2.bf16.msra.mxu0 %v3813
          %3950 = vmatprep.subr.bf16.mxu0 %v3812
          %3951 = vmatpush2.bf16.msra.mxu0 %v3811
          %3952 = vmatprep.subr.bf16.mxu0 %v3810
          %3953 = vmatpush2.bf16.msra.mxu0 %v3809
          %3954 = vmatprep.subr.bf16.mxu0 %v3808
          %3955 = vmatpush2.bf16.msra.mxu0 %v3807
          %3956 = vmatprep.subr.bf16.mxu0 %v3806
          %3957 = vmatpush2.bf16.msra.mxu0 %v3805
          %3958 = vmatprep.mubr.bf16.mxu0 %v3490
          %3959 = vmatmul.mubr.bf16.gmra.mxu0 %v3489
          %v3960 = vpop.f32.mrf.mxu0
          %v3961 = vadd.f32 %v3920, %v3960
          %v3962 = vpop.f32.mrf.mxu0
          %v3963 = vadd.f32 %v3922, %v3962
          %v3964 = vpop.f32.mrf.mxu0
          %v3965 = vpop.f32.mrf.mxu0
          %3966 = vdwg.mxu0
          %v3967 = vmax.f32 %v3961, 0.0
          %v3968 = vmax.f32 %v3963, 0.0
          %v3969 = vlaneseq
          %v3970 = vshrl.u32 %v3969, 7
          %v3971 = vsub.s32 1, %v3970
          %v3972 = vrot.slane %v3555, %v3971
          %v3973 = vlaneseq
          %v3974 = vshrl.u32 %v3973, 7
          %v3975 = vsub.s32 1, %v3974
          %v3976 = vrot.slane %v3556, %v3975
          %v3977 = vmul.f32 %v3967, %v3972
          %v3978 = vmul.f32 %v3968, %v3976
          %v3979 = vlaneseq
          %v3980 = vshrl.u32 %v3979, 7
          %v3981 = vsub.s32 2, %v3980
          %v3982 = vrot.slane %v3555, %v3981
          %v3983 = vlaneseq
          %v3984 = vshrl.u32 %v3983, 7
          %v3985 = vsub.s32 2, %v3984
          %v3986 = vrot.slane %v3556, %v3985
          %v3987 = vadd.f32 %v3977, %v3982
          %v3988 = vadd.f32 %v3978, %v3986
          %v3989 = vpack.c.bf16 %v3987, %v3987
          %v3990 = vpack.c.bf16 %v3988, %v3988
          %v3991 = vld [vmem:[#allocation11] sm:$0xf]
          %v3992 = vld [vmem:[#allocation11 + $0x4] sm:$0xf]
          %v3993 = vld [vmem:[#allocation11 + $0x8] sm:$0xf]
          %v3994 = vld [vmem:[#allocation11 + $0xc] sm:$0xf]
          %v3995 = vld [vmem:[#allocation11 + $0x10] sm:$0xf]
          %v3996 = vld [vmem:[#allocation11 + $0x14] sm:$0xf]
          %v3997 = vld [vmem:[#allocation11 + $0x18] sm:$0xf]
          %v3998 = vld [vmem:[#allocation11 + $0x1c] sm:$0xf]
          %v3999 = vld [vmem:[#allocation11 + $0x20] sm:$0xf]
          %v4000 = vld [vmem:[#allocation11 + $0x24] sm:$0xf]
          %v4001 = vld [vmem:[#allocation11 + $0x28] sm:$0xf]
          %v4002 = vld [vmem:[#allocation11 + $0x2c] sm:$0xf]
          %v4003 = vld [vmem:[#allocation11 + $0x30] sm:$0xf]
          %v4004 = vld [vmem:[#allocation11 + $0x34] sm:$0xf]
          %v4005 = vld [vmem:[#allocation11 + $0x38] sm:$0xf]
          %v4006 = vld [vmem:[#allocation11 + $0x3c] sm:$0xf]
          %v4007 = vld [vmem:[#allocation11 + $0x40] sm:$0xf]
          %v4008 = vld [vmem:[#allocation11 + $0x44] sm:$0xf]
          %v4009 = vld [vmem:[#allocation11 + $0x48] sm:$0xf]
          %v4010 = vld [vmem:[#allocation11 + $0x4c] sm:$0xf]
          %v4011 = vld [vmem:[#allocation11 + $0x50] sm:$0xf]
          %v4012 = vld [vmem:[#allocation11 + $0x54] sm:$0xf]
          %v4013 = vld [vmem:[#allocation11 + $0x58] sm:$0xf]
          %v4014 = vld [vmem:[#allocation11 + $0x5c] sm:$0xf]
          %v4015 = vld [vmem:[#allocation11 + $0x60] sm:$0xf]
          %v4016 = vld [vmem:[#allocation11 + $0x64] sm:$0xf]
          %v4017 = vld [vmem:[#allocation11 + $0x68] sm:$0xf]
          %v4018 = vld [vmem:[#allocation11 + $0x6c] sm:$0xf]
          %v4019 = vld [vmem:[#allocation11 + $0x70] sm:$0xf]
          %v4020 = vld [vmem:[#allocation11 + $0x74] sm:$0xf]
          %v4021 = vld [vmem:[#allocation11 + $0x78] sm:$0xf]
          %v4022 = vld [vmem:[#allocation11 + $0x7c] sm:$0xf]
          %v4023 = vld [vmem:[#allocation14 + $0xc0] sm:$0xff]
          %v4024 = vlaneseq
          %v4025 = vshrl.u32 %v4024, 7
          %v4026 = vsub.s32 0, %v4025
          %v4027 = vrot.slane %v4023, %v4026
          %v4060 = vunpack.c.l.b16 %v3991
          %v4061 = vunpack.c.l.b16 %v3992
          %v4062 = vunpack.c.l.b16 %v3993
          %v4063 = vunpack.c.l.b16 %v3994
          %v4064 = vunpack.c.l.b16 %v3995
          %v4065 = vunpack.c.l.b16 %v3996
          %v4066 = vunpack.c.l.b16 %v3997
          %v4067 = vunpack.c.l.b16 %v3998
          %v4068 = vunpack.c.l.b16 %v3999
          %v4069 = vunpack.c.l.b16 %v4000
          %v4070 = vunpack.c.l.b16 %v4001
          %v4071 = vunpack.c.l.b16 %v4002
          %v4072 = vunpack.c.l.b16 %v4003
          %v4073 = vunpack.c.l.b16 %v4004
          %v4074 = vunpack.c.l.b16 %v4005
          %v4075 = vunpack.c.l.b16 %v4006
          %v4076 = vunpack.c.l.b16 %v4007
          %v4077 = vunpack.c.l.b16 %v4008
          %v4078 = vunpack.c.l.b16 %v4009
          %v4079 = vunpack.c.l.b16 %v4010
          %v4080 = vunpack.c.l.b16 %v4011
          %v4081 = vunpack.c.l.b16 %v4012
          %v4082 = vunpack.c.l.b16 %v4013
          %v4083 = vunpack.c.l.b16 %v4014
          %v4084 = vunpack.c.l.b16 %v4015
          %v4085 = vunpack.c.l.b16 %v4016
          %v4086 = vunpack.c.l.b16 %v4017
          %v4087 = vunpack.c.l.b16 %v4018
          %v4088 = vunpack.c.l.b16 %v4019
          %v4089 = vunpack.c.l.b16 %v4020
          %v4090 = vunpack.c.l.b16 %v4021
          %v4091 = vunpack.c.l.b16 %v4022
          %v4092 = vpack.c.b16 %v4061, %v4060
          %v4093 = vpack.c.b16 %v4063, %v4062
          %v4094 = vpack.c.b16 %v4065, %v4064
          %v4095 = vpack.c.b16 %v4067, %v4066
          %v4096 = vpack.c.b16 %v4069, %v4068
          %v4097 = vpack.c.b16 %v4071, %v4070
          %v4098 = vpack.c.b16 %v4073, %v4072
          %v4099 = vpack.c.b16 %v4075, %v4074
          %v4100 = vpack.c.b16 %v4077, %v4076
          %v4101 = vpack.c.b16 %v4079, %v4078
          %v4102 = vpack.c.b16 %v4081, %v4080
          %v4103 = vpack.c.b16 %v4083, %v4082
          %v4104 = vpack.c.b16 %v4085, %v4084
          %v4105 = vpack.c.b16 %v4087, %v4086
          %v4106 = vpack.c.b16 %v4089, %v4088
          %v4107 = vpack.c.b16 %v4091, %v4090
          %4124 = vmatprep.subr.bf16.mxu0 0
          %4125 = vmatpush1.bf16.msra.mxu0 %v4099
          %4126 = vmatprep.subr.bf16.mxu0 0
          %4127 = vmatpush1.bf16.msra.mxu0 %v4098
          %4128 = vmatprep.subr.bf16.mxu0 0
          %4129 = vmatpush1.bf16.msra.mxu0 %v4097
          %4130 = vmatprep.subr.bf16.mxu0 0
          %4131 = vmatpush1.bf16.msra.mxu0 %v4096
          %4132 = vmatprep.subr.bf16.mxu0 0
          %4133 = vmatpush1.bf16.msra.mxu0 %v4095
          %4134 = vmatprep.subr.bf16.mxu0 0
          %4135 = vmatpush1.bf16.msra.mxu0 %v4094
          %4136 = vmatprep.subr.bf16.mxu0 0
          %4137 = vmatpush1.bf16.msra.mxu0 %v4093
          %4138 = vmatprep.subr.bf16.mxu0 0
          %4139 = vmatpush1.bf16.msra.mxu0 %v4092
          %4140 = vmatprep.subr.bf16.mxu0 0
          %4141 = vmatpush2.bf16.msra.mxu0 %v4107
          %4142 = vmatprep.subr.bf16.mxu0 0
          %4143 = vmatpush2.bf16.msra.mxu0 %v4106
          %4144 = vmatprep.subr.bf16.mxu0 0
          %4145 = vmatpush2.bf16.msra.mxu0 %v4105
          %4146 = vmatprep.subr.bf16.mxu0 0
          %4147 = vmatpush2.bf16.msra.mxu0 %v4104
          %4148 = vmatprep.subr.bf16.mxu0 0
          %4149 = vmatpush2.bf16.msra.mxu0 %v4103
          %4150 = vmatprep.subr.bf16.mxu0 0
          %4151 = vmatpush2.bf16.msra.mxu0 %v4102
          %4152 = vmatprep.subr.bf16.mxu0 0
          %4153 = vmatpush2.bf16.msra.mxu0 %v4101
          %4154 = vmatprep.subr.bf16.mxu0 0
          %4155 = vmatpush2.bf16.msra.mxu0 %v4100
          %4156 = vmatprep.mubr.bf16.mxu0 %v3990
          %4157 = vmatmul.mubr.bf16.gmra.mxu0 %v3989
          %v4158 = vpop.f32.mrf.mxu0
          %v4159 = vadd.f32 %v4027, %v4158
          %v4160 = vpop.f32.mrf.mxu0
          %v4161 = vpop.f32.mrf.mxu0
          %v4162 = vpop.f32.mrf.mxu0
          %4163 = vdwg.mxu0
          %v4164 = vmax.f32 %v4159, 0.0
          %v4165 = vlaneseq
          %v4166 = vshrl.u32 %v4165, 7
          %v4167 = vsub.s32 1, %v4166
          %v4168 = vrot.slane %v4023, %v4167
          %v4169 = vmul.f32 %v4164, %v4168
          %v4170 = vlaneseq
          %v4171 = vshrl.u32 %v4170, 7
          %v4172 = vsub.s32 2, %v4171
          %v4173 = vrot.slane %v4023, %v4172
          %v4174 = vadd.f32 %v4169, %v4173
          %v4175 = vld [vmem:[#allocation14 + $0x100] sm:$0xff]
          %v4176 = vpack.c.bf16 %v4174, %v4174
          %v4177 = vld [vmem:[#allocation12] sm:$0xf]
          %v4178 = vld [vmem:[#allocation12 + $0x4] sm:$0xf]
          %v4179 = vld [vmem:[#allocation12 + $0x8] sm:$0xf]
          %v4180 = vld [vmem:[#allocation12 + $0xc] sm:$0xf]
          %v4181 = vld [vmem:[#allocation12 + $0x10] sm:$0xf]
          %v4182 = vld [vmem:[#allocation12 + $0x14] sm:$0xf]
          %v4183 = vld [vmem:[#allocation12 + $0x18] sm:$0xf]
          %v4184 = vld [vmem:[#allocation12 + $0x1c] sm:$0xf]
          %v4185 = vld [vmem:[#allocation12 + $0x20] sm:$0xf]
          %v4186 = vld [vmem:[#allocation12 + $0x24] sm:$0xf]
          %v4187 = vld [vmem:[#allocation12 + $0x28] sm:$0xf]
          %v4188 = vld [vmem:[#allocation12 + $0x2c] sm:$0xf]
          %v4189 = vld [vmem:[#allocation12 + $0x30] sm:$0xf]
          %v4190 = vld [vmem:[#allocation12 + $0x34] sm:$0xf]
          %v4191 = vld [vmem:[#allocation12 + $0x38] sm:$0xf]
          %v4192 = vld [vmem:[#allocation12 + $0x3c] sm:$0xf]
          %v4193 = vlaneseq
          %v4194 = vshrl.u32 %v4193, 7
          %v4195 = vsub.s32 0, %v4194
          %v4196 = vrot.slane %v4175, %v4195
          %v4213 = vunpack.c.l.b16 %v4177
          %v4214 = vunpack.c.l.b16 %v4178
          %v4215 = vunpack.c.l.b16 %v4179
          %v4216 = vunpack.c.l.b16 %v4180
          %v4217 = vunpack.c.l.b16 %v4181
          %v4218 = vunpack.c.l.b16 %v4182
          %v4219 = vunpack.c.l.b16 %v4183
          %v4220 = vunpack.c.l.b16 %v4184
          %v4221 = vunpack.c.l.b16 %v4185
          %v4222 = vunpack.c.l.b16 %v4186
          %v4223 = vunpack.c.l.b16 %v4187
          %v4224 = vunpack.c.l.b16 %v4188
          %v4225 = vunpack.c.l.b16 %v4189
          %v4226 = vunpack.c.l.b16 %v4190
          %v4227 = vunpack.c.l.b16 %v4191
          %v4228 = vunpack.c.l.b16 %v4192
          %v4229 = vpack.c.b16 %v4214, %v4213
          %v4230 = vpack.c.b16 %v4216, %v4215
          %v4231 = vpack.c.b16 %v4218, %v4217
          %v4232 = vpack.c.b16 %v4220, %v4219
          %v4233 = vpack.c.b16 %v4222, %v4221
          %v4234 = vpack.c.b16 %v4224, %v4223
          %v4235 = vpack.c.b16 %v4226, %v4225
          %v4236 = vpack.c.b16 %v4228, %v4227
          %4245 = vmatprep.subr.bf16.mxu0 0
          %4246 = vmatpush1.bf16.msra.mxu0 %v4236
          %4247 = vmatprep.subr.bf16.mxu0 0
          %4248 = vmatpush1.bf16.msra.mxu0 %v4235
          %4249 = vmatprep.subr.bf16.mxu0 0
          %4250 = vmatpush1.bf16.msra.mxu0 %v4234
          %4251 = vmatprep.subr.bf16.mxu0 0
          %4252 = vmatpush1.bf16.msra.mxu0 %v4233
          %4253 = vmatprep.subr.bf16.mxu0 0
          %4254 = vmatpush1.bf16.msra.mxu0 %v4232
          %4255 = vmatprep.subr.bf16.mxu0 0
          %4256 = vmatpush1.bf16.msra.mxu0 %v4231
          %4257 = vmatprep.subr.bf16.mxu0 0
          %4258 = vmatpush1.bf16.msra.mxu0 %v4230
          %4259 = vmatprep.subr.bf16.mxu0 0
          %4260 = vmatpush1.bf16.msra.mxu0 %v4229
          %4261 = vmatprep.subr.bf16.mxu0 0
          %4262 = vmatpush2.bf16.msra.mxu0 0
          %4263 = vmatprep.subr.bf16.mxu0 0
          %4264 = vmatpush2.bf16.msra.mxu0 0
          %4265 = vmatprep.subr.bf16.mxu0 0
          %4266 = vmatpush2.bf16.msra.mxu0 0
          %4267 = vmatprep.subr.bf16.mxu0 0
          %4268 = vmatpush2.bf16.msra.mxu0 0
          %4269 = vmatprep.subr.bf16.mxu0 0
          %4270 = vmatpush2.bf16.msra.mxu0 0
          %4271 = vmatprep.subr.bf16.mxu0 0
          %4272 = vmatpush2.bf16.msra.mxu0 0
          %4273 = vmatprep.subr.bf16.mxu0 0
          %4274 = vmatpush2.bf16.msra.mxu0 0
          %4275 = vmatprep.subr.bf16.mxu0 0
          %4276 = vmatpush2.bf16.msra.mxu0 0
          %4277 = vmatprep.mubr.bf16.mxu0 0
          %4278 = vmatmul.mubr.bf16.gmra.mxu0 %v4176
          %v4279 = vpop.f32.mrf.mxu0
          %v4280 = vadd.f32 %v4196, %v4279
          %v4281 = vpop.f32.mrf.mxu0
          %v4282 = vpop.f32.mrf.mxu0
          %v4283 = vpop.f32.mrf.mxu0
          %4284 = vdwg.mxu0
          %4285 = vst [vmem:[%s423] sm:$0xff] %v4280
        $region84: #{tpu_custom_call.1} parent=47 // pred_fallthru
          _
        %s4286 = sand.u32 %s208, 1
        %s4287 = scalar_lea.sflag [#allocation5], %s4286
        %s4288 = sand.u32 %s208, 1
        %s4289 = smul.addr %s4288, 8
        %s4290 = scalar_lea.vmem [#allocation15], %s4289
        // Predicated region
        $region85: #{tpu_custom_call.1} parent=47 // pred_check
          %p4291 = pneg %p218
        $region86: #{tpu_custom_call.1} parent=47 // pred_check_branch
          %4293 = sbr.rel (%p4291) target = $region88
        $region87: #{tpu_custom_call.1} parent=47 // pred_region
          %s4295 = ssub.s32 128, 128
          %4296 = vsyncadd %s4287, %s4295
          %s4297 = smul.addr %s33, 128
          %s4298 = scalar_lea.hbm %s7, %s4297
          %s4300 = sshll.u32 %s4290, 4
          %s4301 = int_to_ptr.vmem [resolvable:$true] %s4300
          %4303 = dma.vmem_to_hbm [thread:$0]  %s4301, 128, %s4298, %s4287
        $region88: #{tpu_custom_call.1} parent=47 // pred_fallthru
          _
      $region48: #{tpu_custom_call.1} parent=5 // pred_fallthru
        _
      %p4304 = scmp.le.s32.totalorder 2, %s24
      // Predicated region
      $region89: #{tpu_custom_call.1} parent=5 // pred_check
        %p4305 = pneg %p4304
      $region90: #{tpu_custom_call.1} parent=5 // pred_check_branch
        %4307 = sbr.rel (%p4305) target = $region92
      $region91: #{tpu_custom_call.1} parent=5 // pred_region
        %s4308 = ssub.s32 %s24, 2
        // Predicated region
        $region93: #{tpu_custom_call.1} parent=91 // pred_check
          %p4309 = pneg %p224
        $region94: #{tpu_custom_call.1} parent=91 // pred_check_branch
          %4311 = sbr.rel (%p4309) target = $region96
        $region95: #{tpu_custom_call.1} parent=91 // pred_region
          %s4312 = sand.u32 %s209, 1
          %s4313 = scalar_lea.sflag [#allocation5], %s4312
          %s4314 = sand.u32 %s209, 1
          %s4315 = smul.addr %s4314, 8
          %s4316 = scalar_lea.vmem [#allocation15], %s4315
          %4317 = dma.done %s4313, 128
        $region96: #{tpu_custom_call.1} parent=91 // pred_fallthru
          _
      $region92: #{tpu_custom_call.1} parent=5 // pred_fallthru
        _
    $region6: #{tpu_custom_call.1} parent=1 // loop_footer
      %s28 = sadd.s32 1, %s24
    $region7: #{tpu_custom_call.1} parent=1 // loop_footer_branch
      %23 = sbr.rel target = $region3
    $region8: #{tpu_custom_call.1} parent=1 // loop_exit
      _
    %4318 = vsyncpa [#allocation4], 1
    %s4319 = scalar_lea.sflag [#allocation4], 1
    %4320 = vsyncpa %s4319, 1
    %4321 = vsyncpa [#allocation7], 1
    %s4322 = scalar_lea.sflag [#allocation7], 1
    %4323 = vsyncpa %s4322, 1
    %4324 = vsyncpa [#allocation10], 1
    %4325 = vsyncpa [#allocation13], 1
    %4326 = vsyncpa [#allocation5], 1
    %s4327 = scalar_lea.sflag [#allocation5], 1
    %4328 = vsyncpa %s4327, 1

// kernel: tpu_custom_call.1
$region0: #{tpu_custom_call.1}
  #allocation0 [shape = 'u32[]', space=smem, size = 0x4, offset = 0x4, fixed_abs, tag = 'smem constant byte address 0x4 - core index']
  #allocation1 [shape = 'u32[144,128]{1,0:T(1,128)}', space=vmem, size = 0x12000, scoped, tag = 'internal scratch']
  #allocation2 [shape = 'f32[8,1024]{1,0:T(8,128)}', space=vmem, size = 0x8000, scoped, tag = 'scratch operand']
  %s0 = inlined_call_operand.hbm [shape: bf16[16,1024], index: 0, kind: input, shape index: {}]
  %s1 = inlined_call_operand.hbm [shape: bf16[1024,1024], index: 1, kind: input, shape index: {}]
  %s2 = inlined_call_operand.hbm [shape: bf16[1024,512], index: 2, kind: input, shape index: {}]
  %s3 = inlined_call_operand.hbm [shape: bf16[512,256], index: 3, kind: input, shape index: {}]
  %s4 = inlined_call_operand.hbm [shape: bf16[256,128], index: 4, kind: input, shape index: {}]
  %s5 = inlined_call_operand.hbm [shape: bf16[128,128], index: 5, kind: input, shape index: {}]
  %s6 = inlined_call_operand.hbm [shape: f32[40,1024], index: 6, kind: input, shape index: {}]
  %s7 = inlined_call_operand.hbm [shape: f32[16,128], index: 7, kind: output, shape index: {}]
  %s8 = sld [smem:[#allocation0]]
  $region97: #{tpu_custom_call.1} parent=0
    _
  %s10 = ssub.s32 1, %s8
  %s11 = scalar_select 0, %s10, %s8
  $region1: #{tpu_custom_call.1} parent=0
    #allocation3 [shape = 'u8[8192]{0}', space=vmem, size = 0x2000, scoped, tag = 'input window, operand 0']
    #allocation4 [shape = 's32[2]{0}', space=sflag, size = 0x8, scoped, tag = 'scoped memory for tpu_custom_call.1']
    #allocation5 [shape = 's32[2]{0}', space=sflag, size = 0x8, scoped, tag = 'scoped memory for tpu_custom_call.1']
    #allocation6 [shape = 'u8[1048576]{0}', space=vmem, size = 0x100000, scoped, tag = 'input window, operand 1']
    #allocation7 [shape = 's32[2]{0}', space=sflag, size = 0x8, scoped, tag = 'scoped memory for tpu_custom_call.1']
    #allocation8 [shape = 'u8[1048576]{0}', space=vmem, size = 0x100000, scoped, tag = 'input window, operand 2, single buffered']
    #allocation9 [shape = 'u8[262144]{0}', space=vmem, size = 0x40000, scoped, tag = 'input window, operand 3, single buffered']
    #allocation10 [shape = 's32[1]{0}', space=sflag, size = 0x4, scoped, tag = 'scoped memory for tpu_custom_call.1']
    #allocation11 [shape = 'u8[65536]{0}', space=vmem, size = 0x10000, scoped, tag = 'input window, operand 4, single buffered']
    #allocation12 [shape = 'u8[32768]{0}', space=vmem, size = 0x8000, scoped, tag = 'input window, operand 5, single buffered']
    #allocation13 [shape = 's32[1]{0}', space=sflag, size = 0x4, scoped, tag = 'scoped memory for tpu_custom_call.1']
    #allocation14 [shape = 'u8[163840]{0}', space=vmem, size = 0x28000, scoped, tag = 'input window, operand 6, single buffered']
    #allocation15 [shape = 'u8[8192]{0}', space=vmem, size = 0x2000, scoped, tag = 'output window, operand 0']
    %12 = vsyncpa [#allocation4], 0
    %s13 = scalar_lea.sflag [#allocation4], 1
    %14 = vsyncpa %s13, 0
    %15 = vsyncpa [#allocation7], 0
    %s16 = scalar_lea.sflag [#allocation7], 1
    %17 = vsyncpa %s16, 0
    %18 = vsyncpa [#allocation10], 0
    %19 = vsyncpa [#allocation13], 0
    %20 = vsyncpa [#allocation5], 0
    %s21 = scalar_lea.sflag [#allocation5], 1
    %22 = vsyncpa %s21, 0
    loop: start=0, step=1, limit=10
    $region2: #{tpu_custom_call.1} parent=1 // loop_pre_header
      _
    $region3: #{tpu_custom_call.1} parent=1 // loop_header
      %s24 = sphi 0, %s28
      %p25 = scmp.ge.s32.totalorder %s24, 10
      %s31 = sphi 0, %s43
      %s32 = sphi 0, %s39
      %s33 = sphi 0, %s31
      %s34 = sphi 0, %s32
      %s35 = sphi 0, %s33
      %s36 = sphi 0, %s34
      %s48 = sphi 0, %s50
      %s51 = sphi 0, %s48
      %s52 = sphi 0, %s51
      %s68 = sphi 0, %s52
      %s74 = sphi 0, %s76
      %s77 = sphi 0, %s74
      %s78 = sphi 0, %s77
      %s94 = sphi 0, %s78
      %s98 = sphi 0, %s98
      %s100 = sphi 0, %s98
      %s101 = sphi 0, %s100
      %s115 = sphi 0, %s101
      %s119 = sphi 0, %s119
      %s121 = sphi 0, %s119
      %s122 = sphi 0, %s121
      %s136 = sphi 0, %s122
      %s140 = sphi 0, %s140
      %s142 = sphi 0, %s140
      %s143 = sphi 0, %s142
      %s157 = sphi 0, %s143
      %s161 = sphi 0, %s161
      %s163 = sphi 0, %s161
      %s164 = sphi 0, %s163
      %s178 = sphi 0, %s164
      %s182 = sphi 0, %s182
      %s184 = sphi 0, %s182
      %s185 = sphi 0, %s184
      %s199 = sphi 0, %s185
      %s205 = sphi 0, %s207
      %s208 = sphi 0, %s205
      %s209 = sphi 0, %s208
      %s225 = sphi 0, %s209
    $region4: #{tpu_custom_call.1} parent=1 // loop_header_branch
      %27 = sbr.rel (%p25) target = $region8
    $region5: #{tpu_custom_call.1} parent=1 // loop_body
      %s29 = ssub.s32 %s24, 1
      %s30 = ssub.s32 %s24, 2
      %s37 = sadd.s32 1, %s32
      %p38 = scmp.ge.s32.totalorder %s37, 4
      %s39 = scalar_select %p38, 0, %s37
      %s40 = sadd.s32 1, %s31
      %s41 = scalar_select %p38, %s40, %s31
      %p42 = scmp.ge.s32.totalorder %s41, 2
      %s43 = scalar_select %p42, 0, %s41
      %s44 = ssub.s32 %s31, %s43
      %s45 = ssub.s32 %s32, %s39
      %s46 = sor.u32 %s44, %s45
      %p47 = scmp.eq.s32.totalorder %s46, 0
      %s49 = sadd.s32 %s48, 1
      %s50 = scalar_select %p47, %s48, %s49
      %p53 = pneg %p47
      %p54 = scmp.eq.s32.totalorder %s24, 7
      %p55 = por %p53, %p54
      %p56 = scmp.ne.s32.totalorder %s48, %s51
      %p57 = scmp.eq.s32.totalorder %s24, 0
      %p58 = por %p56, %p57
      %p59 = scmp.ne.s32.totalorder %s48, %s51
      %p60 = scmp.eq.s32.totalorder %s29, 7
      %p61 = por %p59, %p60
      %p62 = scmp.ne.s32.totalorder %s51, %s52
      %p63 = scmp.eq.s32.totalorder %s29, 0
      %p64 = por %p62, %p63
      %p65 = scmp.ne.s32.totalorder %s51, %s52
      %p66 = scmp.eq.s32.totalorder %s30, 7
      %p67 = por %p65, %p66
      %p69 = scmp.ne.s32.totalorder %s52, %s68
      %p70 = scmp.eq.s32.totalorder %s30, 0
      %p71 = por %p69, %p70
      %s72 = ssub.s32 %s32, %s39
      %p73 = scmp.eq.s32.totalorder %s72, 0
      %s75 = sadd.s32 %s74, 1
      %s76 = scalar_select %p73, %s74, %s75
      %p79 = pneg %p73
      %p80 = scmp.eq.s32.totalorder %s24, 7
      %p81 = por %p79, %p80
      %p82 = scmp.ne.s32.totalorder %s74, %s77
      %p83 = scmp.eq.s32.totalorder %s24, 0
      %p84 = por %p82, %p83
      %p85 = scmp.ne.s32.totalorder %s74, %s77
      %p86 = scmp.eq.s32.totalorder %s29, 7
      %p87 = por %p85, %p86
      %p88 = scmp.ne.s32.totalorder %s77, %s78
      %p89 = scmp.eq.s32.totalorder %s29, 0
      %p90 = por %p88, %p89
      %p91 = scmp.ne.s32.totalorder %s77, %s78
      %p92 = scmp.eq.s32.totalorder %s30, 7
      %p93 = por %p91, %p92
      %p95 = scmp.ne.s32.totalorder %s78, %s94
      %p96 = scmp.eq.s32.totalorder %s30, 0
      %p97 = por %p95, %p96
      %s99 = sadd.s32 %s98, 1
      %p102 = scmp.eq.s32.totalorder %s24, 7
      %p103 = scmp.ne.s32.totalorder %s98, %s100
      %p104 = scmp.eq.s32.totalorder %s24, 0
      %p105 = por %p103, %p104
      %p106 = scmp.ne.s32.totalorder %s98, %s100
      %p107 = scmp.eq.s32.totalorder %s29, 7
      %p108 = por %p106, %p107
      %p109 = scmp.ne.s32.totalorder %s100, %s101
      %p110 = scmp.eq.s32.totalorder %s29, 0
      %p111 = por %p109, %p110
      %p112 = scmp.ne.s32.totalorder %s100, %s101
      %p113 = scmp.eq.s32.totalorder %s30, 7
      %p114 = por %p112, %p113
      %p116 = scmp.ne.s32.totalorder %s101, %s115
      %p117 = scmp.eq.s32.totalorder %s30, 0
      %p118 = por %p116, %p117
      %s120 = sadd.s32 %s119, 1
      %p123 = scmp.eq.s32.totalorder %s24, 7
      %p124 = scmp.ne.s32.totalorder %s119, %s121
      %p125 = scmp.eq.s32.totalorder %s24, 0
      %p126 = por %p124, %p125
      %p127 = scmp.ne.s32.totalorder %s119, %s121
      %p128 = scmp.eq.s32.totalorder %s29, 7
      %p129 = por %p127, %p128
      %p130 = scmp.ne.s32.totalorder %s121, %s122
      %p131 = scmp.eq.s32.totalorder %s29, 0
      %p132 = por %p130, %p131
      %p133 = scmp.ne.s32.totalorder %s121, %s122
      %p134 = scmp.eq.s32.totalorder %s30, 7
      %p135 = por %p133, %p134
      %p137 = scmp.ne.s32.totalorder %s122, %s136
      %p138 = scmp.eq.s32.totalorder %s30, 0
      %p139 = por %p137, %p138
      %s141 = sadd.s32 %s140, 1
      %p144 = scmp.eq.s32.totalorder %s24, 7
      %p145 = scmp.ne.s32.totalorder %s140, %s142
      %p146 = scmp.eq.s32.totalorder %s24, 0
      %p147 = por %p145, %p146
      %p148 = scmp.ne.s32.totalorder %s140, %s142
      %p149 = scmp.eq.s32.totalorder %s29, 7
      %p150 = por %p148, %p149
      %p151 = scmp.ne.s32.totalorder %s142, %s143
      %p152 = scmp.eq.s32.totalorder %s29, 0
      %p153 = por %p151, %p152
      %p154 = scmp.ne.s32.totalorder %s142, %s143
      %p155 = scmp.eq.s32.totalorder %s30, 7
      %p156 = por %p154, %p155
      %p158 = scmp.ne.s32.totalorder %s143, %s157
      %p159 = scmp.eq.s32.totalorder %s30, 0
      %p160 = por %p158, %p159
      %s162 = sadd.s32 %s161, 1
      %p165 = scmp.eq.s32.totalorder %s24, 7
      %p166 = scmp.ne.s32.totalorder %s161, %s163
      %p167 = scmp.eq.s32.totalorder %s24, 0
      %p168 = por %p166, %p167
      %p169 = scmp.ne.s32.totalorder %s161, %s163
      %p170 = scmp.eq.s32.totalorder %s29, 7
      %p171 = por %p169, %p170
      %p172 = scmp.ne.s32.totalorder %s163, %s164
      %p173 = scmp.eq.s32.totalorder %s29, 0
      %p174 = por %p172, %p173
      %p175 = scmp.ne.s32.totalorder %s163, %s164
      %p176 = scmp.eq.s32.totalorder %s30, 7
      %p177 = por %p175, %p176
      %p179 = scmp.ne.s32.totalorder %s164, %s178
      %p180 = scmp.eq.s32.totalorder %s30, 0
      %p181 = por %p179, %p180
      %s183 = sadd.s32 %s182, 1
      %p186 = scmp.eq.s32.totalorder %s24, 7
      %p187 = scmp.ne.s32.totalorder %s182, %s184
      %p188 = scmp.eq.s32.totalorder %s24, 0
      %p189 = por %p187, %p188
      %p190 = scmp.ne.s32.totalorder %s182, %s184
      %p191 = scmp.eq.s32.totalorder %s29, 7
      %p192 = por %p190, %p191
      %p193 = scmp.ne.s32.totalorder %s184, %s185
      %p194 = scmp.eq.s32.totalorder %s29, 0
      %p195 = por %p193, %p194
      %p196 = scmp.ne.s32.totalorder %s184, %s185
      %p197 = scmp.eq.s32.totalorder %s30, 7
      %p198 = por %p196, %p197
      %p200 = scmp.ne.s32.totalorder %s185, %s199
      %p201 = scmp.eq.s32.totalorder %s30, 0
      %p202 = por %p200, %p201
      %s203 = ssub.s32 %s31, %s43
      %p204 = scmp.eq.s32.totalorder %s203, 0
      %s206 = sadd.s32 %s205, 1
      %s207 = scalar_select %p204, %s205, %s206
      %p210 = pneg %p204
      %p211 = scmp.eq.s32.totalorder %s24, 7
      %p212 = por %p210, %p211
      %p213 = scmp.ne.s32.totalorder %s205, %s208
      %p214 = scmp.eq.s32.totalorder %s24, 0
      %p215 = por %p213, %p214
      %p216 = scmp.ne.s32.totalorder %s205, %s208
      %p217 = scmp.eq.s32.totalorder %s29, 7
      %p218 = por %p216, %p217
      %p219 = scmp.ne.s32.totalorder %s208, %s209
      %p220 = scmp.eq.s32.totalorder %s29, 0
      %p221 = por %p219, %p220
      %p222 = scmp.ne.s32.totalorder %s208, %s209
      %p223 = scmp.eq.s32.totalorder %s30, 7
      %p224 = por %p222, %p223
      %p226 = scmp.ne.s32.totalorder %s209, %s225
      %p227 = scmp.eq.s32.totalorder %s30, 0
      %p228 = por %p226, %p227
      %p229 = scmp.le.s32.totalorder 1, %s24
      %p230 = scmp.lt.s32.totalorder %s24, 9
      %p231 = pnand %p229, %p230
      %p232 = pneg %p231
      // Predicated region
      $region9: #{tpu_custom_call.1} parent=5 // pred_check
        _
      $region10: #{tpu_custom_call.1} parent=5 // pred_check_branch
        %234 = sbr.rel (%p231) target = $region12
      $region11: #{tpu_custom_call.1} parent=5 // pred_region
        %s235 = ssub.s32 %s24, 1
        // Predicated region
        $region13: #{tpu_custom_call.1} parent=11 // pred_check
          %p236 = pneg %p111
        $region14: #{tpu_custom_call.1} parent=11 // pred_check_branch
          %238 = sbr.rel (%p236) target = $region16
        $region15: #{tpu_custom_call.1} parent=11 // pred_region
          %s240 = ssub.s32 32768, 32768
          %241 = vsyncadd [#allocation7], %s240
          %s242 = sshll.u32 [#allocation8], 4
          %s243 = int_to_ptr.vmem [resolvable:$true] %s242
          %248 = dma.hbm_to_vmem [thread:$0]  %s2, 32768, %s243, [#allocation7], 256, 256, 16
        $region16: #{tpu_custom_call.1} parent=11 // pred_fallthru
          _
        // Predicated region
        $region17: #{tpu_custom_call.1} parent=11 // pred_check
          %p249 = pneg %p132
        $region18: #{tpu_custom_call.1} parent=11 // pred_check_branch
          %251 = sbr.rel (%p249) target = $region20
        $region19: #{tpu_custom_call.1} parent=11 // pred_region
          %s253 = ssub.s32 8192, 8192
          %254 = vsyncadd [#allocation10], %s253
          %s255 = sshll.u32 [#allocation9], 4
          %s256 = int_to_ptr.vmem [resolvable:$true] %s255
          %261 = dma.hbm_to_vmem [thread:$0]  %s3, 8192, %s256, [#allocation10], 128, 128, 8
        $region20: #{tpu_custom_call.1} parent=11 // pred_fallthru
          _
        // Predicated region
        $region21: #{tpu_custom_call.1} parent=11 // pred_check
          %p262 = pneg %p153
        $region22: #{tpu_custom_call.1} parent=11 // pred_check_branch
          %264 = sbr.rel (%p262) target = $region24
        $region23: #{tpu_custom_call.1} parent=11 // pred_region
          %s266 = ssub.s32 2048, 2048
          %267 = vsyncadd [#allocation10], %s266
          %s268 = sshll.u32 [#allocation11], 4
          %s269 = int_to_ptr.vmem [resolvable:$true] %s268
          %274 = dma.hbm_to_vmem [thread:$0]  %s4, 2048, %s269, [#allocation10], 64, 64, 4
        $region24: #{tpu_custom_call.1} parent=11 // pred_fallthru
          _
        // Predicated region
        $region25: #{tpu_custom_call.1} parent=11 // pred_check
          %p275 = pneg %p174
        $region26: #{tpu_custom_call.1} parent=11 // pred_check_branch
          %277 = sbr.rel (%p275) target = $region28
        $region27: #{tpu_custom_call.1} parent=11 // pred_region
          %s279 = ssub.s32 1024, 1024
          %280 = vsyncadd [#allocation13], %s279
          %s281 = sshll.u32 [#allocation12], 4
          %s282 = int_to_ptr.vmem [resolvable:$true] %s281
          %287 = dma.hbm_to_vmem [thread:$0]  %s5, 1024, %s282, [#allocation13], 64, 64, 4
        $region28: #{tpu_custom_call.1} parent=11 // pred_fallthru
          _
        // Predicated region
        $region29: #{tpu_custom_call.1} parent=11 // pred_check
          %p288 = pneg %p195
        $region30: #{tpu_custom_call.1} parent=11 // pred_check_branch
          %290 = sbr.rel (%p288) target = $region32
        $region31: #{tpu_custom_call.1} parent=11 // pred_region
          %s292 = ssub.s32 5120, 5120
          %293 = vsyncadd [#allocation13], %s292
          %s294 = sshll.u32 [#allocation14], 4
          %s295 = int_to_ptr.vmem [resolvable:$true] %s294
          %300 = dma.hbm_to_vmem [thread:$0]  %s6, 5120, %s295, [#allocation13], 1024, 1024, 64
        $region32: #{tpu_custom_call.1} parent=11 // pred_fallthru
          _
      $region12: #{tpu_custom_call.1} parent=5 // pred_fallthru
        _
      %p301 = scmp.lt.s32.totalorder %s24, 8
      // Predicated region
      $region33: #{tpu_custom_call.1} parent=5 // pred_check
        %p302 = pneg %p301
      $region34: #{tpu_custom_call.1} parent=5 // pred_check_branch
        %304 = sbr.rel (%p302) target = $region36
      $region35: #{tpu_custom_call.1} parent=5 // pred_region
        // Predicated region
        $region37: #{tpu_custom_call.1} parent=35 // pred_check
          %p305 = pneg %p58
        $region38: #{tpu_custom_call.1} parent=35 // pred_check_branch
          %307 = sbr.rel (%p305) target = $region40
        $region39: #{tpu_custom_call.1} parent=35 // pred_region
          %s308 = sand.u32 %s48, 1
          %s309 = scalar_lea.sflag [#allocation4], %s308
          %s310 = sand.u32 %s48, 1
          %s311 = smul.addr %s310, 8
          %s312 = scalar_lea.vmem [#allocation3], %s311
          %s313 = smul.u32 2, %s32
          %s315 = ssub.s32 128, 128
          %316 = vsyncadd %s309, %s315
          %s317 = smul.addr %s31, 8
          %s318 = sadd.s32 %s313, %s317
          %s319 = smul.addr %s318, 64
          %s320 = scalar_lea.hbm %s0, %s319
          %s322 = sshll.u32 %s312, 4
          %s323 = int_to_ptr.vmem [resolvable:$true] %s322
          %325 = dma.hbm_to_vmem [thread:$0]  %s320, 128, %s323, %s309
        $region40: #{tpu_custom_call.1} parent=35 // pred_fallthru
          _
        // Predicated region
        $region41: #{tpu_custom_call.1} parent=35 // pred_check
          %p326 = pneg %p84
        $region42: #{tpu_custom_call.1} parent=35 // pred_check_branch
          %328 = sbr.rel (%p326) target = $region44
        $region43: #{tpu_custom_call.1} parent=35 // pred_region
          %s329 = sand.u32 %s24, 1
          %s330 = scalar_lea.sflag [#allocation7], %s329
          %s331 = sand.u32 %s74, 1
          %s332 = smul.addr %s331, 1024
          %s333 = scalar_lea.vmem [#allocation6], %s332
          %s334 = smul.u32 32, %s32
          %s336 = ssub.s32 16384, 16384
          %337 = vsyncadd %s330, %s336
          %s338 = smul.addr %s334, 8
          %s339 = smul.addr %s338, 64
          %s340 = scalar_lea.hbm %s1, %s339
          %s341 = sshll.u32 %s333, 4
          %s342 = int_to_ptr.vmem [resolvable:$true] %s341
          %347 = dma.hbm_to_vmem [thread:$0]  %s340, 16384, %s342, %s330, 512, 512, 32
        $region44: #{tpu_custom_call.1} parent=35 // pred_fallthru
          _
      $region36: #{tpu_custom_call.1} parent=5 // pred_fallthru
        _
      %p348 = scmp.le.s32.totalorder 1, %s24
      %p349 = scmp.lt.s32.totalorder %s24, 9
      %p350 = pnand %p348, %p349
      %p351 = pneg %p350
      // Predicated region
      $region45: #{tpu_custom_call.1} parent=5 // pred_check
        _
      $region46: #{tpu_custom_call.1} parent=5 // pred_check_branch
        %353 = sbr.rel (%p350) target = $region48
      $region47: #{tpu_custom_call.1} parent=5 // pred_region
        %s354 = ssub.s32 %s24, 1
        %s355 = sand.u32 %s51, 1
        %s356 = scalar_lea.sflag [#allocation4], %s355
        %s357 = sand.u32 %s51, 1
        %s358 = smul.addr %s357, 8
        %s359 = scalar_lea.vmem [#allocation3], %s358
        // Predicated region
        $region49: #{tpu_custom_call.1} parent=47 // pred_check
          %p360 = pneg %p64
        $region50: #{tpu_custom_call.1} parent=47 // pred_check_branch
          %362 = sbr.rel (%p360) target = $region52
        $region51: #{tpu_custom_call.1} parent=47 // pred_region
          %363 = dma.done %s356, 128
        $region52: #{tpu_custom_call.1} parent=47 // pred_fallthru
          _
        %s364 = sand.u32 %s29, 1
        %s365 = scalar_lea.sflag [#allocation7], %s364
        %s366 = sand.u32 %s77, 1
        %s367 = smul.addr %s366, 1024
        %s368 = scalar_lea.vmem [#allocation6], %s367
        // Predicated region
        $region53: #{tpu_custom_call.1} parent=47 // pred_check
          %p369 = pneg %p90
        $region54: #{tpu_custom_call.1} parent=47 // pred_check_branch
          %371 = sbr.rel (%p369) target = $region56
        $region55: #{tpu_custom_call.1} parent=47 // pred_region
          %372 = dma.done %s365, 16384
        $region56: #{tpu_custom_call.1} parent=47 // pred_fallthru
          _
        // Predicated region
        $region57: #{tpu_custom_call.1} parent=47 // pred_check
          %p373 = pneg %p111
        $region58: #{tpu_custom_call.1} parent=47 // pred_check_branch
          %375 = sbr.rel (%p373) target = $region60
        $region59: #{tpu_custom_call.1} parent=47 // pred_region
          %376 = dma.done [#allocation7], 32768
        $region60: #{tpu_custom_call.1} parent=47 // pred_fallthru
          _
        // Predicated region
        $region61: #{tpu_custom_call.1} parent=47 // pred_check
          %p377 = pneg %p132
        $region62: #{tpu_custom_call.1} parent=47 // pred_check_branch
          %379 = sbr.rel (%p377) target = $region64
        $region63: #{tpu_custom_call.1} parent=47 // pred_region
          %380 = dma.done [#allocation10], 8192
        $region64: #{tpu_custom_call.1} parent=47 // pred_fallthru
          _
        // Predicated region
        $region65: #{tpu_custom_call.1} parent=47 // pred_check
          %p381 = pneg %p153
        $region66: #{tpu_custom_call.1} parent=47 // pred_check_branch
          %383 = sbr.rel (%p381) target = $region68
        $region67: #{tpu_custom_call.1} parent=47 // pred_region
          %384 = dma.done [#allocation10], 2048
        $region68: #{tpu_custom_call.1} parent=47 // pred_fallthru
          _
        // Predicated region
        $region69: #{tpu_custom_call.1} parent=47 // pred_check
          %p385 = pneg %p174
        $region70: #{tpu_custom_call.1} parent=47 // pred_check_branch
          %387 = sbr.rel (%p385) target = $region72
        $region71: #{tpu_custom_call.1} parent=47 // pred_region
          %388 = dma.done [#allocation13], 1024
        $region72: #{tpu_custom_call.1} parent=47 // pred_fallthru
          _
        // Predicated region
        $region73: #{tpu_custom_call.1} parent=47 // pred_check
          %p389 = pneg %p195
        $region74: #{tpu_custom_call.1} parent=47 // pred_check_branch
          %391 = sbr.rel (%p389) target = $region76
        $region75: #{tpu_custom_call.1} parent=47 // pred_region
          %392 = dma.done [#allocation13], 5120
        $region76: #{tpu_custom_call.1} parent=47 // pred_fallthru
          _
        %s393 = sand.u32 %s51, 1
        %s394 = scalar_lea.sflag [#allocation4], %s393
        %s395 = sand.u32 %s51, 1
        %s396 = smul.addr %s395, 8
        %s397 = scalar_lea.vmem [#allocation3], %s396
        %p398 = pneg %p64
        %p399 = pneg %p61
        %s400 = sand.u32 %s29, 1
        %s401 = scalar_lea.sflag [#allocation7], %s400
        %s402 = sand.u32 %s77, 1
        %s403 = smul.addr %s402, 1024
        %s404 = scalar_lea.vmem [#allocation6], %s403
        %p405 = pneg %p90
        %p406 = pneg %p87
        %p407 = pneg %p111
        %p408 = pneg %p108
        %p409 = pneg %p132
        %p410 = pneg %p129
        %p411 = pneg %p153
        %p412 = pneg %p150
        %p413 = pneg %p174
        %p414 = pneg %p171
        %p415 = pneg %p195
        %p416 = pneg %p192
        %p417 = pneg %p221
        %p418 = pneg %p218
        %s419 = sand.u32 %s208, 1
        %s420 = scalar_lea.sflag [#allocation5], %s419
        %s421 = sand.u32 %s208, 1
        %s422 = smul.addr %s421, 8
        %s423 = scalar_lea.vmem [#allocation15], %s422
        %s424 = smul.u32 2, %s34
        %s425 = smul.u32 32, %s34
        %p427 = scmp.eq.s32.totalorder %s34, 0
        // Predicated region
        $region77: #{tpu_custom_call.1} parent=47 // pred_check
          %p428 = pneg %p427
        $region78: #{tpu_custom_call.1} parent=47 // pred_check_branch
          %430 = sbr.rel (%p428) target = $region80
        $region79: #{tpu_custom_call.1} parent=47 // pred_region
          %431 = vst [vmem:[#allocation2] sm:$0xff] 0.0
          %432 = vst [vmem:[#allocation2 + $0x8] sm:$0xff] 0.0
          %433 = vst [vmem:[#allocation2 + $0x10] sm:$0xff] 0.0
          %434 = vst [vmem:[#allocation2 + $0x18] sm:$0xff] 0.0
          %435 = vst [vmem:[#allocation2 + $0x20] sm:$0xff] 0.0
          %436 = vst [vmem:[#allocation2 + $0x28] sm:$0xff] 0.0
          %437 = vst [vmem:[#allocation2 + $0x30] sm:$0xff] 0.0
          %438 = vst [vmem:[#allocation2 + $0x38] sm:$0xff] 0.0
        $region80: #{tpu_custom_call.1} parent=47 // pred_fallthru
          _
        %v439 = vld [vmem:[#allocation2] sm:$0xff]
        %v440 = vld [vmem:[#allocation2 + $0x8] sm:$0xff]
        %v441 = vld [vmem:[#allocation2 + $0x10] sm:$0xff]
        %v442 = vld [vmem:[#allocation2 + $0x18] sm:$0xff]
        %v443 = vld [vmem:[#allocation2 + $0x20] sm:$0xff]
        %v444 = vld [vmem:[#allocation2 + $0x28] sm:$0xff]
        %v445 = vld [vmem:[#allocation2 + $0x30] sm:$0xff]
        %v446 = vld [vmem:[#allocation2 + $0x38] sm:$0xff]
        %v447 = vld [vmem:[%s359] sm:$0xff]
        %v448 = vld [vmem:[%s368] sm:$0xff]
        %v449 = vld [vmem:[%s368 + $0x8] sm:$0xff]
        %v450 = vld [vmem:[%s368 + $0x10] sm:$0xff]
        %v451 = vld [vmem:[%s368 + $0x18] sm:$0xff]
        %v452 = vld [vmem:[%s368 + $0x20] sm:$0xff]
        %v453 = vld [vmem:[%s368 + $0x28] sm:$0xff]
        %v454 = vld [vmem:[%s368 + $0x30] sm:$0xff]
        %v455 = vld [vmem:[%s368 + $0x38] sm:$0xff]
        %v456 = vld [vmem:[%s368 + $0x40] sm:$0xff]
        %v457 = vld [vmem:[%s368 + $0x48] sm:$0xff]
        %v458 = vld [vmem:[%s368 + $0x50] sm:$0xff]
        %v459 = vld [vmem:[%s368 + $0x58] sm:$0xff]
        %v460 = vld [vmem:[%s368 + $0x60] sm:$0xff]
        %v461 = vld [vmem:[%s368 + $0x68] sm:$0xff]
        %v462 = vld [vmem:[%s368 + $0x70] sm:$0xff]
        %v463 = vld [vmem:[%s368 + $0x78] sm:$0xff]
        %v464 = vld [vmem:[%s368 + $0x80] sm:$0xff]
        %v465 = vld [vmem:[%s368 + $0x88] sm:$0xff]
        %v466 = vld [vmem:[%s368 + $0x90] sm:$0xff]
        %v467 = vld [vmem:[%s368 + $0x98] sm:$0xff]
        %v468 = vld [vmem:[%s368 + $0xa0] sm:$0xff]
        %v469 = vld [vmem:[%s368 + $0xa8] sm:$0xff]
        %v470 = vld [vmem:[%s368 + $0xb0] sm:$0xff]
        %v471 = vld [vmem:[%s368 + $0xb8] sm:$0xff]
        %v472 = vld [vmem:[%s368 + $0xc0] sm:$0xff]
        %v473 = vld [vmem:[%s368 + $0xc8] sm:$0xff]
        %v474 = vld [vmem:[%s368 + $0xd0] sm:$0xff]
        %v475 = vld [vmem:[%s368 + $0xd8] sm:$0xff]
        %v476 = vld [vmem:[%s368 + $0xe0] sm:$0xff]
        %v477 = vld [vmem:[%s368 + $0xe8] sm:$0xff]
        %v478 = vld [vmem:[%s368 + $0xf0] sm:$0xff]
        %v479 = vld [vmem:[%s368 + $0xf8] sm:$0xff]
        %v480 = vld [vmem:[%s368 + $0x100] sm:$0xff]
        %v481 = vld [vmem:[%s368 + $0x108] sm:$0xff]
        %v482 = vld [vmem:[%s368 + $0x110] sm:$0xff]
        %v483 = vld [vmem:[%s368 + $0x118] sm:$0xff]
        %v484 = vld [vmem:[%s368 + $0x120] sm:$0xff]
        %v485 = vld [vmem:[%s368 + $0x128] sm:$0xff]
        %v486 = vld [vmem:[%s368 + $0x130] sm:$0xff]
        %v487 = vld [vmem:[%s368 + $0x138] sm:$0xff]
        %v488 = vld [vmem:[%s368 + $0x140] sm:$0xff]
        %v489 = vld [vmem:[%s368 + $0x148] sm:$0xff]
        %v490 = vld [vmem:[%s368 + $0x150] sm:$0xff]
        %v491 = vld [vmem:[%s368 + $0x158] sm:$0xff]
        %v492 = vld [vmem:[%s368 + $0x160] sm:$0xff]
        %v493 = vld [vmem:[%s368 + $0x168] sm:$0xff]
        %v494 = vld [vmem:[%s368 + $0x170] sm:$0xff]
        %v495 = vld [vmem:[%s368 + $0x178] sm:$0xff]
        %v496 = vld [vmem:[%s368 + $0x180] sm:$0xff]
        %v497 = vld [vmem:[%s368 + $0x188] sm:$0xff]
        %v498 = vld [vmem:[%s368 + $0x190] sm:$0xff]
        %v499 = vld [vmem:[%s368 + $0x198] sm:$0xff]
        %v500 = vld [vmem:[%s368 + $0x1a0] sm:$0xff]
        %v501 = vld [vmem:[%s368 + $0x1a8] sm:$0xff]
        %v502 = vld [vmem:[%s368 + $0x1b0] sm:$0xff]
        %v503 = vld [vmem:[%s368 + $0x1b8] sm:$0xff]
        %v504 = vld [vmem:[%s368 + $0x1c0] sm:$0xff]
        %v505 = vld [vmem:[%s368 + $0x1c8] sm:$0xff]
        %v506 = vld [vmem:[%s368 + $0x1d0] sm:$0xff]
        %v507 = vld [vmem:[%s368 + $0x1d8] sm:$0xff]
        %v508 = vld [vmem:[%s368 + $0x1e0] sm:$0xff]
        %v509 = vld [vmem:[%s368 + $0x1e8] sm:$0xff]
        %v510 = vld [vmem:[%s368 + $0x1f0] sm:$0xff]
        %v511 = vld [vmem:[%s368 + $0x1f8] sm:$0xff]
        %v512 = vld [vmem:[%s368 + $0x200] sm:$0xff]
        %v513 = vld [vmem:[%s368 + $0x208] sm:$0xff]
        %v514 = vld [vmem:[%s368 + $0x210] sm:$0xff]
        %v515 = vld [vmem:[%s368 + $0x218] sm:$0xff]
        %v516 = vld [vmem:[%s368 + $0x220] sm:$0xff]
        %v517 = vld [vmem:[%s368 + $0x228] sm:$0xff]
        %v518 = vld [vmem:[%s368 + $0x230] sm:$0xff]
        %v519 = vld [vmem:[%s368 + $0x238] sm:$0xff]
        %v520 = vld [vmem:[%s368 + $0x240] sm:$0xff]
        %v521 = vld [vmem:[%s368 + $0x248] sm:$0xff]
        %v522 = vld [vmem:[%s368 + $0x250] sm:$0xff]
        %v523 = vld [vmem:[%s368 + $0x258] sm:$0xff]
        %v524 = vld [vmem:[%s368 + $0x260] sm:$0xff]
        %v525 = vld [vmem:[%s368 + $0x268] sm:$0xff]
        %v526 = vld [vmem:[%s368 + $0x270] sm:$0xff]
        %v527 = vld [vmem:[%s368 + $0x278] sm:$0xff]
        %v528 = vld [vmem:[%s368 + $0x280] sm:$0xff]
        %v529 = vld [vmem:[%s368 + $0x288] sm:$0xff]
        %v530 = vld [vmem:[%s368 + $0x290] sm:$0xff]
        %v531 = vld [vmem:[%s368 + $0x298] sm:$0xff]
        %v532 = vld [vmem:[%s368 + $0x2a0] sm:$0xff]
        %v533 = vld [vmem:[%s368 + $0x2a8] sm:$0xff]
        %v534 = vld [vmem:[%s368 + $0x2b0] sm:$0xff]
        %v535 = vld [vmem:[%s368 + $0x2b8] sm:$0xff]
        %v536 = vld [vmem:[%s368 + $0x2c0] sm:$0xff]
        %v537 = vld [vmem:[%s368 + $0x2c8] sm:$0xff]
        %v538 = vld [vmem:[%s368 + $0x2d0] sm:$0xff]
        %v539 = vld [vmem:[%s368 + $0x2d8] sm:$0xff]
        %v540 = vld [vmem:[%s368 + $0x2e0] sm:$0xff]
        %v541 = vld [vmem:[%s368 + $0x2e8] sm:$0xff]
        %v542 = vld [vmem:[%s368 + $0x2f0] sm:$0xff]
        %v543 = vld [vmem:[%s368 + $0x2f8] sm:$0xff]
        %v544 = vld [vmem:[%s368 + $0x300] sm:$0xff]
        %v545 = vld [vmem:[%s368 + $0x308] sm:$0xff]
        %v546 = vld [vmem:[%s368 + $0x310] sm:$0xff]
        %v547 = vld [vmem:[%s368 + $0x318] sm:$0xff]
        %v548 = vld [vmem:[%s368 + $0x320] sm:$0xff]
        %v549 = vld [vmem:[%s368 + $0x328] sm:$0xff]
        %v550 = vld [vmem:[%s368 + $0x330] sm:$0xff]
        %v551 = vld [vmem:[%s368 + $0x338] sm:$0xff]
        %v552 = vld [vmem:[%s368 + $0x340] sm:$0xff]
        %v553 = vld [vmem:[%s368 + $0x348] sm:$0xff]
        %v554 = vld [vmem:[%s368 + $0x350] sm:$0xff]
        %v555 = vld [vmem:[%s368 + $0x358] sm:$0xff]
        %v556 = vld [vmem:[%s368 + $0x360] sm:$0xff]
        %v557 = vld [vmem:[%s368 + $0x368] sm:$0xff]
        %v558 = vld [vmem:[%s368 + $0x370] sm:$0xff]
        %v559 = vld [vmem:[%s368 + $0x378] sm:$0xff]
        %v560 = vld [vmem:[%s368 + $0x380] sm:$0xff]
        %v561 = vld [vmem:[%s368 + $0x388] sm:$0xff]
        %v562 = vld [vmem:[%s368 + $0x390] sm:$0xff]
        %v563 = vld [vmem:[%s368 + $0x398] sm:$0xff]
        %v564 = vld [vmem:[%s368 + $0x3a0] sm:$0xff]
        %v565 = vld [vmem:[%s368 + $0x3a8] sm:$0xff]
        %v566 = vld [vmem:[%s368 + $0x3b0] sm:$0xff]
        %v567 = vld [vmem:[%s368 + $0x3b8] sm:$0xff]
        %v568 = vld [vmem:[%s368 + $0x3c0] sm:$0xff]
        %v569 = vld [vmem:[%s368 + $0x3c8] sm:$0xff]
        %v570 = vld [vmem:[%s368 + $0x3d0] sm:$0xff]
        %v571 = vld [vmem:[%s368 + $0x3d8] sm:$0xff]
        %v572 = vld [vmem:[%s368 + $0x3e0] sm:$0xff]
        %v573 = vld [vmem:[%s368 + $0x3e8] sm:$0xff]
        %v574 = vld [vmem:[%s368 + $0x3f0] sm:$0xff]
        %v575 = vld [vmem:[%s368 + $0x3f8] sm:$0xff]
        %v577 = vunpack.c.l.b16 %v447
        %v578 = vunpack.c.h.b16 %v447
        %v579 = vpack.c.b16 %v577, %v577
        %v580 = vpack.c.b16 %v578, %v578
        %v711 = vunpack.c.l.b16 %v448
        %v712 = vunpack.c.h.b16 %v448
        %v713 = vunpack.c.l.b16 %v449
        %v714 = vunpack.c.h.b16 %v449
        %v715 = vunpack.c.l.b16 %v450
        %v716 = vunpack.c.h.b16 %v450
        %v717 = vunpack.c.l.b16 %v451
        %v718 = vunpack.c.h.b16 %v451
        %v719 = vunpack.c.l.b16 %v452
        %v720 = vunpack.c.h.b16 %v452
        %v721 = vunpack.c.l.b16 %v453
        %v722 = vunpack.c.h.b16 %v453
        %v723 = vunpack.c.l.b16 %v454
        %v724 = vunpack.c.h.b16 %v454
        %v725 = vunpack.c.l.b16 %v455
        %v726 = vunpack.c.h.b16 %v455
        %v727 = vunpack.c.l.b16 %v456
        %v728 = vunpack.c.h.b16 %v456
        %v729 = vunpack.c.l.b16 %v457
        %v730 = vunpack.c.h.b16 %v457
        %v731 = vunpack.c.l.b16 %v458
        %v732 = vunpack.c.h.b16 %v458
        %v733 = vunpack.c.l.b16 %v459
        %v734 = vunpack.c.h.b16 %v459
        %v735 = vunpack.c.l.b16 %v460
        %v736 = vunpack.c.h.b16 %v460
        %v737 = vunpack.c.l.b16 %v461
        %v738 = vunpack.c.h.b16 %v461
        %v739 = vunpack.c.l.b16 %v462
        %v740 = vunpack.c.h.b16 %v462
        %v741 = vunpack.c.l.b16 %v463
        %v742 = vunpack.c.h.b16 %v463
        %v743 = vunpack.c.l.b16 %v464
        %v744 = vunpack.c.h.b16 %v464
        %v745 = vunpack.c.l.b16 %v465
        %v746 = vunpack.c.h.b16 %v465
        %v747 = vunpack.c.l.b16 %v466
        %v748 = vunpack.c.h.b16 %v466
        %v749 = vunpack.c.l.b16 %v467
        %v750 = vunpack.c.h.b16 %v467
        %v751 = vunpack.c.l.b16 %v468
        %v752 = vunpack.c.h.b16 %v468
        %v753 = vunpack.c.l.b16 %v469
        %v754 = vunpack.c.h.b16 %v469
        %v755 = vunpack.c.l.b16 %v470
        %v756 = vunpack.c.h.b16 %v470
        %v757 = vunpack.c.l.b16 %v471
        %v758 = vunpack.c.h.b16 %v471
        %v759 = vunpack.c.l.b16 %v472
        %v760 = vunpack.c.h.b16 %v472
        %v761 = vunpack.c.l.b16 %v473
        %v762 = vunpack.c.h.b16 %v473
        %v763 = vunpack.c.l.b16 %v474
        %v764 = vunpack.c.h.b16 %v474
        %v765 = vunpack.c.l.b16 %v475
        %v766 = vunpack.c.h.b16 %v475
        %v767 = vunpack.c.l.b16 %v476
        %v768 = vunpack.c.h.b16 %v476
        %v769 = vunpack.c.l.b16 %v477
        %v770 = vunpack.c.h.b16 %v477
        %v771 = vunpack.c.l.b16 %v478
        %v772 = vunpack.c.h.b16 %v478
        %v773 = vunpack.c.l.b16 %v479
        %v774 = vunpack.c.h.b16 %v479
        %v775 = vunpack.c.l.b16 %v480
        %v776 = vunpack.c.h.b16 %v480
        %v777 = vunpack.c.l.b16 %v481
        %v778 = vunpack.c.h.b16 %v481
        %v779 = vunpack.c.l.b16 %v482
        %v780 = vunpack.c.h.b16 %v482
        %v781 = vunpack.c.l.b16 %v483
        %v782 = vunpack.c.h.b16 %v483
        %v783 = vunpack.c.l.b16 %v484
        %v784 = vunpack.c.h.b16 %v484
        %v785 = vunpack.c.l.b16 %v485
        %v786 = vunpack.c.h.b16 %v485
        %v787 = vunpack.c.l.b16 %v486
        %v788 = vunpack.c.h.b16 %v486
        %v789 = vunpack.c.l.b16 %v487
        %v790 = vunpack.c.h.b16 %v487
        %v791 = vunpack.c.l.b16 %v488
        %v792 = vunpack.c.h.b16 %v488
        %v793 = vunpack.c.l.b16 %v489
        %v794 = vunpack.c.h.b16 %v489
        %v795 = vunpack.c.l.b16 %v490
        %v796 = vunpack.c.h.b16 %v490
        %v797 = vunpack.c.l.b16 %v491
        %v798 = vunpack.c.h.b16 %v491
        %v799 = vunpack.c.l.b16 %v492
        %v800 = vunpack.c.h.b16 %v492
        %v801 = vunpack.c.l.b16 %v493
        %v802 = vunpack.c.h.b16 %v493
        %v803 = vunpack.c.l.b16 %v494
        %v804 = vunpack.c.h.b16 %v494
        %v805 = vunpack.c.l.b16 %v495
        %v806 = vunpack.c.h.b16 %v495
        %v807 = vunpack.c.l.b16 %v496
        %v808 = vunpack.c.h.b16 %v496
        %v809 = vunpack.c.l.b16 %v497
        %v810 = vunpack.c.h.b16 %v497
        %v811 = vunpack.c.l.b16 %v498
        %v812 = vunpack.c.h.b16 %v498
        %v813 = vunpack.c.l.b16 %v499
        %v814 = vunpack.c.h.b16 %v499
        %v815 = vunpack.c.l.b16 %v500
        %v816 = vunpack.c.h.b16 %v500
        %v817 = vunpack.c.l.b16 %v501
        %v818 = vunpack.c.h.b16 %v501
        %v819 = vunpack.c.l.b16 %v502
        %v820 = vunpack.c.h.b16 %v502
        %v821 = vunpack.c.l.b16 %v503
        %v822 = vunpack.c.h.b16 %v503
        %v823 = vunpack.c.l.b16 %v504
        %v824 = vunpack.c.h.b16 %v504
        %v825 = vunpack.c.l.b16 %v505
        %v826 = vunpack.c.h.b16 %v505
        %v827 = vunpack.c.l.b16 %v506
        %v828 = vunpack.c.h.b16 %v506
        %v829 = vunpack.c.l.b16 %v507
        %v830 = vunpack.c.h.b16 %v507
        %v831 = vunpack.c.l.b16 %v508
        %v832 = vunpack.c.h.b16 %v508
        %v833 = vunpack.c.l.b16 %v509
        %v834 = vunpack.c.h.b16 %v509
        %v835 = vunpack.c.l.b16 %v510
        %v836 = vunpack.c.h.b16 %v510
        %v837 = vunpack.c.l.b16 %v511
        %v838 = vunpack.c.h.b16 %v511
        %v839 = vunpack.c.l.b16 %v512
        %v840 = vunpack.c.h.b16 %v512
        %v841 = vunpack.c.l.b16 %v513
        %v842 = vunpack.c.h.b16 %v513
        %v843 = vunpack.c.l.b16 %v514
        %v844 = vunpack.c.h.b16 %v514
        %v845 = vunpack.c.l.b16 %v515
        %v846 = vunpack.c.h.b16 %v515
        %v847 = vunpack.c.l.b16 %v516
        %v848 = vunpack.c.h.b16 %v516
        %v849 = vunpack.c.l.b16 %v517
        %v850 = vunpack.c.h.b16 %v517
        %v851 = vunpack.c.l.b16 %v518
        %v852 = vunpack.c.h.b16 %v518
        %v853 = vunpack.c.l.b16 %v519
        %v854 = vunpack.c.h.b16 %v519
        %v855 = vunpack.c.l.b16 %v520
        %v856 = vunpack.c.h.b16 %v520
        %v857 = vunpack.c.l.b16 %v521
        %v858 = vunpack.c.h.b16 %v521
        %v859 = vunpack.c.l.b16 %v522
        %v860 = vunpack.c.h.b16 %v522
        %v861 = vunpack.c.l.b16 %v523
        %v862 = vunpack.c.h.b16 %v523
        %v863 = vunpack.c.l.b16 %v524
        %v864 = vunpack.c.h.b16 %v524
        %v865 = vunpack.c.l.b16 %v525
        %v866 = vunpack.c.h.b16 %v525
        %v867 = vunpack.c.l.b16 %v526
        %v868 = vunpack.c.h.b16 %v526
        %v869 = vunpack.c.l.b16 %v527
        %v870 = vunpack.c.h.b16 %v527
        %v871 = vunpack.c.l.b16 %v528
        %v872 = vunpack.c.h.b16 %v528
        %v873 = vunpack.c.l.b16 %v529
        %v874 = vunpack.c.h.b16 %v529
        %v875 = vunpack.c.l.b16 %v530
        %v876 = vunpack.c.h.b16 %v530
        %v877 = vunpack.c.l.b16 %v531
        %v878 = vunpack.c.h.b16 %v531
        %v879 = vunpack.c.l.b16 %v532
        %v880 = vunpack.c.h.b16 %v532
        %v881 = vunpack.c.l.b16 %v533
        %v882 = vunpack.c.h.b16 %v533
        %v883 = vunpack.c.l.b16 %v534
        %v884 = vunpack.c.h.b16 %v534
        %v885 = vunpack.c.l.b16 %v535
        %v886 = vunpack.c.h.b16 %v535
        %v887 = vunpack.c.l.b16 %v536
        %v888 = vunpack.c.h.b16 %v536
        %v889 = vunpack.c.l.b16 %v537
        %v890 = vunpack.c.h.b16 %v537
        %v891 = vunpack.c.l.b16 %v538
        %v892 = vunpack.c.h.b16 %v538
        %v893 = vunpack.c.l.b16 %v539
        %v894 = vunpack.c.h.b16 %v539
        %v895 = vunpack.c.l.b16 %v540
        %v896 = vunpack.c.h.b16 %v540
        %v897 = vunpack.c.l.b16 %v541
        %v898 = vunpack.c.h.b16 %v541
        %v899 = vunpack.c.l.b16 %v542
        %v900 = vunpack.c.h.b16 %v542
        %v901 = vunpack.c.l.b16 %v543
        %v902 = vunpack.c.h.b16 %v543
        %v903 = vunpack.c.l.b16 %v544
        %v904 = vunpack.c.h.b16 %v544
        %v905 = vunpack.c.l.b16 %v545
        %v906 = vunpack.c.h.b16 %v545
        %v907 = vunpack.c.l.b16 %v546
        %v908 = vunpack.c.h.b16 %v546
        %v909 = vunpack.c.l.b16 %v547
        %v910 = vunpack.c.h.b16 %v547
        %v911 = vunpack.c.l.b16 %v548
        %v912 = vunpack.c.h.b16 %v548
        %v913 = vunpack.c.l.b16 %v549
        %v914 = vunpack.c.h.b16 %v549
        %v915 = vunpack.c.l.b16 %v550
        %v916 = vunpack.c.h.b16 %v550
        %v917 = vunpack.c.l.b16 %v551
        %v918 = vunpack.c.h.b16 %v551
        %v919 = vunpack.c.l.b16 %v552
        %v920 = vunpack.c.h.b16 %v552
        %v921 = vunpack.c.l.b16 %v553
        %v922 = vunpack.c.h.b16 %v553
        %v923 = vunpack.c.l.b16 %v554
        %v924 = vunpack.c.h.b16 %v554
        %v925 = vunpack.c.l.b16 %v555
        %v926 = vunpack.c.h.b16 %v555
        %v927 = vunpack.c.l.b16 %v556
        %v928 = vunpack.c.h.b16 %v556
        %v929 = vunpack.c.l.b16 %v557
        %v930 = vunpack.c.h.b16 %v557
        %v931 = vunpack.c.l.b16 %v558
        %v932 = vunpack.c.h.b16 %v558
        %v933 = vunpack.c.l.b16 %v559
        %v934 = vunpack.c.h.b16 %v559
        %v935 = vunpack.c.l.b16 %v560
        %v936 = vunpack.c.h.b16 %v560
        %v937 = vunpack.c.l.b16 %v561
        %v938 = vunpack.c.h.b16 %v561
        %v939 = vunpack.c.l.b16 %v562
        %v940 = vunpack.c.h.b16 %v562
        %v941 = vunpack.c.l.b16 %v563
        %v942 = vunpack.c.h.b16 %v563
        %v943 = vunpack.c.l.b16 %v564
        %v944 = vunpack.c.h.b16 %v564
        %v945 = vunpack.c.l.b16 %v565
        %v946 = vunpack.c.h.b16 %v565
        %v947 = vunpack.c.l.b16 %v566
        %v948 = vunpack.c.h.b16 %v566
        %v949 = vunpack.c.l.b16 %v567
        %v950 = vunpack.c.h.b16 %v567
        %v951 = vunpack.c.l.b16 %v568
        %v952 = vunpack.c.h.b16 %v568
        %v953 = vunpack.c.l.b16 %v569
        %v954 = vunpack.c.h.b16 %v569
        %v955 = vunpack.c.l.b16 %v570
        %v956 = vunpack.c.h.b16 %v570
        %v957 = vunpack.c.l.b16 %v571
        %v958 = vunpack.c.h.b16 %v571
        %v959 = vunpack.c.l.b16 %v572
        %v960 = vunpack.c.h.b16 %v572
        %v961 = vunpack.c.l.b16 %v573
        %v962 = vunpack.c.h.b16 %v573
        %v963 = vunpack.c.l.b16 %v574
        %v964 = vunpack.c.h.b16 %v574
        %v965 = vunpack.c.l.b16 %v575
        %v966 = vunpack.c.h.b16 %v575
        %v967 = vpack.c.b16 %v719, %v711
        %v968 = vpack.c.b16 %v720, %v712
        %v969 = vpack.c.b16 %v721, %v713
        %v970 = vpack.c.b16 %v722, %v714
        %v971 = vpack.c.b16 %v723, %v715
        %v972 = vpack.c.b16 %v724, %v716
        %v973 = vpack.c.b16 %v725, %v717
        %v974 = vpack.c.b16 %v726, %v718
        %v975 = vpack.c.b16 %v735, %v727
        %v976 = vpack.c.b16 %v736, %v728
        %v977 = vpack.c.b16 %v737, %v729
        %v978 = vpack.c.b16 %v738, %v730
        %v979 = vpack.c.b16 %v739, %v731
        %v980 = vpack.c.b16 %v740, %v732
        %v981 = vpack.c.b16 %v741, %v733
        %v982 = vpack.c.b16 %v742, %v734
        %v983 = vpack.c.b16 %v751, %v743
        %v984 = vpack.c.b16 %v752, %v744
        %v985 = vpack.c.b16 %v753, %v745
        %v986 = vpack.c.b16 %v754, %v746
        %v987 = vpack.c.b16 %v755, %v747
        %v988 = vpack.c.b16 %v756, %v748
        %v989 = vpack.c.b16 %v757, %v749
        %v990 = vpack.c.b16 %v758, %v750
        %v991 = vpack.c.b16 %v767, %v759
        %v992 = vpack.c.b16 %v768, %v760
        %v993 = vpack.c.b16 %v769, %v761
        %v994 = vpack.c.b16 %v770, %v762
        %v995 = vpack.c.b16 %v771, %v763
        %v996 = vpack.c.b16 %v772, %v764
        %v997 = vpack.c.b16 %v773, %v765
        %v998 = vpack.c.b16 %v774, %v766
        %v999 = vpack.c.b16 %v783, %v775
        %v1000 = vpack.c.b16 %v784, %v776
        %v1001 = vpack.c.b16 %v785, %v777
        %v1002 = vpack.c.b16 %v786, %v778
        %v1003 = vpack.c.b16 %v787, %v779
        %v1004 = vpack.c.b16 %v788, %v780
        %v1005 = vpack.c.b16 %v789, %v781
        %v1006 = vpack.c.b16 %v790, %v782
        %v1007 = vpack.c.b16 %v799, %v791
        %v1008 = vpack.c.b16 %v800, %v792
        %v1009 = vpack.c.b16 %v801, %v793
        %v1010 = vpack.c.b16 %v802, %v794
        %v1011 = vpack.c.b16 %v803, %v795
        %v1012 = vpack.c.b16 %v804, %v796
        %v1013 = vpack.c.b16 %v805, %v797
        %v1014 = vpack.c.b16 %v806, %v798
        %v1015 = vpack.c.b16 %v815, %v807
        %v1016 = vpack.c.b16 %v816, %v808
        %v1017 = vpack.c.b16 %v817, %v809
        %v1018 = vpack.c.b16 %v818, %v810
        %v1019 = vpack.c.b16 %v819, %v811
        %v1020 = vpack.c.b16 %v820, %v812
        %v1021 = vpack.c.b16 %v821, %v813
        %v1022 = vpack.c.b16 %v822, %v814
        %v1023 = vpack.c.b16 %v831, %v823
        %v1024 = vpack.c.b16 %v832, %v824
        %v1025 = vpack.c.b16 %v833, %v825
        %v1026 = vpack.c.b16 %v834, %v826
        %v1027 = vpack.c.b16 %v835, %v827
        %v1028 = vpack.c.b16 %v836, %v828
        %v1029 = vpack.c.b16 %v837, %v829
        %v1030 = vpack.c.b16 %v838, %v830
        %v1031 = vpack.c.b16 %v847, %v839
        %v1032 = vpack.c.b16 %v848, %v840
        %v1033 = vpack.c.b16 %v849, %v841
        %v1034 = vpack.c.b16 %v850, %v842
        %v1035 = vpack.c.b16 %v851, %v843
        %v1036 = vpack.c.b16 %v852, %v844
        %v1037 = vpack.c.b16 %v853, %v845
        %v1038 = vpack.c.b16 %v854, %v846
        %v1039 = vpack.c.b16 %v863, %v855
        %v1040 = vpack.c.b16 %v864, %v856
        %v1041 = vpack.c.b16 %v865, %v857
        %v1042 = vpack.c.b16 %v866, %v858
        %v1043 = vpack.c.b16 %v867, %v859
        %v1044 = vpack.c.b16 %v868, %v860
        %v1045 = vpack.c.b16 %v869, %v861
        %v1046 = vpack.c.b16 %v870, %v862
        %v1047 = vpack.c.b16 %v879, %v871
        %v1048 = vpack.c.b16 %v880, %v872
        %v1049 = vpack.c.b16 %v881, %v873
        %v1050 = vpack.c.b16 %v882, %v874
        %v1051 = vpack.c.b16 %v883, %v875
        %v1052 = vpack.c.b16 %v884, %v876
        %v1053 = vpack.c.b16 %v885, %v877
        %v1054 = vpack.c.b16 %v886, %v878
        %v1055 = vpack.c.b16 %v895, %v887
        %v1056 = vpack.c.b16 %v896, %v888
        %v1057 = vpack.c.b16 %v897, %v889
        %v1058 = vpack.c.b16 %v898, %v890
        %v1059 = vpack.c.b16 %v899, %v891
        %v1060 = vpack.c.b16 %v900, %v892
        %v1061 = vpack.c.b16 %v901, %v893
        %v1062 = vpack.c.b16 %v902, %v894
        %v1063 = vpack.c.b16 %v911, %v903
        %v1064 = vpack.c.b16 %v912, %v904
        %v1065 = vpack.c.b16 %v913, %v905
        %v1066 = vpack.c.b16 %v914, %v906
        %v1067 = vpack.c.b16 %v915, %v907
        %v1068 = vpack.c.b16 %v916, %v908
        %v1069 = vpack.c.b16 %v917, %v909
        %v1070 = vpack.c.b16 %v918, %v910
        %v1071 = vpack.c.b16 %v927, %v919
        %v1072 = vpack.c.b16 %v928, %v920
        %v1073 = vpack.c.b16 %v929, %v921
        %v1074 = vpack.c.b16 %v930, %v922
        %v1075 = vpack.c.b16 %v931, %v923
        %v1076 = vpack.c.b16 %v932, %v924
        %v1077 = vpack.c.b16 %v933, %v925
        %v1078 = vpack.c.b16 %v934, %v926
        %v1079 = vpack.c.b16 %v943, %v935
        %v1080 = vpack.c.b16 %v944, %v936
        %v1081 = vpack.c.b16 %v945, %v937
        %v1082 = vpack.c.b16 %v946, %v938
        %v1083 = vpack.c.b16 %v947, %v939
        %v1084 = vpack.c.b16 %v948, %v940
        %v1085 = vpack.c.b16 %v949, %v941
        %v1086 = vpack.c.b16 %v950, %v942
        %v1087 = vpack.c.b16 %v959, %v951
        %v1088 = vpack.c.b16 %v960, %v952
        %v1089 = vpack.c.b16 %v961, %v953
        %v1090 = vpack.c.b16 %v962, %v954
        %v1091 = vpack.c.b16 %v963, %v955
        %v1092 = vpack.c.b16 %v964, %v956
        %v1093 = vpack.c.b16 %v965, %v957
        %v1094 = vpack.c.b16 %v966, %v958
        %1223 = vmatprep.subr.bf16.mxu0 %v1024
        %1224 = vmatpush1.bf16.msra.mxu0 %v1023
        %1225 = vmatprep.subr.bf16.mxu0 %v1016
        %1226 = vmatpush1.bf16.msra.mxu0 %v1015
        %1227 = vmatprep.subr.bf16.mxu0 %v1008
        %1228 = vmatpush1.bf16.msra.mxu0 %v1007
        %1229 = vmatprep.subr.bf16.mxu0 %v1000
        %1230 = vmatpush1.bf16.msra.mxu0 %v999
        %1231 = vmatprep.subr.bf16.mxu0 %v992
        %1232 = vmatpush1.bf16.msra.mxu0 %v991
        %1233 = vmatprep.subr.bf16.mxu0 %v984
        %1234 = vmatpush1.bf16.msra.mxu0 %v983
        %1235 = vmatprep.subr.bf16.mxu0 %v976
        %1236 = vmatpush1.bf16.msra.mxu0 %v975
        %1237 = vmatprep.subr.bf16.mxu0 %v968
        %1238 = vmatpush1.bf16.msra.mxu0 %v967
        %1239 = vmatprep.subr.bf16.mxu0 %v1088
        %1240 = vmatpush2.bf16.msra.mxu0 %v1087
        %1241 = vmatprep.subr.bf16.mxu0 %v1080
        %1242 = vmatpush2.bf16.msra.mxu0 %v1079
        %1243 = vmatprep.subr.bf16.mxu0 %v1072
        %1244 = vmatpush2.bf16.msra.mxu0 %v1071
        %1245 = vmatprep.subr.bf16.mxu0 %v1064
        %1246 = vmatpush2.bf16.msra.mxu0 %v1063
        %1247 = vmatprep.subr.bf16.mxu0 %v1056
        %1248 = vmatpush2.bf16.msra.mxu0 %v1055
        %1249 = vmatprep.subr.bf16.mxu0 %v1048
        %1250 = vmatpush2.bf16.msra.mxu0 %v1047
        %1251 = vmatprep.subr.bf16.mxu0 %v1040
        %1252 = vmatpush2.bf16.msra.mxu0 %v1039
        %1253 = vmatprep.subr.bf16.mxu0 %v1032
        %1254 = vmatpush2.bf16.msra.mxu0 %v1031
        %1255 = vmatprep.mubr.bf16.mxu0 %v580
        %1256 = vmatmul.mubr.bf16.gmra.mxu0 %v579
        %v1257 = vpop.f32.mrf.mxu0
        %v1258 = vadd.f32 0.0, %v1257
        %v1259 = vpop.f32.mrf.mxu0
        %v1260 = vadd.f32 0.0, %v1259
        %v1261 = vpop.f32.mrf.mxu0
        %v1262 = vpop.f32.mrf.mxu0
        %1263 = vdwg.mxu0
        %1264 = vmatprep.subr.bf16.mxu0 %v1026
        %1265 = vmatpush1.bf16.msra.mxu0 %v1025
        %1266 = vmatprep.subr.bf16.mxu0 %v1018
        %1267 = vmatpush1.bf16.msra.mxu0 %v1017
        %1268 = vmatprep.subr.bf16.mxu0 %v1010
        %1269 = vmatpush1.bf16.msra.mxu0 %v1009
        %1270 = vmatprep.subr.bf16.mxu0 %v1002
        %1271 = vmatpush1.bf16.msra.mxu0 %v1001
        %1272 = vmatprep.subr.bf16.mxu0 %v994
        %1273 = vmatpush1.bf16.msra.mxu0 %v993
        %1274 = vmatprep.subr.bf16.mxu0 %v986
        %1275 = vmatpush1.bf16.msra.mxu0 %v985
        %1276 = vmatprep.subr.bf16.mxu0 %v978
        %1277 = vmatpush1.bf16.msra.mxu0 %v977
        %1278 = vmatprep.subr.bf16.mxu0 %v970
        %1279 = vmatpush1.bf16.msra.mxu0 %v969
        %1280 = vmatprep.subr.bf16.mxu0 %v1090
        %1281 = vmatpush2.bf16.msra.mxu0 %v1089
        %1282 = vmatprep.subr.bf16.mxu0 %v1082
        %1283 = vmatpush2.bf16.msra.mxu0 %v1081
        %1284 = vmatprep.subr.bf16.mxu0 %v1074
        %1285 = vmatpush2.bf16.msra.mxu0 %v1073
        %1286 = vmatprep.subr.bf16.mxu0 %v1066
        %1287 = vmatpush2.bf16.msra.mxu0 %v1065
        %1288 = vmatprep.subr.bf16.mxu0 %v1058
        %1289 = vmatpush2.bf16.msra.mxu0 %v1057
        %1290 = vmatprep.subr.bf16.mxu0 %v1050
        %1291 = vmatpush2.bf16.msra.mxu0 %v1049
        %1292 = vmatprep.subr.bf16.mxu0 %v1042
        %1293 = vmatpush2.bf16.msra.mxu0 %v1041
        %1294 = vmatprep.subr.bf16.mxu0 %v1034
        %1295 = vmatpush2.bf16.msra.mxu0 %v1033
        %1296 = vmatprep.mubr.bf16.mxu0 %v580
        %1297 = vmatmul.mubr.bf16.gmra.mxu0 %v579
        %v1298 = vpop.f32.mrf.mxu0
        %v1299 = vadd.f32 0.0, %v1298
        %v1300 = vpop.f32.mrf.mxu0
        %v1301 = vadd.f32 0.0, %v1300
        %v1302 = vpop.f32.mrf.mxu0
        %v1303 = vpop.f32.mrf.mxu0
        %1304 = vdwg.mxu0
        %1305 = vmatprep.subr.bf16.mxu0 %v1028
        %1306 = vmatpush1.bf16.msra.mxu0 %v1027
        %1307 = vmatprep.subr.bf16.mxu0 %v1020
        %1308 = vmatpush1.bf16.msra.mxu0 %v1019
        %1309 = vmatprep.subr.bf16.mxu0 %v1012
        %1310 = vmatpush1.bf16.msra.mxu0 %v1011
        %1311 = vmatprep.subr.bf16.mxu0 %v1004
        %1312 = vmatpush1.bf16.msra.mxu0 %v1003
        %1313 = vmatprep.subr.bf16.mxu0 %v996
        %1314 = vmatpush1.bf16.msra.mxu0 %v995
        %1315 = vmatprep.subr.bf16.mxu0 %v988
        %1316 = vmatpush1.bf16.msra.mxu0 %v987
        %1317 = vmatprep.subr.bf16.mxu0 %v980
        %1318 = vmatpush1.bf16.msra.mxu0 %v979
        %1319 = vmatprep.subr.bf16.mxu0 %v972
        %1320 = vmatpush1.bf16.msra.mxu0 %v971
        %1321 = vmatprep.subr.bf16.mxu0 %v1092
        %1322 = vmatpush2.bf16.msra.mxu0 %v1091
        %1323 = vmatprep.subr.bf16.mxu0 %v1084
        %1324 = vmatpush2.bf16.msra.mxu0 %v1083
        %1325 = vmatprep.subr.bf16.mxu0 %v1076
        %1326 = vmatpush2.bf16.msra.mxu0 %v1075
        %1327 = vmatprep.subr.bf16.mxu0 %v1068
        %1328 = vmatpush2.bf16.msra.mxu0 %v1067
        %1329 = vmatprep.subr.bf16.mxu0 %v1060
        %1330 = vmatpush2.bf16.msra.mxu0 %v1059
        %1331 = vmatprep.subr.bf16.mxu0 %v1052
        %1332 = vmatpush2.bf16.msra.mxu0 %v1051
        %1333 = vmatprep.subr.bf16.mxu0 %v1044
        %1334 = vmatpush2.bf16.msra.mxu0 %v1043
        %1335 = vmatprep.subr.bf16.mxu0 %v1036
        %1336 = vmatpush2.bf16.msra.mxu0 %v1035
        %1337 = vmatprep.mubr.bf16.mxu0 %v580
        %1338 = vmatmul.mubr.bf16.gmra.mxu0 %v579
        %v1339 = vpop.f32.mrf.mxu0
        %v1340 = vadd.f32 0.0, %v1339
        %v1341 = vpop.f32.mrf.mxu0
        %v1342 = vadd.f32 0.0, %v1341
        %v1343 = vpop.f32.mrf.mxu0
        %v1344 = vpop.f32.mrf.mxu0
        %1345 = vdwg.mxu0
        %1346 = vmatprep.subr.bf16.mxu0 %v1030
        %1347 = vmatpush1.bf16.msra.mxu0 %v1029
        %1348 = vmatprep.subr.bf16.mxu0 %v1022
        %1349 = vmatpush1.bf16.msra.mxu0 %v1021
        %1350 = vmatprep.subr.bf16.mxu0 %v1014
        %1351 = vmatpush1.bf16.msra.mxu0 %v1013
        %1352 = vmatprep.subr.bf16.mxu0 %v1006
        %1353 = vmatpush1.bf16.msra.mxu0 %v1005
        %1354 = vmatprep.subr.bf16.mxu0 %v998
        %1355 = vmatpush1.bf16.msra.mxu0 %v997
        %1356 = vmatprep.subr.bf16.mxu0 %v990
        %1357 = vmatpush1.bf16.msra.mxu0 %v989
        %1358 = vmatprep.subr.bf16.mxu0 %v982
        %1359 = vmatpush1.bf16.msra.mxu0 %v981
        %1360 = vmatprep.subr.bf16.mxu0 %v974
        %1361 = vmatpush1.bf16.msra.mxu0 %v973
        %1362 = vmatprep.subr.bf16.mxu0 %v1094
        %1363 = vmatpush2.bf16.msra.mxu0 %v1093
        %1364 = vmatprep.subr.bf16.mxu0 %v1086
        %1365 = vmatpush2.bf16.msra.mxu0 %v1085
        %1366 = vmatprep.subr.bf16.mxu0 %v1078
        %1367 = vmatpush2.bf16.msra.mxu0 %v1077
        %1368 = vmatprep.subr.bf16.mxu0 %v1070
        %1369 = vmatpush2.bf16.msra.mxu0 %v1069
        %1370 = vmatprep.subr.bf16.mxu0 %v1062
        %1371 = vmatpush2.bf16.msra.mxu0 %v1061
        %1372 = vmatprep.subr.bf16.mxu0 %v1054
        %1373 = vmatpush2.bf16.msra.mxu0 %v1053
        %1374 = vmatprep.subr.bf16.mxu0 %v1046
        %1375 = vmatpush2.bf16.msra.mxu0 %v1045
        %1376 = vmatprep.subr.bf16.mxu0 %v1038
        %1377 = vmatpush2.bf16.msra.mxu0 %v1037
        %1378 = vmatprep.mubr.bf16.mxu0 %v580
        %1379 = vmatmul.mubr.bf16.gmra.mxu0 %v579
        %v1380 = vpop.f32.mrf.mxu0
        %v1381 = vadd.f32 0.0, %v1380
        %v1382 = vpop.f32.mrf.mxu0
        %v1383 = vadd.f32 0.0, %v1382
        %v1384 = vpop.f32.mrf.mxu0
        %v1385 = vpop.f32.mrf.mxu0
        %1386 = vdwg.mxu0
        %v1387 = vadd.f32 %v439, %v1258
        %v1388 = vadd.f32 %v440, %v1260
        %v1389 = vadd.f32 %v441, %v1299
        %v1390 = vadd.f32 %v442, %v1301
        %v1391 = vadd.f32 %v443, %v1340
        %v1392 = vadd.f32 %v444, %v1342
        %v1393 = vadd.f32 %v445, %v1381
        %v1394 = vadd.f32 %v446, %v1383
        %1395 = vst [vmem:[#allocation2] sm:$0xff] %v1387
        %1396 = vst [vmem:[#allocation2 + $0x8] sm:$0xff] %v1388
        %1397 = vst [vmem:[#allocation2 + $0x10] sm:$0xff] %v1389
        %1398 = vst [vmem:[#allocation2 + $0x18] sm:$0xff] %v1390
        %1399 = vst [vmem:[#allocation2 + $0x20] sm:$0xff] %v1391
        %1400 = vst [vmem:[#allocation2 + $0x28] sm:$0xff] %v1392
        %1401 = vst [vmem:[#allocation2 + $0x30] sm:$0xff] %v1393
        %1402 = vst [vmem:[#allocation2 + $0x38] sm:$0xff] %v1394
        %p1403 = scmp.eq.s32.totalorder %s34, 3
        // Predicated region
        $region81: #{tpu_custom_call.1} parent=47 // pred_check
          %p1404 = pneg %p1403
        $region82: #{tpu_custom_call.1} parent=47 // pred_check_branch
          %1406 = sbr.rel (%p1404) target = $region84
        $region83: #{tpu_custom_call.1} parent=47 // pred_region
          %v1407 = vld [vmem:[#allocation2] sm:$0xff]
          %v1408 = vld [vmem:[#allocation2 + $0x8] sm:$0xff]
          %v1409 = vld [vmem:[#allocation2 + $0x10] sm:$0xff]
          %v1410 = vld [vmem:[#allocation2 + $0x18] sm:$0xff]
          %v1411 = vld [vmem:[#allocation2 + $0x20] sm:$0xff]
          %v1412 = vld [vmem:[#allocation2 + $0x28] sm:$0xff]
          %v1413 = vld [vmem:[#allocation2 + $0x30] sm:$0xff]
          %v1414 = vld [vmem:[#allocation2 + $0x38] sm:$0xff]
          %v1415 = vld [vmem:[#allocation14] sm:$0xff]
          %v1416 = vld [vmem:[#allocation14 + $0x8] sm:$0xff]
          %v1417 = vld [vmem:[#allocation14 + $0x10] sm:$0xff]
          %v1418 = vld [vmem:[#allocation14 + $0x18] sm:$0xff]
          %v1419 = vld [vmem:[#allocation14 + $0x20] sm:$0xff]
          %v1420 = vld [vmem:[#allocation14 + $0x28] sm:$0xff]
          %v1421 = vld [vmem:[#allocation14 + $0x30] sm:$0xff]
          %v1422 = vld [vmem:[#allocation14 + $0x38] sm:$0xff]
          %v1423 = vlaneseq
          %v1424 = vshrl.u32 %v1423, 7
          %v1425 = vsub.s32 0, %v1424
          %v1426 = vrot.slane %v1415, %v1425
          %v1427 = vlaneseq
          %v1428 = vshrl.u32 %v1427, 7
          %v1429 = vsub.s32 0, %v1428
          %v1430 = vrot.slane %v1416, %v1429
          %v1431 = vlaneseq
          %v1432 = vshrl.u32 %v1431, 7
          %v1433 = vsub.s32 0, %v1432
          %v1434 = vrot.slane %v1417, %v1433
          %v1435 = vlaneseq
          %v1436 = vshrl.u32 %v1435, 7
          %v1437 = vsub.s32 0, %v1436
          %v1438 = vrot.slane %v1418, %v1437
          %v1439 = vlaneseq
          %v1440 = vshrl.u32 %v1439, 7
          %v1441 = vsub.s32 0, %v1440
          %v1442 = vrot.slane %v1419, %v1441
          %v1443 = vlaneseq
          %v1444 = vshrl.u32 %v1443, 7
          %v1445 = vsub.s32 0, %v1444
          %v1446 = vrot.slane %v1420, %v1445
          %v1447 = vlaneseq
          %v1448 = vshrl.u32 %v1447, 7
          %v1449 = vsub.s32 0, %v1448
          %v1450 = vrot.slane %v1421, %v1449
          %v1451 = vlaneseq
          %v1452 = vshrl.u32 %v1451, 7
          %v1453 = vsub.s32 0, %v1452
          %v1454 = vrot.slane %v1422, %v1453
          %v1455 = vadd.f32 %v1407, %v1426
          %v1456 = vadd.f32 %v1408, %v1430
          %v1457 = vadd.f32 %v1409, %v1434
          %v1458 = vadd.f32 %v1410, %v1438
          %v1459 = vadd.f32 %v1411, %v1442
          %v1460 = vadd.f32 %v1412, %v1446
          %v1461 = vadd.f32 %v1413, %v1450
          %v1462 = vadd.f32 %v1414, %v1454
          %v1463 = vmax.f32 %v1455, 0.0
          %v1464 = vmax.f32 %v1456, 0.0
          %v1465 = vmax.f32 %v1457, 0.0
          %v1466 = vmax.f32 %v1458, 0.0
          %v1467 = vmax.f32 %v1459, 0.0
          %v1468 = vmax.f32 %v1460, 0.0
          %v1469 = vmax.f32 %v1461, 0.0
          %v1470 = vmax.f32 %v1462, 0.0
          %v1471 = vlaneseq
          %v1472 = vshrl.u32 %v1471, 7
          %v1473 = vsub.s32 1, %v1472
          %v1474 = vrot.slane %v1415, %v1473
          %v1475 = vlaneseq
          %v1476 = vshrl.u32 %v1475, 7
          %v1477 = vsub.s32 1, %v1476
          %v1478 = vrot.slane %v1416, %v1477
          %v1479 = vlaneseq
          %v1480 = vshrl.u32 %v1479, 7
          %v1481 = vsub.s32 1, %v1480
          %v1482 = vrot.slane %v1417, %v1481
          %v1483 = vlaneseq
          %v1484 = vshrl.u32 %v1483, 7
          %v1485 = vsub.s32 1, %v1484
          %v1486 = vrot.slane %v1418, %v1485
          %v1487 = vlaneseq
          %v1488 = vshrl.u32 %v1487, 7
          %v1489 = vsub.s32 1, %v1488
          %v1490 = vrot.slane %v1419, %v1489
          %v1491 = vlaneseq
          %v1492 = vshrl.u32 %v1491, 7
          %v1493 = vsub.s32 1, %v1492
          %v1494 = vrot.slane %v1420, %v1493
          %v1495 = vlaneseq
          %v1496 = vshrl.u32 %v1495, 7
          %v1497 = vsub.s32 1, %v1496
          %v1498 = vrot.slane %v1421, %v1497
          %v1499 = vlaneseq
          %v1500 = vshrl.u32 %v1499, 7
          %v1501 = vsub.s32 1, %v1500
          %v1502 = vrot.slane %v1422, %v1501
          %v1503 = vmul.f32 %v1463, %v1474
          %v1504 = vmul.f32 %v1464, %v1478
          %v1505 = vmul.f32 %v1465, %v1482
          %v1506 = vmul.f32 %v1466, %v1486
          %v1507 = vmul.f32 %v1467, %v1490
          %v1508 = vmul.f32 %v1468, %v1494
          %v1509 = vmul.f32 %v1469, %v1498
          %v1510 = vmul.f32 %v1470, %v1502
          %v1511 = vlaneseq
          %v1512 = vshrl.u32 %v1511, 7
          %v1513 = vsub.s32 2, %v1512
          %v1514 = vrot.slane %v1415, %v1513
          %v1515 = vlaneseq
          %v1516 = vshrl.u32 %v1515, 7
          %v1517 = vsub.s32 2, %v1516
          %v1518 = vrot.slane %v1416, %v1517
          %v1519 = vlaneseq
          %v1520 = vshrl.u32 %v1519, 7
          %v1521 = vsub.s32 2, %v1520
          %v1522 = vrot.slane %v1417, %v1521
          %v1523 = vlaneseq
          %v1524 = vshrl.u32 %v1523, 7
          %v1525 = vsub.s32 2, %v1524
          %v1526 = vrot.slane %v1418, %v1525
          %v1527 = vlaneseq
          %v1528 = vshrl.u32 %v1527, 7
          %v1529 = vsub.s32 2, %v1528
          %v1530 = vrot.slane %v1419, %v1529
          %v1531 = vlaneseq
          %v1532 = vshrl.u32 %v1531, 7
          %v1533 = vsub.s32 2, %v1532
          %v1534 = vrot.slane %v1420, %v1533
          %v1535 = vlaneseq
          %v1536 = vshrl.u32 %v1535, 7
          %v1537 = vsub.s32 2, %v1536
          %v1538 = vrot.slane %v1421, %v1537
          %v1539 = vlaneseq
          %v1540 = vshrl.u32 %v1539, 7
          %v1541 = vsub.s32 2, %v1540
          %v1542 = vrot.slane %v1422, %v1541
          %v1543 = vadd.f32 %v1503, %v1514
          %v1544 = vadd.f32 %v1504, %v1518
          %v1545 = vadd.f32 %v1505, %v1522
          %v1546 = vadd.f32 %v1506, %v1526
          %v1547 = vadd.f32 %v1507, %v1530
          %v1548 = vadd.f32 %v1508, %v1534
          %v1549 = vadd.f32 %v1509, %v1538
          %v1550 = vadd.f32 %v1510, %v1542
          %v1551 = vpack.c.bf16 %v1543, %v1543
          %v1552 = vpack.c.bf16 %v1544, %v1544
          %v1553 = vpack.c.bf16 %v1545, %v1545
          %v1554 = vpack.c.bf16 %v1546, %v1546
          %v1555 = vpack.c.bf16 %v1547, %v1547
          %v1556 = vpack.c.bf16 %v1548, %v1548
          %v1557 = vpack.c.bf16 %v1549, %v1549
          %v1558 = vpack.c.bf16 %v1550, %v1550
          %v1559 = vld [vmem:[#allocation8] sm:$0xff]
          %v1560 = vld [vmem:[#allocation8 + $0x8] sm:$0xff]
          %v1561 = vld [vmem:[#allocation8 + $0x10] sm:$0xff]
          %v1562 = vld [vmem:[#allocation8 + $0x18] sm:$0xff]
          %v1563 = vld [vmem:[#allocation8 + $0x20] sm:$0xff]
          %v1564 = vld [vmem:[#allocation8 + $0x28] sm:$0xff]
          %v1565 = vld [vmem:[#allocation8 + $0x30] sm:$0xff]
          %v1566 = vld [vmem:[#allocation8 + $0x38] sm:$0xff]
          %v1567 = vld [vmem:[#allocation8 + $0x40] sm:$0xff]
          %v1568 = vld [vmem:[#allocation8 + $0x48] sm:$0xff]
          %v1569 = vld [vmem:[#allocation8 + $0x50] sm:$0xff]
          %v1570 = vld [vmem:[#allocation8 + $0x58] sm:$0xff]
          %v1571 = vld [vmem:[#allocation8 + $0x60] sm:$0xff]
          %v1572 = vld [vmem:[#allocation8 + $0x68] sm:$0xff]
          %v1573 = vld [vmem:[#allocation8 + $0x70] sm:$0xff]
          %v1574 = vld [vmem:[#allocation8 + $0x78] sm:$0xff]
          %v1575 = vld [vmem:[#allocation8 + $0x80] sm:$0xff]
          %v1576 = vld [vmem:[#allocation8 + $0x88] sm:$0xff]
          %v1577 = vld [vmem:[#allocation8 + $0x90] sm:$0xff]
          %v1578 = vld [vmem:[#allocation8 + $0x98] sm:$0xff]
          %v1579 = vld [vmem:[#allocation8 + $0xa0] sm:$0xff]
          %v1580 = vld [vmem:[#allocation8 + $0xa8] sm:$0xff]
          %v1581 = vld [vmem:[#allocation8 + $0xb0] sm:$0xff]
          %v1582 = vld [vmem:[#allocation8 + $0xb8] sm:$0xff]
          %v1583 = vld [vmem:[#allocation8 + $0xc0] sm:$0xff]
          %v1584 = vld [vmem:[#allocation8 + $0xc8] sm:$0xff]
          %v1585 = vld [vmem:[#allocation8 + $0xd0] sm:$0xff]
          %v1586 = vld [vmem:[#allocation8 + $0xd8] sm:$0xff]
          %v1587 = vld [vmem:[#allocation8 + $0xe0] sm:$0xff]
          %v1588 = vld [vmem:[#allocation8 + $0xe8] sm:$0xff]
          %v1589 = vld [vmem:[#allocation8 + $0xf0] sm:$0xff]
          %v1590 = vld [vmem:[#allocation8 + $0xf8] sm:$0xff]
          %v1591 = vld [vmem:[#allocation8 + $0x100] sm:$0xff]
          %v1592 = vld [vmem:[#allocation8 + $0x108] sm:$0xff]
          %v1593 = vld [vmem:[#allocation8 + $0x110] sm:$0xff]
          %v1594 = vld [vmem:[#allocation8 + $0x118] sm:$0xff]
          %v1595 = vld [vmem:[#allocation8 + $0x120] sm:$0xff]
          %v1596 = vld [vmem:[#allocation8 + $0x128] sm:$0xff]
          %v1597 = vld [vmem:[#allocation8 + $0x130] sm:$0xff]
          %v1598 = vld [vmem:[#allocation8 + $0x138] sm:$0xff]
          %v1599 = vld [vmem:[#allocation8 + $0x140] sm:$0xff]
          %v1600 = vld [vmem:[#allocation8 + $0x148] sm:$0xff]
          %v1601 = vld [vmem:[#allocation8 + $0x150] sm:$0xff]
          %v1602 = vld [vmem:[#allocation8 + $0x158] sm:$0xff]
          %v1603 = vld [vmem:[#allocation8 + $0x160] sm:$0xff]
          %v1604 = vld [vmem:[#allocation8 + $0x168] sm:$0xff]
          %v1605 = vld [vmem:[#allocation8 + $0x170] sm:$0xff]
          %v1606 = vld [vmem:[#allocation8 + $0x178] sm:$0xff]
          %v1607 = vld [vmem:[#allocation8 + $0x180] sm:$0xff]
          %v1608 = vld [vmem:[#allocation8 + $0x188] sm:$0xff]
          %v1609 = vld [vmem:[#allocation8 + $0x190] sm:$0xff]
          %v1610 = vld [vmem:[#allocation8 + $0x198] sm:$0xff]
          %v1611 = vld [vmem:[#allocation8 + $0x1a0] sm:$0xff]
          %v1612 = vld [vmem:[#allocation8 + $0x1a8] sm:$0xff]
          %v1613 = vld [vmem:[#allocation8 + $0x1b0] sm:$0xff]
          %v1614 = vld [vmem:[#allocation8 + $0x1b8] sm:$0xff]
          %v1615 = vld [vmem:[#allocation8 + $0x1c0] sm:$0xff]
          %v1616 = vld [vmem:[#allocation8 + $0x1c8] sm:$0xff]
          %v1617 = vld [vmem:[#allocation8 + $0x1d0] sm:$0xff]
          %v1618 = vld [vmem:[#allocation8 + $0x1d8] sm:$0xff]
          %v1619 = vld [vmem:[#allocation8 + $0x1e0] sm:$0xff]
          %v1620 = vld [vmem:[#allocation8 + $0x1e8] sm:$0xff]
          %v1621 = vld [vmem:[#allocation8 + $0x1f0] sm:$0xff]
          %v1622 = vld [vmem:[#allocation8 + $0x1f8] sm:$0xff]
          %v1623 = vld [vmem:[#allocation8 + $0x200] sm:$0xff]
          %v1624 = vld [vmem:[#allocation8 + $0x208] sm:$0xff]
          %v1625 = vld [vmem:[#allocation8 + $0x210] sm:$0xff]
          %v1626 = vld [vmem:[#allocation8 + $0x218] sm:$0xff]
          %v1627 = vld [vmem:[#allocation8 + $0x220] sm:$0xff]
          %v1628 = vld [vmem:[#allocation8 + $0x228] sm:$0xff]
          %v1629 = vld [vmem:[#allocation8 + $0x230] sm:$0xff]
          %v1630 = vld [vmem:[#allocation8 + $0x238] sm:$0xff]
          %v1631 = vld [vmem:[#allocation8 + $0x240] sm:$0xff]
          %v1632 = vld [vmem:[#allocation8 + $0x248] sm:$0xff]
          %v1633 = vld [vmem:[#allocation8 + $0x250] sm:$0xff]
          %v1634 = vld [vmem:[#allocation8 + $0x258] sm:$0xff]
          %v1635 = vld [vmem:[#allocation8 + $0x260] sm:$0xff]
          %v1636 = vld [vmem:[#allocation8 + $0x268] sm:$0xff]
          %v1637 = vld [vmem:[#allocation8 + $0x270] sm:$0xff]
          %v1638 = vld [vmem:[#allocation8 + $0x278] sm:$0xff]
          %v1639 = vld [vmem:[#allocation8 + $0x280] sm:$0xff]
          %v1640 = vld [vmem:[#allocation8 + $0x288] sm:$0xff]
          %v1641 = vld [vmem:[#allocation8 + $0x290] sm:$0xff]
          %v1642 = vld [vmem:[#allocation8 + $0x298] sm:$0xff]
          %v1643 = vld [vmem:[#allocation8 + $0x2a0] sm:$0xff]
          %v1644 = vld [vmem:[#allocation8 + $0x2a8] sm:$0xff]
          %v1645 = vld [vmem:[#allocation8 + $0x2b0] sm:$0xff]
          %v1646 = vld [vmem:[#allocation8 + $0x2b8] sm:$0xff]
          %v1647 = vld [vmem:[#allocation8 + $0x2c0] sm:$0xff]
          %v1648 = vld [vmem:[#allocation8 + $0x2c8] sm:$0xff]
          %v1649 = vld [vmem:[#allocation8 + $0x2d0] sm:$0xff]
          %v1650 = vld [vmem:[#allocation8 + $0x2d8] sm:$0xff]
          %v1651 = vld [vmem:[#allocation8 + $0x2e0] sm:$0xff]
          %v1652 = vld [vmem:[#allocation8 + $0x2e8] sm:$0xff]
          %v1653 = vld [vmem:[#allocation8 + $0x2f0] sm:$0xff]
          %v1654 = vld [vmem:[#allocation8 + $0x2f8] sm:$0xff]
          %v1655 = vld [vmem:[#allocation8 + $0x300] sm:$0xff]
          %v1656 = vld [vmem:[#allocation8 + $0x308] sm:$0xff]
          %v1657 = vld [vmem:[#allocation8 + $0x310] sm:$0xff]
          %v1658 = vld [vmem:[#allocation8 + $0x318] sm:$0xff]
          %v1659 = vld [vmem:[#allocation8 + $0x320] sm:$0xff]
          %v1660 = vld [vmem:[#allocation8 + $0x328] sm:$0xff]
          %v1661 = vld [vmem:[#allocation8 + $0x330] sm:$0xff]
          %v1662 = vld [vmem:[#allocation8 + $0x338] sm:$0xff]
          %v1663 = vld [vmem:[#allocation8 + $0x340] sm:$0xff]
          %v1664 = vld [vmem:[#allocation8 + $0x348] sm:$0xff]
          %v1665 = vld [vmem:[#allocation8 + $0x350] sm:$0xff]
          %v1666 = vld [vmem:[#allocation8 + $0x358] sm:$0xff]
          %v1667 = vld [vmem:[#allocation8 + $0x360] sm:$0xff]
          %v1668 = vld [vmem:[#allocation8 + $0x368] sm:$0xff]
          %v1669 = vld [vmem:[#allocation8 + $0x370] sm:$0xff]
          %v1670 = vld [vmem:[#allocation8 + $0x378] sm:$0xff]
          %v1671 = vld [vmem:[#allocation8 + $0x380] sm:$0xff]
          %v1672 = vld [vmem:[#allocation8 + $0x388] sm:$0xff]
          %v1673 = vld [vmem:[#allocation8 + $0x390] sm:$0xff]
          %v1674 = vld [vmem:[#allocation8 + $0x398] sm:$0xff]
          %v1675 = vld [vmem:[#allocation8 + $0x3a0] sm:$0xff]
          %v1676 = vld [vmem:[#allocation8 + $0x3a8] sm:$0xff]
          %v1677 = vld [vmem:[#allocation8 + $0x3b0] sm:$0xff]
          %v1678 = vld [vmem:[#allocation8 + $0x3b8] sm:$0xff]
          %v1679 = vld [vmem:[#allocation8 + $0x3c0] sm:$0xff]
          %v1680 = vld [vmem:[#allocation8 + $0x3c8] sm:$0xff]
          %v1681 = vld [vmem:[#allocation8 + $0x3d0] sm:$0xff]
          %v1682 = vld [vmem:[#allocation8 + $0x3d8] sm:$0xff]
          %v1683 = vld [vmem:[#allocation8 + $0x3e0] sm:$0xff]
          %v1684 = vld [vmem:[#allocation8 + $0x3e8] sm:$0xff]
          %v1685 = vld [vmem:[#allocation8 + $0x3f0] sm:$0xff]
          %v1686 = vld [vmem:[#allocation8 + $0x3f8] sm:$0xff]
          %v1687 = vld [vmem:[#allocation8 + $0x400] sm:$0xff]
          %v1688 = vld [vmem:[#allocation8 + $0x408] sm:$0xff]
          %v1689 = vld [vmem:[#allocation8 + $0x410] sm:$0xff]
          %v1690 = vld [vmem:[#allocation8 + $0x418] sm:$0xff]
          %v1691 = vld [vmem:[#allocation8 + $0x420] sm:$0xff]
          %v1692 = vld [vmem:[#allocation8 + $0x428] sm:$0xff]
          %v1693 = vld [vmem:[#allocation8 + $0x430] sm:$0xff]
          %v1694 = vld [vmem:[#allocation8 + $0x438] sm:$0xff]
          %v1695 = vld [vmem:[#allocation8 + $0x440] sm:$0xff]
          %v1696 = vld [vmem:[#allocation8 + $0x448] sm:$0xff]
          %v1697 = vld [vmem:[#allocation8 + $0x450] sm:$0xff]
          %v1698 = vld [vmem:[#allocation8 + $0x458] sm:$0xff]
          %v1699 = vld [vmem:[#allocation8 + $0x460] sm:$0xff]
          %v1700 = vld [vmem:[#allocation8 + $0x468] sm:$0xff]
          %v1701 = vld [vmem:[#allocation8 + $0x470] sm:$0xff]
          %v1702 = vld [vmem:[#allocation8 + $0x478] sm:$0xff]
          %v1703 = vld [vmem:[#allocation8 + $0x480] sm:$0xff]
          %v1704 = vld [vmem:[#allocation8 + $0x488] sm:$0xff]
          %v1705 = vld [vmem:[#allocation8 + $0x490] sm:$0xff]
          %v1706 = vld [vmem:[#allocation8 + $0x498] sm:$0xff]
          %v1707 = vld [vmem:[#allocation8 + $0x4a0] sm:$0xff]
          %v1708 = vld [vmem:[#allocation8 + $0x4a8] sm:$0xff]
          %v1709 = vld [vmem:[#allocation8 + $0x4b0] sm:$0xff]
          %v1710 = vld [vmem:[#allocation8 + $0x4b8] sm:$0xff]
          %v1711 = vld [vmem:[#allocation8 + $0x4c0] sm:$0xff]
          %v1712 = vld [vmem:[#allocation8 + $0x4c8] sm:$0xff]
          %v1713 = vld [vmem:[#allocation8 + $0x4d0] sm:$0xff]
          %v1714 = vld [vmem:[#allocation8 + $0x4d8] sm:$0xff]
          %v1715 = vld [vmem:[#allocation8 + $0x4e0] sm:$0xff]
          %v1716 = vld [vmem:[#allocation8 + $0x4e8] sm:$0xff]
          %v1717 = vld [vmem:[#allocation8 + $0x4f0] sm:$0xff]
          %v1718 = vld [vmem:[#allocation8 + $0x4f8] sm:$0xff]
          %v1719 = vld [vmem:[#allocation8 + $0x500] sm:$0xff]
          %v1720 = vld [vmem:[#allocation8 + $0x508] sm:$0xff]
          %v1721 = vld [vmem:[#allocation8 + $0x510] sm:$0xff]
          %v1722 = vld [vmem:[#allocation8 + $0x518] sm:$0xff]
          %v1723 = vld [vmem:[#allocation8 + $0x520] sm:$0xff]
          %v1724 = vld [vmem:[#allocation8 + $0x528] sm:$0xff]
          %v1725 = vld [vmem:[#allocation8 + $0x530] sm:$0xff]
          %v1726 = vld [vmem:[#allocation8 + $0x538] sm:$0xff]
          %v1727 = vld [vmem:[#allocation8 + $0x540] sm:$0xff]
          %v1728 = vld [vmem:[#allocation8 + $0x548] sm:$0xff]
          %v1729 = vld [vmem:[#allocation8 + $0x550] sm:$0xff]
          %v1730 = vld [vmem:[#allocation8 + $0x558] sm:$0xff]
          %v1731 = vld [vmem:[#allocation8 + $0x560] sm:$0xff]
          %v1732 = vld [vmem:[#allocation8 + $0x568] sm:$0xff]
          %v1733 = vld [vmem:[#allocation8 + $0x570] sm:$0xff]
          %v1734 = vld [vmem:[#allocation8 + $0x578] sm:$0xff]
          %v1735 = vld [vmem:[#allocation8 + $0x580] sm:$0xff]
          %v1736 = vld [vmem:[#allocation8 + $0x588] sm:$0xff]
          %v1737 = vld [vmem:[#allocation8 + $0x590] sm:$0xff]
          %v1738 = vld [vmem:[#allocation8 + $0x598] sm:$0xff]
          %v1739 = vld [vmem:[#allocation8 + $0x5a0] sm:$0xff]
          %v1740 = vld [vmem:[#allocation8 + $0x5a8] sm:$0xff]
          %v1741 = vld [vmem:[#allocation8 + $0x5b0] sm:$0xff]
          %v1742 = vld [vmem:[#allocation8 + $0x5b8] sm:$0xff]
          %v1743 = vld [vmem:[#allocation8 + $0x5c0] sm:$0xff]
          %v1744 = vld [vmem:[#allocation8 + $0x5c8] sm:$0xff]
          %v1745 = vld [vmem:[#allocation8 + $0x5d0] sm:$0xff]
          %v1746 = vld [vmem:[#allocation8 + $0x5d8] sm:$0xff]
          %v1747 = vld [vmem:[#allocation8 + $0x5e0] sm:$0xff]
          %v1748 = vld [vmem:[#allocation8 + $0x5e8] sm:$0xff]
          %v1749 = vld [vmem:[#allocation8 + $0x5f0] sm:$0xff]
          %v1750 = vld [vmem:[#allocation8 + $0x5f8] sm:$0xff]
          %v1751 = vld [vmem:[#allocation8 + $0x600] sm:$0xff]
          %v1752 = vld [vmem:[#allocation8 + $0x608] sm:$0xff]
          %v1753 = vld [vmem:[#allocation8 + $0x610] sm:$0xff]
          %v1754 = vld [vmem:[#allocation8 + $0x618] sm:$0xff]
          %v1755 = vld [vmem:[#allocation8 + $0x620] sm:$0xff]
          %v1756 = vld [vmem:[#allocation8 + $0x628] sm:$0xff]
          %v1757 = vld [vmem:[#allocation8 + $0x630] sm:$0xff]
          %v1758 = vld [vmem:[#allocation8 + $0x638] sm:$0xff]
          %v1759 = vld [vmem:[#allocation8 + $0x640] sm:$0xff]
          %v1760 = vld [vmem:[#allocation8 + $0x648] sm:$0xff]
          %v1761 = vld [vmem:[#allocation8 + $0x650] sm:$0xff]
          %v1762 = vld [vmem:[#allocation8 + $0x658] sm:$0xff]
          %v1763 = vld [vmem:[#allocation8 + $0x660] sm:$0xff]
          %v1764 = vld [vmem:[#allocation8 + $0x668] sm:$0xff]
          %v1765 = vld [vmem:[#allocation8 + $0x670] sm:$0xff]
          %v1766 = vld [vmem:[#allocation8 + $0x678] sm:$0xff]
          %v1767 = vld [vmem:[#allocation8 + $0x680] sm:$0xff]
          %v1768 = vld [vmem:[#allocation8 + $0x688] sm:$0xff]
          %v1769 = vld [vmem:[#allocation8 + $0x690] sm:$0xff]
          %v1770 = vld [vmem:[#allocation8 + $0x698] sm:$0xff]
          %v1771 = vld [vmem:[#allocation8 + $0x6a0] sm:$0xff]
          %v1772 = vld [vmem:[#allocation8 + $0x6a8] sm:$0xff]
          %v1773 = vld [vmem:[#allocation8 + $0x6b0] sm:$0xff]
          %v1774 = vld [vmem:[#allocation8 + $0x6b8] sm:$0xff]
          %v1775 = vld [vmem:[#allocation8 + $0x6c0] sm:$0xff]
          %v1776 = vld [vmem:[#allocation8 + $0x6c8] sm:$0xff]
          %v1777 = vld [vmem:[#allocation8 + $0x6d0] sm:$0xff]
          %v1778 = vld [vmem:[#allocation8 + $0x6d8] sm:$0xff]
          %v1779 = vld [vmem:[#allocation8 + $0x6e0] sm:$0xff]
          %v1780 = vld [vmem:[#allocation8 + $0x6e8] sm:$0xff]
          %v1781 = vld [vmem:[#allocation8 + $0x6f0] sm:$0xff]
          %v1782 = vld [vmem:[#allocation8 + $0x6f8] sm:$0xff]
          %v1783 = vld [vmem:[#allocation8 + $0x700] sm:$0xff]
          %v1784 = vld [vmem:[#allocation8 + $0x708] sm:$0xff]
          %v1785 = vld [vmem:[#allocation8 + $0x710] sm:$0xff]
          %v1786 = vld [vmem:[#allocation8 + $0x718] sm:$0xff]
          %v1787 = vld [vmem:[#allocation8 + $0x720] sm:$0xff]
          %v1788 = vld [vmem:[#allocation8 + $0x728] sm:$0xff]
          %v1789 = vld [vmem:[#allocation8 + $0x730] sm:$0xff]
          %v1790 = vld [vmem:[#allocation8 + $0x738] sm:$0xff]
          %v1791 = vld [vmem:[#allocation8 + $0x740] sm:$0xff]
          %v1792 = vld [vmem:[#allocation8 + $0x748] sm:$0xff]
          %v1793 = vld [vmem:[#allocation8 + $0x750] sm:$0xff]
          %v1794 = vld [vmem:[#allocation8 + $0x758] sm:$0xff]
          %v1795 = vld [vmem:[#allocation8 + $0x760] sm:$0xff]
          %v1796 = vld [vmem:[#allocation8 + $0x768] sm:$0xff]
          %v1797 = vld [vmem:[#allocation8 + $0x770] sm:$0xff]
          %v1798 = vld [vmem:[#allocation8 + $0x778] sm:$0xff]
          %v1799 = vld [vmem:[#allocation8 + $0x780] sm:$0xff]
          %v1800 = vld [vmem:[#allocation8 + $0x788] sm:$0xff]
          %v1801 = vld [vmem:[#allocation8 + $0x790] sm:$0xff]
          %v1802 = vld [vmem:[#allocation8 + $0x798] sm:$0xff]
          %v1803 = vld [vmem:[#allocation8 + $0x7a0] sm:$0xff]
          %v1804 = vld [vmem:[#allocation8 + $0x7a8] sm:$0xff]
          %v1805 = vld [vmem:[#allocation8 + $0x7b0] sm:$0xff]
          %v1806 = vld [vmem:[#allocation8 + $0x7b8] sm:$0xff]
          %v1807 = vld [vmem:[#allocation8 + $0x7c0] sm:$0xff]
          %v1808 = vld [vmem:[#allocation8 + $0x7c8] sm:$0xff]
          %v1809 = vld [vmem:[#allocation8 + $0x7d0] sm:$0xff]
          %v1810 = vld [vmem:[#allocation8 + $0x7d8] sm:$0xff]
          %v1811 = vld [vmem:[#allocation8 + $0x7e0] sm:$0xff]
          %v1812 = vld [vmem:[#allocation8 + $0x7e8] sm:$0xff]
          %v1813 = vld [vmem:[#allocation8 + $0x7f0] sm:$0xff]
          %v1814 = vld [vmem:[#allocation8 + $0x7f8] sm:$0xff]
          %v1815 = vld [vmem:[#allocation14 + $0x40] sm:$0xff]
          %v1816 = vld [vmem:[#allocation14 + $0x48] sm:$0xff]
          %v1817 = vld [vmem:[#allocation14 + $0x50] sm:$0xff]
          %v1818 = vld [vmem:[#allocation14 + $0x58] sm:$0xff]
          %v1819 = vlaneseq
          %v1820 = vshrl.u32 %v1819, 7
          %v1821 = vsub.s32 0, %v1820
          %v1822 = vrot.slane %v1815, %v1821
          %v1823 = vlaneseq
          %v1824 = vshrl.u32 %v1823, 7
          %v1825 = vsub.s32 0, %v1824
          %v1826 = vrot.slane %v1816, %v1825
          %v1827 = vlaneseq
          %v1828 = vshrl.u32 %v1827, 7
          %v1829 = vsub.s32 0, %v1828
          %v1830 = vrot.slane %v1817, %v1829
          %v1831 = vlaneseq
          %v1832 = vshrl.u32 %v1831, 7
          %v1833 = vsub.s32 0, %v1832
          %v1834 = vrot.slane %v1818, %v1833
          %v2091 = vunpack.c.l.b16 %v1559
          %v2092 = vunpack.c.h.b16 %v1559
          %v2093 = vunpack.c.l.b16 %v1560
          %v2094 = vunpack.c.h.b16 %v1560
          %v2095 = vunpack.c.l.b16 %v1561
          %v2096 = vunpack.c.h.b16 %v1561
          %v2097 = vunpack.c.l.b16 %v1562
          %v2098 = vunpack.c.h.b16 %v1562
          %v2099 = vunpack.c.l.b16 %v1563
          %v2100 = vunpack.c.h.b16 %v1563
          %v2101 = vunpack.c.l.b16 %v1564
          %v2102 = vunpack.c.h.b16 %v1564
          %v2103 = vunpack.c.l.b16 %v1565
          %v2104 = vunpack.c.h.b16 %v1565
          %v2105 = vunpack.c.l.b16 %v1566
          %v2106 = vunpack.c.h.b16 %v1566
          %v2107 = vunpack.c.l.b16 %v1567
          %v2108 = vunpack.c.h.b16 %v1567
          %v2109 = vunpack.c.l.b16 %v1568
          %v2110 = vunpack.c.h.b16 %v1568
          %v2111 = vunpack.c.l.b16 %v1569
          %v2112 = vunpack.c.h.b16 %v1569
          %v2113 = vunpack.c.l.b16 %v1570
          %v2114 = vunpack.c.h.b16 %v1570
          %v2115 = vunpack.c.l.b16 %v1571
          %v2116 = vunpack.c.h.b16 %v1571
          %v2117 = vunpack.c.l.b16 %v1572
          %v2118 = vunpack.c.h.b16 %v1572
          %v2119 = vunpack.c.l.b16 %v1573
          %v2120 = vunpack.c.h.b16 %v1573
          %v2121 = vunpack.c.l.b16 %v1574
          %v2122 = vunpack.c.h.b16 %v1574
          %v2123 = vunpack.c.l.b16 %v1575
          %v2124 = vunpack.c.h.b16 %v1575
          %v2125 = vunpack.c.l.b16 %v1576
          %v2126 = vunpack.c.h.b16 %v1576
          %v2127 = vunpack.c.l.b16 %v1577
          %v2128 = vunpack.c.h.b16 %v1577
          %v2129 = vunpack.c.l.b16 %v1578
          %v2130 = vunpack.c.h.b16 %v1578
          %v2131 = vunpack.c.l.b16 %v1579
          %v2132 = vunpack.c.h.b16 %v1579
          %v2133 = vunpack.c.l.b16 %v1580
          %v2134 = vunpack.c.h.b16 %v1580
          %v2135 = vunpack.c.l.b16 %v1581
          %v2136 = vunpack.c.h.b16 %v1581
          %v2137 = vunpack.c.l.b16 %v1582
          %v2138 = vunpack.c.h.b16 %v1582
          %v2139 = vunpack.c.l.b16 %v1583
          %v2140 = vunpack.c.h.b16 %v1583
          %v2141 = vunpack.c.l.b16 %v1584
          %v2142 = vunpack.c.h.b16 %v1584
          %v2143 = vunpack.c.l.b16 %v1585
          %v2144 = vunpack.c.h.b16 %v1585
          %v2145 = vunpack.c.l.b16 %v1586
          %v2146 = vunpack.c.h.b16 %v1586
          %v2147 = vunpack.c.l.b16 %v1587
          %v2148 = vunpack.c.h.b16 %v1587
          %v2149 = vunpack.c.l.b16 %v1588
          %v2150 = vunpack.c.h.b16 %v1588
          %v2151 = vunpack.c.l.b16 %v1589
          %v2152 = vunpack.c.h.b16 %v1589
          %v2153 = vunpack.c.l.b16 %v1590
          %v2154 = vunpack.c.h.b16 %v1590
          %v2155 = vunpack.c.l.b16 %v1591
          %v2156 = vunpack.c.h.b16 %v1591
          %v2157 = vunpack.c.l.b16 %v1592
          %v2158 = vunpack.c.h.b16 %v1592
          %v2159 = vunpack.c.l.b16 %v1593
          %v2160 = vunpack.c.h.b16 %v1593
          %v2161 = vunpack.c.l.b16 %v1594
          %v2162 = vunpack.c.h.b16 %v1594
          %v2163 = vunpack.c.l.b16 %v1595
          %v2164 = vunpack.c.h.b16 %v1595
          %v2165 = vunpack.c.l.b16 %v1596
          %v2166 = vunpack.c.h.b16 %v1596
          %v2167 = vunpack.c.l.b16 %v1597
          %v2168 = vunpack.c.h.b16 %v1597
          %v2169 = vunpack.c.l.b16 %v1598
          %v2170 = vunpack.c.h.b16 %v1598
          %v2171 = vunpack.c.l.b16 %v1599
          %v2172 = vunpack.c.h.b16 %v1599
          %v2173 = vunpack.c.l.b16 %v1600
          %v2174 = vunpack.c.h.b16 %v1600
          %v2175 = vunpack.c.l.b16 %v1601
          %v2176 = vunpack.c.h.b16 %v1601
          %v2177 = vunpack.c.l.b16 %v1602
          %v2178 = vunpack.c.h.b16 %v1602
          %v2179 = vunpack.c.l.b16 %v1603
          %v2180 = vunpack.c.h.b16 %v1603
          %v2181 = vunpack.c.l.b16 %v1604
          %v2182 = vunpack.c.h.b16 %v1604
          %v2183 = vunpack.c.l.b16 %v1605
          %v2184 = vunpack.c.h.b16 %v1605
          %v2185 = vunpack.c.l.b16 %v1606
          %v2186 = vunpack.c.h.b16 %v1606
          %v2187 = vunpack.c.l.b16 %v1607
          %v2188 = vunpack.c.h.b16 %v1607
          %v2189 = vunpack.c.l.b16 %v1608
          %v2190 = vunpack.c.h.b16 %v1608
          %v2191 = vunpack.c.l.b16 %v1609
          %v2192 = vunpack.c.h.b16 %v1609
          %v2193 = vunpack.c.l.b16 %v1610
          %v2194 = vunpack.c.h.b16 %v1610
          %v2195 = vunpack.c.l.b16 %v1611
          %v2196 = vunpack.c.h.b16 %v1611
          %v2197 = vunpack.c.l.b16 %v1612
          %v2198 = vunpack.c.h.b16 %v1612
          %v2199 = vunpack.c.l.b16 %v1613
          %v2200 = vunpack.c.h.b16 %v1613
          %v2201 = vunpack.c.l.b16 %v1614
          %v2202 = vunpack.c.h.b16 %v1614
          %v2203 = vunpack.c.l.b16 %v1615
          %v2204 = vunpack.c.h.b16 %v1615
          %v2205 = vunpack.c.l.b16 %v1616
          %v2206 = vunpack.c.h.b16 %v1616
          %v2207 = vunpack.c.l.b16 %v1617
          %v2208 = vunpack.c.h.b16 %v1617
          %v2209 = vunpack.c.l.b16 %v1618
          %v2210 = vunpack.c.h.b16 %v1618
          %v2211 = vunpack.c.l.b16 %v1619
          %v2212 = vunpack.c.h.b16 %v1619
          %v2213 = vunpack.c.l.b16 %v1620
          %v2214 = vunpack.c.h.b16 %v1620
          %v2215 = vunpack.c.l.b16 %v1621
          %v2216 = vunpack.c.h.b16 %v1621
          %v2217 = vunpack.c.l.b16 %v1622
          %v2218 = vunpack.c.h.b16 %v1622
          %v2219 = vunpack.c.l.b16 %v1623
          %v2220 = vunpack.c.h.b16 %v1623
          %v2221 = vunpack.c.l.b16 %v1624
          %v2222 = vunpack.c.h.b16 %v1624
          %v2223 = vunpack.c.l.b16 %v1625
          %v2224 = vunpack.c.h.b16 %v1625
          %v2225 = vunpack.c.l.b16 %v1626
          %v2226 = vunpack.c.h.b16 %v1626
          %v2227 = vunpack.c.l.b16 %v1627
          %v2228 = vunpack.c.h.b16 %v1627
          %v2229 = vunpack.c.l.b16 %v1628
          %v2230 = vunpack.c.h.b16 %v1628
          %v2231 = vunpack.c.l.b16 %v1629
          %v2232 = vunpack.c.h.b16 %v1629
          %v2233 = vunpack.c.l.b16 %v1630
          %v2234 = vunpack.c.h.b16 %v1630
          %v2235 = vunpack.c.l.b16 %v1631
          %v2236 = vunpack.c.h.b16 %v1631
          %v2237 = vunpack.c.l.b16 %v1632
          %v2238 = vunpack.c.h.b16 %v1632
          %v2239 = vunpack.c.l.b16 %v1633
          %v2240 = vunpack.c.h.b16 %v1633
          %v2241 = vunpack.c.l.b16 %v1634
          %v2242 = vunpack.c.h.b16 %v1634
          %v2243 = vunpack.c.l.b16 %v1635
          %v2244 = vunpack.c.h.b16 %v1635
          %v2245 = vunpack.c.l.b16 %v1636
          %v2246 = vunpack.c.h.b16 %v1636
          %v2247 = vunpack.c.l.b16 %v1637
          %v2248 = vunpack.c.h.b16 %v1637
          %v2249 = vunpack.c.l.b16 %v1638
          %v2250 = vunpack.c.h.b16 %v1638
          %v2251 = vunpack.c.l.b16 %v1639
          %v2252 = vunpack.c.h.b16 %v1639
          %v2253 = vunpack.c.l.b16 %v1640
          %v2254 = vunpack.c.h.b16 %v1640
          %v2255 = vunpack.c.l.b16 %v1641
          %v2256 = vunpack.c.h.b16 %v1641
          %v2257 = vunpack.c.l.b16 %v1642
          %v2258 = vunpack.c.h.b16 %v1642
          %v2259 = vunpack.c.l.b16 %v1643
          %v2260 = vunpack.c.h.b16 %v1643
          %v2261 = vunpack.c.l.b16 %v1644
          %v2262 = vunpack.c.h.b16 %v1644
          %v2263 = vunpack.c.l.b16 %v1645
          %v2264 = vunpack.c.h.b16 %v1645
          %v2265 = vunpack.c.l.b16 %v1646
          %v2266 = vunpack.c.h.b16 %v1646
          %v2267 = vunpack.c.l.b16 %v1647
          %v2268 = vunpack.c.h.b16 %v1647
          %v2269 = vunpack.c.l.b16 %v1648
          %v2270 = vunpack.c.h.b16 %v1648
          %v2271 = vunpack.c.l.b16 %v1649
          %v2272 = vunpack.c.h.b16 %v1649
          %v2273 = vunpack.c.l.b16 %v1650
          %v2274 = vunpack.c.h.b16 %v1650
          %v2275 = vunpack.c.l.b16 %v1651
          %v2276 = vunpack.c.h.b16 %v1651
          %v2277 = vunpack.c.l.b16 %v1652
          %v2278 = vunpack.c.h.b16 %v1652
          %v2279 = vunpack.c.l.b16 %v1653
          %v2280 = vunpack.c.h.b16 %v1653
          %v2281 = vunpack.c.l.b16 %v1654
          %v2282 = vunpack.c.h.b16 %v1654
          %v2283 = vunpack.c.l.b16 %v1655
          %v2284 = vunpack.c.h.b16 %v1655
          %v2285 = vunpack.c.l.b16 %v1656
          %v2286 = vunpack.c.h.b16 %v1656
          %v2287 = vunpack.c.l.b16 %v1657
          %v2288 = vunpack.c.h.b16 %v1657
          %v2289 = vunpack.c.l.b16 %v1658
          %v2290 = vunpack.c.h.b16 %v1658
          %v2291 = vunpack.c.l.b16 %v1659
          %v2292 = vunpack.c.h.b16 %v1659
          %v2293 = vunpack.c.l.b16 %v1660
          %v2294 = vunpack.c.h.b16 %v1660
          %v2295 = vunpack.c.l.b16 %v1661
          %v2296 = vunpack.c.h.b16 %v1661
          %v2297 = vunpack.c.l.b16 %v1662
          %v2298 = vunpack.c.h.b16 %v1662
          %v2299 = vunpack.c.l.b16 %v1663
          %v2300 = vunpack.c.h.b16 %v1663
          %v2301 = vunpack.c.l.b16 %v1664
          %v2302 = vunpack.c.h.b16 %v1664
          %v2303 = vunpack.c.l.b16 %v1665
          %v2304 = vunpack.c.h.b16 %v1665
          %v2305 = vunpack.c.l.b16 %v1666
          %v2306 = vunpack.c.h.b16 %v1666
          %v2307 = vunpack.c.l.b16 %v1667
          %v2308 = vunpack.c.h.b16 %v1667
          %v2309 = vunpack.c.l.b16 %v1668
          %v2310 = vunpack.c.h.b16 %v1668
          %v2311 = vunpack.c.l.b16 %v1669
          %v2312 = vunpack.c.h.b16 %v1669
          %v2313 = vunpack.c.l.b16 %v1670
          %v2314 = vunpack.c.h.b16 %v1670
          %v2315 = vunpack.c.l.b16 %v1671
          %v2316 = vunpack.c.h.b16 %v1671
          %v2317 = vunpack.c.l.b16 %v1672
          %v2318 = vunpack.c.h.b16 %v1672
          %v2319 = vunpack.c.l.b16 %v1673
          %v2320 = vunpack.c.h.b16 %v1673
          %v2321 = vunpack.c.l.b16 %v1674
          %v2322 = vunpack.c.h.b16 %v1674
          %v2323 = vunpack.c.l.b16 %v1675
          %v2324 = vunpack.c.h.b16 %v1675
          %v2325 = vunpack.c.l.b16 %v1676
          %v2326 = vunpack.c.h.b16 %v1676
          %v2327 = vunpack.c.l.b16 %v1677
          %v2328 = vunpack.c.h.b16 %v1677
          %v2329 = vunpack.c.l.b16 %v1678
          %v2330 = vunpack.c.h.b16 %v1678
          %v2331 = vunpack.c.l.b16 %v1679
          %v2332 = vunpack.c.h.b16 %v1679
          %v2333 = vunpack.c.l.b16 %v1680
          %v2334 = vunpack.c.h.b16 %v1680
          %v2335 = vunpack.c.l.b16 %v1681
          %v2336 = vunpack.c.h.b16 %v1681
          %v2337 = vunpack.c.l.b16 %v1682
          %v2338 = vunpack.c.h.b16 %v1682
          %v2339 = vunpack.c.l.b16 %v1683
          %v2340 = vunpack.c.h.b16 %v1683
          %v2341 = vunpack.c.l.b16 %v1684
          %v2342 = vunpack.c.h.b16 %v1684
          %v2343 = vunpack.c.l.b16 %v1685
          %v2344 = vunpack.c.h.b16 %v1685
          %v2345 = vunpack.c.l.b16 %v1686
          %v2346 = vunpack.c.h.b16 %v1686
          %v2347 = vunpack.c.l.b16 %v1687
          %v2348 = vunpack.c.h.b16 %v1687
          %v2349 = vunpack.c.l.b16 %v1688
          %v2350 = vunpack.c.h.b16 %v1688
          %v2351 = vunpack.c.l.b16 %v1689
          %v2352 = vunpack.c.h.b16 %v1689
          %v2353 = vunpack.c.l.b16 %v1690
          %v2354 = vunpack.c.h.b16 %v1690
          %v2355 = vunpack.c.l.b16 %v1691
          %v2356 = vunpack.c.h.b16 %v1691
          %v2357 = vunpack.c.l.b16 %v1692
          %v2358 = vunpack.c.h.b16 %v1692
          %v2359 = vunpack.c.l.b16 %v1693
          %v2360 = vunpack.c.h.b16 %v1693
          %v2361 = vunpack.c.l.b16 %v1694
          %v2362 = vunpack.c.h.b16 %v1694
          %v2363 = vunpack.c.l.b16 %v1695
          %v2364 = vunpack.c.h.b16 %v1695
          %v2365 = vunpack.c.l.b16 %v1696
          %v2366 = vunpack.c.h.b16 %v1696
          %v2367 = vunpack.c.l.b16 %v1697
          %v2368 = vunpack.c.h.b16 %v1697
          %v2369 = vunpack.c.l.b16 %v1698
          %v2370 = vunpack.c.h.b16 %v1698
          %v2371 = vunpack.c.l.b16 %v1699
          %v2372 = vunpack.c.h.b16 %v1699
          %v2373 = vunpack.c.l.b16 %v1700
          %v2374 = vunpack.c.h.b16 %v1700
          %v2375 = vunpack.c.l.b16 %v1701
          %v2376 = vunpack.c.h.b16 %v1701
          %v2377 = vunpack.c.l.b16 %v1702
          %v2378 = vunpack.c.h.b16 %v1702
          %v2379 = vunpack.c.l.b16 %v1703
          %v2380 = vunpack.c.h.b16 %v1703
          %v2381 = vunpack.c.l.b16 %v1704
          %v2382 = vunpack.c.h.b16 %v1704
          %v2383 = vunpack.c.l.b16 %v1705
          %v2384 = vunpack.c.h.b16 %v1705
          %v2385 = vunpack.c.l.b16 %v1706
          %v2386 = vunpack.c.h.b16 %v1706
          %v2387 = vunpack.c.l.b16 %v1707
          %v2388 = vunpack.c.h.b16 %v1707
          %v2389 = vunpack.c.l.b16 %v1708
          %v2390 = vunpack.c.h.b16 %v1708
          %v2391 = vunpack.c.l.b16 %v1709
          %v2392 = vunpack.c.h.b16 %v1709
          %v2393 = vunpack.c.l.b16 %v1710
          %v2394 = vunpack.c.h.b16 %v1710
          %v2395 = vunpack.c.l.b16 %v1711
          %v2396 = vunpack.c.h.b16 %v1711
          %v2397 = vunpack.c.l.b16 %v1712
          %v2398 = vunpack.c.h.b16 %v1712
          %v2399 = vunpack.c.l.b16 %v1713
          %v2400 = vunpack.c.h.b16 %v1713
          %v2401 = vunpack.c.l.b16 %v1714
          %v2402 = vunpack.c.h.b16 %v1714
          %v2403 = vunpack.c.l.b16 %v1715
          %v2404 = vunpack.c.h.b16 %v1715
          %v2405 = vunpack.c.l.b16 %v1716
          %v2406 = vunpack.c.h.b16 %v1716
          %v2407 = vunpack.c.l.b16 %v1717
          %v2408 = vunpack.c.h.b16 %v1717
          %v2409 = vunpack.c.l.b16 %v1718
          %v2410 = vunpack.c.h.b16 %v1718
          %v2411 = vunpack.c.l.b16 %v1719
          %v2412 = vunpack.c.h.b16 %v1719
          %v2413 = vunpack.c.l.b16 %v1720
          %v2414 = vunpack.c.h.b16 %v1720
          %v2415 = vunpack.c.l.b16 %v1721
          %v2416 = vunpack.c.h.b16 %v1721
          %v2417 = vunpack.c.l.b16 %v1722
          %v2418 = vunpack.c.h.b16 %v1722
          %v2419 = vunpack.c.l.b16 %v1723
          %v2420 = vunpack.c.h.b16 %v1723
          %v2421 = vunpack.c.l.b16 %v1724
          %v2422 = vunpack.c.h.b16 %v1724
          %v2423 = vunpack.c.l.b16 %v1725
          %v2424 = vunpack.c.h.b16 %v1725
          %v2425 = vunpack.c.l.b16 %v1726
          %v2426 = vunpack.c.h.b16 %v1726
          %v2427 = vunpack.c.l.b16 %v1727
          %v2428 = vunpack.c.h.b16 %v1727
          %v2429 = vunpack.c.l.b16 %v1728
          %v2430 = vunpack.c.h.b16 %v1728
          %v2431 = vunpack.c.l.b16 %v1729
          %v2432 = vunpack.c.h.b16 %v1729
          %v2433 = vunpack.c.l.b16 %v1730
          %v2434 = vunpack.c.h.b16 %v1730
          %v2435 = vunpack.c.l.b16 %v1731
          %v2436 = vunpack.c.h.b16 %v1731
          %v2437 = vunpack.c.l.b16 %v1732
          %v2438 = vunpack.c.h.b16 %v1732
          %v2439 = vunpack.c.l.b16 %v1733
          %v2440 = vunpack.c.h.b16 %v1733
          %v2441 = vunpack.c.l.b16 %v1734
          %v2442 = vunpack.c.h.b16 %v1734
          %v2443 = vunpack.c.l.b16 %v1735
          %v2444 = vunpack.c.h.b16 %v1735
          %v2445 = vunpack.c.l.b16 %v1736
          %v2446 = vunpack.c.h.b16 %v1736
          %v2447 = vunpack.c.l.b16 %v1737
          %v2448 = vunpack.c.h.b16 %v1737
          %v2449 = vunpack.c.l.b16 %v1738
          %v2450 = vunpack.c.h.b16 %v1738
          %v2451 = vunpack.c.l.b16 %v1739
          %v2452 = vunpack.c.h.b16 %v1739
          %v2453 = vunpack.c.l.b16 %v1740
          %v2454 = vunpack.c.h.b16 %v1740
          %v2455 = vunpack.c.l.b16 %v1741
          %v2456 = vunpack.c.h.b16 %v1741
          %v2457 = vunpack.c.l.b16 %v1742
          %v2458 = vunpack.c.h.b16 %v1742
          %v2459 = vunpack.c.l.b16 %v1743
          %v2460 = vunpack.c.h.b16 %v1743
          %v2461 = vunpack.c.l.b16 %v1744
          %v2462 = vunpack.c.h.b16 %v1744
          %v2463 = vunpack.c.l.b16 %v1745
          %v2464 = vunpack.c.h.b16 %v1745
          %v2465 = vunpack.c.l.b16 %v1746
          %v2466 = vunpack.c.h.b16 %v1746
          %v2467 = vunpack.c.l.b16 %v1747
          %v2468 = vunpack.c.h.b16 %v1747
          %v2469 = vunpack.c.l.b16 %v1748
          %v2470 = vunpack.c.h.b16 %v1748
          %v2471 = vunpack.c.l.b16 %v1749
          %v2472 = vunpack.c.h.b16 %v1749
          %v2473 = vunpack.c.l.b16 %v1750
          %v2474 = vunpack.c.h.b16 %v1750
          %v2475 = vunpack.c.l.b16 %v1751
          %v2476 = vunpack.c.h.b16 %v1751
          %v2477 = vunpack.c.l.b16 %v1752
          %v2478 = vunpack.c.h.b16 %v1752
          %v2479 = vunpack.c.l.b16 %v1753
          %v2480 = vunpack.c.h.b16 %v1753
          %v2481 = vunpack.c.l.b16 %v1754
          %v2482 = vunpack.c.h.b16 %v1754
          %v2483 = vunpack.c.l.b16 %v1755
          %v2484 = vunpack.c.h.b16 %v1755
          %v2485 = vunpack.c.l.b16 %v1756
          %v2486 = vunpack.c.h.b16 %v1756
          %v2487 = vunpack.c.l.b16 %v1757
          %v2488 = vunpack.c.h.b16 %v1757
          %v2489 = vunpack.c.l.b16 %v1758
          %v2490 = vunpack.c.h.b16 %v1758
          %v2491 = vunpack.c.l.b16 %v1759
          %v2492 = vunpack.c.h.b16 %v1759
          %v2493 = vunpack.c.l.b16 %v1760
          %v2494 = vunpack.c.h.b16 %v1760
          %v2495 = vunpack.c.l.b16 %v1761
          %v2496 = vunpack.c.h.b16 %v1761
          %v2497 = vunpack.c.l.b16 %v1762
          %v2498 = vunpack.c.h.b16 %v1762
          %v2499 = vunpack.c.l.b16 %v1763
          %v2500 = vunpack.c.h.b16 %v1763
          %v2501 = vunpack.c.l.b16 %v1764
          %v2502 = vunpack.c.h.b16 %v1764
          %v2503 = vunpack.c.l.b16 %v1765
          %v2504 = vunpack.c.h.b16 %v1765
          %v2505 = vunpack.c.l.b16 %v1766
          %v2506 = vunpack.c.h.b16 %v1766
          %v2507 = vunpack.c.l.b16 %v1767
          %v2508 = vunpack.c.h.b16 %v1767
          %v2509 = vunpack.c.l.b16 %v1768
          %v2510 = vunpack.c.h.b16 %v1768
          %v2511 = vunpack.c.l.b16 %v1769
          %v2512 = vunpack.c.h.b16 %v1769
          %v2513 = vunpack.c.l.b16 %v1770
          %v2514 = vunpack.c.h.b16 %v1770
          %v2515 = vunpack.c.l.b16 %v1771
          %v2516 = vunpack.c.h.b16 %v1771
          %v2517 = vunpack.c.l.b16 %v1772
          %v2518 = vunpack.c.h.b16 %v1772
          %v2519 = vunpack.c.l.b16 %v1773
          %v2520 = vunpack.c.h.b16 %v1773
          %v2521 = vunpack.c.l.b16 %v1774
          %v2522 = vunpack.c.h.b16 %v1774
          %v2523 = vunpack.c.l.b16 %v1775
          %v2524 = vunpack.c.h.b16 %v1775
          %v2525 = vunpack.c.l.b16 %v1776
          %v2526 = vunpack.c.h.b16 %v1776
          %v2527 = vunpack.c.l.b16 %v1777
          %v2528 = vunpack.c.h.b16 %v1777
          %v2529 = vunpack.c.l.b16 %v1778
          %v2530 = vunpack.c.h.b16 %v1778
          %v2531 = vunpack.c.l.b16 %v1779
          %v2532 = vunpack.c.h.b16 %v1779
          %v2533 = vunpack.c.l.b16 %v1780
          %v2534 = vunpack.c.h.b16 %v1780
          %v2535 = vunpack.c.l.b16 %v1781
          %v2536 = vunpack.c.h.b16 %v1781
          %v2537 = vunpack.c.l.b16 %v1782
          %v2538 = vunpack.c.h.b16 %v1782
          %v2539 = vunpack.c.l.b16 %v1783
          %v2540 = vunpack.c.h.b16 %v1783
          %v2541 = vunpack.c.l.b16 %v1784
          %v2542 = vunpack.c.h.b16 %v1784
          %v2543 = vunpack.c.l.b16 %v1785
          %v2544 = vunpack.c.h.b16 %v1785
          %v2545 = vunpack.c.l.b16 %v1786
          %v2546 = vunpack.c.h.b16 %v1786
          %v2547 = vunpack.c.l.b16 %v1787
          %v2548 = vunpack.c.h.b16 %v1787
          %v2549 = vunpack.c.l.b16 %v1788
          %v2550 = vunpack.c.h.b16 %v1788
          %v2551 = vunpack.c.l.b16 %v1789
          %v2552 = vunpack.c.h.b16 %v1789
          %v2553 = vunpack.c.l.b16 %v1790
          %v2554 = vunpack.c.h.b16 %v1790
          %v2555 = vunpack.c.l.b16 %v1791
          %v2556 = vunpack.c.h.b16 %v1791
          %v2557 = vunpack.c.l.b16 %v1792
          %v2558 = vunpack.c.h.b16 %v1792
          %v2559 = vunpack.c.l.b16 %v1793
          %v2560 = vunpack.c.h.b16 %v1793
          %v2561 = vunpack.c.l.b16 %v1794
          %v2562 = vunpack.c.h.b16 %v1794
          %v2563 = vunpack.c.l.b16 %v1795
          %v2564 = vunpack.c.h.b16 %v1795
          %v2565 = vunpack.c.l.b16 %v1796
          %v2566 = vunpack.c.h.b16 %v1796
          %v2567 = vunpack.c.l.b16 %v1797
          %v2568 = vunpack.c.h.b16 %v1797
          %v2569 = vunpack.c.l.b16 %v1798
          %v2570 = vunpack.c.h.b16 %v1798
          %v2571 = vunpack.c.l.b16 %v1799
          %v2572 = vunpack.c.h.b16 %v1799
          %v2573 = vunpack.c.l.b16 %v1800
          %v2574 = vunpack.c.h.b16 %v1800
          %v2575 = vunpack.c.l.b16 %v1801
          %v2576 = vunpack.c.h.b16 %v1801
          %v2577 = vunpack.c.l.b16 %v1802
          %v2578 = vunpack.c.h.b16 %v1802
          %v2579 = vunpack.c.l.b16 %v1803
          %v2580 = vunpack.c.h.b16 %v1803
          %v2581 = vunpack.c.l.b16 %v1804
          %v2582 = vunpack.c.h.b16 %v1804
          %v2583 = vunpack.c.l.b16 %v1805
          %v2584 = vunpack.c.h.b16 %v1805
          %v2585 = vunpack.c.l.b16 %v1806
          %v2586 = vunpack.c.h.b16 %v1806
          %v2587 = vunpack.c.l.b16 %v1807
          %v2588 = vunpack.c.h.b16 %v1807
          %v2589 = vunpack.c.l.b16 %v1808
          %v2590 = vunpack.c.h.b16 %v1808
          %v2591 = vunpack.c.l.b16 %v1809
          %v2592 = vunpack.c.h.b16 %v1809
          %v2593 = vunpack.c.l.b16 %v1810
          %v2594 = vunpack.c.h.b16 %v1810
          %v2595 = vunpack.c.l.b16 %v1811
          %v2596 = vunpack.c.h.b16 %v1811
          %v2597 = vunpack.c.l.b16 %v1812
          %v2598 = vunpack.c.h.b16 %v1812
          %v2599 = vunpack.c.l.b16 %v1813
          %v2600 = vunpack.c.h.b16 %v1813
          %v2601 = vunpack.c.l.b16 %v1814
          %v2602 = vunpack.c.h.b16 %v1814
          %v2603 = vpack.c.b16 %v2095, %v2091
          %v2604 = vpack.c.b16 %v2096, %v2092
          %v2605 = vpack.c.b16 %v2097, %v2093
          %v2606 = vpack.c.b16 %v2098, %v2094
          %v2607 = vpack.c.b16 %v2103, %v2099
          %v2608 = vpack.c.b16 %v2104, %v2100
          %v2609 = vpack.c.b16 %v2105, %v2101
          %v2610 = vpack.c.b16 %v2106, %v2102
          %v2611 = vpack.c.b16 %v2111, %v2107
          %v2612 = vpack.c.b16 %v2112, %v2108
          %v2613 = vpack.c.b16 %v2113, %v2109
          %v2614 = vpack.c.b16 %v2114, %v2110
          %v2615 = vpack.c.b16 %v2119, %v2115
          %v2616 = vpack.c.b16 %v2120, %v2116
          %v2617 = vpack.c.b16 %v2121, %v2117
          %v2618 = vpack.c.b16 %v2122, %v2118
          %v2619 = vpack.c.b16 %v2127, %v2123
          %v2620 = vpack.c.b16 %v2128, %v2124
          %v2621 = vpack.c.b16 %v2129, %v2125
          %v2622 = vpack.c.b16 %v2130, %v2126
          %v2623 = vpack.c.b16 %v2135, %v2131
          %v2624 = vpack.c.b16 %v2136, %v2132
          %v2625 = vpack.c.b16 %v2137, %v2133
          %v2626 = vpack.c.b16 %v2138, %v2134
          %v2627 = vpack.c.b16 %v2143, %v2139
          %v2628 = vpack.c.b16 %v2144, %v2140
          %v2629 = vpack.c.b16 %v2145, %v2141
          %v2630 = vpack.c.b16 %v2146, %v2142
          %v2631 = vpack.c.b16 %v2151, %v2147
          %v2632 = vpack.c.b16 %v2152, %v2148
          %v2633 = vpack.c.b16 %v2153, %v2149
          %v2634 = vpack.c.b16 %v2154, %v2150
          %v2635 = vpack.c.b16 %v2159, %v2155
          %v2636 = vpack.c.b16 %v2160, %v2156
          %v2637 = vpack.c.b16 %v2161, %v2157
          %v2638 = vpack.c.b16 %v2162, %v2158
          %v2639 = vpack.c.b16 %v2167, %v2163
          %v2640 = vpack.c.b16 %v2168, %v2164
          %v2641 = vpack.c.b16 %v2169, %v2165
          %v2642 = vpack.c.b16 %v2170, %v2166
          %v2643 = vpack.c.b16 %v2175, %v2171
          %v2644 = vpack.c.b16 %v2176, %v2172
          %v2645 = vpack.c.b16 %v2177, %v2173
          %v2646 = vpack.c.b16 %v2178, %v2174
          %v2647 = vpack.c.b16 %v2183, %v2179
          %v2648 = vpack.c.b16 %v2184, %v2180
          %v2649 = vpack.c.b16 %v2185, %v2181
          %v2650 = vpack.c.b16 %v2186, %v2182
          %v2651 = vpack.c.b16 %v2191, %v2187
          %v2652 = vpack.c.b16 %v2192, %v2188
          %v2653 = vpack.c.b16 %v2193, %v2189
          %v2654 = vpack.c.b16 %v2194, %v2190
          %v2655 = vpack.c.b16 %v2199, %v2195
          %v2656 = vpack.c.b16 %v2200, %v2196
          %v2657 = vpack.c.b16 %v2201, %v2197
          %v2658 = vpack.c.b16 %v2202, %v2198
          %v2659 = vpack.c.b16 %v2207, %v2203
          %v2660 = vpack.c.b16 %v2208, %v2204
          %v2661 = vpack.c.b16 %v2209, %v2205
          %v2662 = vpack.c.b16 %v2210, %v2206
          %v2663 = vpack.c.b16 %v2215, %v2211
          %v2664 = vpack.c.b16 %v2216, %v2212
          %v2665 = vpack.c.b16 %v2217, %v2213
          %v2666 = vpack.c.b16 %v2218, %v2214
          %v2667 = vpack.c.b16 %v2223, %v2219
          %v2668 = vpack.c.b16 %v2224, %v2220
          %v2669 = vpack.c.b16 %v2225, %v2221
          %v2670 = vpack.c.b16 %v2226, %v2222
          %v2671 = vpack.c.b16 %v2231, %v2227
          %v2672 = vpack.c.b16 %v2232, %v2228
          %v2673 = vpack.c.b16 %v2233, %v2229
          %v2674 = vpack.c.b16 %v2234, %v2230
          %v2675 = vpack.c.b16 %v2239, %v2235
          %v2676 = vpack.c.b16 %v2240, %v2236
          %v2677 = vpack.c.b16 %v2241, %v2237
          %v2678 = vpack.c.b16 %v2242, %v2238
          %v2679 = vpack.c.b16 %v2247, %v2243
          %v2680 = vpack.c.b16 %v2248, %v2244
          %v2681 = vpack.c.b16 %v2249, %v2245
          %v2682 = vpack.c.b16 %v2250, %v2246
          %v2683 = vpack.c.b16 %v2255, %v2251
          %v2684 = vpack.c.b16 %v2256, %v2252
          %v2685 = vpack.c.b16 %v2257, %v2253
          %v2686 = vpack.c.b16 %v2258, %v2254
          %v2687 = vpack.c.b16 %v2263, %v2259
          %v2688 = vpack.c.b16 %v2264, %v2260
          %v2689 = vpack.c.b16 %v2265, %v2261
          %v2690 = vpack.c.b16 %v2266, %v2262
          %v2691 = vpack.c.b16 %v2271, %v2267
          %v2692 = vpack.c.b16 %v2272, %v2268
          %v2693 = vpack.c.b16 %v2273, %v2269
          %v2694 = vpack.c.b16 %v2274, %v2270
          %v2695 = vpack.c.b16 %v2279, %v2275
          %v2696 = vpack.c.b16 %v2280, %v2276
          %v2697 = vpack.c.b16 %v2281, %v2277
          %v2698 = vpack.c.b16 %v2282, %v2278
          %v2699 = vpack.c.b16 %v2287, %v2283
          %v2700 = vpack.c.b16 %v2288, %v2284
          %v2701 = vpack.c.b16 %v2289, %v2285
          %v2702 = vpack.c.b16 %v2290, %v2286
          %v2703 = vpack.c.b16 %v2295, %v2291
          %v2704 = vpack.c.b16 %v2296, %v2292
          %v2705 = vpack.c.b16 %v2297, %v2293
          %v2706 = vpack.c.b16 %v2298, %v2294
          %v2707 = vpack.c.b16 %v2303, %v2299
          %v2708 = vpack.c.b16 %v2304, %v2300
          %v2709 = vpack.c.b16 %v2305, %v2301
          %v2710 = vpack.c.b16 %v2306, %v2302
          %v2711 = vpack.c.b16 %v2311, %v2307
          %v2712 = vpack.c.b16 %v2312, %v2308
          %v2713 = vpack.c.b16 %v2313, %v2309
          %v2714 = vpack.c.b16 %v2314, %v2310
          %v2715 = vpack.c.b16 %v2319, %v2315
          %v2716 = vpack.c.b16 %v2320, %v2316
          %v2717 = vpack.c.b16 %v2321, %v2317
          %v2718 = vpack.c.b16 %v2322, %v2318
          %v2719 = vpack.c.b16 %v2327, %v2323
          %v2720 = vpack.c.b16 %v2328, %v2324
          %v2721 = vpack.c.b16 %v2329, %v2325
          %v2722 = vpack.c.b16 %v2330, %v2326
          %v2723 = vpack.c.b16 %v2335, %v2331
          %v2724 = vpack.c.b16 %v2336, %v2332
          %v2725 = vpack.c.b16 %v2337, %v2333
          %v2726 = vpack.c.b16 %v2338, %v2334
          %v2727 = vpack.c.b16 %v2343, %v2339
          %v2728 = vpack.c.b16 %v2344, %v2340
          %v2729 = vpack.c.b16 %v2345, %v2341
          %v2730 = vpack.c.b16 %v2346, %v2342
          %v2731 = vpack.c.b16 %v2351, %v2347
          %v2732 = vpack.c.b16 %v2352, %v2348
          %v2733 = vpack.c.b16 %v2353, %v2349
          %v2734 = vpack.c.b16 %v2354, %v2350
          %v2735 = vpack.c.b16 %v2359, %v2355
          %v2736 = vpack.c.b16 %v2360, %v2356
          %v2737 = vpack.c.b16 %v2361, %v2357
          %v2738 = vpack.c.b16 %v2362, %v2358
          %v2739 = vpack.c.b16 %v2367, %v2363
          %v2740 = vpack.c.b16 %v2368, %v2364
          %v2741 = vpack.c.b16 %v2369, %v2365
          %v2742 = vpack.c.b16 %v2370, %v2366
          %v2743 = vpack.c.b16 %v2375, %v2371
          %v2744 = vpack.c.b16 %v2376, %v2372
          %v2745 = vpack.c.b16 %v2377, %v2373
          %v2746 = vpack.c.b16 %v2378, %v2374
          %v2747 = vpack.c.b16 %v2383, %v2379
          %v2748 = vpack.c.b16 %v2384, %v2380
          %v2749 = vpack.c.b16 %v2385, %v2381
          %v2750 = vpack.c.b16 %v2386, %v2382
          %v2751 = vpack.c.b16 %v2391, %v2387
          %v2752 = vpack.c.b16 %v2392, %v2388
          %v2753 = vpack.c.b16 %v2393, %v2389
          %v2754 = vpack.c.b16 %v2394, %v2390
          %v2755 = vpack.c.b16 %v2399, %v2395
          %v2756 = vpack.c.b16 %v2400, %v2396
          %v2757 = vpack.c.b16 %v2401, %v2397
          %v2758 = vpack.c.b16 %v2402, %v2398
          %v2759 = vpack.c.b16 %v2407, %v2403
          %v2760 = vpack.c.b16 %v2408, %v2404
          %v2761 = vpack.c.b16 %v2409, %v2405
          %v2762 = vpack.c.b16 %v2410, %v2406
          %v2763 = vpack.c.b16 %v2415, %v2411
          %v2764 = vpack.c.b16 %v2416, %v2412
          %v2765 = vpack.c.b16 %v2417, %v2413
          %v2766 = vpack.c.b16 %v2418, %v2414
          %v2767 = vpack.c.b16 %v2423, %v2419
          %v2768 = vpack.c.b16 %v2424, %v2420
          %v2769 = vpack.c.b16 %v2425, %v2421
          %v2770 = vpack.c.b16 %v2426, %v2422
          %v2771 = vpack.c.b16 %v2431, %v2427
          %v2772 = vpack.c.b16 %v2432, %v2428
          %v2773 = vpack.c.b16 %v2433, %v2429
          %v2774 = vpack.c.b16 %v2434, %v2430
          %v2775 = vpack.c.b16 %v2439, %v2435
          %v2776 = vpack.c.b16 %v2440, %v2436
          %v2777 = vpack.c.b16 %v2441, %v2437
          %v2778 = vpack.c.b16 %v2442, %v2438
          %v2779 = vpack.c.b16 %v2447, %v2443
          %v2780 = vpack.c.b16 %v2448, %v2444
          %v2781 = vpack.c.b16 %v2449, %v2445
          %v2782 = vpack.c.b16 %v2450, %v2446
          %v2783 = vpack.c.b16 %v2455, %v2451
          %v2784 = vpack.c.b16 %v2456, %v2452
          %v2785 = vpack.c.b16 %v2457, %v2453
          %v2786 = vpack.c.b16 %v2458, %v2454
          %v2787 = vpack.c.b16 %v2463, %v2459
          %v2788 = vpack.c.b16 %v2464, %v2460
          %v2789 = vpack.c.b16 %v2465, %v2461
          %v2790 = vpack.c.b16 %v2466, %v2462
          %v2791 = vpack.c.b16 %v2471, %v2467
          %v2792 = vpack.c.b16 %v2472, %v2468
          %v2793 = vpack.c.b16 %v2473, %v2469
          %v2794 = vpack.c.b16 %v2474, %v2470
          %v2795 = vpack.c.b16 %v2479, %v2475
          %v2796 = vpack.c.b16 %v2480, %v2476
          %v2797 = vpack.c.b16 %v2481, %v2477
          %v2798 = vpack.c.b16 %v2482, %v2478
          %v2799 = vpack.c.b16 %v2487, %v2483
          %v2800 = vpack.c.b16 %v2488, %v2484
          %v2801 = vpack.c.b16 %v2489, %v2485
          %v2802 = vpack.c.b16 %v2490, %v2486
          %v2803 = vpack.c.b16 %v2495, %v2491
          %v2804 = vpack.c.b16 %v2496, %v2492
          %v2805 = vpack.c.b16 %v2497, %v2493
          %v2806 = vpack.c.b16 %v2498, %v2494
          %v2807 = vpack.c.b16 %v2503, %v2499
          %v2808 = vpack.c.b16 %v2504, %v2500
          %v2809 = vpack.c.b16 %v2505, %v2501
          %v2810 = vpack.c.b16 %v2506, %v2502
          %v2811 = vpack.c.b16 %v2511, %v2507
          %v2812 = vpack.c.b16 %v2512, %v2508
          %v2813 = vpack.c.b16 %v2513, %v2509
          %v2814 = vpack.c.b16 %v2514, %v2510
          %v2815 = vpack.c.b16 %v2519, %v2515
          %v2816 = vpack.c.b16 %v2520, %v2516
          %v2817 = vpack.c.b16 %v2521, %v2517
          %v2818 = vpack.c.b16 %v2522, %v2518
          %v2819 = vpack.c.b16 %v2527, %v2523
          %v2820 = vpack.c.b16 %v2528, %v2524
          %v2821 = vpack.c.b16 %v2529, %v2525
          %v2822 = vpack.c.b16 %v2530, %v2526
          %v2823 = vpack.c.b16 %v2535, %v2531
          %v2824 = vpack.c.b16 %v2536, %v2532
          %v2825 = vpack.c.b16 %v2537, %v2533
          %v2826 = vpack.c.b16 %v2538, %v2534
          %v2827 = vpack.c.b16 %v2543, %v2539
          %v2828 = vpack.c.b16 %v2544, %v2540
          %v2829 = vpack.c.b16 %v2545, %v2541
          %v2830 = vpack.c.b16 %v2546, %v2542
          %v2831 = vpack.c.b16 %v2551, %v2547
          %v2832 = vpack.c.b16 %v2552, %v2548
          %v2833 = vpack.c.b16 %v2553, %v2549
          %v2834 = vpack.c.b16 %v2554, %v2550
          %v2835 = vpack.c.b16 %v2559, %v2555
          %v2836 = vpack.c.b16 %v2560, %v2556
          %v2837 = vpack.c.b16 %v2561, %v2557
          %v2838 = vpack.c.b16 %v2562, %v2558
          %v2839 = vpack.c.b16 %v2567, %v2563
          %v2840 = vpack.c.b16 %v2568, %v2564
          %v2841 = vpack.c.b16 %v2569, %v2565
          %v2842 = vpack.c.b16 %v2570, %v2566
          %v2843 = vpack.c.b16 %v2575, %v2571
          %v2844 = vpack.c.b16 %v2576, %v2572
          %v2845 = vpack.c.b16 %v2577, %v2573
          %v2846 = vpack.c.b16 %v2578, %v2574
          %v2847 = vpack.c.b16 %v2583, %v2579
          %v2848 = vpack.c.b16 %v2584, %v2580
          %v2849 = vpack.c.b16 %v2585, %v2581
          %v2850 = vpack.c.b16 %v2586, %v2582
          %v2851 = vpack.c.b16 %v2591, %v2587
          %v2852 = vpack.c.b16 %v2592, %v2588
          %v2853 = vpack.c.b16 %v2593, %v2589
          %v2854 = vpack.c.b16 %v2594, %v2590
          %v2855 = vpack.c.b16 %v2599, %v2595
          %v2856 = vpack.c.b16 %v2600, %v2596
          %v2857 = vpack.c.b16 %v2601, %v2597
          %v2858 = vpack.c.b16 %v2602, %v2598
          %3115 = vmatprep.subr.bf16.mxu0 %v2632
          %3116 = vmatpush1.bf16.msra.mxu0 %v2631
          %3117 = vmatprep.subr.bf16.mxu0 %v2628
          %3118 = vmatpush1.bf16.msra.mxu0 %v2627
          %3119 = vmatprep.subr.bf16.mxu0 %v2624
          %3120 = vmatpush1.bf16.msra.mxu0 %v2623
          %3121 = vmatprep.subr.bf16.mxu0 %v2620
          %3122 = vmatpush1.bf16.msra.mxu0 %v2619
          %3123 = vmatprep.subr.bf16.mxu0 %v2616
          %3124 = vmatpush1.bf16.msra.mxu0 %v2615
          %3125 = vmatprep.subr.bf16.mxu0 %v2612
          %3126 = vmatpush1.bf16.msra.mxu0 %v2611
          %3127 = vmatprep.subr.bf16.mxu0 %v2608
          %3128 = vmatpush1.bf16.msra.mxu0 %v2607
          %3129 = vmatprep.subr.bf16.mxu0 %v2604
          %3130 = vmatpush1.bf16.msra.mxu0 %v2603
          %3131 = vmatprep.subr.bf16.mxu0 %v2664
          %3132 = vmatpush2.bf16.msra.mxu0 %v2663
          %3133 = vmatprep.subr.bf16.mxu0 %v2660
          %3134 = vmatpush2.bf16.msra.mxu0 %v2659
          %3135 = vmatprep.subr.bf16.mxu0 %v2656
          %3136 = vmatpush2.bf16.msra.mxu0 %v2655
          %3137 = vmatprep.subr.bf16.mxu0 %v2652
          %3138 = vmatpush2.bf16.msra.mxu0 %v2651
          %3139 = vmatprep.subr.bf16.mxu0 %v2648
          %3140 = vmatpush2.bf16.msra.mxu0 %v2647
          %3141 = vmatprep.subr.bf16.mxu0 %v2644
          %3142 = vmatpush2.bf16.msra.mxu0 %v2643
          %3143 = vmatprep.subr.bf16.mxu0 %v2640
          %3144 = vmatpush2.bf16.msra.mxu0 %v2639
          %3145 = vmatprep.subr.bf16.mxu0 %v2636
          %3146 = vmatpush2.bf16.msra.mxu0 %v2635
          %3147 = vmatprep.mubr.bf16.mxu0 %v1552
          %3148 = vmatmul.mubr.bf16.gmra.mxu0 %v1551
          %v3149 = vpop.f32.mrf.mxu0
          %v3150 = vadd.f32 %v1822, %v3149
          %v3151 = vpop.f32.mrf.mxu0
          %v3152 = vadd.f32 %v1826, %v3151
          %v3153 = vpop.f32.mrf.mxu0
          %v3154 = vpop.f32.mrf.mxu0
          %3155 = vdwg.mxu0
          %3156 = vmatprep.subr.bf16.mxu0 %v2696
          %3157 = vmatpush1.bf16.msra.mxu0 %v2695
          %3158 = vmatprep.subr.bf16.mxu0 %v2692
          %3159 = vmatpush1.bf16.msra.mxu0 %v2691
          %3160 = vmatprep.subr.bf16.mxu0 %v2688
          %3161 = vmatpush1.bf16.msra.mxu0 %v2687
          %3162 = vmatprep.subr.bf16.mxu0 %v2684
          %3163 = vmatpush1.bf16.msra.mxu0 %v2683
          %3164 = vmatprep.subr.bf16.mxu0 %v2680
          %3165 = vmatpush1.bf16.msra.mxu0 %v2679
          %3166 = vmatprep.subr.bf16.mxu0 %v2676
          %3167 = vmatpush1.bf16.msra.mxu0 %v2675
          %3168 = vmatprep.subr.bf16.mxu0 %v2672
          %3169 = vmatpush1.bf16.msra.mxu0 %v2671
          %3170 = vmatprep.subr.bf16.mxu0 %v2668
          %3171 = vmatpush1.bf16.msra.mxu0 %v2667
          %3172 = vmatprep.subr.bf16.mxu0 %v2728
          %3173 = vmatpush2.bf16.msra.mxu0 %v2727
          %3174 = vmatprep.subr.bf16.mxu0 %v2724
          %3175 = vmatpush2.bf16.msra.mxu0 %v2723
          %3176 = vmatprep.subr.bf16.mxu0 %v2720
          %3177 = vmatpush2.bf16.msra.mxu0 %v2719
          %3178 = vmatprep.subr.bf16.mxu0 %v2716
          %3179 = vmatpush2.bf16.msra.mxu0 %v2715
          %3180 = vmatprep.subr.bf16.mxu0 %v2712
          %3181 = vmatpush2.bf16.msra.mxu0 %v2711
          %3182 = vmatprep.subr.bf16.mxu0 %v2708
          %3183 = vmatpush2.bf16.msra.mxu0 %v2707
          %3184 = vmatprep.subr.bf16.mxu0 %v2704
          %3185 = vmatpush2.bf16.msra.mxu0 %v2703
          %3186 = vmatprep.subr.bf16.mxu0 %v2700
          %3187 = vmatpush2.bf16.msra.mxu0 %v2699
          %3188 = vmatprep.mubr.bf16.mxu0 %v1554
          %3189 = vmatmul.mubr.bf16.gmra.mxu0 %v1553
          %v3190 = vpop.f32.mrf.mxu0
          %v3191 = vadd.f32 %v3150, %v3190
          %v3192 = vpop.f32.mrf.mxu0
          %v3193 = vadd.f32 %v3152, %v3192
          %v3194 = vpop.f32.mrf.mxu0
          %v3195 = vpop.f32.mrf.mxu0
          %3196 = vdwg.mxu0
          %3197 = vmatprep.subr.bf16.mxu0 %v2760
          %3198 = vmatpush1.bf16.msra.mxu0 %v2759
          %3199 = vmatprep.subr.bf16.mxu0 %v2756
          %3200 = vmatpush1.bf16.msra.mxu0 %v2755
          %3201 = vmatprep.subr.bf16.mxu0 %v2752
          %3202 = vmatpush1.bf16.msra.mxu0 %v2751
          %3203 = vmatprep.subr.bf16.mxu0 %v2748
          %3204 = vmatpush1.bf16.msra.mxu0 %v2747
          %3205 = vmatprep.subr.bf16.mxu0 %v2744
          %3206 = vmatpush1.bf16.msra.mxu0 %v2743
          %3207 = vmatprep.subr.bf16.mxu0 %v2740
          %3208 = vmatpush1.bf16.msra.mxu0 %v2739
          %3209 = vmatprep.subr.bf16.mxu0 %v2736
          %3210 = vmatpush1.bf16.msra.mxu0 %v2735
          %3211 = vmatprep.subr.bf16.mxu0 %v2732
          %3212 = vmatpush1.bf16.msra.mxu0 %v2731
          %3213 = vmatprep.subr.bf16.mxu0 %v2792
          %3214 = vmatpush2.bf16.msra.mxu0 %v2791
          %3215 = vmatprep.subr.bf16.mxu0 %v2788
          %3216 = vmatpush2.bf16.msra.mxu0 %v2787
          %3217 = vmatprep.subr.bf16.mxu0 %v2784
          %3218 = vmatpush2.bf16.msra.mxu0 %v2783
          %3219 = vmatprep.subr.bf16.mxu0 %v2780
          %3220 = vmatpush2.bf16.msra.mxu0 %v2779
          %3221 = vmatprep.subr.bf16.mxu0 %v2776
          %3222 = vmatpush2.bf16.msra.mxu0 %v2775
          %3223 = vmatprep.subr.bf16.mxu0 %v2772
          %3224 = vmatpush2.bf16.msra.mxu0 %v2771
          %3225 = vmatprep.subr.bf16.mxu0 %v2768
          %3226 = vmatpush2.bf16.msra.mxu0 %v2767
          %3227 = vmatprep.subr.bf16.mxu0 %v2764
          %3228 = vmatpush2.bf16.msra.mxu0 %v2763
          %3229 = vmatprep.mubr.bf16.mxu0 %v1556
          %3230 = vmatmul.mubr.bf16.gmra.mxu0 %v1555
          %v3231 = vpop.f32.mrf.mxu0
          %v3232 = vadd.f32 %v3191, %v3231
          %v3233 = vpop.f32.mrf.mxu0
          %v3234 = vadd.f32 %v3193, %v3233
          %v3235 = vpop.f32.mrf.mxu0
          %v3236 = vpop.f32.mrf.mxu0
          %3237 = vdwg.mxu0
          %3238 = vmatprep.subr.bf16.mxu0 %v2824
          %3239 = vmatpush1.bf16.msra.mxu0 %v2823
          %3240 = vmatprep.subr.bf16.mxu0 %v2820
          %3241 = vmatpush1.bf16.msra.mxu0 %v2819
          %3242 = vmatprep.subr.bf16.mxu0 %v2816
          %3243 = vmatpush1.bf16.msra.mxu0 %v2815
          %3244 = vmatprep.subr.bf16.mxu0 %v2812
          %3245 = vmatpush1.bf16.msra.mxu0 %v2811
          %3246 = vmatprep.subr.bf16.mxu0 %v2808
          %3247 = vmatpush1.bf16.msra.mxu0 %v2807
          %3248 = vmatprep.subr.bf16.mxu0 %v2804
          %3249 = vmatpush1.bf16.msra.mxu0 %v2803
          %3250 = vmatprep.subr.bf16.mxu0 %v2800
          %3251 = vmatpush1.bf16.msra.mxu0 %v2799
          %3252 = vmatprep.subr.bf16.mxu0 %v2796
          %3253 = vmatpush1.bf16.msra.mxu0 %v2795
          %3254 = vmatprep.subr.bf16.mxu0 %v2856
          %3255 = vmatpush2.bf16.msra.mxu0 %v2855
          %3256 = vmatprep.subr.bf16.mxu0 %v2852
          %3257 = vmatpush2.bf16.msra.mxu0 %v2851
          %3258 = vmatprep.subr.bf16.mxu0 %v2848
          %3259 = vmatpush2.bf16.msra.mxu0 %v2847
          %3260 = vmatprep.subr.bf16.mxu0 %v2844
          %3261 = vmatpush2.bf16.msra.mxu0 %v2843
          %3262 = vmatprep.subr.bf16.mxu0 %v2840
          %3263 = vmatpush2.bf16.msra.mxu0 %v2839
          %3264 = vmatprep.subr.bf16.mxu0 %v2836
          %3265 = vmatpush2.bf16.msra.mxu0 %v2835
          %3266 = vmatprep.subr.bf16.mxu0 %v2832
          %3267 = vmatpush2.bf16.msra.mxu0 %v2831
          %3268 = vmatprep.subr.bf16.mxu0 %v2828
          %3269 = vmatpush2.bf16.msra.mxu0 %v2827
          %3270 = vmatprep.mubr.bf16.mxu0 %v1558
          %3271 = vmatmul.mubr.bf16.gmra.mxu0 %v1557
          %v3272 = vpop.f32.mrf.mxu0
          %v3273 = vadd.f32 %v3232, %v3272
          %v3274 = vpop.f32.mrf.mxu0
          %v3275 = vadd.f32 %v3234, %v3274
          %v3276 = vpop.f32.mrf.mxu0
          %v3277 = vpop.f32.mrf.mxu0
          %3278 = vdwg.mxu0
          %3279 = vmatprep.subr.bf16.mxu0 %v2634
          %3280 = vmatpush1.bf16.msra.mxu0 %v2633
          %3281 = vmatprep.subr.bf16.mxu0 %v2630
          %3282 = vmatpush1.bf16.msra.mxu0 %v2629
          %3283 = vmatprep.subr.bf16.mxu0 %v2626
          %3284 = vmatpush1.bf16.msra.mxu0 %v2625
          %3285 = vmatprep.subr.bf16.mxu0 %v2622
          %3286 = vmatpush1.bf16.msra.mxu0 %v2621
          %3287 = vmatprep.subr.bf16.mxu0 %v2618
          %3288 = vmatpush1.bf16.msra.mxu0 %v2617
          %3289 = vmatprep.subr.bf16.mxu0 %v2614
          %3290 = vmatpush1.bf16.msra.mxu0 %v2613
          %3291 = vmatprep.subr.bf16.mxu0 %v2610
          %3292 = vmatpush1.bf16.msra.mxu0 %v2609
          %3293 = vmatprep.subr.bf16.mxu0 %v2606
          %3294 = vmatpush1.bf16.msra.mxu0 %v2605
          %3295 = vmatprep.subr.bf16.mxu0 %v2666
          %3296 = vmatpush2.bf16.msra.mxu0 %v2665
          %3297 = vmatprep.subr.bf16.mxu0 %v2662
          %3298 = vmatpush2.bf16.msra.mxu0 %v2661
          %3299 = vmatprep.subr.bf16.mxu0 %v2658
          %3300 = vmatpush2.bf16.msra.mxu0 %v2657
          %3301 = vmatprep.subr.bf16.mxu0 %v2654
          %3302 = vmatpush2.bf16.msra.mxu0 %v2653
          %3303 = vmatprep.subr.bf16.mxu0 %v2650
          %3304 = vmatpush2.bf16.msra.mxu0 %v2649
          %3305 = vmatprep.subr.bf16.mxu0 %v2646
          %3306 = vmatpush2.bf16.msra.mxu0 %v2645
          %3307 = vmatprep.subr.bf16.mxu0 %v2642
          %3308 = vmatpush2.bf16.msra.mxu0 %v2641
          %3309 = vmatprep.subr.bf16.mxu0 %v2638
          %3310 = vmatpush2.bf16.msra.mxu0 %v2637
          %3311 = vmatprep.mubr.bf16.mxu0 %v1552
          %3312 = vmatmul.mubr.bf16.gmra.mxu0 %v1551
          %v3313 = vpop.f32.mrf.mxu0
          %v3314 = vadd.f32 %v1830, %v3313
          %v3315 = vpop.f32.mrf.mxu0
          %v3316 = vadd.f32 %v1834, %v3315
          %v3317 = vpop.f32.mrf.mxu0
          %v3318 = vpop.f32.mrf.mxu0
          %3319 = vdwg.mxu0
          %3320 = vmatprep.subr.bf16.mxu0 %v2698
          %3321 = vmatpush1.bf16.msra.mxu0 %v2697
          %3322 = vmatprep.subr.bf16.mxu0 %v2694
          %3323 = vmatpush1.bf16.msra.mxu0 %v2693
          %3324 = vmatprep.subr.bf16.mxu0 %v2690
          %3325 = vmatpush1.bf16.msra.mxu0 %v2689
          %3326 = vmatprep.subr.bf16.mxu0 %v2686
          %3327 = vmatpush1.bf16.msra.mxu0 %v2685
          %3328 = vmatprep.subr.bf16.mxu0 %v2682
          %3329 = vmatpush1.bf16.msra.mxu0 %v2681
          %3330 = vmatprep.subr.bf16.mxu0 %v2678
          %3331 = vmatpush1.bf16.msra.mxu0 %v2677
          %3332 = vmatprep.subr.bf16.mxu0 %v2674
          %3333 = vmatpush1.bf16.msra.mxu0 %v2673
          %3334 = vmatprep.subr.bf16.mxu0 %v2670
          %3335 = vmatpush1.bf16.msra.mxu0 %v2669
          %3336 = vmatprep.subr.bf16.mxu0 %v2730
          %3337 = vmatpush2.bf16.msra.mxu0 %v2729
          %3338 = vmatprep.subr.bf16.mxu0 %v2726
          %3339 = vmatpush2.bf16.msra.mxu0 %v2725
          %3340 = vmatprep.subr.bf16.mxu0 %v2722
          %3341 = vmatpush2.bf16.msra.mxu0 %v2721
          %3342 = vmatprep.subr.bf16.mxu0 %v2718
          %3343 = vmatpush2.bf16.msra.mxu0 %v2717
          %3344 = vmatprep.subr.bf16.mxu0 %v2714
          %3345 = vmatpush2.bf16.msra.mxu0 %v2713
          %3346 = vmatprep.subr.bf16.mxu0 %v2710
          %3347 = vmatpush2.bf16.msra.mxu0 %v2709
          %3348 = vmatprep.subr.bf16.mxu0 %v2706
          %3349 = vmatpush2.bf16.msra.mxu0 %v2705
          %3350 = vmatprep.subr.bf16.mxu0 %v2702
          %3351 = vmatpush2.bf16.msra.mxu0 %v2701
          %3352 = vmatprep.mubr.bf16.mxu0 %v1554
          %3353 = vmatmul.mubr.bf16.gmra.mxu0 %v1553
          %v3354 = vpop.f32.mrf.mxu0
          %v3355 = vadd.f32 %v3314, %v3354
          %v3356 = vpop.f32.mrf.mxu0
          %v3357 = vadd.f32 %v3316, %v3356
          %v3358 = vpop.f32.mrf.mxu0
          %v3359 = vpop.f32.mrf.mxu0
          %3360 = vdwg.mxu0
          %3361 = vmatprep.subr.bf16.mxu0 %v2762
          %3362 = vmatpush1.bf16.msra.mxu0 %v2761
          %3363 = vmatprep.subr.bf16.mxu0 %v2758
          %3364 = vmatpush1.bf16.msra.mxu0 %v2757
          %3365 = vmatprep.subr.bf16.mxu0 %v2754
          %3366 = vmatpush1.bf16.msra.mxu0 %v2753
          %3367 = vmatprep.subr.bf16.mxu0 %v2750
          %3368 = vmatpush1.bf16.msra.mxu0 %v2749
          %3369 = vmatprep.subr.bf16.mxu0 %v2746
          %3370 = vmatpush1.bf16.msra.mxu0 %v2745
          %3371 = vmatprep.subr.bf16.mxu0 %v2742
          %3372 = vmatpush1.bf16.msra.mxu0 %v2741
          %3373 = vmatprep.subr.bf16.mxu0 %v2738
          %3374 = vmatpush1.bf16.msra.mxu0 %v2737
          %3375 = vmatprep.subr.bf16.mxu0 %v2734
          %3376 = vmatpush1.bf16.msra.mxu0 %v2733
          %3377 = vmatprep.subr.bf16.mxu0 %v2794
          %3378 = vmatpush2.bf16.msra.mxu0 %v2793
          %3379 = vmatprep.subr.bf16.mxu0 %v2790
          %3380 = vmatpush2.bf16.msra.mxu0 %v2789
          %3381 = vmatprep.subr.bf16.mxu0 %v2786
          %3382 = vmatpush2.bf16.msra.mxu0 %v2785
          %3383 = vmatprep.subr.bf16.mxu0 %v2782
          %3384 = vmatpush2.bf16.msra.mxu0 %v2781
          %3385 = vmatprep.subr.bf16.mxu0 %v2778
          %3386 = vmatpush2.bf16.msra.mxu0 %v2777
          %3387 = vmatprep.subr.bf16.mxu0 %v2774
          %3388 = vmatpush2.bf16.msra.mxu0 %v2773
          %3389 = vmatprep.subr.bf16.mxu0 %v2770
          %3390 = vmatpush2.bf16.msra.mxu0 %v2769
          %3391 = vmatprep.subr.bf16.mxu0 %v2766
          %3392 = vmatpush2.bf16.msra.mxu0 %v2765
          %3393 = vmatprep.mubr.bf16.mxu0 %v1556
          %3394 = vmatmul.mubr.bf16.gmra.mxu0 %v1555
          %v3395 = vpop.f32.mrf.mxu0
          %v3396 = vadd.f32 %v3355, %v3395
          %v3397 = vpop.f32.mrf.mxu0
          %v3398 = vadd.f32 %v3357, %v3397
          %v3399 = vpop.f32.mrf.mxu0
          %v3400 = vpop.f32.mrf.mxu0
          %3401 = vdwg.mxu0
          %3402 = vmatprep.subr.bf16.mxu0 %v2826
          %3403 = vmatpush1.bf16.msra.mxu0 %v2825
          %3404 = vmatprep.subr.bf16.mxu0 %v2822
          %3405 = vmatpush1.bf16.msra.mxu0 %v2821
          %3406 = vmatprep.subr.bf16.mxu0 %v2818
          %3407 = vmatpush1.bf16.msra.mxu0 %v2817
          %3408 = vmatprep.subr.bf16.mxu0 %v2814
          %3409 = vmatpush1.bf16.msra.mxu0 %v2813
          %3410 = vmatprep.subr.bf16.mxu0 %v2810
          %3411 = vmatpush1.bf16.msra.mxu0 %v2809
          %3412 = vmatprep.subr.bf16.mxu0 %v2806
          %3413 = vmatpush1.bf16.msra.mxu0 %v2805
          %3414 = vmatprep.subr.bf16.mxu0 %v2802
          %3415 = vmatpush1.bf16.msra.mxu0 %v2801
          %3416 = vmatprep.subr.bf16.mxu0 %v2798
          %3417 = vmatpush1.bf16.msra.mxu0 %v2797
          %3418 = vmatprep.subr.bf16.mxu0 %v2858
          %3419 = vmatpush2.bf16.msra.mxu0 %v2857
          %3420 = vmatprep.subr.bf16.mxu0 %v2854
          %3421 = vmatpush2.bf16.msra.mxu0 %v2853
          %3422 = vmatprep.subr.bf16.mxu0 %v2850
          %3423 = vmatpush2.bf16.msra.mxu0 %v2849
          %3424 = vmatprep.subr.bf16.mxu0 %v2846
          %3425 = vmatpush2.bf16.msra.mxu0 %v2845
          %3426 = vmatprep.subr.bf16.mxu0 %v2842
          %3427 = vmatpush2.bf16.msra.mxu0 %v2841
          %3428 = vmatprep.subr.bf16.mxu0 %v2838
          %3429 = vmatpush2.bf16.msra.mxu0 %v2837
          %3430 = vmatprep.subr.bf16.mxu0 %v2834
          %3431 = vmatpush2.bf16.msra.mxu0 %v2833
          %3432 = vmatprep.subr.bf16.mxu0 %v2830
          %3433 = vmatpush2.bf16.msra.mxu0 %v2829
          %3434 = vmatprep.mubr.bf16.mxu0 %v1558
          %3435 = vmatmul.mubr.bf16.gmra.mxu0 %v1557
          %v3436 = vpop.f32.mrf.mxu0
          %v3437 = vadd.f32 %v3396, %v3436
          %v3438 = vpop.f32.mrf.mxu0
          %v3439 = vadd.f32 %v3398, %v3438
          %v3440 = vpop.f32.mrf.mxu0
          %v3441 = vpop.f32.mrf.mxu0
          %3442 = vdwg.mxu0
          %v3443 = vmax.f32 %v3273, 0.0
          %v3444 = vmax.f32 %v3275, 0.0
          %v3445 = vmax.f32 %v3437, 0.0
          %v3446 = vmax.f32 %v3439, 0.0
          %v3447 = vlaneseq
          %v3448 = vshrl.u32 %v3447, 7
          %v3449 = vsub.s32 1, %v3448
          %v3450 = vrot.slane %v1815, %v3449
          %v3451 = vlaneseq
          %v3452 = vshrl.u32 %v3451, 7
          %v3453 = vsub.s32 1, %v3452
          %v3454 = vrot.slane %v1816, %v3453
          %v3455 = vlaneseq
          %v3456 = vshrl.u32 %v3455, 7
          %v3457 = vsub.s32 1, %v3456
          %v3458 = vrot.slane %v1817, %v3457
          %v3459 = vlaneseq
          %v3460 = vshrl.u32 %v3459, 7
          %v3461 = vsub.s32 1, %v3460
          %v3462 = vrot.slane %v1818, %v3461
          %v3463 = vmul.f32 %v3443, %v3450
          %v3464 = vmul.f32 %v3444, %v3454
          %v3465 = vmul.f32 %v3445, %v3458
          %v3466 = vmul.f32 %v3446, %v3462
          %v3467 = vlaneseq
          %v3468 = vshrl.u32 %v3467, 7
          %v3469 = vsub.s32 2, %v3468
          %v3470 = vrot.slane %v1815, %v3469
          %v3471 = vlaneseq
          %v3472 = vshrl.u32 %v3471, 7
          %v3473 = vsub.s32 2, %v3472
          %v3474 = vrot.slane %v1816, %v3473
          %v3475 = vlaneseq
          %v3476 = vshrl.u32 %v3475, 7
          %v3477 = vsub.s32 2, %v3476
          %v3478 = vrot.slane %v1817, %v3477
          %v3479 = vlaneseq
          %v3480 = vshrl.u32 %v3479, 7
          %v3481 = vsub.s32 2, %v3480
          %v3482 = vrot.slane %v1818, %v3481
          %v3483 = vadd.f32 %v3463, %v3470
          %v3484 = vadd.f32 %v3464, %v3474
          %v3485 = vadd.f32 %v3465, %v3478
          %v3486 = vadd.f32 %v3466, %v3482
          %v3487 = vpack.c.bf16 %v3483, %v3483
          %v3488 = vpack.c.bf16 %v3484, %v3484
          %v3489 = vpack.c.bf16 %v3485, %v3485
          %v3490 = vpack.c.bf16 %v3486, %v3486
          %v3491 = vld [vmem:[#allocation9] sm:$0xff]
          %v3492 = vld [vmem:[#allocation9 + $0x8] sm:$0xff]
          %v3493 = vld [vmem:[#allocation9 + $0x10] sm:$0xff]
          %v3494 = vld [vmem:[#allocation9 + $0x18] sm:$0xff]
          %v3495 = vld [vmem:[#allocation9 + $0x20] sm:$0xff]
          %v3496 = vld [vmem:[#allocation9 + $0x28] sm:$0xff]
          %v3497 = vld [vmem:[#allocation9 + $0x30] sm:$0xff]
          %v3498 = vld [vmem:[#allocation9 + $0x38] sm:$0xff]
          %v3499 = vld [vmem:[#allocation9 + $0x40] sm:$0xff]
          %v3500 = vld [vmem:[#allocation9 + $0x48] sm:$0xff]
          %v3501 = vld [vmem:[#allocation9 + $0x50] sm:$0xff]
          %v3502 = vld [vmem:[#allocation9 + $0x58] sm:$0xff]
          %v3503 = vld [vmem:[#allocation9 + $0x60] sm:$0xff]
          %v3504 = vld [vmem:[#allocation9 + $0x68] sm:$0xff]
          %v3505 = vld [vmem:[#allocation9 + $0x70] sm:$0xff]
          %v3506 = vld [vmem:[#allocation9 + $0x78] sm:$0xff]
          %v3507 = vld [vmem:[#allocation9 + $0x80] sm:$0xff]
          %v3508 = vld [vmem:[#allocation9 + $0x88] sm:$0xff]
          %v3509 = vld [vmem:[#allocation9 + $0x90] sm:$0xff]
          %v3510 = vld [vmem:[#allocation9 + $0x98] sm:$0xff]
          %v3511 = vld [vmem:[#allocation9 + $0xa0] sm:$0xff]
          %v3512 = vld [vmem:[#allocation9 + $0xa8] sm:$0xff]
          %v3513 = vld [vmem:[#allocation9 + $0xb0] sm:$0xff]
          %v3514 = vld [vmem:[#allocation9 + $0xb8] sm:$0xff]
          %v3515 = vld [vmem:[#allocation9 + $0xc0] sm:$0xff]
          %v3516 = vld [vmem:[#allocation9 + $0xc8] sm:$0xff]
          %v3517 = vld [vmem:[#allocation9 + $0xd0] sm:$0xff]
          %v3518 = vld [vmem:[#allocation9 + $0xd8] sm:$0xff]
          %v3519 = vld [vmem:[#allocation9 + $0xe0] sm:$0xff]
          %v3520 = vld [vmem:[#allocation9 + $0xe8] sm:$0xff]
          %v3521 = vld [vmem:[#allocation9 + $0xf0] sm:$0xff]
          %v3522 = vld [vmem:[#allocation9 + $0xf8] sm:$0xff]
          %v3523 = vld [vmem:[#allocation9 + $0x100] sm:$0xff]
          %v3524 = vld [vmem:[#allocation9 + $0x108] sm:$0xff]
          %v3525 = vld [vmem:[#allocation9 + $0x110] sm:$0xff]
          %v3526 = vld [vmem:[#allocation9 + $0x118] sm:$0xff]
          %v3527 = vld [vmem:[#allocation9 + $0x120] sm:$0xff]
          %v3528 = vld [vmem:[#allocation9 + $0x128] sm:$0xff]
          %v3529 = vld [vmem:[#allocation9 + $0x130] sm:$0xff]
          %v3530 = vld [vmem:[#allocation9 + $0x138] sm:$0xff]
          %v3531 = vld [vmem:[#allocation9 + $0x140] sm:$0xff]
          %v3532 = vld [vmem:[#allocation9 + $0x148] sm:$0xff]
          %v3533 = vld [vmem:[#allocation9 + $0x150] sm:$0xff]
          %v3534 = vld [vmem:[#allocation9 + $0x158] sm:$0xff]
          %v3535 = vld [vmem:[#allocation9 + $0x160] sm:$0xff]
          %v3536 = vld [vmem:[#allocation9 + $0x168] sm:$0xff]
          %v3537 = vld [vmem:[#allocation9 + $0x170] sm:$0xff]
          %v3538 = vld [vmem:[#allocation9 + $0x178] sm:$0xff]
          %v3539 = vld [vmem:[#allocation9 + $0x180] sm:$0xff]
          %v3540 = vld [vmem:[#allocation9 + $0x188] sm:$0xff]
          %v3541 = vld [vmem:[#allocation9 + $0x190] sm:$0xff]
          %v3542 = vld [vmem:[#allocation9 + $0x198] sm:$0xff]
          %v3543 = vld [vmem:[#allocation9 + $0x1a0] sm:$0xff]
          %v3544 = vld [vmem:[#allocation9 + $0x1a8] sm:$0xff]
          %v3545 = vld [vmem:[#allocation9 + $0x1b0] sm:$0xff]
          %v3546 = vld [vmem:[#allocation9 + $0x1b8] sm:$0xff]
          %v3547 = vld [vmem:[#allocation9 + $0x1c0] sm:$0xff]
          %v3548 = vld [vmem:[#allocation9 + $0x1c8] sm:$0xff]
          %v3549 = vld [vmem:[#allocation9 + $0x1d0] sm:$0xff]
          %v3550 = vld [vmem:[#allocation9 + $0x1d8] sm:$0xff]
          %v3551 = vld [vmem:[#allocation9 + $0x1e0] sm:$0xff]
          %v3552 = vld [vmem:[#allocation9 + $0x1e8] sm:$0xff]
          %v3553 = vld [vmem:[#allocation9 + $0x1f0] sm:$0xff]
          %v3554 = vld [vmem:[#allocation9 + $0x1f8] sm:$0xff]
          %v3555 = vld [vmem:[#allocation14 + $0x80] sm:$0xff]
          %v3556 = vld [vmem:[#allocation14 + $0x88] sm:$0xff]
          %v3557 = vlaneseq
          %v3558 = vshrl.u32 %v3557, 7
          %v3559 = vsub.s32 0, %v3558
          %v3560 = vrot.slane %v3555, %v3559
          %v3561 = vlaneseq
          %v3562 = vshrl.u32 %v3561, 7
          %v3563 = vsub.s32 0, %v3562
          %v3564 = vrot.slane %v3556, %v3563
          %v3629 = vunpack.c.l.b16 %v3491
          %v3630 = vunpack.c.h.b16 %v3491
          %v3631 = vunpack.c.l.b16 %v3492
          %v3632 = vunpack.c.h.b16 %v3492
          %v3633 = vunpack.c.l.b16 %v3493
          %v3634 = vunpack.c.h.b16 %v3493
          %v3635 = vunpack.c.l.b16 %v3494
          %v3636 = vunpack.c.h.b16 %v3494
          %v3637 = vunpack.c.l.b16 %v3495
          %v3638 = vunpack.c.h.b16 %v3495
          %v3639 = vunpack.c.l.b16 %v3496
          %v3640 = vunpack.c.h.b16 %v3496
          %v3641 = vunpack.c.l.b16 %v3497
          %v3642 = vunpack.c.h.b16 %v3497
          %v3643 = vunpack.c.l.b16 %v3498
          %v3644 = vunpack.c.h.b16 %v3498
          %v3645 = vunpack.c.l.b16 %v3499
          %v3646 = vunpack.c.h.b16 %v3499
          %v3647 = vunpack.c.l.b16 %v3500
          %v3648 = vunpack.c.h.b16 %v3500
          %v3649 = vunpack.c.l.b16 %v3501
          %v3650 = vunpack.c.h.b16 %v3501
          %v3651 = vunpack.c.l.b16 %v3502
          %v3652 = vunpack.c.h.b16 %v3502
          %v3653 = vunpack.c.l.b16 %v3503
          %v3654 = vunpack.c.h.b16 %v3503
          %v3655 = vunpack.c.l.b16 %v3504
          %v3656 = vunpack.c.h.b16 %v3504
          %v3657 = vunpack.c.l.b16 %v3505
          %v3658 = vunpack.c.h.b16 %v3505
          %v3659 = vunpack.c.l.b16 %v3506
          %v3660 = vunpack.c.h.b16 %v3506
          %v3661 = vunpack.c.l.b16 %v3507
          %v3662 = vunpack.c.h.b16 %v3507
          %v3663 = vunpack.c.l.b16 %v3508
          %v3664 = vunpack.c.h.b16 %v3508
          %v3665 = vunpack.c.l.b16 %v3509
          %v3666 = vunpack.c.h.b16 %v3509
          %v3667 = vunpack.c.l.b16 %v3510
          %v3668 = vunpack.c.h.b16 %v3510
          %v3669 = vunpack.c.l.b16 %v3511
          %v3670 = vunpack.c.h.b16 %v3511
          %v3671 = vunpack.c.l.b16 %v3512
          %v3672 = vunpack.c.h.b16 %v3512
          %v3673 = vunpack.c.l.b16 %v3513
          %v3674 = vunpack.c.h.b16 %v3513
          %v3675 = vunpack.c.l.b16 %v3514
          %v3676 = vunpack.c.h.b16 %v3514
          %v3677 = vunpack.c.l.b16 %v3515
          %v3678 = vunpack.c.h.b16 %v3515
          %v3679 = vunpack.c.l.b16 %v3516
          %v3680 = vunpack.c.h.b16 %v3516
          %v3681 = vunpack.c.l.b16 %v3517
          %v3682 = vunpack.c.h.b16 %v3517
          %v3683 = vunpack.c.l.b16 %v3518
          %v3684 = vunpack.c.h.b16 %v3518
          %v3685 = vunpack.c.l.b16 %v3519
          %v3686 = vunpack.c.h.b16 %v3519
          %v3687 = vunpack.c.l.b16 %v3520
          %v3688 = vunpack.c.h.b16 %v3520
          %v3689 = vunpack.c.l.b16 %v3521
          %v3690 = vunpack.c.h.b16 %v3521
          %v3691 = vunpack.c.l.b16 %v3522
          %v3692 = vunpack.c.h.b16 %v3522
          %v3693 = vunpack.c.l.b16 %v3523
          %v3694 = vunpack.c.h.b16 %v3523
          %v3695 = vunpack.c.l.b16 %v3524
          %v3696 = vunpack.c.h.b16 %v3524
          %v3697 = vunpack.c.l.b16 %v3525
          %v3698 = vunpack.c.h.b16 %v3525
          %v3699 = vunpack.c.l.b16 %v3526
          %v3700 = vunpack.c.h.b16 %v3526
          %v3701 = vunpack.c.l.b16 %v3527
          %v3702 = vunpack.c.h.b16 %v3527
          %v3703 = vunpack.c.l.b16 %v3528
          %v3704 = vunpack.c.h.b16 %v3528
          %v3705 = vunpack.c.l.b16 %v3529
          %v3706 = vunpack.c.h.b16 %v3529
          %v3707 = vunpack.c.l.b16 %v3530
          %v3708 = vunpack.c.h.b16 %v3530
          %v3709 = vunpack.c.l.b16 %v3531
          %v3710 = vunpack.c.h.b16 %v3531
          %v3711 = vunpack.c.l.b16 %v3532
          %v3712 = vunpack.c.h.b16 %v3532
          %v3713 = vunpack.c.l.b16 %v3533
          %v3714 = vunpack.c.h.b16 %v3533
          %v3715 = vunpack.c.l.b16 %v3534
          %v3716 = vunpack.c.h.b16 %v3534
          %v3717 = vunpack.c.l.b16 %v3535
          %v3718 = vunpack.c.h.b16 %v3535
          %v3719 = vunpack.c.l.b16 %v3536
          %v3720 = vunpack.c.h.b16 %v3536
          %v3721 = vunpack.c.l.b16 %v3537
          %v3722 = vunpack.c.h.b16 %v3537
          %v3723 = vunpack.c.l.b16 %v3538
          %v3724 = vunpack.c.h.b16 %v3538
          %v3725 = vunpack.c.l.b16 %v3539
          %v3726 = vunpack.c.h.b16 %v3539
          %v3727 = vunpack.c.l.b16 %v3540
          %v3728 = vunpack.c.h.b16 %v3540
          %v3729 = vunpack.c.l.b16 %v3541
          %v3730 = vunpack.c.h.b16 %v3541
          %v3731 = vunpack.c.l.b16 %v3542
          %v3732 = vunpack.c.h.b16 %v3542
          %v3733 = vunpack.c.l.b16 %v3543
          %v3734 = vunpack.c.h.b16 %v3543
          %v3735 = vunpack.c.l.b16 %v3544
          %v3736 = vunpack.c.h.b16 %v3544
          %v3737 = vunpack.c.l.b16 %v3545
          %v3738 = vunpack.c.h.b16 %v3545
          %v3739 = vunpack.c.l.b16 %v3546
          %v3740 = vunpack.c.h.b16 %v3546
          %v3741 = vunpack.c.l.b16 %v3547
          %v3742 = vunpack.c.h.b16 %v3547
          %v3743 = vunpack.c.l.b16 %v3548
          %v3744 = vunpack.c.h.b16 %v3548
          %v3745 = vunpack.c.l.b16 %v3549
          %v3746 = vunpack.c.h.b16 %v3549
          %v3747 = vunpack.c.l.b16 %v3550
          %v3748 = vunpack.c.h.b16 %v3550
          %v3749 = vunpack.c.l.b16 %v3551
          %v3750 = vunpack.c.h.b16 %v3551
          %v3751 = vunpack.c.l.b16 %v3552
          %v3752 = vunpack.c.h.b16 %v3552
          %v3753 = vunpack.c.l.b16 %v3553
          %v3754 = vunpack.c.h.b16 %v3553
          %v3755 = vunpack.c.l.b16 %v3554
          %v3756 = vunpack.c.h.b16 %v3554
          %v3757 = vpack.c.b16 %v3631, %v3629
          %v3758 = vpack.c.b16 %v3632, %v3630
          %v3759 = vpack.c.b16 %v3635, %v3633
          %v3760 = vpack.c.b16 %v3636, %v3634
          %v3761 = vpack.c.b16 %v3639, %v3637
          %v3762 = vpack.c.b16 %v3640, %v3638
          %v3763 = vpack.c.b16 %v3643, %v3641
          %v3764 = vpack.c.b16 %v3644, %v3642
          %v3765 = vpack.c.b16 %v3647, %v3645
          %v3766 = vpack.c.b16 %v3648, %v3646
          %v3767 = vpack.c.b16 %v3651, %v3649
          %v3768 = vpack.c.b16 %v3652, %v3650
          %v3769 = vpack.c.b16 %v3655, %v3653
          %v3770 = vpack.c.b16 %v3656, %v3654
          %v3771 = vpack.c.b16 %v3659, %v3657
          %v3772 = vpack.c.b16 %v3660, %v3658
          %v3773 = vpack.c.b16 %v3663, %v3661
          %v3774 = vpack.c.b16 %v3664, %v3662
          %v3775 = vpack.c.b16 %v3667, %v3665
          %v3776 = vpack.c.b16 %v3668, %v3666
          %v3777 = vpack.c.b16 %v3671, %v3669
          %v3778 = vpack.c.b16 %v3672, %v3670
          %v3779 = vpack.c.b16 %v3675, %v3673
          %v3780 = vpack.c.b16 %v3676, %v3674
          %v3781 = vpack.c.b16 %v3679, %v3677
          %v3782 = vpack.c.b16 %v3680, %v3678
          %v3783 = vpack.c.b16 %v3683, %v3681
          %v3784 = vpack.c.b16 %v3684, %v3682
          %v3785 = vpack.c.b16 %v3687, %v3685
          %v3786 = vpack.c.b16 %v3688, %v3686
          %v3787 = vpack.c.b16 %v3691, %v3689
          %v3788 = vpack.c.b16 %v3692, %v3690
          %v3789 = vpack.c.b16 %v3695, %v3693
          %v3790 = vpack.c.b16 %v3696, %v3694
          %v3791 = vpack.c.b16 %v3699, %v3697
          %v3792 = vpack.c.b16 %v3700, %v3698
          %v3793 = vpack.c.b16 %v3703, %v3701
          %v3794 = vpack.c.b16 %v3704, %v3702
          %v3795 = vpack.c.b16 %v3707, %v3705
          %v3796 = vpack.c.b16 %v3708, %v3706
          %v3797 = vpack.c.b16 %v3711, %v3709
          %v3798 = vpack.c.b16 %v3712, %v3710
          %v3799 = vpack.c.b16 %v3715, %v3713
          %v3800 = vpack.c.b16 %v3716, %v3714
          %v3801 = vpack.c.b16 %v3719, %v3717
          %v3802 = vpack.c.b16 %v3720, %v3718
          %v3803 = vpack.c.b16 %v3723, %v3721
          %v3804 = vpack.c.b16 %v3724, %v3722
          %v3805 = vpack.c.b16 %v3727, %v3725
          %v3806 = vpack.c.b16 %v3728, %v3726
          %v3807 = vpack.c.b16 %v3731, %v3729
          %v3808 = vpack.c.b16 %v3732, %v3730
          %v3809 = vpack.c.b16 %v3735, %v3733
          %v3810 = vpack.c.b16 %v3736, %v3734
          %v3811 = vpack.c.b16 %v3739, %v3737
          %v3812 = vpack.c.b16 %v3740, %v3738
          %v3813 = vpack.c.b16 %v3743, %v3741
          %v3814 = vpack.c.b16 %v3744, %v3742
          %v3815 = vpack.c.b16 %v3747, %v3745
          %v3816 = vpack.c.b16 %v3748, %v3746
          %v3817 = vpack.c.b16 %v3751, %v3749
          %v3818 = vpack.c.b16 %v3752, %v3750
          %v3819 = vpack.c.b16 %v3755, %v3753
          %v3820 = vpack.c.b16 %v3756, %v3754
          %3885 = vmatprep.subr.bf16.mxu0 %v3772
          %3886 = vmatpush1.bf16.msra.mxu0 %v3771
          %3887 = vmatprep.subr.bf16.mxu0 %v3770
          %3888 = vmatpush1.bf16.msra.mxu0 %v3769
          %3889 = vmatprep.subr.bf16.mxu0 %v3768
          %3890 = vmatpush1.bf16.msra.mxu0 %v3767
          %3891 = vmatprep.subr.bf16.mxu0 %v3766
          %3892 = vmatpush1.bf16.msra.mxu0 %v3765
          %3893 = vmatprep.subr.bf16.mxu0 %v3764
          %3894 = vmatpush1.bf16.msra.mxu0 %v3763
          %3895 = vmatprep.subr.bf16.mxu0 %v3762
          %3896 = vmatpush1.bf16.msra.mxu0 %v3761
          %3897 = vmatprep.subr.bf16.mxu0 %v3760
          %3898 = vmatpush1.bf16.msra.mxu0 %v3759
          %3899 = vmatprep.subr.bf16.mxu0 %v3758
          %3900 = vmatpush1.bf16.msra.mxu0 %v3757
          %3901 = vmatprep.subr.bf16.mxu0 %v3788
          %3902 = vmatpush2.bf16.msra.mxu0 %v3787
          %3903 = vmatprep.subr.bf16.mxu0 %v3786
          %3904 = vmatpush2.bf16.msra.mxu0 %v3785
          %3905 = vmatprep.subr.bf16.mxu0 %v3784
          %3906 = vmatpush2.bf16.msra.mxu0 %v3783
          %3907 = vmatprep.subr.bf16.mxu0 %v3782
          %3908 = vmatpush2.bf16.msra.mxu0 %v3781
          %3909 = vmatprep.subr.bf16.mxu0 %v3780
          %3910 = vmatpush2.bf16.msra.mxu0 %v3779
          %3911 = vmatprep.subr.bf16.mxu0 %v3778
          %3912 = vmatpush2.bf16.msra.mxu0 %v3777
          %3913 = vmatprep.subr.bf16.mxu0 %v3776
          %3914 = vmatpush2.bf16.msra.mxu0 %v3775
          %3915 = vmatprep.subr.bf16.mxu0 %v3774
          %3916 = vmatpush2.bf16.msra.mxu0 %v3773
          %3917 = vmatprep.mubr.bf16.mxu0 %v3488
          %3918 = vmatmul.mubr.bf16.gmra.mxu0 %v3487
          %v3919 = vpop.f32.mrf.mxu0
          %v3920 = vadd.f32 %v3560, %v3919
          %v3921 = vpop.f32.mrf.mxu0
          %v3922 = vadd.f32 %v3564, %v3921
          %v3923 = vpop.f32.mrf.mxu0
          %v3924 = vpop.f32.mrf.mxu0
          %3925 = vdwg.mxu0
          %3926 = vmatprep.subr.bf16.mxu0 %v3804
          %3927 = vmatpush1.bf16.msra.mxu0 %v3803
          %3928 = vmatprep.subr.bf16.mxu0 %v3802
          %3929 = vmatpush1.bf16.msra.mxu0 %v3801
          %3930 = vmatprep.subr.bf16.mxu0 %v3800
          %3931 = vmatpush1.bf16.msra.mxu0 %v3799
          %3932 = vmatprep.subr.bf16.mxu0 %v3798
          %3933 = vmatpush1.bf16.msra.mxu0 %v3797
          %3934 = vmatprep.subr.bf16.mxu0 %v3796
          %3935 = vmatpush1.bf16.msra.mxu0 %v3795
          %3936 = vmatprep.subr.bf16.mxu0 %v3794
          %3937 = vmatpush1.bf16.msra.mxu0 %v3793
          %3938 = vmatprep.subr.bf16.mxu0 %v3792
          %3939 = vmatpush1.bf16.msra.mxu0 %v3791
          %3940 = vmatprep.subr.bf16.mxu0 %v3790
          %3941 = vmatpush1.bf16.msra.mxu0 %v3789
          %3942 = vmatprep.subr.bf16.mxu0 %v3820
          %3943 = vmatpush2.bf16.msra.mxu0 %v3819
          %3944 = vmatprep.subr.bf16.mxu0 %v3818
          %3945 = vmatpush2.bf16.msra.mxu0 %v3817
          %3946 = vmatprep.subr.bf16.mxu0 %v3816
          %3947 = vmatpush2.bf16.msra.mxu0 %v3815
          %3948 = vmatprep.subr.bf16.mxu0 %v3814
          %3949 = vmatpush2.bf16.msra.mxu0 %v3813
          %3950 = vmatprep.subr.bf16.mxu0 %v3812
          %3951 = vmatpush2.bf16.msra.mxu0 %v3811
          %3952 = vmatprep.subr.bf16.mxu0 %v3810
          %3953 = vmatpush2.bf16.msra.mxu0 %v3809
          %3954 = vmatprep.subr.bf16.mxu0 %v3808
          %3955 = vmatpush2.bf16.msra.mxu0 %v3807
          %3956 = vmatprep.subr.bf16.mxu0 %v3806
          %3957 = vmatpush2.bf16.msra.mxu0 %v3805
          %3958 = vmatprep.mubr.bf16.mxu0 %v3490
          %3959 = vmatmul.mubr.bf16.gmra.mxu0 %v3489
          %v3960 = vpop.f32.mrf.mxu0
          %v3961 = vadd.f32 %v3920, %v3960
          %v3962 = vpop.f32.mrf.mxu0
          %v3963 = vadd.f32 %v3922, %v3962
          %v3964 = vpop.f32.mrf.mxu0
          %v3965 = vpop.f32.mrf.mxu0
          %3966 = vdwg.mxu0
          %v3967 = vmax.f32 %v3961, 0.0
          %v3968 = vmax.f32 %v3963, 0.0
          %v3969 = vlaneseq
          %v3970 = vshrl.u32 %v3969, 7
          %v3971 = vsub.s32 1, %v3970
          %v3972 = vrot.slane %v3555, %v3971
          %v3973 = vlaneseq
          %v3974 = vshrl.u32 %v3973, 7
          %v3975 = vsub.s32 1, %v3974
          %v3976 = vrot.slane %v3556, %v3975
          %v3977 = vmul.f32 %v3967, %v3972
          %v3978 = vmul.f32 %v3968, %v3976
          %v3979 = vlaneseq
          %v3980 = vshrl.u32 %v3979, 7
          %v3981 = vsub.s32 2, %v3980
          %v3982 = vrot.slane %v3555, %v3981
          %v3983 = vlaneseq
          %v3984 = vshrl.u32 %v3983, 7
          %v3985 = vsub.s32 2, %v3984
          %v3986 = vrot.slane %v3556, %v3985
          %v3987 = vadd.f32 %v3977, %v3982
          %v3988 = vadd.f32 %v3978, %v3986
          %v3989 = vpack.c.bf16 %v3987, %v3987
          %v3990 = vpack.c.bf16 %v3988, %v3988
          %v3991 = vld [vmem:[#allocation11] sm:$0xf]
          %v3992 = vld [vmem:[#allocation11 + $0x4] sm:$0xf]
          %v3993 = vld [vmem:[#allocation11 + $0x8] sm:$0xf]
          %v3994 = vld [vmem:[#allocation11 + $0xc] sm:$0xf]
          %v3995 = vld [vmem:[#allocation11 + $0x10] sm:$0xf]
          %v3996 = vld [vmem:[#allocation11 + $0x14] sm:$0xf]
          %v3997 = vld [vmem:[#allocation11 + $0x18] sm:$0xf]
          %v3998 = vld [vmem:[#allocation11 + $0x1c] sm:$0xf]
          %v3999 = vld [vmem:[#allocation11 + $0x20] sm:$0xf]
          %v4000 = vld [vmem:[#allocation11 + $0x24] sm:$0xf]
          %v4001 = vld [vmem:[#allocation11 + $0x28] sm:$0xf]
          %v4002 = vld [vmem:[#allocation11 + $0x2c] sm:$0xf]
          %v4003 = vld [vmem:[#allocation11 + $0x30] sm:$0xf]
          %v4004 = vld [vmem:[#allocation11 + $0x34] sm:$0xf]
          %v4005 = vld [vmem:[#allocation11 + $0x38] sm:$0xf]
          %v4006 = vld [vmem:[#allocation11 + $0x3c] sm:$0xf]
          %v4007 = vld [vmem:[#allocation11 + $0x40] sm:$0xf]
          %v4008 = vld [vmem:[#allocation11 + $0x44] sm:$0xf]
          %v4009 = vld [vmem:[#allocation11 + $0x48] sm:$0xf]
          %v4010 = vld [vmem:[#allocation11 + $0x4c] sm:$0xf]
          %v4011 = vld [vmem:[#allocation11 + $0x50] sm:$0xf]
          %v4012 = vld [vmem:[#allocation11 + $0x54] sm:$0xf]
          %v4013 = vld [vmem:[#allocation11 + $0x58] sm:$0xf]
          %v4014 = vld [vmem:[#allocation11 + $0x5c] sm:$0xf]
          %v4015 = vld [vmem:[#allocation11 + $0x60] sm:$0xf]
          %v4016 = vld [vmem:[#allocation11 + $0x64] sm:$0xf]
          %v4017 = vld [vmem:[#allocation11 + $0x68] sm:$0xf]
          %v4018 = vld [vmem:[#allocation11 + $0x6c] sm:$0xf]
          %v4019 = vld [vmem:[#allocation11 + $0x70] sm:$0xf]
          %v4020 = vld [vmem:[#allocation11 + $0x74] sm:$0xf]
          %v4021 = vld [vmem:[#allocation11 + $0x78] sm:$0xf]
          %v4022 = vld [vmem:[#allocation11 + $0x7c] sm:$0xf]
          %v4023 = vld [vmem:[#allocation14 + $0xc0] sm:$0xff]
          %v4024 = vlaneseq
          %v4025 = vshrl.u32 %v4024, 7
          %v4026 = vsub.s32 0, %v4025
          %v4027 = vrot.slane %v4023, %v4026
          %v4060 = vunpack.c.l.b16 %v3991
          %v4061 = vunpack.c.l.b16 %v3992
          %v4062 = vunpack.c.l.b16 %v3993
          %v4063 = vunpack.c.l.b16 %v3994
          %v4064 = vunpack.c.l.b16 %v3995
          %v4065 = vunpack.c.l.b16 %v3996
          %v4066 = vunpack.c.l.b16 %v3997
          %v4067 = vunpack.c.l.b16 %v3998
          %v4068 = vunpack.c.l.b16 %v3999
          %v4069 = vunpack.c.l.b16 %v4000
          %v4070 = vunpack.c.l.b16 %v4001
          %v4071 = vunpack.c.l.b16 %v4002
          %v4072 = vunpack.c.l.b16 %v4003
          %v4073 = vunpack.c.l.b16 %v4004
          %v4074 = vunpack.c.l.b16 %v4005
          %v4075 = vunpack.c.l.b16 %v4006
          %v4076 = vunpack.c.l.b16 %v4007
          %v4077 = vunpack.c.l.b16 %v4008
          %v4078 = vunpack.c.l.b16 %v4009
          %v4079 = vunpack.c.l.b16 %v4010
          %v4080 = vunpack.c.l.b16 %v4011
          %v4081 = vunpack.c.l.b16 %v4012
          %v4082 = vunpack.c.l.b16 %v4013
          %v4083 = vunpack.c.l.b16 %v4014
          %v4084 = vunpack.c.l.b16 %v4015
          %v4085 = vunpack.c.l.b16 %v4016
          %v4086 = vunpack.c.l.b16 %v4017
          %v4087 = vunpack.c.l.b16 %v4018
          %v4088 = vunpack.c.l.b16 %v4019
          %v4089 = vunpack.c.l.b16 %v4020
          %v4090 = vunpack.c.l.b16 %v4021
          %v4091 = vunpack.c.l.b16 %v4022
          %v4092 = vpack.c.b16 %v4061, %v4060
          %v4093 = vpack.c.b16 %v4063, %v4062
          %v4094 = vpack.c.b16 %v4065, %v4064
          %v4095 = vpack.c.b16 %v4067, %v4066
          %v4096 = vpack.c.b16 %v4069, %v4068
          %v4097 = vpack.c.b16 %v4071, %v4070
          %v4098 = vpack.c.b16 %v4073, %v4072
          %v4099 = vpack.c.b16 %v4075, %v4074
          %v4100 = vpack.c.b16 %v4077, %v4076
          %v4101 = vpack.c.b16 %v4079, %v4078
          %v4102 = vpack.c.b16 %v4081, %v4080
          %v4103 = vpack.c.b16 %v4083, %v4082
          %v4104 = vpack.c.b16 %v4085, %v4084
          %v4105 = vpack.c.b16 %v4087, %v4086
          %v4106 = vpack.c.b16 %v4089, %v4088
          %v4107 = vpack.c.b16 %v4091, %v4090
          %4124 = vmatprep.subr.bf16.mxu0 0
          %4125 = vmatpush1.bf16.msra.mxu0 %v4099
          %4126 = vmatprep.subr.bf16.mxu0 0
          %4127 = vmatpush1.bf16.msra.mxu0 %v4098
          %4128 = vmatprep.subr.bf16.mxu0 0
          %4129 = vmatpush1.bf16.msra.mxu0 %v4097
          %4130 = vmatprep.subr.bf16.mxu0 0
          %4131 = vmatpush1.bf16.msra.mxu0 %v4096
          %4132 = vmatprep.subr.bf16.mxu0 0
          %4133 = vmatpush1.bf16.msra.mxu0 %v4095
          %4134 = vmatprep.subr.bf16.mxu0 0
          %4135 = vmatpush1.bf16.msra.mxu0 %v4094
          %4136 = vmatprep.subr.bf16.mxu0 0
          %4137 = vmatpush1.bf16.msra.mxu0 %v4093
          %4138 = vmatprep.subr.bf16.mxu0 0
          %4139 = vmatpush1.bf16.msra.mxu0 %v4092
          %4140 = vmatprep.subr.bf16.mxu0 0
          %4141 = vmatpush2.bf16.msra.mxu0 %v4107
          %4142 = vmatprep.subr.bf16.mxu0 0
          %4143 = vmatpush2.bf16.msra.mxu0 %v4106
          %4144 = vmatprep.subr.bf16.mxu0 0
          %4145 = vmatpush2.bf16.msra.mxu0 %v4105
          %4146 = vmatprep.subr.bf16.mxu0 0
          %4147 = vmatpush2.bf16.msra.mxu0 %v4104
          %4148 = vmatprep.subr.bf16.mxu0 0
          %4149 = vmatpush2.bf16.msra.mxu0 %v4103
          %4150 = vmatprep.subr.bf16.mxu0 0
          %4151 = vmatpush2.bf16.msra.mxu0 %v4102
          %4152 = vmatprep.subr.bf16.mxu0 0
          %4153 = vmatpush2.bf16.msra.mxu0 %v4101
          %4154 = vmatprep.subr.bf16.mxu0 0
          %4155 = vmatpush2.bf16.msra.mxu0 %v4100
          %4156 = vmatprep.mubr.bf16.mxu0 %v3990
          %4157 = vmatmul.mubr.bf16.gmra.mxu0 %v3989
          %v4158 = vpop.f32.mrf.mxu0
          %v4159 = vadd.f32 %v4027, %v4158
          %v4160 = vpop.f32.mrf.mxu0
          %v4161 = vpop.f32.mrf.mxu0
          %v4162 = vpop.f32.mrf.mxu0
          %4163 = vdwg.mxu0
          %v4164 = vmax.f32 %v4159, 0.0
          %v4165 = vlaneseq
          %v4166 = vshrl.u32 %v4165, 7
          %v4167 = vsub.s32 1, %v4166
          %v4168 = vrot.slane %v4023, %v4167
          %v4169 = vmul.f32 %v4164, %v4168
          %v4170 = vlaneseq
          %v4171 = vshrl.u32 %v4170, 7
          %v4172 = vsub.s32 2, %v4171
          %v4173 = vrot.slane %v4023, %v4172
          %v4174 = vadd.f32 %v4169, %v4173
          %v4175 = vld [vmem:[#allocation14 + $0x100] sm:$0xff]
          %v4176 = vpack.c.bf16 %v4174, %v4174
          %v4177 = vld [vmem:[#allocation12] sm:$0xf]
          %v4178 = vld [vmem:[#allocation12 + $0x4] sm:$0xf]
          %v4179 = vld [vmem:[#allocation12 + $0x8] sm:$0xf]
          %v4180 = vld [vmem:[#allocation12 + $0xc] sm:$0xf]
          %v4181 = vld [vmem:[#allocation12 + $0x10] sm:$0xf]
          %v4182 = vld [vmem:[#allocation12 + $0x14] sm:$0xf]
          %v4183 = vld [vmem:[#allocation12 + $0x18] sm:$0xf]
          %v4184 = vld [vmem:[#allocation12 + $0x1c] sm:$0xf]
          %v4185 = vld [vmem:[#allocation12 + $0x20] sm:$0xf]
          %v4186 = vld [vmem:[#allocation12 + $0x24] sm:$0xf]
          %v4187 = vld [vmem:[#allocation12 + $0x28] sm:$0xf]
          %v4188 = vld [vmem:[#allocation12 + $0x2c] sm:$0xf]
          %v4189 = vld [vmem:[#allocation12 + $0x30] sm:$0xf]
          %v4190 = vld [vmem:[#allocation12 + $0x34] sm:$0xf]
          %v4191 = vld [vmem:[#allocation12 + $0x38] sm:$0xf]
          %v4192 = vld [vmem:[#allocation12 + $0x3c] sm:$0xf]
          %v4193 = vlaneseq
          %v4194 = vshrl.u32 %v4193, 7
          %v4195 = vsub.s32 0, %v4194
          %v4196 = vrot.slane %v4175, %v4195
          %v4213 = vunpack.c.l.b16 %v4177
          %v4214 = vunpack.c.l.b16 %v4178
          %v4215 = vunpack.c.l.b16 %v4179
          %v4216 = vunpack.c.l.b16 %v4180
          %v4217 = vunpack.c.l.b16 %v4181
          %v4218 = vunpack.c.l.b16 %v4182
          %v4219 = vunpack.c.l.b16 %v4183
          %v4220 = vunpack.c.l.b16 %v4184
          %v4221 = vunpack.c.l.b16 %v4185
          %v4222 = vunpack.c.l.b16 %v4186
          %v4223 = vunpack.c.l.b16 %v4187
          %v4224 = vunpack.c.l.b16 %v4188
          %v4225 = vunpack.c.l.b16 %v4189
          %v4226 = vunpack.c.l.b16 %v4190
          %v4227 = vunpack.c.l.b16 %v4191
          %v4228 = vunpack.c.l.b16 %v4192
          %v4229 = vpack.c.b16 %v4214, %v4213
          %v4230 = vpack.c.b16 %v4216, %v4215
          %v4231 = vpack.c.b16 %v4218, %v4217
          %v4232 = vpack.c.b16 %v4220, %v4219
          %v4233 = vpack.c.b16 %v4222, %v4221
          %v4234 = vpack.c.b16 %v4224, %v4223
          %v4235 = vpack.c.b16 %v4226, %v4225
          %v4236 = vpack.c.b16 %v4228, %v4227
          %4245 = vmatprep.subr.bf16.mxu0 0
          %4246 = vmatpush1.bf16.msra.mxu0 %v4236
          %4247 = vmatprep.subr.bf16.mxu0 0
          %4248 = vmatpush1.bf16.msra.mxu0 %v4235
          %4249 = vmatprep.subr.bf16.mxu0 0
          %4250 = vmatpush1.bf16.msra.mxu0 %v4234
          %4251 = vmatprep.subr.bf16.mxu0 0
          %4252 = vmatpush1.bf16.msra.mxu0 %v4233
          %4253 = vmatprep.subr.bf16.mxu0 0
          %4254 = vmatpush1.bf16.msra.mxu0 %v4232
          %4255 = vmatprep.subr.bf16.mxu0 0
          %4256 = vmatpush1.bf16.msra.mxu0 %v4231
          %4257 = vmatprep.subr.bf16.mxu0 0
          %4258 = vmatpush1.bf16.msra.mxu0 %v4230
          %4259 = vmatprep.subr.bf16.mxu0 0
          %4260 = vmatpush1.bf16.msra.mxu0 %v4229
          %4261 = vmatprep.subr.bf16.mxu0 0
          %4262 = vmatpush2.bf16.msra.mxu0 0
          %4263 = vmatprep.subr.bf16.mxu0 0
          %4264 = vmatpush2.bf16.msra.mxu0 0
          %4265 = vmatprep.subr.bf16.mxu0 0
          %4266 = vmatpush2.bf16.msra.mxu0 0
          %4267 = vmatprep.subr.bf16.mxu0 0
          %4268 = vmatpush2.bf16.msra.mxu0 0
          %4269 = vmatprep.subr.bf16.mxu0 0
          %4270 = vmatpush2.bf16.msra.mxu0 0
          %4271 = vmatprep.subr.bf16.mxu0 0
          %4272 = vmatpush2.bf16.msra.mxu0 0
          %4273 = vmatprep.subr.bf16.mxu0 0
          %4274 = vmatpush2.bf16.msra.mxu0 0
          %4275 = vmatprep.subr.bf16.mxu0 0
          %4276 = vmatpush2.bf16.msra.mxu0 0
          %4277 = vmatprep.mubr.bf16.mxu0 0
          %4278 = vmatmul.mubr.bf16.gmra.mxu0 %v4176
          %v4279 = vpop.f32.mrf.mxu0
          %v4280 = vadd.f32 %v4196, %v4279
          %v4281 = vpop.f32.mrf.mxu0
          %v4282 = vpop.f32.mrf.mxu0
          %v4283 = vpop.f32.mrf.mxu0
          %4284 = vdwg.mxu0
          %4285 = vst [vmem:[%s423] sm:$0xff] %v4280
        $region84: #{tpu_custom_call.1} parent=47 // pred_fallthru
          _
        %s4286 = sand.u32 %s208, 1
        %s4287 = scalar_lea.sflag [#allocation5], %s4286
        %s4288 = sand.u32 %s208, 1
        %s4289 = smul.addr %s4288, 8
        %s4290 = scalar_lea.vmem [#allocation15], %s4289
        // Predicated region
        $region85: #{tpu_custom_call.1} parent=47 // pred_check
          %p4291 = pneg %p218
        $region86: #{tpu_custom_call.1} parent=47 // pred_check_branch
          %4293 = sbr.rel (%p4291) target = $region88
        $region87: #{tpu_custom_call.1} parent=47 // pred_region
          %s4295 = ssub.s32 128, 128
          %4296 = vsyncadd %s4287, %s4295
          %s4297 = smul.addr %s33, 128
          %s4298 = scalar_lea.hbm %s7, %s4297
          %s4300 = sshll.u32 %s4290, 4
          %s4301 = int_to_ptr.vmem [resolvable:$true] %s4300
          %4303 = dma.vmem_to_hbm [thread:$0]  %s4301, 128, %s4298, %s4287
        $region88: #{tpu_custom_call.1} parent=47 // pred_fallthru
          _
      $region48: #{tpu_custom_call.1} parent=5 // pred_fallthru
        _
      %p4304 = scmp.le.s32.totalorder 2, %s24
      // Predicated region
      $region89: #{tpu_custom_call.1} parent=5 // pred_check
        %p4305 = pneg %p4304
      $region90: #{tpu_custom_call.1} parent=5 // pred_check_branch
        %4307 = sbr.rel (%p4305) target = $region92
      $region91: #{tpu_custom_call.1} parent=5 // pred_region
        %s4308 = ssub.s32 %s24, 2
        // Predicated region
        $region93: #{tpu_custom_call.1} parent=91 // pred_check
          %p4309 = pneg %p224
        $region94: #{tpu_custom_call.1} parent=91 // pred_check_branch
          %4311 = sbr.rel (%p4309) target = $region96
        $region95: #{tpu_custom_call.1} parent=91 // pred_region
          %s4312 = sand.u32 %s209, 1
          %s4313 = scalar_lea.sflag [#allocation5], %s4312
          %s4314 = sand.u32 %s209, 1
          %s4315 = smul.addr %s4314, 8
          %s4316 = scalar_lea.vmem [#allocation15], %s4315
          %4317 = dma.done %s4313, 128
        $region96: #{tpu_custom_call.1} parent=91 // pred_fallthru
          _
      $region92: #{tpu_custom_call.1} parent=5 // pred_fallthru
        _
    $region6: #{tpu_custom_call.1} parent=1 // loop_footer
      %s28 = sadd.s32 1, %s24
    $region7: #{tpu_custom_call.1} parent=1 // loop_footer_branch
      %23 = sbr.rel target = $region3
    $region8: #{tpu_custom_call.1} parent=1 // loop_exit
      _
    %4318 = vsyncpa [#allocation4], 1
    %s4319 = scalar_lea.sflag [#allocation4], 1
    %4320 = vsyncpa %s4319, 1
    %4321 = vsyncpa [#allocation7], 1
    %s4322 = scalar_lea.sflag [#allocation7], 1
    %4323 = vsyncpa %s4322, 1
    %4324 = vsyncpa [#allocation10], 1
    %4325 = vsyncpa [#allocation13], 1
    %4326 = vsyncpa [#allocation5], 1
    %s4327 = scalar_lea.sflag [#allocation5], 1
    %4328 = vsyncpa %s4327, 1

</llo_original>
